<compile_context>
chip_gen: v7x
topology: tpu7x:2x2x1
jax: 0.10.0
libtpu: 0.0.40
codegen_flags: <defaults>
</compile_context>

<pallas_src>
import functools

import jax
import jax.numpy as jnp
import numpy as np
from jax import lax
from jax.experimental import pallas as pl
from jax.experimental.pallas import tpu as pltpu


def _round_up(x, m):
    return ((x + m - 1) // m) * m


# ----------------- fused conv3x3 + bias + ReLU + maxpool2x2 (in-kernel im2col) -----------------
def _conv_pool_kernel(x_ref, w_ref, b_ref, o_ref, *, wq, block_rows, num_blocks, cin):
    """x_ref: (1, 4, Rq, Cin) phase-split padded input, phase p=2a+b holds xpad[2r+a, 2c+b].
    w_ref: (9, Cin, Cout) taps (t = dy*3+dx).  b_ref: (1, Cout) f32.
    o_ref: (1, block_rows, Cout): pooled rows on the flat (Ho, Wq=Wo+1) grid (one junk col/row).
    The 36 (pool-position, tap) terms read 16 distinct contiguous row-slices of the phase planes;
    dots accumulate in f32, the 4 position accumulators are max-reduced, then bias+ReLU."""
    row0 = 0 if num_blocks == 1 else pl.program_id(1) * block_rows

    # Group the 36 terms by the lhs slice they read (trace-time bookkeeping only).
    terms = {}
    for py in range(2):
        for px in range(2):
            for dy in range(3):
                for dx in range(3):
                    al, a0 = (py + dy) % 2, (py + dy) // 2
                    be, b0 = (px + dx) % 2, (px + dx) // 2
                    key = (2 * al + be, a0 * wq + b0)
                    terms.setdefault(key, []).append((2 * py + px, dy * 3 + dx))

    accs = [None, None, None, None]
    for (ph, off), uses in sorted(terms.items()):
        lhs = x_ref[0, ph, pl.ds(row0 + off, block_rows), :]
        for pos, tap in uses:
            if cin == 1:
                # K=1: a VPU broadcast multiply beats a degenerate MXU dot.
                term = lhs.astype(jnp.float32) * w_ref[tap].astype(jnp.float32)
            else:
                term = jnp.dot(lhs, w_ref[tap], preferred_element_type=jnp.float32)
            accs[pos] = term if accs[pos] is None else accs[pos] + term

    # max over the pool window commutes with the monotone bias + ReLU epilogue.
    pooled = jnp.maximum(jnp.maximum(accs[0], accs[1]), jnp.maximum(accs[2], accs[3]))
    o_ref[0] = jnp.maximum(pooled + b_ref[...], 0.0).astype(o_ref.dtype)


def _pick_row_blocks(ho, wq):
    for nrb in (4, 2):
        if ho % nrb == 0 and ((ho // nrb) * wq) % 16 == 0:
            return nrb
    return 1


def conv3x3_relu_pool(x_nhwc, w_taps, b):
    """'same' 3x3 conv (stride 1, pad 1) + bias + ReLU + 2x2/2 max-pool (floor semantics)."""
    N, H, W, Cin = x_nhwc.shape
    Cout = w_taps.shape[-1]
    Ho, Wo = H // 2, W // 2                       # floor pooling, matches nn.MaxPool2d(2)
    Hq, Wq = Ho + 1, Wo + 1
    Rq = _round_up(Hq * Wq + 1, 8)

    # Zero-pad (conv padding=1), crop to the pool-covered region, phase-split (space-to-depth).
    xp = jnp.pad(x_nhwc, ((0, 0), (1, 1), (1, 1), (0, 0)))[:, :2 * Ho + 2, :2 * Wo + 2, :]
    xq = xp.reshape(N, Hq, 2, Wq, 2, Cin).transpose(0, 2, 4, 1, 3, 5)
    xq = xq.reshape(N, 4, Hq * Wq, Cin)
    xq = jnp.pad(xq, ((0, 0), (0, 0), (0, Rq - Hq * Wq), (0, 0)))

    nrb = _pick_row_blocks(Ho, Wq)
    rb_rows = (Ho // nrb) * Wq
    kernel = functools.partial(_conv_pool_kernel, wq=Wq, block_rows=rb_rows,
                               num_blocks=nrb, cin=Cin)
    out = pl.pallas_call(
        kernel,
        out_shape=jax.ShapeDtypeStruct((N, Ho * Wq, Cout), x_nhwc.dtype),
        grid=(N, nrb),
        in_specs=[
            pl.BlockSpec((1, 4, Rq, Cin), lambda n, r: (n, 0, 0, 0)),
            pl.BlockSpec((9, Cin, Cout), lambda n, r: (0, 0, 0)),
            pl.BlockSpec((1, Cout), lambda n, r: (0, 0)),
        ],
        out_specs=pl.BlockSpec((1, rb_rows, Cout), lambda n, r: (n, r, 0)),
        compiler_params=pltpu.CompilerParams(
            dimension_semantics=("parallel", "parallel"),
            vmem_limit_bytes=32 * 1024 * 1024),
    )(xq, w_taps, b)
    # Drop the per-row junk column (c == Wo) introduced by the flat-row formulation.
    return out.reshape(N, Ho, Wq, Cout)[:, :, :Wo, :]


# ----------------------------- fused FC1 + ReLU + FC2 kernel -----------------------------------
def _fc_fused_kernel(x_ref, w1_ref, b1_ref, w2_ref, b2_ref, o_ref, acc_ref):
    k = pl.program_id(1)

    @pl.when(k == 0)
    def _():
        acc_ref[...] = jnp.zeros_like(acc_ref)

    acc_ref[...] += jnp.dot(x_ref[0], w1_ref[...], preferred_element_type=jnp.float32)

    @pl.when(k == pl.num_programs(1) - 1)
    def _():
        h = jnp.maximum(acc_ref[...] + b1_ref[...], 0.0)
        o_ref[0] = jnp.dot(h, w2_ref[...], preferred_element_type=jnp.float32) + b2_ref[...]


_FC_K_TILES = (8192, 4096, 2048, 1024, 512, 256, 128)


def _fc_k_tile(f):
    for cand in _FC_K_TILES:
        if cand <= f:
            return cand
    return _FC_K_TILES[-1]


def fc1_relu_fc2(x, w1, b1, w2, b2):
    """x: (N, F) NHWC-flattened activations; w1: (F_pad, H) rows pre-permuted & zero-padded to a
    multiple of the K tile; w2/b2 column-padded to a multiple of 128 lanes."""
    N, F = x.shape
    F_pad, Hdim = w1.shape
    Cpad = w2.shape[1]
    if F_pad != F:
        x = jnp.pad(x, ((0, 0), (0, F_pad - F)))
    tk = max(c for c in _FC_K_TILES if F_pad % c == 0)
    nb = 2 if (N >= 2 and N % 2 == 0) else 1      # leading parallel batch axis (v7x dual-TC)
    bn = N // nb
    x3 = x.reshape(nb, bn, F_pad)

    out = pl.pallas_call(
        _fc_fused_kernel,
        out_shape=jax.ShapeDtypeStruct((nb, bn, Cpad), jnp.float32),
        grid=(nb, F_pad // tk),
        in_specs=[
            pl.BlockSpec((1, bn, tk), lambda i, k: (i, 0, k)),
            pl.BlockSpec((tk, Hdim), lambda i, k: (k, 0)),
            pl.BlockSpec((1, Hdim), lambda i, k: (0, 0)),
            pl.BlockSpec((Hdim, Cpad), lambda i, k: (0, 0)),
            pl.BlockSpec((1, Cpad), lambda i, k: (0, 0)),
        ],
        out_specs=pl.BlockSpec((1, bn, Cpad), lambda i, k: (i, 0, 0)),
        scratch_shapes=[pltpu.VMEM((bn, Hdim), jnp.float32)],
        compiler_params=pltpu.CompilerParams(
            dimension_semantics=("parallel", "arbitrary"),
            vmem_limit_bytes=32 * 1024 * 1024),
    )(x3, w1, b1, w2, b2)
    return out.reshape(N, Cpad)


# --------------------------------- param prep & forward ---------------------------------------
def prepare_params(params, image_hw, num_classes, compute_dtype=jnp.bfloat16):
    """Offline weight prep: conv weights -> (9, Cin, Cout) taps in the streaming dtype; wfc1 rows
    permuted from torch NCHW-flatten order to NHWC-flatten order (kills the runtime transpose),
    zero-padded to a multiple of the FC K tile and cast to the streaming dtype; FC2 columns padded
    to 128 lanes (unmasked output stores).  Biases stay f32 (f32 epilogues)."""
    h, w = image_hw
    for _ in range(3):
        h, w = h // 2, w // 2
    c3 = params["w3"].shape[-1]
    F = c3 * h * w
    f_pad = _round_up(F, _fc_k_tile(F))
    cpad = _round_up(max(num_classes, 1), 128)

    def conv_w(w_hwio):                            # (3,3,Cin,Cout) -> (9,Cin,Cout)
        cin, cout = w_hwio.shape[2], w_hwio.shape[3]
        return jnp.asarray(w_hwio, jnp.float32).reshape(9, cin, cout).astype(compute_dtype)

    def bias(v):
        return jnp.asarray(v, jnp.float32).reshape(1, -1)

    idx = np.arange(F).reshape(c3, h, w).transpose(1, 2, 0).reshape(-1)
    w1p = jnp.asarray(params["wfc1"], jnp.float32)[idx, :]
    w1p = jnp.pad(w1p, ((0, f_pad - F), (0, 0))).astype(compute_dtype)

    return dict(
        w1=conv_w(params["w1"]), b1=bias(params["b1"]),
        w2=conv_w(params["w2"]), b2=bias(params["b2"]),
        w3=conv_w(params["w3"]), b3=bias(params["b3"]),
        wfc1=w1p, bfc1=bias(params["bfc1"]),
        wfc2=jnp.pad(jnp.asarray(params["wfc2"], jnp.float32),
                     ((0, 0), (0, cpad - num_classes))),
        bfc2=jnp.pad(jnp.asarray(params["bfc2"], jnp.float32),
                     (0, cpad - num_classes)).reshape(1, -1),
    )


def chord_detector_forward(x_nchw, p, *, num_classes):
    cdt = p["w1"].dtype
    x = jnp.transpose(x_nchw, (0, 2, 3, 1)).astype(cdt)   # NCHW -> NHWC (C=1, cheap)
    x = conv3x3_relu_pool(x, p["w1"], p["b1"])
    x = conv3x3_relu_pool(x, p["w2"], p["b2"])
    x = conv3x3_relu_pool(x, p["w3"], p["b3"])
    N = x.shape[0]
    x = x.reshape(N, -1)                                   # NHWC flatten; wfc1 rows pre-permuted
    y = fc1_relu_fc2(x, p["wfc1"], p["bfc1"], p["wfc2"], p["bfc2"])
    return y[:, :num_classes]


# ------------------------------------ pure-JAX reference --------------------------------------
def ref_forward(x_nchw, params):
    x = jnp.transpose(x_nchw, (0, 2, 3, 1))

    def conv(x, w, b):
        y = lax.conv_general_dilated(x, w, (1, 1), "SAME",
                                     dimension_numbers=("NHWC", "HWIO", "NHWC"))
        return jnp.maximum(y + b, 0.0)

    def pool(x):
        return lax.reduce_window(x, -jnp.inf, lax.max, (1, 2, 2, 1), (1, 2, 2, 1), "VALID")

    x = pool(conv(x, params["w1"], params["b1"]))
    x = pool(conv(x, params["w2"], params["b2"]))
    x = pool(conv(x, params["w3"], params["b3"]))
    N = x.shape[0]
    x = jnp.transpose(x, (0, 3, 1, 2)).reshape(N, -1)      # torch .view on NCHW
    x = jnp.maximum(x @ params["wfc1"] + params["bfc1"], 0.0)
    return x @ params["wfc2"] + params["bfc2"]


# -------------------------------------------- main ---------------------------------------------
if __name__ == "__main__":
    # Small shapes consistent with the module (nominal torch input is (N,1,128,100);
    # here H=W=16 so flattened_size = 128 * (16//8) * (16//8) = 512).
    N, H, W = 2, 16, 16
    num_classes = 10
    flattened = 128 * (H // 8) * (W // 8)

    key = jax.random.PRNGKey(0)
    ks = jax.random.split(key, 11)

    def uinit(k, shape, fan_in):
        bound = 1.0 / np.sqrt(fan_in)
        return jax.random.uniform(k, shape, jnp.float32, -bound, bound)

    params = dict(
        w1=uinit(ks[1], (3, 3, 1, 32), 9 * 1),    b1=uinit(ks[2], (32,), 9 * 1),
        w2=uinit(ks[3], (3, 3, 32, 64), 9 * 32),  b2=uinit(ks[4], (64,), 9 * 32),
        w3=uinit(ks[5], (3, 3, 64, 128), 9 * 64), b3=uinit(ks[6], (128,), 9 * 64),
        wfc1=uinit(ks[7], (flattened, 256), flattened), bfc1=uinit(ks[8], (256,), flattened),
        wfc2=uinit(ks[9], (256, num_classes), 256),     bfc2=uinit(ks[10], (num_classes,), 256),
    )
    x = jax.random.normal(ks[0], (N, 1, H, W), jnp.float32)

    ref = jax.block_until_ready(ref_forward(x, params))
    fwd = jax.jit(functools.partial(chord_detector_forward, num_classes=num_classes))

    # f32 path: validates the kernel structure at tight tolerance.
    p_f32 = prepare_params(params, (H, W), num_classes, compute_dtype=jnp.float32)
    out_f32 = jax.block_until_ready(fwd(x, p_f32))
    assert out_f32.shape == (N, num_classes), out_f32.shape
    assert np.allclose(np.asarray(out_f32), np.asarray(ref), rtol=2e-3, atol=2e-3), (
        np.max(np.abs(np.asarray(out_f32) - np.asarray(ref))))

    # bf16 streaming path (the HBM-optimized production path); f32 accumulation, looser tolerance
    # reflecting bf16 operand rounding of weights/activations.
    p_bf16 = prepare_params(params, (H, W), num_classes, compute_dtype=jnp.bfloat16)
    out_bf16 = jax.block_until_ready(fwd(x, p_bf16))
    assert out_bf16.shape == (N, num_classes), out_bf16.shape
    assert np.allclose(np.asarray(out_bf16), np.asarray(ref), rtol=2e-2, atol=2e-2), (
        np.max(np.abs(np.asarray(out_bf16) - np.asarray(ref))))

    print("KERNEL_OK")
</pallas_src>

<mosaic_0001>
module attributes {stable_mosaic.version = 11 : i64} {
  func.func @_conv_pool_kernel(%arg0: i32, %arg1: i32, %arg2: memref<1x4x88x1xf32, #tpu.memory_space<vmem>>, %arg3: memref<9x1x32xf32, #tpu.memory_space<vmem>>, %arg4: memref<1x32xf32, #tpu.memory_space<vmem>>, %arg5: memref<1x72x32xf32, #tpu.memory_space<vmem>>) attributes {dimension_semantics = [#tpu.dimension_semantics<parallel>, #tpu.dimension_semantics<parallel>], iteration_bounds = array<i64: 2, 1>, scalar_prefetch = 0 : i64, scratch_operands = 0 : i64, tpu.core_type = #tpu.core_type<tc>, window_params = [{transform_indices = @transform_0, window_bounds = array<i64: 1, 4, 88, 1>}, {pipeline_mode = #tpu.pipeline_mode<synchronous>, transform_indices = @transform_1, window_bounds = array<i64: 9, 1, 32>}, {pipeline_mode = #tpu.pipeline_mode<synchronous>, transform_indices = @transform_2, window_bounds = array<i64: 1, 32>}, {transform_indices = @transform_3, window_bounds = array<i64: 1, 72, 32>}]} {
    %c0 = arith.constant 0 : index
    %c0_0 = arith.constant 0 : index
    %c0_1 = arith.constant 0 : index
    %c0_2 = arith.constant 0 : index
    %0 = vector.load %arg2[%c0, %c0_0, %c0_1, %c0_2] : memref<1x4x88x1xf32, #tpu.memory_space<vmem>>, vector<1x1x72x1xf32>
    %1 = vector.shape_cast %0 : vector<1x1x72x1xf32> to vector<72x1xf32>
    %c0_3 = arith.constant 0 : index
    %c0_4 = arith.constant 0 : index
    %c0_5 = arith.constant 0 : index
    %2 = vector.load %arg3[%c0_3, %c0_4, %c0_5] : memref<9x1x32xf32, #tpu.memory_space<vmem>>, vector<1x1x32xf32>
    %3 = vector.shape_cast %2 : vector<1x1x32xf32> to vector<1x32xf32>
    %4 = vector.broadcast %1 : vector<72x1xf32> to vector<72x32xf32>
    %5 = vector.broadcast %3 : vector<1x32xf32> to vector<72x32xf32>
    %6 = arith.mulf %4, %5 : vector<72x32xf32>
    %c0_6 = arith.constant 0 : index
    %c0_7 = arith.constant 0 : index
    %c1 = arith.constant 1 : index
    %c0_8 = arith.constant 0 : index
    %7 = vector.load %arg2[%c0_6, %c0_7, %c1, %c0_8] : memref<1x4x88x1xf32, #tpu.memory_space<vmem>>, vector<1x1x72x1xf32>
    %8 = vector.shape_cast %7 : vector<1x1x72x1xf32> to vector<72x1xf32>
    %c2 = arith.constant 2 : index
    %c0_9 = arith.constant 0 : index
    %c0_10 = arith.constant 0 : index
    %9 = vector.load %arg3[%c2, %c0_9, %c0_10] : memref<9x1x32xf32, #tpu.memory_space<vmem>>, vector<1x1x32xf32>
    %10 = vector.shape_cast %9 : vector<1x1x32xf32> to vector<1x32xf32>
    %11 = vector.broadcast %8 : vector<72x1xf32> to vector<72x32xf32>
    %12 = vector.broadcast %10 : vector<1x32xf32> to vector<72x32xf32>
    %13 = arith.mulf %11, %12 : vector<72x32xf32>
    %14 = arith.addf %6, %13 : vector<72x32xf32>
    %c1_11 = arith.constant 1 : index
    %c0_12 = arith.constant 0 : index
    %c0_13 = arith.constant 0 : index
    %15 = vector.load %arg3[%c1_11, %c0_12, %c0_13] : memref<9x1x32xf32, #tpu.memory_space<vmem>>, vector<1x1x32xf32>
    %16 = vector.shape_cast %15 : vector<1x1x32xf32> to vector<1x32xf32>
    %17 = vector.broadcast %8 : vector<72x1xf32> to vector<72x32xf32>
    %18 = vector.broadcast %16 : vector<1x32xf32> to vector<72x32xf32>
    %19 = arith.mulf %17, %18 : vector<72x32xf32>
    %c0_14 = arith.constant 0 : index
    %c0_15 = arith.constant 0 : index
    %c9 = arith.constant 9 : index
    %c0_16 = arith.constant 0 : index
    %20 = vector.load %arg2[%c0_14, %c0_15, %c9, %c0_16] : memref<1x4x88x1xf32, #tpu.memory_space<vmem>>, vector<1x1x72x1xf32>
    %21 = vector.shape_cast %20 : vector<1x1x72x1xf32> to vector<72x1xf32>
    %c6 = arith.constant 6 : index
    %c0_17 = arith.constant 0 : index
    %c0_18 = arith.constant 0 : index
    %22 = vector.load %arg3[%c6, %c0_17, %c0_18] : memref<9x1x32xf32, #tpu.memory_space<vmem>>, vector<1x1x32xf32>
    %23 = vector.shape_cast %22 : vector<1x1x32xf32> to vector<1x32xf32>
    %24 = vector.broadcast %21 : vector<72x1xf32> to vector<72x32xf32>
    %25 = vector.broadcast %23 : vector<1x32xf32> to vector<72x32xf32>
    %26 = arith.mulf %24, %25 : vector<72x32xf32>
    %27 = arith.addf %14, %26 : vector<72x32xf32>
    %c3 = arith.constant 3 : index
    %c0_19 = arith.constant 0 : index
    %c0_20 = arith.constant 0 : index
    %28 = vector.load %arg3[%c3, %c0_19, %c0_20] : memref<9x1x32xf32, #tpu.memory_space<vmem>>, vector<1x1x32xf32>
    %29 = vector.shape_cast %28 : vector<1x1x32xf32> to vector<1x32xf32>
    %30 = vector.broadcast %21 : vector<72x1xf32> to vector<72x32xf32>
    %31 = vector.broadcast %29 : vector<1x32xf32> to vector<72x32xf32>
    %32 = arith.mulf %30, %31 : vector<72x32xf32>
    %c0_21 = arith.constant 0 : index
    %c0_22 = arith.constant 0 : index
    %c10 = arith.constant 10 : index
    %c0_23 = arith.constant 0 : index
    %33 = vector.load %arg2[%c0_21, %c0_22, %c10, %c0_23] : memref<1x4x88x1xf32, #tpu.memory_space<vmem>>, vector<1x1x72x1xf32>
    %34 = vector.shape_cast %33 : vector<1x1x72x1xf32> to vector<72x1xf32>
    %c8 = arith.constant 8 : index
    %c0_24 = arith.constant 0 : index
    %c0_25 = arith.constant 0 : index
    %35 = vector.load %arg3[%c8, %c0_24, %c0_25] : memref<9x1x32xf32, #tpu.memory_space<vmem>>, vector<1x1x32xf32>
    %36 = vector.shape_cast %35 : vector<1x1x32xf32> to vector<1x32xf32>
    %37 = vector.broadcast %34 : vector<72x1xf32> to vector<72x32xf32>
    %38 = vector.broadcast %36 : vector<1x32xf32> to vector<72x32xf32>
    %39 = arith.mulf %37, %38 : vector<72x32xf32>
    %40 = arith.addf %27, %39 : vector<72x32xf32>
    %c7 = arith.constant 7 : index
    %c0_26 = arith.constant 0 : index
    %c0_27 = arith.constant 0 : index
    %41 = vector.load %arg3[%c7, %c0_26, %c0_27] : memref<9x1x32xf32, #tpu.memory_space<vmem>>, vector<1x1x32xf32>
    %42 = vector.shape_cast %41 : vector<1x1x32xf32> to vector<1x32xf32>
    %43 = vector.broadcast %34 : vector<72x1xf32> to vector<72x32xf32>
    %44 = vector.broadcast %42 : vector<1x32xf32> to vector<72x32xf32>
    %45 = arith.mulf %43, %44 : vector<72x32xf32>
    %46 = arith.addf %19, %45 : vector<72x32xf32>
    %c5 = arith.constant 5 : index
    %c0_28 = arith.constant 0 : index
    %c0_29 = arith.constant 0 : index
    %47 = vector.load %arg3[%c5, %c0_28, %c0_29] : memref<9x1x32xf32, #tpu.memory_space<vmem>>, vector<1x1x32xf32>
    %48 = vector.shape_cast %47 : vector<1x1x32xf32> to vector<1x32xf32>
    %49 = vector.broadcast %34 : vector<72x1xf32> to vector<72x32xf32>
    %50 = vector.broadcast %48 : vector<1x32xf32> to vector<72x32xf32>
    %51 = arith.mulf %49, %50 : vector<72x32xf32>
    %52 = arith.addf %32, %51 : vector<72x32xf32>
    %c4 = arith.constant 4 : index
    %c0_30 = arith.constant 0 : index
    %c0_31 = arith.constant 0 : index
    %53 = vector.load %arg3[%c4, %c0_30, %c0_31] : memref<9x1x32xf32, #tpu.memory_space<vmem>>, vector<1x1x32xf32>
    %54 = vector.shape_cast %53 : vector<1x1x32xf32> to vector<1x32xf32>
    %55 = vector.broadcast %34 : vector<72x1xf32> to vector<72x32xf32>
    %56 = vector.broadcast %54 : vector<1x32xf32> to vector<72x32xf32>
    %57 = arith.mulf %55, %56 : vector<72x32xf32>
    %c0_32 = arith.constant 0 : index
    %c1_33 = arith.constant 1 : index
    %c0_34 = arith.constant 0 : index
    %c0_35 = arith.constant 0 : index
    %58 = vector.load %arg2[%c0_32, %c1_33, %c0_34, %c0_35] : memref<1x4x88x1xf32, #tpu.memory_space<vmem>>, vector<1x1x72x1xf32>
    %59 = vector.shape_cast %58 : vector<1x1x72x1xf32> to vector<72x1xf32>
    %c1_36 = arith.constant 1 : index
    %c0_37 = arith.constant 0 : index
    %c0_38 = arith.constant 0 : index
    %60 = vector.load %arg3[%c1_36, %c0_37, %c0_38] : memref<9x1x32xf32, #tpu.memory_space<vmem>>, vector<1x1x32xf32>
    %61 = vector.shape_cast %60 : vector<1x1x32xf32> to vector<1x32xf32>
    %62 = vector.broadcast %59 : vector<72x1xf32> to vector<72x32xf32>
    %63 = vector.broadcast %61 : vector<1x32xf32> to vector<72x32xf32>
    %64 = arith.mulf %62, %63 : vector<72x32xf32>
    %65 = arith.addf %40, %64 : vector<72x32xf32>
    %c0_39 = arith.constant 0 : index
    %c0_40 = arith.constant 0 : index
    %c0_41 = arith.constant 0 : index
    %66 = vector.load %arg3[%c0_39, %c0_40, %c0_41] : memref<9x1x32xf32, #tpu.memory_space<vmem>>, vector<1x1x32xf32>
    %67 = vector.shape_cast %66 : vector<1x1x32xf32> to vector<1x32xf32>
    %68 = vector.broadcast %59 : vector<72x1xf32> to vector<72x32xf32>
    %69 = vector.broadcast %67 : vector<1x32xf32> to vector<72x32xf32>
    %70 = arith.mulf %68, %69 : vector<72x32xf32>
    %71 = arith.addf %46, %70 : vector<72x32xf32>
    %c0_42 = arith.constant 0 : index
    %c1_43 = arith.constant 1 : index
    %c1_44 = arith.constant 1 : index
    %c0_45 = arith.constant 0 : index
    %72 = vector.load %arg2[%c0_42, %c1_43, %c1_44, %c0_45] : memref<1x4x88x1xf32, #tpu.memory_space<vmem>>, vector<1x1x72x1xf32>
    %73 = vector.shape_cast %72 : vector<1x1x72x1xf32> to vector<72x1xf32>
    %c2_46 = arith.constant 2 : index
    %c0_47 = arith.constant 0 : index
    %c0_48 = arith.constant 0 : index
    %74 = vector.load %arg3[%c2_46, %c0_47, %c0_48] : memref<9x1x32xf32, #tpu.memory_space<vmem>>, vector<1x1x32xf32>
    %75 = vector.shape_cast %74 : vector<1x1x32xf32> to vector<1x32xf32>
    %76 = vector.broadcast %73 : vector<72x1xf32> to vector<72x32xf32>
    %77 = vector.broadcast %75 : vector<1x32xf32> to vector<72x32xf32>
    %78 = arith.mulf %76, %77 : vector<72x32xf32>
    %79 = arith.addf %71, %78 : vector<72x32xf32>
    %c0_49 = arith.constant 0 : index
    %c1_50 = arith.constant 1 : index
    %c9_51 = arith.constant 9 : index
    %c0_52 = arith.constant 0 : index
    %80 = vector.load %arg2[%c0_49, %c1_50, %c9_51, %c0_52] : memref<1x4x88x1xf32, #tpu.memory_space<vmem>>, vector<1x1x72x1xf32>
    %81 = vector.shape_cast %80 : vector<1x1x72x1xf32> to vector<72x1xf32>
    %c7_53 = arith.constant 7 : index
    %c0_54 = arith.constant 0 : index
    %c0_55 = arith.constant 0 : index
    %82 = vector.load %arg3[%c7_53, %c0_54, %c0_55] : memref<9x1x32xf32, #tpu.memory_space<vmem>>, vector<1x1x32xf32>
    %83 = vector.shape_cast %82 : vector<1x1x32xf32> to vector<1x32xf32>
    %84 = vector.broadcast %81 : vector<72x1xf32> to vector<72x32xf32>
    %85 = vector.broadcast %83 : vector<1x32xf32> to vector<72x32xf32>
    %86 = arith.mulf %84, %85 : vector<72x32xf32>
    %87 = arith.addf %65, %86 : vector<72x32xf32>
    %c6_56 = arith.constant 6 : index
    %c0_57 = arith.constant 0 : index
    %c0_58 = arith.constant 0 : index
    %88 = vector.load %arg3[%c6_56, %c0_57, %c0_58] : memref<9x1x32xf32, #tpu.memory_space<vmem>>, vector<1x1x32xf32>
    %89 = vector.shape_cast %88 : vector<1x1x32xf32> to vector<1x32xf32>
    %90 = vector.broadcast %81 : vector<72x1xf32> to vector<72x32xf32>
    %91 = vector.broadcast %89 : vector<1x32xf32> to vector<72x32xf32>
    %92 = arith.mulf %90, %91 : vector<72x32xf32>
    %93 = arith.addf %79, %92 : vector<72x32xf32>
    %c4_59 = arith.constant 4 : index
    %c0_60 = arith.constant 0 : index
    %c0_61 = arith.constant 0 : index
    %94 = vector.load %arg3[%c4_59, %c0_60, %c0_61] : memref<9x1x32xf32, #tpu.memory_space<vmem>>, vector<1x1x32xf32>
    %95 = vector.shape_cast %94 : vector<1x1x32xf32> to vector<1x32xf32>
    %96 = vector.broadcast %81 : vector<72x1xf32> to vector<72x32xf32>
    %97 = vector.broadcast %95 : vector<1x32xf32> to vector<72x32xf32>
    %98 = arith.mulf %96, %97 : vector<72x32xf32>
    %99 = arith.addf %52, %98 : vector<72x32xf32>
    %c3_62 = arith.constant 3 : index
    %c0_63 = arith.constant 0 : index
    %c0_64 = arith.constant 0 : index
    %100 = vector.load %arg3[%c3_62, %c0_63, %c0_64] : memref<9x1x32xf32, #tpu.memory_space<vmem>>, vector<1x1x32xf32>
    %101 = vector.shape_cast %100 : vector<1x1x32xf32> to vector<1x32xf32>
    %102 = vector.broadcast %81 : vector<72x1xf32> to vector<72x32xf32>
    %103 = vector.broadcast %101 : vector<1x32xf32> to vector<72x32xf32>
    %104 = arith.mulf %102, %103 : vector<72x32xf32>
    %105 = arith.addf %57, %104 : vector<72x32xf32>
    %c0_65 = arith.constant 0 : index
    %c1_66 = arith.constant 1 : index
    %c10_67 = arith.constant 10 : index
    %c0_68 = arith.constant 0 : index
    %106 = vector.load %arg2[%c0_65, %c1_66, %c10_67, %c0_68] : memref<1x4x88x1xf32, #tpu.memory_space<vmem>>, vector<1x1x72x1xf32>
    %107 = vector.shape_cast %106 : vector<1x1x72x1xf32> to vector<72x1xf32>
    %c8_69 = arith.constant 8 : index
    %c0_70 = arith.constant 0 : index
    %c0_71 = arith.constant 0 : index
    %108 = vector.load %arg3[%c8_69, %c0_70, %c0_71] : memref<9x1x32xf32, #tpu.memory_space<vmem>>, vector<1x1x32xf32>
    %109 = vector.shape_cast %108 : vector<1x1x32xf32> to vector<1x32xf32>
    %110 = vector.broadcast %107 : vector<72x1xf32> to vector<72x32xf32>
    %111 = vector.broadcast %109 : vector<1x32xf32> to vector<72x32xf32>
    %112 = arith.mulf %110, %111 : vector<72x32xf32>
    %113 = arith.addf %93, %112 : vector<72x32xf32>
    %c5_72 = arith.constant 5 : index
    %c0_73 = arith.constant 0 : index
    %c0_74 = arith.constant 0 : index
    %114 = vector.load %arg3[%c5_72, %c0_73, %c0_74] : memref<9x1x32xf32, #tpu.memory_space<vmem>>, vector<1x1x32xf32>
    %115 = vector.shape_cast %114 : vector<1x1x32xf32> to vector<1x32xf32>
    %116 = vector.broadcast %107 : vector<72x1xf32> to vector<72x32xf32>
    %117 = vector.broadcast %115 : vector<1x32xf32> to vector<72x32xf32>
    %118 = arith.mulf %116, %117 : vector<72x32xf32>
    %119 = arith.addf %105, %118 : vector<72x32xf32>
    %c0_75 = arith.constant 0 : index
    %c2_76 = arith.constant 2 : index
    %c0_77 = arith.constant 0 : index
    %c0_78 = arith.constant 0 : index
    %120 = vector.load %arg2[%c0_75, %c2_76, %c0_77, %c0_78] : memref<1x4x88x1xf32, #tpu.memory_space<vmem>>, vector<1x1x72x1xf32>
    %121 = vector.shape_cast %120 : vector<1x1x72x1xf32> to vector<72x1xf32>
    %c3_79 = arith.constant 3 : index
    %c0_80 = arith.constant 0 : index
    %c0_81 = arith.constant 0 : index
    %122 = vector.load %arg3[%c3_79, %c0_80, %c0_81] : memref<9x1x32xf32, #tpu.memory_space<vmem>>, vector<1x1x32xf32>
    %123 = vector.shape_cast %122 : vector<1x1x32xf32> to vector<1x32xf32>
    %124 = vector.broadcast %121 : vector<72x1xf32> to vector<72x32xf32>
    %125 = vector.broadcast %123 : vector<1x32xf32> to vector<72x32xf32>
    %126 = arith.mulf %124, %125 : vector<72x32xf32>
    %127 = arith.addf %87, %126 : vector<72x32xf32>
    %c0_82 = arith.constant 0 : index
    %c0_83 = arith.constant 0 : index
    %c0_84 = arith.constant 0 : index
    %128 = vector.load %arg3[%c0_82, %c0_83, %c0_84] : memref<9x1x32xf32, #tpu.memory_space<vmem>>, vector<1x1x32xf32>
    %129 = vector.shape_cast %128 : vector<1x1x32xf32> to vector<1x32xf32>
    %130 = vector.broadcast %121 : vector<72x1xf32> to vector<72x32xf32>
    %131 = vector.broadcast %129 : vector<1x32xf32> to vector<72x32xf32>
    %132 = arith.mulf %130, %131 : vector<72x32xf32>
    %133 = arith.addf %99, %132 : vector<72x32xf32>
    %c0_85 = arith.constant 0 : index
    %c2_86 = arith.constant 2 : index
    %c1_87 = arith.constant 1 : index
    %c0_88 = arith.constant 0 : index
    %134 = vector.load %arg2[%c0_85, %c2_86, %c1_87, %c0_88] : memref<1x4x88x1xf32, #tpu.memory_space<vmem>>, vector<1x1x72x1xf32>
    %135 = vector.shape_cast %134 : vector<1x1x72x1xf32> to vector<72x1xf32>
    %c5_89 = arith.constant 5 : index
    %c0_90 = arith.constant 0 : index
    %c0_91 = arith.constant 0 : index
    %136 = vector.load %arg3[%c5_89, %c0_90, %c0_91] : memref<9x1x32xf32, #tpu.memory_space<vmem>>, vector<1x1x32xf32>
    %137 = vector.shape_cast %136 : vector<1x1x32xf32> to vector<1x32xf32>
    %138 = vector.broadcast %135 : vector<72x1xf32> to vector<72x32xf32>
    %139 = vector.broadcast %137 : vector<1x32xf32> to vector<72x32xf32>
    %140 = arith.mulf %138, %139 : vector<72x32xf32>
    %141 = arith.addf %127, %140 : vector<72x32xf32>
    %c4_92 = arith.constant 4 : index
    %c0_93 = arith.constant 0 : index
    %c0_94 = arith.constant 0 : index
    %142 = vector.load %arg3[%c4_92, %c0_93, %c0_94] : memref<9x1x32xf32, #tpu.memory_space<vmem>>, vector<1x1x32xf32>
    %143 = vector.shape_cast %142 : vector<1x1x32xf32> to vector<1x32xf32>
    %144 = vector.broadcast %135 : vector<72x1xf32> to vector<72x32xf32>
    %145 = vector.broadcast %143 : vector<1x32xf32> to vector<72x32xf32>
    %146 = arith.mulf %144, %145 : vector<72x32xf32>
    %147 = arith.addf %113, %146 : vector<72x32xf32>
    %c2_95 = arith.constant 2 : index
    %c0_96 = arith.constant 0 : index
    %c0_97 = arith.constant 0 : index
    %148 = vector.load %arg3[%c2_95, %c0_96, %c0_97] : memref<9x1x32xf32, #tpu.memory_space<vmem>>, vector<1x1x32xf32>
    %149 = vector.shape_cast %148 : vector<1x1x32xf32> to vector<1x32xf32>
    %150 = vector.broadcast %135 : vector<72x1xf32> to vector<72x32xf32>
    %151 = vector.broadcast %149 : vector<1x32xf32> to vector<72x32xf32>
    %152 = arith.mulf %150, %151 : vector<72x32xf32>
    %153 = arith.addf %133, %152 : vector<72x32xf32>
    %c1_98 = arith.constant 1 : index
    %c0_99 = arith.constant 0 : index
    %c0_100 = arith.constant 0 : index
    %154 = vector.load %arg3[%c1_98, %c0_99, %c0_100] : memref<9x1x32xf32, #tpu.memory_space<vmem>>, vector<1x1x32xf32>
    %155 = vector.shape_cast %154 : vector<1x1x32xf32> to vector<1x32xf32>
    %156 = vector.broadcast %135 : vector<72x1xf32> to vector<72x32xf32>
    %157 = vector.broadcast %155 : vector<1x32xf32> to vector<72x32xf32>
    %158 = arith.mulf %156, %157 : vector<72x32xf32>
    %159 = arith.addf %119, %158 : vector<72x32xf32>
    %c0_101 = arith.constant 0 : index
    %c2_102 = arith.constant 2 : index
    %c9_103 = arith.constant 9 : index
    %c0_104 = arith.constant 0 : index
    %160 = vector.load %arg2[%c0_101, %c2_102, %c9_103, %c0_104] : memref<1x4x88x1xf32, #tpu.memory_space<vmem>>, vector<1x1x72x1xf32>
    %161 = vector.shape_cast %160 : vector<1x1x72x1xf32> to vector<72x1xf32>
    %c6_105 = arith.constant 6 : index
    %c0_106 = arith.constant 0 : index
    %c0_107 = arith.constant 0 : index
    %162 = vector.load %arg3[%c6_105, %c0_106, %c0_107] : memref<9x1x32xf32, #tpu.memory_space<vmem>>, vector<1x1x32xf32>
    %163 = vector.shape_cast %162 : vector<1x1x32xf32> to vector<1x32xf32>
    %164 = vector.broadcast %161 : vector<72x1xf32> to vector<72x32xf32>
    %165 = vector.broadcast %163 : vector<1x32xf32> to vector<72x32xf32>
    %166 = arith.mulf %164, %165 : vector<72x32xf32>
    %167 = arith.addf %153, %166 : vector<72x32xf32>
    %c0_108 = arith.constant 0 : index
    %c2_109 = arith.constant 2 : index
    %c10_110 = arith.constant 10 : index
    %c0_111 = arith.constant 0 : index
    %168 = vector.load %arg2[%c0_108, %c2_109, %c10_110, %c0_111] : memref<1x4x88x1xf32, #tpu.memory_space<vmem>>, vector<1x1x72x1xf32>
    %169 = vector.shape_cast %168 : vector<1x1x72x1xf32> to vector<72x1xf32>
    %c8_112 = arith.constant 8 : index
    %c0_113 = arith.constant 0 : index
    %c0_114 = arith.constant 0 : index
    %170 = vector.load %arg3[%c8_112, %c0_113, %c0_114] : memref<9x1x32xf32, #tpu.memory_space<vmem>>, vector<1x1x32xf32>
    %171 = vector.shape_cast %170 : vector<1x1x32xf32> to vector<1x32xf32>
    %172 = vector.broadcast %169 : vector<72x1xf32> to vector<72x32xf32>
    %173 = vector.broadcast %171 : vector<1x32xf32> to vector<72x32xf32>
    %174 = arith.mulf %172, %173 : vector<72x32xf32>
    %175 = arith.addf %167, %174 : vector<72x32xf32>
    %c7_115 = arith.constant 7 : index
    %c0_116 = arith.constant 0 : index
    %c0_117 = arith.constant 0 : index
    %176 = vector.load %arg3[%c7_115, %c0_116, %c0_117] : memref<9x1x32xf32, #tpu.memory_space<vmem>>, vector<1x1x32xf32>
    %177 = vector.shape_cast %176 : vector<1x1x32xf32> to vector<1x32xf32>
    %178 = vector.broadcast %169 : vector<72x1xf32> to vector<72x32xf32>
    %179 = vector.broadcast %177 : vector<1x32xf32> to vector<72x32xf32>
    %180 = arith.mulf %178, %179 : vector<72x32xf32>
    %181 = arith.addf %159, %180 : vector<72x32xf32>
    %c0_118 = arith.constant 0 : index
    %c3_119 = arith.constant 3 : index
    %c0_120 = arith.constant 0 : index
    %c0_121 = arith.constant 0 : index
    %182 = vector.load %arg2[%c0_118, %c3_119, %c0_120, %c0_121] : memref<1x4x88x1xf32, #tpu.memory_space<vmem>>, vector<1x1x72x1xf32>
    %183 = vector.shape_cast %182 : vector<1x1x72x1xf32> to vector<72x1xf32>
    %c4_122 = arith.constant 4 : index
    %c0_123 = arith.constant 0 : index
    %c0_124 = arith.constant 0 : index
    %184 = vector.load %arg3[%c4_122, %c0_123, %c0_124] : memref<9x1x32xf32, #tpu.memory_space<vmem>>, vector<1x1x32xf32>
    %185 = vector.shape_cast %184 : vector<1x1x32xf32> to vector<1x32xf32>
    %186 = vector.broadcast %183 : vector<72x1xf32> to vector<72x32xf32>
    %187 = vector.broadcast %185 : vector<1x32xf32> to vector<72x32xf32>
    %188 = arith.mulf %186, %187 : vector<72x32xf32>
    %189 = arith.addf %141, %188 : vector<72x32xf32>
    %c3_125 = arith.constant 3 : index
    %c0_126 = arith.constant 0 : index
    %c0_127 = arith.constant 0 : index
    %190 = vector.load %arg3[%c3_125, %c0_126, %c0_127] : memref<9x1x32xf32, #tpu.memory_space<vmem>>, vector<1x1x32xf32>
    %191 = vector.shape_cast %190 : vector<1x1x32xf32> to vector<1x32xf32>
    %192 = vector.broadcast %183 : vector<72x1xf32> to vector<72x32xf32>
    %193 = vector.broadcast %191 : vector<1x32xf32> to vector<72x32xf32>
    %194 = arith.mulf %192, %193 : vector<72x32xf32>
    %195 = arith.addf %147, %194 : vector<72x32xf32>
    %c1_128 = arith.constant 1 : index
    %c0_129 = arith.constant 0 : index
    %c0_130 = arith.constant 0 : index
    %196 = vector.load %arg3[%c1_128, %c0_129, %c0_130] : memref<9x1x32xf32, #tpu.memory_space<vmem>>, vector<1x1x32xf32>
    %197 = vector.shape_cast %196 : vector<1x1x32xf32> to vector<1x32xf32>
    %198 = vector.broadcast %183 : vector<72x1xf32> to vector<72x32xf32>
    %199 = vector.broadcast %197 : vector<1x32xf32> to vector<72x32xf32>
    %200 = arith.mulf %198, %199 : vector<72x32xf32>
    %201 = arith.addf %175, %200 : vector<72x32xf32>
    %c0_131 = arith.constant 0 : index
    %c0_132 = arith.constant 0 : index
    %c0_133 = arith.constant 0 : index
    %202 = vector.load %arg3[%c0_131, %c0_132, %c0_133] : memref<9x1x32xf32, #tpu.memory_space<vmem>>, vector<1x1x32xf32>
    %203 = vector.shape_cast %202 : vector<1x1x32xf32> to vector<1x32xf32>
    %204 = vector.broadcast %183 : vector<72x1xf32> to vector<72x32xf32>
    %205 = vector.broadcast %203 : vector<1x32xf32> to vector<72x32xf32>
    %206 = arith.mulf %204, %205 : vector<72x32xf32>
    %207 = arith.addf %181, %206 : vector<72x32xf32>
    %c0_134 = arith.constant 0 : index
    %c3_135 = arith.constant 3 : index
    %c1_136 = arith.constant 1 : index
    %c0_137 = arith.constant 0 : index
    %208 = vector.load %arg2[%c0_134, %c3_135, %c1_136, %c0_137] : memref<1x4x88x1xf32, #tpu.memory_space<vmem>>, vector<1x1x72x1xf32>
    %209 = vector.shape_cast %208 : vector<1x1x72x1xf32> to vector<72x1xf32>
    %c5_138 = arith.constant 5 : index
    %c0_139 = arith.constant 0 : index
    %c0_140 = arith.constant 0 : index
    %210 = vector.load %arg3[%c5_138, %c0_139, %c0_140] : memref<9x1x32xf32, #tpu.memory_space<vmem>>, vector<1x1x32xf32>
    %211 = vector.shape_cast %210 : vector<1x1x32xf32> to vector<1x32xf32>
    %212 = vector.broadcast %209 : vector<72x1xf32> to vector<72x32xf32>
    %213 = vector.broadcast %211 : vector<1x32xf32> to vector<72x32xf32>
    %214 = arith.mulf %212, %213 : vector<72x32xf32>
    %215 = arith.addf %195, %214 : vector<72x32xf32>
    %c2_141 = arith.constant 2 : index
    %c0_142 = arith.constant 0 : index
    %c0_143 = arith.constant 0 : index
    %216 = vector.load %arg3[%c2_141, %c0_142, %c0_143] : memref<9x1x32xf32, #tpu.memory_space<vmem>>, vector<1x1x32xf32>
    %217 = vector.shape_cast %216 : vector<1x1x32xf32> to vector<1x32xf32>
    %218 = vector.broadcast %209 : vector<72x1xf32> to vector<72x32xf32>
    %219 = vector.broadcast %217 : vector<1x32xf32> to vector<72x32xf32>
    %220 = arith.mulf %218, %219 : vector<72x32xf32>
    %221 = arith.addf %207, %220 : vector<72x32xf32>
    %c0_144 = arith.constant 0 : index
    %c3_145 = arith.constant 3 : index
    %c9_146 = arith.constant 9 : index
    %c0_147 = arith.constant 0 : index
    %222 = vector.load %arg2[%c0_144, %c3_145, %c9_146, %c0_147] : memref<1x4x88x1xf32, #tpu.memory_space<vmem>>, vector<1x1x72x1xf32>
    %223 = vector.shape_cast %222 : vector<1x1x72x1xf32> to vector<72x1xf32>
    %c7_148 = arith.constant 7 : index
    %c0_149 = arith.constant 0 : index
    %c0_150 = arith.constant 0 : index
    %224 = vector.load %arg3[%c7_148, %c0_149, %c0_150] : memref<9x1x32xf32, #tpu.memory_space<vmem>>, vector<1x1x32xf32>
    %225 = vector.shape_cast %224 : vector<1x1x32xf32> to vector<1x32xf32>
    %226 = vector.broadcast %223 : vector<72x1xf32> to vector<72x32xf32>
    %227 = vector.broadcast %225 : vector<1x32xf32> to vector<72x32xf32>
    %228 = arith.mulf %226, %227 : vector<72x32xf32>
    %229 = arith.addf %201, %228 : vector<72x32xf32>
    %c6_151 = arith.constant 6 : index
    %c0_152 = arith.constant 0 : index
    %c0_153 = arith.constant 0 : index
    %230 = vector.load %arg3[%c6_151, %c0_152, %c0_153] : memref<9x1x32xf32, #tpu.memory_space<vmem>>, vector<1x1x32xf32>
    %231 = vector.shape_cast %230 : vector<1x1x32xf32> to vector<1x32xf32>
    %232 = vector.broadcast %223 : vector<72x1xf32> to vector<72x32xf32>
    %233 = vector.broadcast %231 : vector<1x32xf32> to vector<72x32xf32>
    %234 = arith.mulf %232, %233 : vector<72x32xf32>
    %235 = arith.addf %221, %234 : vector<72x32xf32>
    %c0_154 = arith.constant 0 : index
    %c3_155 = arith.constant 3 : index
    %c10_156 = arith.constant 10 : index
    %c0_157 = arith.constant 0 : index
    %236 = vector.load %arg2[%c0_154, %c3_155, %c10_156, %c0_157] : memref<1x4x88x1xf32, #tpu.memory_space<vmem>>, vector<1x1x72x1xf32>
    %237 = vector.shape_cast %236 : vector<1x1x72x1xf32> to vector<72x1xf32>
    %c8_158 = arith.constant 8 : index
    %c0_159 = arith.constant 0 : index
    %c0_160 = arith.constant 0 : index
    %238 = vector.load %arg3[%c8_158, %c0_159, %c0_160] : memref<9x1x32xf32, #tpu.memory_space<vmem>>, vector<1x1x32xf32>
    %239 = vector.shape_cast %238 : vector<1x1x32xf32> to vector<1x32xf32>
    %240 = vector.broadcast %237 : vector<72x1xf32> to vector<72x32xf32>
    %241 = vector.broadcast %239 : vector<1x32xf32> to vector<72x32xf32>
    %242 = arith.mulf %240, %241 : vector<72x32xf32>
    %243 = arith.addf %235, %242 : vector<72x32xf32>
    %244 = arith.maximumf %189, %215 : vector<72x32xf32>
    %245 = arith.maximumf %229, %243 : vector<72x32xf32>
    %246 = arith.maximumf %244, %245 : vector<72x32xf32>
    %c0_161 = arith.constant 0 : index
    %c0_162 = arith.constant 0 : index
    %247 = vector.load %arg4[%c0_161, %c0_162] : memref<1x32xf32, #tpu.memory_space<vmem>>, vector<1x32xf32>
    %248 = vector.broadcast %247 : vector<1x32xf32> to vector<72x32xf32>
    %249 = arith.addf %246, %248 : vector<72x32xf32>
    %cst = arith.constant 0.000000e+00 : f32
    %250 = vector.broadcast %cst : f32 to vector<72x32xf32>
    %251 = arith.maximumf %249, %250 : vector<72x32xf32>
    %c0_163 = arith.constant 0 : index
    %c0_164 = arith.constant 0 : index
    %c0_165 = arith.constant 0 : index
    %252 = vector.load %arg5[%c0_163, %c0_164, %c0_165] : memref<1x72x32xf32, #tpu.memory_space<vmem>>, vector<1x72x32xf32>
    %253 = vector.shape_cast %252 : vector<1x72x32xf32> to vector<72x32xf32>
    %254 = vector.shape_cast %251 : vector<72x32xf32> to vector<1x72x32xf32>
    tpu.vector_store %arg5[%c0_163, %c0_164, %c0_165], %254 {strides = array<i32>} : memref<1x72x32xf32, #tpu.memory_space<vmem>>, vector<1x72x32xf32>,
    return
  }
  func.func @transform_0(%arg0: i32, %arg1: i32) -> (i32, i32, i32, i32) {
    %c0_i32 = arith.constant 0 : i32
    %c0_i32_0 = arith.constant 0 : i32
    %c0_i32_1 = arith.constant 0 : i32
    %c0_i32_2 = arith.constant 0 : i32
    return %arg0, %c0_i32, %c0_i32_0, %c0_i32_1 : i32, i32, i32, i32
  }
  func.func @transform_1(%arg0: i32, %arg1: i32) -> (i32, i32, i32) {
    %c0_i32 = arith.constant 0 : i32
    %c0_i32_0 = arith.constant 0 : i32
    %c0_i32_1 = arith.constant 0 : i32
    %c0_i32_2 = arith.constant 0 : i32
    return %c0_i32, %c0_i32_0, %c0_i32_1 : i32, i32, i32
  }
  func.func @transform_2(%arg0: i32, %arg1: i32) -> (i32, i32) {
    %c0_i32 = arith.constant 0 : i32
    %c0_i32_0 = arith.constant 0 : i32
    %c0_i32_1 = arith.constant 0 : i32
    return %c0_i32, %c0_i32_0 : i32, i32
  }
  func.func @transform_3(%arg0: i32, %arg1: i32) -> (i32, i32, i32) {
    %c0_i32 = arith.constant 0 : i32
    %c0_i32_0 = arith.constant 0 : i32
    return %arg0, %arg1, %c0_i32 : i32, i32, i32
  }
}

module attributes {stable_mosaic.version = 11 : i64} {
  func.func @_conv_pool_kernel(%arg0: i32, %arg1: i32, %arg2: memref<1x4x32x32xf32, #tpu.memory_space<vmem>>, %arg3: memref<9x32x64xf32, #tpu.memory_space<vmem>>, %arg4: memref<1x64xf32, #tpu.memory_space<vmem>>, %arg5: memref<1x20x64xf32, #tpu.memory_space<vmem>>) attributes {dimension_semantics = [#tpu.dimension_semantics<parallel>, #tpu.dimension_semantics<parallel>], iteration_bounds = array<i64: 2, 1>, scalar_prefetch = 0 : i64, scratch_operands = 0 : i64, tpu.core_type = #tpu.core_type<tc>, window_params = [{transform_indices = @transform_0, window_bounds = array<i64: 1, 4, 32, 32>}, {pipeline_mode = #tpu.pipeline_mode<synchronous>, transform_indices = @transform_1, window_bounds = array<i64: 9, 32, 64>}, {pipeline_mode = #tpu.pipeline_mode<synchronous>, transform_indices = @transform_2, window_bounds = array<i64: 1, 64>}, {transform_indices = @transform_3, window_bounds = array<i64: 1, 20, 64>}]} {
    %c0 = arith.constant 0 : index
    %c0_0 = arith.constant 0 : index
    %c0_1 = arith.constant 0 : index
    %c0_2 = arith.constant 0 : index
    %0 = vector.load %arg2[%c0, %c0_0, %c0_1, %c0_2] : memref<1x4x32x32xf32, #tpu.memory_space<vmem>>, vector<1x1x20x32xf32>
    %1 = vector.shape_cast %0 : vector<1x1x20x32xf32> to vector<20x32xf32>
    %c0_3 = arith.constant 0 : index
    %c0_4 = arith.constant 0 : index
    %c0_5 = arith.constant 0 : index
    %2 = vector.load %arg3[%c0_3, %c0_4, %c0_5] : memref<9x32x64xf32, #tpu.memory_space<vmem>>, vector<1x32x64xf32>
    %3 = vector.shape_cast %2 : vector<1x32x64xf32> to vector<32x64xf32>
    %cst = arith.constant dense<0.000000e+00> : vector<20x64xf32>
    %4 = tpu.matmul %1, %3, %cst {dimension_numbers = #tpu.dot_dimension_numbers<[1], [0], [0], [1], [0, 0, 1, 1], [], []>} : vector<20x32xf32>, vector<32x64xf32>, vector<20x64xf32> -> vector<20x64xf32>
    %c0_6 = arith.constant 0 : index
    %c0_7 = arith.constant 0 : index
    %c1 = arith.constant 1 : index
    %c0_8 = arith.constant 0 : index
    %5 = vector.load %arg2[%c0_6, %c0_7, %c1, %c0_8] : memref<1x4x32x32xf32, #tpu.memory_space<vmem>>, vector<1x1x20x32xf32>
    %6 = vector.shape_cast %5 : vector<1x1x20x32xf32> to vector<20x32xf32>
    %c2 = arith.constant 2 : index
    %c0_9 = arith.constant 0 : index
    %c0_10 = arith.constant 0 : index
    %7 = vector.load %arg3[%c2, %c0_9, %c0_10] : memref<9x32x64xf32, #tpu.memory_space<vmem>>, vector<1x32x64xf32>
    %8 = vector.shape_cast %7 : vector<1x32x64xf32> to vector<32x64xf32>
    %cst_11 = arith.constant dense<0.000000e+00> : vector<20x64xf32>
    %9 = tpu.matmul %6, %8, %cst_11 {dimension_numbers = #tpu.dot_dimension_numbers<[1], [0], [0], [1], [0, 0, 1, 1], [], []>} : vector<20x32xf32>, vector<32x64xf32>, vector<20x64xf32> -> vector<20x64xf32>
    %10 = arith.addf %4, %9 : vector<20x64xf32>
    %c1_12 = arith.constant 1 : index
    %c0_13 = arith.constant 0 : index
    %c0_14 = arith.constant 0 : index
    %11 = vector.load %arg3[%c1_12, %c0_13, %c0_14] : memref<9x32x64xf32, #tpu.memory_space<vmem>>, vector<1x32x64xf32>
    %12 = vector.shape_cast %11 : vector<1x32x64xf32> to vector<32x64xf32>
    %cst_15 = arith.constant dense<0.000000e+00> : vector<20x64xf32>
    %13 = tpu.matmul %6, %12, %cst_15 {dimension_numbers = #tpu.dot_dimension_numbers<[1], [0], [0], [1], [0, 0, 1, 1], [], []>} : vector<20x32xf32>, vector<32x64xf32>, vector<20x64xf32> -> vector<20x64xf32>
    %c0_16 = arith.constant 0 : index
    %c0_17 = arith.constant 0 : index
    %c5 = arith.constant 5 : index
    %c0_18 = arith.constant 0 : index
    %14 = vector.load %arg2[%c0_16, %c0_17, %c5, %c0_18] : memref<1x4x32x32xf32, #tpu.memory_space<vmem>>, vector<1x1x20x32xf32>
    %15 = vector.shape_cast %14 : vector<1x1x20x32xf32> to vector<20x32xf32>
    %c6 = arith.constant 6 : index
    %c0_19 = arith.constant 0 : index
    %c0_20 = arith.constant 0 : index
    %16 = vector.load %arg3[%c6, %c0_19, %c0_20] : memref<9x32x64xf32, #tpu.memory_space<vmem>>, vector<1x32x64xf32>
    %17 = vector.shape_cast %16 : vector<1x32x64xf32> to vector<32x64xf32>
    %cst_21 = arith.constant dense<0.000000e+00> : vector<20x64xf32>
    %18 = tpu.matmul %15, %17, %cst_21 {dimension_numbers = #tpu.dot_dimension_numbers<[1], [0], [0], [1], [0, 0, 1, 1], [], []>} : vector<20x32xf32>, vector<32x64xf32>, vector<20x64xf32> -> vector<20x64xf32>
    %19 = arith.addf %10, %18 : vector<20x64xf32>
    %c3 = arith.constant 3 : index
    %c0_22 = arith.constant 0 : index
    %c0_23 = arith.constant 0 : index
    %20 = vector.load %arg3[%c3, %c0_22, %c0_23] : memref<9x32x64xf32, #tpu.memory_space<vmem>>, vector<1x32x64xf32>
    %21 = vector.shape_cast %20 : vector<1x32x64xf32> to vector<32x64xf32>
    %cst_24 = arith.constant dense<0.000000e+00> : vector<20x64xf32>
    %22 = tpu.matmul %15, %21, %cst_24 {dimension_numbers = #tpu.dot_dimension_numbers<[1], [0], [0], [1], [0, 0, 1, 1], [], []>} : vector<20x32xf32>, vector<32x64xf32>, vector<20x64xf32> -> vector<20x64xf32>
    %c0_25 = arith.constant 0 : index
    %c0_26 = arith.constant 0 : index
    %c6_27 = arith.constant 6 : index
    %c0_28 = arith.constant 0 : index
    %23 = vector.load %arg2[%c0_25, %c0_26, %c6_27, %c0_28] : memref<1x4x32x32xf32, #tpu.memory_space<vmem>>, vector<1x1x20x32xf32>
    %24 = vector.shape_cast %23 : vector<1x1x20x32xf32> to vector<20x32xf32>
    %c8 = arith.constant 8 : index
    %c0_29 = arith.constant 0 : index
    %c0_30 = arith.constant 0 : index
    %25 = vector.load %arg3[%c8, %c0_29, %c0_30] : memref<9x32x64xf32, #tpu.memory_space<vmem>>, vector<1x32x64xf32>
    %26 = vector.shape_cast %25 : vector<1x32x64xf32> to vector<32x64xf32>
    %cst_31 = arith.constant dense<0.000000e+00> : vector<20x64xf32>
    %27 = tpu.matmul %24, %26, %cst_31 {dimension_numbers = #tpu.dot_dimension_numbers<[1], [0], [0], [1], [0, 0, 1, 1], [], []>} : vector<20x32xf32>, vector<32x64xf32>, vector<20x64xf32> -> vector<20x64xf32>
    %28 = arith.addf %19, %27 : vector<20x64xf32>
    %c7 = arith.constant 7 : index
    %c0_32 = arith.constant 0 : index
    %c0_33 = arith.constant 0 : index
    %29 = vector.load %arg3[%c7, %c0_32, %c0_33] : memref<9x32x64xf32, #tpu.memory_space<vmem>>, vector<1x32x64xf32>
    %30 = vector.shape_cast %29 : vector<1x32x64xf32> to vector<32x64xf32>
    %cst_34 = arith.constant dense<0.000000e+00> : vector<20x64xf32>
    %31 = tpu.matmul %24, %30, %cst_34 {dimension_numbers = #tpu.dot_dimension_numbers<[1], [0], [0], [1], [0, 0, 1, 1], [], []>} : vector<20x32xf32>, vector<32x64xf32>, vector<20x64xf32> -> vector<20x64xf32>
    %32 = arith.addf %13, %31 : vector<20x64xf32>
    %c5_35 = arith.constant 5 : index
    %c0_36 = arith.constant 0 : index
    %c0_37 = arith.constant 0 : index
    %33 = vector.load %arg3[%c5_35, %c0_36, %c0_37] : memref<9x32x64xf32, #tpu.memory_space<vmem>>, vector<1x32x64xf32>
    %34 = vector.shape_cast %33 : vector<1x32x64xf32> to vector<32x64xf32>
    %cst_38 = arith.constant dense<0.000000e+00> : vector<20x64xf32>
    %35 = tpu.matmul %24, %34, %cst_38 {dimension_numbers = #tpu.dot_dimension_numbers<[1], [0], [0], [1], [0, 0, 1, 1], [], []>} : vector<20x32xf32>, vector<32x64xf32>, vector<20x64xf32> -> vector<20x64xf32>
    %36 = arith.addf %22, %35 : vector<20x64xf32>
    %c4 = arith.constant 4 : index
    %c0_39 = arith.constant 0 : index
    %c0_40 = arith.constant 0 : index
    %37 = vector.load %arg3[%c4, %c0_39, %c0_40] : memref<9x32x64xf32, #tpu.memory_space<vmem>>, vector<1x32x64xf32>
    %38 = vector.shape_cast %37 : vector<1x32x64xf32> to vector<32x64xf32>
    %cst_41 = arith.constant dense<0.000000e+00> : vector<20x64xf32>
    %39 = tpu.matmul %24, %38, %cst_41 {dimension_numbers = #tpu.dot_dimension_numbers<[1], [0], [0], [1], [0, 0, 1, 1], [], []>} : vector<20x32xf32>, vector<32x64xf32>, vector<20x64xf32> -> vector<20x64xf32>
    %c0_42 = arith.constant 0 : index
    %c1_43 = arith.constant 1 : index
    %c0_44 = arith.constant 0 : index
    %c0_45 = arith.constant 0 : index
    %40 = vector.load %arg2[%c0_42, %c1_43, %c0_44, %c0_45] : memref<1x4x32x32xf32, #tpu.memory_space<vmem>>, vector<1x1x20x32xf32>
    %41 = vector.shape_cast %40 : vector<1x1x20x32xf32> to vector<20x32xf32>
    %c1_46 = arith.constant 1 : index
    %c0_47 = arith.constant 0 : index
    %c0_48 = arith.constant 0 : index
    %42 = vector.load %arg3[%c1_46, %c0_47, %c0_48] : memref<9x32x64xf32, #tpu.memory_space<vmem>>, vector<1x32x64xf32>
    %43 = vector.shape_cast %42 : vector<1x32x64xf32> to vector<32x64xf32>
    %cst_49 = arith.constant dense<0.000000e+00> : vector<20x64xf32>
    %44 = tpu.matmul %41, %43, %cst_49 {dimension_numbers = #tpu.dot_dimension_numbers<[1], [0], [0], [1], [0, 0, 1, 1], [], []>} : vector<20x32xf32>, vector<32x64xf32>, vector<20x64xf32> -> vector<20x64xf32>
    %45 = arith.addf %28, %44 : vector<20x64xf32>
    %c0_50 = arith.constant 0 : index
    %c0_51 = arith.constant 0 : index
    %c0_52 = arith.constant 0 : index
    %46 = vector.load %arg3[%c0_50, %c0_51, %c0_52] : memref<9x32x64xf32, #tpu.memory_space<vmem>>, vector<1x32x64xf32>
    %47 = vector.shape_cast %46 : vector<1x32x64xf32> to vector<32x64xf32>
    %cst_53 = arith.constant dense<0.000000e+00> : vector<20x64xf32>
    %48 = tpu.matmul %41, %47, %cst_53 {dimension_numbers = #tpu.dot_dimension_numbers<[1], [0], [0], [1], [0, 0, 1, 1], [], []>} : vector<20x32xf32>, vector<32x64xf32>, vector<20x64xf32> -> vector<20x64xf32>
    %49 = arith.addf %32, %48 : vector<20x64xf32>
    %c0_54 = arith.constant 0 : index
    %c1_55 = arith.constant 1 : index
    %c1_56 = arith.constant 1 : index
    %c0_57 = arith.constant 0 : index
    %50 = vector.load %arg2[%c0_54, %c1_55, %c1_56, %c0_57] : memref<1x4x32x32xf32, #tpu.memory_space<vmem>>, vector<1x1x20x32xf32>
    %51 = vector.shape_cast %50 : vector<1x1x20x32xf32> to vector<20x32xf32>
    %c2_58 = arith.constant 2 : index
    %c0_59 = arith.constant 0 : index
    %c0_60 = arith.constant 0 : index
    %52 = vector.load %arg3[%c2_58, %c0_59, %c0_60] : memref<9x32x64xf32, #tpu.memory_space<vmem>>, vector<1x32x64xf32>
    %53 = vector.shape_cast %52 : vector<1x32x64xf32> to vector<32x64xf32>
    %cst_61 = arith.constant dense<0.000000e+00> : vector<20x64xf32>
    %54 = tpu.matmul %51, %53, %cst_61 {dimension_numbers = #tpu.dot_dimension_numbers<[1], [0], [0], [1], [0, 0, 1, 1], [], []>} : vector<20x32xf32>, vector<32x64xf32>, vector<20x64xf32> -> vector<20x64xf32>
    %55 = arith.addf %49, %54 : vector<20x64xf32>
    %c0_62 = arith.constant 0 : index
    %c1_63 = arith.constant 1 : index
    %c5_64 = arith.constant 5 : index
    %c0_65 = arith.constant 0 : index
    %56 = vector.load %arg2[%c0_62, %c1_63, %c5_64, %c0_65] : memref<1x4x32x32xf32, #tpu.memory_space<vmem>>, vector<1x1x20x32xf32>
    %57 = vector.shape_cast %56 : vector<1x1x20x32xf32> to vector<20x32xf32>
    %c7_66 = arith.constant 7 : index
    %c0_67 = arith.constant 0 : index
    %c0_68 = arith.constant 0 : index
    %58 = vector.load %arg3[%c7_66, %c0_67, %c0_68] : memref<9x32x64xf32, #tpu.memory_space<vmem>>, vector<1x32x64xf32>
    %59 = vector.shape_cast %58 : vector<1x32x64xf32> to vector<32x64xf32>
    %cst_69 = arith.constant dense<0.000000e+00> : vector<20x64xf32>
    %60 = tpu.matmul %57, %59, %cst_69 {dimension_numbers = #tpu.dot_dimension_numbers<[1], [0], [0], [1], [0, 0, 1, 1], [], []>} : vector<20x32xf32>, vector<32x64xf32>, vector<20x64xf32> -> vector<20x64xf32>
    %61 = arith.addf %45, %60 : vector<20x64xf32>
    %c6_70 = arith.constant 6 : index
    %c0_71 = arith.constant 0 : index
    %c0_72 = arith.constant 0 : index
    %62 = vector.load %arg3[%c6_70, %c0_71, %c0_72] : memref<9x32x64xf32, #tpu.memory_space<vmem>>, vector<1x32x64xf32>
    %63 = vector.shape_cast %62 : vector<1x32x64xf32> to vector<32x64xf32>
    %cst_73 = arith.constant dense<0.000000e+00> : vector<20x64xf32>
    %64 = tpu.matmul %57, %63, %cst_73 {dimension_numbers = #tpu.dot_dimension_numbers<[1], [0], [0], [1], [0, 0, 1, 1], [], []>} : vector<20x32xf32>, vector<32x64xf32>, vector<20x64xf32> -> vector<20x64xf32>
    %65 = arith.addf %55, %64 : vector<20x64xf32>
    %c4_74 = arith.constant 4 : index
    %c0_75 = arith.constant 0 : index
    %c0_76 = arith.constant 0 : index
    %66 = vector.load %arg3[%c4_74, %c0_75, %c0_76] : memref<9x32x64xf32, #tpu.memory_space<vmem>>, vector<1x32x64xf32>
    %67 = vector.shape_cast %66 : vector<1x32x64xf32> to vector<32x64xf32>
    %cst_77 = arith.constant dense<0.000000e+00> : vector<20x64xf32>
    %68 = tpu.matmul %57, %67, %cst_77 {dimension_numbers = #tpu.dot_dimension_numbers<[1], [0], [0], [1], [0, 0, 1, 1], [], []>} : vector<20x32xf32>, vector<32x64xf32>, vector<20x64xf32> -> vector<20x64xf32>
    %69 = arith.addf %36, %68 : vector<20x64xf32>
    %c3_78 = arith.constant 3 : index
    %c0_79 = arith.constant 0 : index
    %c0_80 = arith.constant 0 : index
    %70 = vector.load %arg3[%c3_78, %c0_79, %c0_80] : memref<9x32x64xf32, #tpu.memory_space<vmem>>, vector<1x32x64xf32>
    %71 = vector.shape_cast %70 : vector<1x32x64xf32> to vector<32x64xf32>
    %cst_81 = arith.constant dense<0.000000e+00> : vector<20x64xf32>
    %72 = tpu.matmul %57, %71, %cst_81 {dimension_numbers = #tpu.dot_dimension_numbers<[1], [0], [0], [1], [0, 0, 1, 1], [], []>} : vector<20x32xf32>, vector<32x64xf32>, vector<20x64xf32> -> vector<20x64xf32>
    %73 = arith.addf %39, %72 : vector<20x64xf32>
    %c0_82 = arith.constant 0 : index
    %c1_83 = arith.constant 1 : index
    %c6_84 = arith.constant 6 : index
    %c0_85 = arith.constant 0 : index
    %74 = vector.load %arg2[%c0_82, %c1_83, %c6_84, %c0_85] : memref<1x4x32x32xf32, #tpu.memory_space<vmem>>, vector<1x1x20x32xf32>
    %75 = vector.shape_cast %74 : vector<1x1x20x32xf32> to vector<20x32xf32>
    %c8_86 = arith.constant 8 : index
    %c0_87 = arith.constant 0 : index
    %c0_88 = arith.constant 0 : index
    %76 = vector.load %arg3[%c8_86, %c0_87, %c0_88] : memref<9x32x64xf32, #tpu.memory_space<vmem>>, vector<1x32x64xf32>
    %77 = vector.shape_cast %76 : vector<1x32x64xf32> to vector<32x64xf32>
    %cst_89 = arith.constant dense<0.000000e+00> : vector<20x64xf32>
    %78 = tpu.matmul %75, %77, %cst_89 {dimension_numbers = #tpu.dot_dimension_numbers<[1], [0], [0], [1], [0, 0, 1, 1], [], []>} : vector<20x32xf32>, vector<32x64xf32>, vector<20x64xf32> -> vector<20x64xf32>
    %79 = arith.addf %65, %78 : vector<20x64xf32>
    %c5_90 = arith.constant 5 : index
    %c0_91 = arith.constant 0 : index
    %c0_92 = arith.constant 0 : index
    %80 = vector.load %arg3[%c5_90, %c0_91, %c0_92] : memref<9x32x64xf32, #tpu.memory_space<vmem>>, vector<1x32x64xf32>
    %81 = vector.shape_cast %80 : vector<1x32x64xf32> to vector<32x64xf32>
    %cst_93 = arith.constant dense<0.000000e+00> : vector<20x64xf32>
    %82 = tpu.matmul %75, %81, %cst_93 {dimension_numbers = #tpu.dot_dimension_numbers<[1], [0], [0], [1], [0, 0, 1, 1], [], []>} : vector<20x32xf32>, vector<32x64xf32>, vector<20x64xf32> -> vector<20x64xf32>
    %83 = arith.addf %73, %82 : vector<20x64xf32>
    %c0_94 = arith.constant 0 : index
    %c2_95 = arith.constant 2 : index
    %c0_96 = arith.constant 0 : index
    %c0_97 = arith.constant 0 : index
    %84 = vector.load %arg2[%c0_94, %c2_95, %c0_96, %c0_97] : memref<1x4x32x32xf32, #tpu.memory_space<vmem>>, vector<1x1x20x32xf32>
    %85 = vector.shape_cast %84 : vector<1x1x20x32xf32> to vector<20x32xf32>
    %c3_98 = arith.constant 3 : index
    %c0_99 = arith.constant 0 : index
    %c0_100 = arith.constant 0 : index
    %86 = vector.load %arg3[%c3_98, %c0_99, %c0_100] : memref<9x32x64xf32, #tpu.memory_space<vmem>>, vector<1x32x64xf32>
    %87 = vector.shape_cast %86 : vector<1x32x64xf32> to vector<32x64xf32>
    %cst_101 = arith.constant dense<0.000000e+00> : vector<20x64xf32>
    %88 = tpu.matmul %85, %87, %cst_101 {dimension_numbers = #tpu.dot_dimension_numbers<[1], [0], [0], [1], [0, 0, 1, 1], [], []>} : vector<20x32xf32>, vector<32x64xf32>, vector<20x64xf32> -> vector<20x64xf32>
    %89 = arith.addf %61, %88 : vector<20x64xf32>
    %c0_102 = arith.constant 0 : index
    %c0_103 = arith.constant 0 : index
    %c0_104 = arith.constant 0 : index
    %90 = vector.load %arg3[%c0_102, %c0_103, %c0_104] : memref<9x32x64xf32, #tpu.memory_space<vmem>>, vector<1x32x64xf32>
    %91 = vector.shape_cast %90 : vector<1x32x64xf32> to vector<32x64xf32>
    %cst_105 = arith.constant dense<0.000000e+00> : vector<20x64xf32>
    %92 = tpu.matmul %85, %91, %cst_105 {dimension_numbers = #tpu.dot_dimension_numbers<[1], [0], [0], [1], [0, 0, 1, 1], [], []>} : vector<20x32xf32>, vector<32x64xf32>, vector<20x64xf32> -> vector<20x64xf32>
    %93 = arith.addf %69, %92 : vector<20x64xf32>
    %c0_106 = arith.constant 0 : index
    %c2_107 = arith.constant 2 : index
    %c1_108 = arith.constant 1 : index
    %c0_109 = arith.constant 0 : index
    %94 = vector.load %arg2[%c0_106, %c2_107, %c1_108, %c0_109] : memref<1x4x32x32xf32, #tpu.memory_space<vmem>>, vector<1x1x20x32xf32>
    %95 = vector.shape_cast %94 : vector<1x1x20x32xf32> to vector<20x32xf32>
    %c5_110 = arith.constant 5 : index
    %c0_111 = arith.constant 0 : index
    %c0_112 = arith.constant 0 : index
    %96 = vector.load %arg3[%c5_110, %c0_111, %c0_112] : memref<9x32x64xf32, #tpu.memory_space<vmem>>, vector<1x32x64xf32>
    %97 = vector.shape_cast %96 : vector<1x32x64xf32> to vector<32x64xf32>
    %cst_113 = arith.constant dense<0.000000e+00> : vector<20x64xf32>
    %98 = tpu.matmul %95, %97, %cst_113 {dimension_numbers = #tpu.dot_dimension_numbers<[1], [0], [0], [1], [0, 0, 1, 1], [], []>} : vector<20x32xf32>, vector<32x64xf32>, vector<20x64xf32> -> vector<20x64xf32>
    %99 = arith.addf %89, %98 : vector<20x64xf32>
    %c4_114 = arith.constant 4 : index
    %c0_115 = arith.constant 0 : index
    %c0_116 = arith.constant 0 : index
    %100 = vector.load %arg3[%c4_114, %c0_115, %c0_116] : memref<9x32x64xf32, #tpu.memory_space<vmem>>, vector<1x32x64xf32>
    %101 = vector.shape_cast %100 : vector<1x32x64xf32> to vector<32x64xf32>
    %cst_117 = arith.constant dense<0.000000e+00> : vector<20x64xf32>
    %102 = tpu.matmul %95, %101, %cst_117 {dimension_numbers = #tpu.dot_dimension_numbers<[1], [0], [0], [1], [0, 0, 1, 1], [], []>} : vector<20x32xf32>, vector<32x64xf32>, vector<20x64xf32> -> vector<20x64xf32>
    %103 = arith.addf %79, %102 : vector<20x64xf32>
    %c2_118 = arith.constant 2 : index
    %c0_119 = arith.constant 0 : index
    %c0_120 = arith.constant 0 : index
    %104 = vector.load %arg3[%c2_118, %c0_119, %c0_120] : memref<9x32x64xf32, #tpu.memory_space<vmem>>, vector<1x32x64xf32>
    %105 = vector.shape_cast %104 : vector<1x32x64xf32> to vector<32x64xf32>
    %cst_121 = arith.constant dense<0.000000e+00> : vector<20x64xf32>
    %106 = tpu.matmul %95, %105, %cst_121 {dimension_numbers = #tpu.dot_dimension_numbers<[1], [0], [0], [1], [0, 0, 1, 1], [], []>} : vector<20x32xf32>, vector<32x64xf32>, vector<20x64xf32> -> vector<20x64xf32>
    %107 = arith.addf %93, %106 : vector<20x64xf32>
    %c1_122 = arith.constant 1 : index
    %c0_123 = arith.constant 0 : index
    %c0_124 = arith.constant 0 : index
    %108 = vector.load %arg3[%c1_122, %c0_123, %c0_124] : memref<9x32x64xf32, #tpu.memory_space<vmem>>, vector<1x32x64xf32>
    %109 = vector.shape_cast %108 : vector<1x32x64xf32> to vector<32x64xf32>
    %cst_125 = arith.constant dense<0.000000e+00> : vector<20x64xf32>
    %110 = tpu.matmul %95, %109, %cst_125 {dimension_numbers = #tpu.dot_dimension_numbers<[1], [0], [0], [1], [0, 0, 1, 1], [], []>} : vector<20x32xf32>, vector<32x64xf32>, vector<20x64xf32> -> vector<20x64xf32>
    %111 = arith.addf %83, %110 : vector<20x64xf32>
    %c0_126 = arith.constant 0 : index
    %c2_127 = arith.constant 2 : index
    %c5_128 = arith.constant 5 : index
    %c0_129 = arith.constant 0 : index
    %112 = vector.load %arg2[%c0_126, %c2_127, %c5_128, %c0_129] : memref<1x4x32x32xf32, #tpu.memory_space<vmem>>, vector<1x1x20x32xf32>
    %113 = vector.shape_cast %112 : vector<1x1x20x32xf32> to vector<20x32xf32>
    %c6_130 = arith.constant 6 : index
    %c0_131 = arith.constant 0 : index
    %c0_132 = arith.constant 0 : index
    %114 = vector.load %arg3[%c6_130, %c0_131, %c0_132] : memref<9x32x64xf32, #tpu.memory_space<vmem>>, vector<1x32x64xf32>
    %115 = vector.shape_cast %114 : vector<1x32x64xf32> to vector<32x64xf32>
    %cst_133 = arith.constant dense<0.000000e+00> : vector<20x64xf32>
    %116 = tpu.matmul %113, %115, %cst_133 {dimension_numbers = #tpu.dot_dimension_numbers<[1], [0], [0], [1], [0, 0, 1, 1], [], []>} : vector<20x32xf32>, vector<32x64xf32>, vector<20x64xf32> -> vector<20x64xf32>
    %117 = arith.addf %107, %116 : vector<20x64xf32>
    %c0_134 = arith.constant 0 : index
    %c2_135 = arith.constant 2 : index
    %c6_136 = arith.constant 6 : index
    %c0_137 = arith.constant 0 : index
    %118 = vector.load %arg2[%c0_134, %c2_135, %c6_136, %c0_137] : memref<1x4x32x32xf32, #tpu.memory_space<vmem>>, vector<1x1x20x32xf32>
    %119 = vector.shape_cast %118 : vector<1x1x20x32xf32> to vector<20x32xf32>
    %c8_138 = arith.constant 8 : index
    %c0_139 = arith.constant 0 : index
    %c0_140 = arith.constant 0 : index
    %120 = vector.load %arg3[%c8_138, %c0_139, %c0_140] : memref<9x32x64xf32, #tpu.memory_space<vmem>>, vector<1x32x64xf32>
    %121 = vector.shape_cast %120 : vector<1x32x64xf32> to vector<32x64xf32>
    %cst_141 = arith.constant dense<0.000000e+00> : vector<20x64xf32>
    %122 = tpu.matmul %119, %121, %cst_141 {dimension_numbers = #tpu.dot_dimension_numbers<[1], [0], [0], [1], [0, 0, 1, 1], [], []>} : vector<20x32xf32>, vector<32x64xf32>, vector<20x64xf32> -> vector<20x64xf32>
    %123 = arith.addf %117, %122 : vector<20x64xf32>
    %c7_142 = arith.constant 7 : index
    %c0_143 = arith.constant 0 : index
    %c0_144 = arith.constant 0 : index
    %124 = vector.load %arg3[%c7_142, %c0_143, %c0_144] : memref<9x32x64xf32, #tpu.memory_space<vmem>>, vector<1x32x64xf32>
    %125 = vector.shape_cast %124 : vector<1x32x64xf32> to vector<32x64xf32>
    %cst_145 = arith.constant dense<0.000000e+00> : vector<20x64xf32>
    %126 = tpu.matmul %119, %125, %cst_145 {dimension_numbers = #tpu.dot_dimension_numbers<[1], [0], [0], [1], [0, 0, 1, 1], [], []>} : vector<20x32xf32>, vector<32x64xf32>, vector<20x64xf32> -> vector<20x64xf32>
    %127 = arith.addf %111, %126 : vector<20x64xf32>
    %c0_146 = arith.constant 0 : index
    %c3_147 = arith.constant 3 : index
    %c0_148 = arith.constant 0 : index
    %c0_149 = arith.constant 0 : index
    %128 = vector.load %arg2[%c0_146, %c3_147, %c0_148, %c0_149] : memref<1x4x32x32xf32, #tpu.memory_space<vmem>>, vector<1x1x20x32xf32>
    %129 = vector.shape_cast %128 : vector<1x1x20x32xf32> to vector<20x32xf32>
    %c4_150 = arith.constant 4 : index
    %c0_151 = arith.constant 0 : index
    %c0_152 = arith.constant 0 : index
    %130 = vector.load %arg3[%c4_150, %c0_151, %c0_152] : memref<9x32x64xf32, #tpu.memory_space<vmem>>, vector<1x32x64xf32>
    %131 = vector.shape_cast %130 : vector<1x32x64xf32> to vector<32x64xf32>
    %cst_153 = arith.constant dense<0.000000e+00> : vector<20x64xf32>
    %132 = tpu.matmul %129, %131, %cst_153 {dimension_numbers = #tpu.dot_dimension_numbers<[1], [0], [0], [1], [0, 0, 1, 1], [], []>} : vector<20x32xf32>, vector<32x64xf32>, vector<20x64xf32> -> vector<20x64xf32>
    %133 = arith.addf %99, %132 : vector<20x64xf32>
    %c3_154 = arith.constant 3 : index
    %c0_155 = arith.constant 0 : index
    %c0_156 = arith.constant 0 : index
    %134 = vector.load %arg3[%c3_154, %c0_155, %c0_156] : memref<9x32x64xf32, #tpu.memory_space<vmem>>, vector<1x32x64xf32>
    %135 = vector.shape_cast %134 : vector<1x32x64xf32> to vector<32x64xf32>
    %cst_157 = arith.constant dense<0.000000e+00> : vector<20x64xf32>
    %136 = tpu.matmul %129, %135, %cst_157 {dimension_numbers = #tpu.dot_dimension_numbers<[1], [0], [0], [1], [0, 0, 1, 1], [], []>} : vector<20x32xf32>, vector<32x64xf32>, vector<20x64xf32> -> vector<20x64xf32>
    %137 = arith.addf %103, %136 : vector<20x64xf32>
    %c1_158 = arith.constant 1 : index
    %c0_159 = arith.constant 0 : index
    %c0_160 = arith.constant 0 : index
    %138 = vector.load %arg3[%c1_158, %c0_159, %c0_160] : memref<9x32x64xf32, #tpu.memory_space<vmem>>, vector<1x32x64xf32>
    %139 = vector.shape_cast %138 : vector<1x32x64xf32> to vector<32x64xf32>
    %cst_161 = arith.constant dense<0.000000e+00> : vector<20x64xf32>
    %140 = tpu.matmul %129, %139, %cst_161 {dimension_numbers = #tpu.dot_dimension_numbers<[1], [0], [0], [1], [0, 0, 1, 1], [], []>} : vector<20x32xf32>, vector<32x64xf32>, vector<20x64xf32> -> vector<20x64xf32>
    %141 = arith.addf %123, %140 : vector<20x64xf32>
    %c0_162 = arith.constant 0 : index
    %c0_163 = arith.constant 0 : index
    %c0_164 = arith.constant 0 : index
    %142 = vector.load %arg3[%c0_162, %c0_163, %c0_164] : memref<9x32x64xf32, #tpu.memory_space<vmem>>, vector<1x32x64xf32>
    %143 = vector.shape_cast %142 : vector<1x32x64xf32> to vector<32x64xf32>
    %cst_165 = arith.constant dense<0.000000e+00> : vector<20x64xf32>
    %144 = tpu.matmul %129, %143, %cst_165 {dimension_numbers = #tpu.dot_dimension_numbers<[1], [0], [0], [1], [0, 0, 1, 1], [], []>} : vector<20x32xf32>, vector<32x64xf32>, vector<20x64xf32> -> vector<20x64xf32>
    %145 = arith.addf %127, %144 : vector<20x64xf32>
    %c0_166 = arith.constant 0 : index
    %c3_167 = arith.constant 3 : index
    %c1_168 = arith.constant 1 : index
    %c0_169 = arith.constant 0 : index
    %146 = vector.load %arg2[%c0_166, %c3_167, %c1_168, %c0_169] : memref<1x4x32x32xf32, #tpu.memory_space<vmem>>, vector<1x1x20x32xf32>
    %147 = vector.shape_cast %146 : vector<1x1x20x32xf32> to vector<20x32xf32>
    %c5_170 = arith.constant 5 : index
    %c0_171 = arith.constant 0 : index
    %c0_172 = arith.constant 0 : index
    %148 = vector.load %arg3[%c5_170, %c0_171, %c0_172] : memref<9x32x64xf32, #tpu.memory_space<vmem>>, vector<1x32x64xf32>
    %149 = vector.shape_cast %148 : vector<1x32x64xf32> to vector<32x64xf32>
    %cst_173 = arith.constant dense<0.000000e+00> : vector<20x64xf32>
    %150 = tpu.matmul %147, %149, %cst_173 {dimension_numbers = #tpu.dot_dimension_numbers<[1], [0], [0], [1], [0, 0, 1, 1], [], []>} : vector<20x32xf32>, vector<32x64xf32>, vector<20x64xf32> -> vector<20x64xf32>
    %151 = arith.addf %137, %150 : vector<20x64xf32>
    %c2_174 = arith.constant 2 : index
    %c0_175 = arith.constant 0 : index
    %c0_176 = arith.constant 0 : index
    %152 = vector.load %arg3[%c2_174, %c0_175, %c0_176] : memref<9x32x64xf32, #tpu.memory_space<vmem>>, vector<1x32x64xf32>
    %153 = vector.shape_cast %152 : vector<1x32x64xf32> to vector<32x64xf32>
    %cst_177 = arith.constant dense<0.000000e+00> : vector<20x64xf32>
    %154 = tpu.matmul %147, %153, %cst_177 {dimension_numbers = #tpu.dot_dimension_numbers<[1], [0], [0], [1], [0, 0, 1, 1], [], []>} : vector<20x32xf32>, vector<32x64xf32>, vector<20x64xf32> -> vector<20x64xf32>
    %155 = arith.addf %145, %154 : vector<20x64xf32>
    %c0_178 = arith.constant 0 : index
    %c3_179 = arith.constant 3 : index
    %c5_180 = arith.constant 5 : index
    %c0_181 = arith.constant 0 : index
    %156 = vector.load %arg2[%c0_178, %c3_179, %c5_180, %c0_181] : memref<1x4x32x32xf32, #tpu.memory_space<vmem>>, vector<1x1x20x32xf32>
    %157 = vector.shape_cast %156 : vector<1x1x20x32xf32> to vector<20x32xf32>
    %c7_182 = arith.constant 7 : index
    %c0_183 = arith.constant 0 : index
    %c0_184 = arith.constant 0 : index
    %158 = vector.load %arg3[%c7_182, %c0_183, %c0_184] : memref<9x32x64xf32, #tpu.memory_space<vmem>>, vector<1x32x64xf32>
    %159 = vector.shape_cast %158 : vector<1x32x64xf32> to vector<32x64xf32>
    %cst_185 = arith.constant dense<0.000000e+00> : vector<20x64xf32>
    %160 = tpu.matmul %157, %159, %cst_185 {dimension_numbers = #tpu.dot_dimension_numbers<[1], [0], [0], [1], [0, 0, 1, 1], [], []>} : vector<20x32xf32>, vector<32x64xf32>, vector<20x64xf32> -> vector<20x64xf32>
    %161 = arith.addf %141, %160 : vector<20x64xf32>
    %c6_186 = arith.constant 6 : index
    %c0_187 = arith.constant 0 : index
    %c0_188 = arith.constant 0 : index
    %162 = vector.load %arg3[%c6_186, %c0_187, %c0_188] : memref<9x32x64xf32, #tpu.memory_space<vmem>>, vector<1x32x64xf32>
    %163 = vector.shape_cast %162 : vector<1x32x64xf32> to vector<32x64xf32>
    %cst_189 = arith.constant dense<0.000000e+00> : vector<20x64xf32>
    %164 = tpu.matmul %157, %163, %cst_189 {dimension_numbers = #tpu.dot_dimension_numbers<[1], [0], [0], [1], [0, 0, 1, 1], [], []>} : vector<20x32xf32>, vector<32x64xf32>, vector<20x64xf32> -> vector<20x64xf32>
    %165 = arith.addf %155, %164 : vector<20x64xf32>
    %c0_190 = arith.constant 0 : index
    %c3_191 = arith.constant 3 : index
    %c6_192 = arith.constant 6 : index
    %c0_193 = arith.constant 0 : index
    %166 = vector.load %arg2[%c0_190, %c3_191, %c6_192, %c0_193] : memref<1x4x32x32xf32, #tpu.memory_space<vmem>>, vector<1x1x20x32xf32>
    %167 = vector.shape_cast %166 : vector<1x1x20x32xf32> to vector<20x32xf32>
    %c8_194 = arith.constant 8 : index
    %c0_195 = arith.constant 0 : index
    %c0_196 = arith.constant 0 : index
    %168 = vector.load %arg3[%c8_194, %c0_195, %c0_196] : memref<9x32x64xf32, #tpu.memory_space<vmem>>, vector<1x32x64xf32>
    %169 = vector.shape_cast %168 : vector<1x32x64xf32> to vector<32x64xf32>
    %cst_197 = arith.constant dense<0.000000e+00> : vector<20x64xf32>
    %170 = tpu.matmul %167, %169, %cst_197 {dimension_numbers = #tpu.dot_dimension_numbers<[1], [0], [0], [1], [0, 0, 1, 1], [], []>} : vector<20x32xf32>, vector<32x64xf32>, vector<20x64xf32> -> vector<20x64xf32>
    %171 = arith.addf %165, %170 : vector<20x64xf32>
    %172 = arith.maximumf %133, %151 : vector<20x64xf32>
    %173 = arith.maximumf %161, %171 : vector<20x64xf32>
    %174 = arith.maximumf %172, %173 : vector<20x64xf32>
    %c0_198 = arith.constant 0 : index
    %c0_199 = arith.constant 0 : index
    %175 = vector.load %arg4[%c0_198, %c0_199] : memref<1x64xf32, #tpu.memory_space<vmem>>, vector<1x64xf32>
    %176 = vector.broadcast %175 : vector<1x64xf32> to vector<20x64xf32>
    %177 = arith.addf %174, %176 : vector<20x64xf32>
    %cst_200 = arith.constant 0.000000e+00 : f32
    %178 = vector.broadcast %cst_200 : f32 to vector<20x64xf32>
    %179 = arith.maximumf %177, %178 : vector<20x64xf32>
    %c0_201 = arith.constant 0 : index
    %c0_202 = arith.constant 0 : index
    %c0_203 = arith.constant 0 : index
    %180 = vector.load %arg5[%c0_201, %c0_202, %c0_203] : memref<1x20x64xf32, #tpu.memory_space<vmem>>, vector<1x20x64xf32>
    %181 = vector.shape_cast %180 : vector<1x20x64xf32> to vector<20x64xf32>
    %182 = vector.shape_cast %179 : vector<20x64xf32> to vector<1x20x64xf32>
    tpu.vector_store %arg5[%c0_201, %c0_202, %c0_203], %182 {strides = array<i32>} : memref<1x20x64xf32, #tpu.memory_space<vmem>>, vector<1x20x64xf32>,
    return
  }
  func.func @transform_0(%arg0: i32, %arg1: i32) -> (i32, i32, i32, i32) {
    %c0_i32 = arith.constant 0 : i32
    %c0_i32_0 = arith.constant 0 : i32
    %c0_i32_1 = arith.constant 0 : i32
    %c0_i32_2 = arith.constant 0 : i32
    return %arg0, %c0_i32, %c0_i32_0, %c0_i32_1 : i32, i32, i32, i32
  }
  func.func @transform_1(%arg0: i32, %arg1: i32) -> (i32, i32, i32) {
    %c0_i32 = arith.constant 0 : i32
    %c0_i32_0 = arith.constant 0 : i32
    %c0_i32_1 = arith.constant 0 : i32
    %c0_i32_2 = arith.constant 0 : i32
    return %c0_i32, %c0_i32_0, %c0_i32_1 : i32, i32, i32
  }
  func.func @transform_2(%arg0: i32, %arg1: i32) -> (i32, i32) {
    %c0_i32 = arith.constant 0 : i32
    %c0_i32_0 = arith.constant 0 : i32
    %c0_i32_1 = arith.constant 0 : i32
    return %c0_i32, %c0_i32_0 : i32, i32
  }
  func.func @transform_3(%arg0: i32, %arg1: i32) -> (i32, i32, i32) {
    %c0_i32 = arith.constant 0 : i32
    %c0_i32_0 = arith.constant 0 : i32
    return %arg0, %arg1, %c0_i32 : i32, i32, i32
  }
}

module attributes {stable_mosaic.version = 11 : i64} {
  func.func @_conv_pool_kernel(%arg0: i32, %arg1: i32, %arg2: memref<1x4x16x64xf32, #tpu.memory_space<vmem>>, %arg3: memref<9x64x128xf32, #tpu.memory_space<vmem>>, %arg4: memref<1x128xf32, #tpu.memory_space<vmem>>, %arg5: memref<1x6x128xf32, #tpu.memory_space<vmem>>) attributes {dimension_semantics = [#tpu.dimension_semantics<parallel>, #tpu.dimension_semantics<parallel>], iteration_bounds = array<i64: 2, 1>, scalar_prefetch = 0 : i64, scratch_operands = 0 : i64, tpu.core_type = #tpu.core_type<tc>, window_params = [{transform_indices = @transform_0, window_bounds = array<i64: 1, 4, 16, 64>}, {pipeline_mode = #tpu.pipeline_mode<synchronous>, transform_indices = @transform_1, window_bounds = array<i64: 9, 64, 128>}, {pipeline_mode = #tpu.pipeline_mode<synchronous>, transform_indices = @transform_2, window_bounds = array<i64: 1, 128>}, {transform_indices = @transform_3, window_bounds = array<i64: 1, 6, 128>}]} {
    %c0 = arith.constant 0 : index
    %c0_0 = arith.constant 0 : index
    %c0_1 = arith.constant 0 : index
    %c0_2 = arith.constant 0 : index
    %0 = vector.load %arg2[%c0, %c0_0, %c0_1, %c0_2] : memref<1x4x16x64xf32, #tpu.memory_space<vmem>>, vector<1x1x6x64xf32>
    %1 = vector.shape_cast %0 : vector<1x1x6x64xf32> to vector<6x64xf32>
    %c0_3 = arith.constant 0 : index
    %c0_4 = arith.constant 0 : index
    %c0_5 = arith.constant 0 : index
    %2 = vector.load %arg3[%c0_3, %c0_4, %c0_5] : memref<9x64x128xf32, #tpu.memory_space<vmem>>, vector<1x64x128xf32>
    %3 = vector.shape_cast %2 : vector<1x64x128xf32> to vector<64x128xf32>
    %cst = arith.constant dense<0.000000e+00> : vector<6x128xf32>
    %4 = tpu.matmul %1, %3, %cst {dimension_numbers = #tpu.dot_dimension_numbers<[1], [0], [0], [1], [0, 0, 1, 1], [], []>} : vector<6x64xf32>, vector<64x128xf32>, vector<6x128xf32> -> vector<6x128xf32>
    %c0_6 = arith.constant 0 : index
    %c0_7 = arith.constant 0 : index
    %c1 = arith.constant 1 : index
    %c0_8 = arith.constant 0 : index
    %5 = vector.load %arg2[%c0_6, %c0_7, %c1, %c0_8] : memref<1x4x16x64xf32, #tpu.memory_space<vmem>>, vector<1x1x6x64xf32>
    %6 = vector.shape_cast %5 : vector<1x1x6x64xf32> to vector<6x64xf32>
    %c2 = arith.constant 2 : index
    %c0_9 = arith.constant 0 : index
    %c0_10 = arith.constant 0 : index
    %7 = vector.load %arg3[%c2, %c0_9, %c0_10] : memref<9x64x128xf32, #tpu.memory_space<vmem>>, vector<1x64x128xf32>
    %8 = vector.shape_cast %7 : vector<1x64x128xf32> to vector<64x128xf32>
    %cst_11 = arith.constant dense<0.000000e+00> : vector<6x128xf32>
    %9 = tpu.matmul %6, %8, %cst_11 {dimension_numbers = #tpu.dot_dimension_numbers<[1], [0], [0], [1], [0, 0, 1, 1], [], []>} : vector<6x64xf32>, vector<64x128xf32>, vector<6x128xf32> -> vector<6x128xf32>
    %10 = arith.addf %4, %9 : vector<6x128xf32>
    %c1_12 = arith.constant 1 : index
    %c0_13 = arith.constant 0 : index
    %c0_14 = arith.constant 0 : index
    %11 = vector.load %arg3[%c1_12, %c0_13, %c0_14] : memref<9x64x128xf32, #tpu.memory_space<vmem>>, vector<1x64x128xf32>
    %12 = vector.shape_cast %11 : vector<1x64x128xf32> to vector<64x128xf32>
    %cst_15 = arith.constant dense<0.000000e+00> : vector<6x128xf32>
    %13 = tpu.matmul %6, %12, %cst_15 {dimension_numbers = #tpu.dot_dimension_numbers<[1], [0], [0], [1], [0, 0, 1, 1], [], []>} : vector<6x64xf32>, vector<64x128xf32>, vector<6x128xf32> -> vector<6x128xf32>
    %c0_16 = arith.constant 0 : index
    %c0_17 = arith.constant 0 : index
    %c3 = arith.constant 3 : index
    %c0_18 = arith.constant 0 : index
    %14 = vector.load %arg2[%c0_16, %c0_17, %c3, %c0_18] : memref<1x4x16x64xf32, #tpu.memory_space<vmem>>, vector<1x1x6x64xf32>
    %15 = vector.shape_cast %14 : vector<1x1x6x64xf32> to vector<6x64xf32>
    %c6 = arith.constant 6 : index
    %c0_19 = arith.constant 0 : index
    %c0_20 = arith.constant 0 : index
    %16 = vector.load %arg3[%c6, %c0_19, %c0_20] : memref<9x64x128xf32, #tpu.memory_space<vmem>>, vector<1x64x128xf32>
    %17 = vector.shape_cast %16 : vector<1x64x128xf32> to vector<64x128xf32>
    %cst_21 = arith.constant dense<0.000000e+00> : vector<6x128xf32>
    %18 = tpu.matmul %15, %17, %cst_21 {dimension_numbers = #tpu.dot_dimension_numbers<[1], [0], [0], [1], [0, 0, 1, 1], [], []>} : vector<6x64xf32>, vector<64x128xf32>, vector<6x128xf32> -> vector<6x128xf32>
    %19 = arith.addf %10, %18 : vector<6x128xf32>
    %c3_22 = arith.constant 3 : index
    %c0_23 = arith.constant 0 : index
    %c0_24 = arith.constant 0 : index
    %20 = vector.load %arg3[%c3_22, %c0_23, %c0_24] : memref<9x64x128xf32, #tpu.memory_space<vmem>>, vector<1x64x128xf32>
    %21 = vector.shape_cast %20 : vector<1x64x128xf32> to vector<64x128xf32>
    %cst_25 = arith.constant dense<0.000000e+00> : vector<6x128xf32>
    %22 = tpu.matmul %15, %21, %cst_25 {dimension_numbers = #tpu.dot_dimension_numbers<[1], [0], [0], [1], [0, 0, 1, 1], [], []>} : vector<6x64xf32>, vector<64x128xf32>, vector<6x128xf32> -> vector<6x128xf32>
    %c0_26 = arith.constant 0 : index
    %c0_27 = arith.constant 0 : index
    %c4 = arith.constant 4 : index
    %c0_28 = arith.constant 0 : index
    %23 = vector.load %arg2[%c0_26, %c0_27, %c4, %c0_28] : memref<1x4x16x64xf32, #tpu.memory_space<vmem>>, vector<1x1x6x64xf32>
    %24 = vector.shape_cast %23 : vector<1x1x6x64xf32> to vector<6x64xf32>
    %c8 = arith.constant 8 : index
    %c0_29 = arith.constant 0 : index
    %c0_30 = arith.constant 0 : index
    %25 = vector.load %arg3[%c8, %c0_29, %c0_30] : memref<9x64x128xf32, #tpu.memory_space<vmem>>, vector<1x64x128xf32>
    %26 = vector.shape_cast %25 : vector<1x64x128xf32> to vector<64x128xf32>
    %cst_31 = arith.constant dense<0.000000e+00> : vector<6x128xf32>
    %27 = tpu.matmul %24, %26, %cst_31 {dimension_numbers = #tpu.dot_dimension_numbers<[1], [0], [0], [1], [0, 0, 1, 1], [], []>} : vector<6x64xf32>, vector<64x128xf32>, vector<6x128xf32> -> vector<6x128xf32>
    %28 = arith.addf %19, %27 : vector<6x128xf32>
    %c7 = arith.constant 7 : index
    %c0_32 = arith.constant 0 : index
    %c0_33 = arith.constant 0 : index
    %29 = vector.load %arg3[%c7, %c0_32, %c0_33] : memref<9x64x128xf32, #tpu.memory_space<vmem>>, vector<1x64x128xf32>
    %30 = vector.shape_cast %29 : vector<1x64x128xf32> to vector<64x128xf32>
    %cst_34 = arith.constant dense<0.000000e+00> : vector<6x128xf32>
    %31 = tpu.matmul %24, %30, %cst_34 {dimension_numbers = #tpu.dot_dimension_numbers<[1], [0], [0], [1], [0, 0, 1, 1], [], []>} : vector<6x64xf32>, vector<64x128xf32>, vector<6x128xf32> -> vector<6x128xf32>
    %32 = arith.addf %13, %31 : vector<6x128xf32>
    %c5 = arith.constant 5 : index
    %c0_35 = arith.constant 0 : index
    %c0_36 = arith.constant 0 : index
    %33 = vector.load %arg3[%c5, %c0_35, %c0_36] : memref<9x64x128xf32, #tpu.memory_space<vmem>>, vector<1x64x128xf32>
    %34 = vector.shape_cast %33 : vector<1x64x128xf32> to vector<64x128xf32>
    %cst_37 = arith.constant dense<0.000000e+00> : vector<6x128xf32>
    %35 = tpu.matmul %24, %34, %cst_37 {dimension_numbers = #tpu.dot_dimension_numbers<[1], [0], [0], [1], [0, 0, 1, 1], [], []>} : vector<6x64xf32>, vector<64x128xf32>, vector<6x128xf32> -> vector<6x128xf32>
    %36 = arith.addf %22, %35 : vector<6x128xf32>
    %c4_38 = arith.constant 4 : index
    %c0_39 = arith.constant 0 : index
    %c0_40 = arith.constant 0 : index
    %37 = vector.load %arg3[%c4_38, %c0_39, %c0_40] : memref<9x64x128xf32, #tpu.memory_space<vmem>>, vector<1x64x128xf32>
    %38 = vector.shape_cast %37 : vector<1x64x128xf32> to vector<64x128xf32>
    %cst_41 = arith.constant dense<0.000000e+00> : vector<6x128xf32>
    %39 = tpu.matmul %24, %38, %cst_41 {dimension_numbers = #tpu.dot_dimension_numbers<[1], [0], [0], [1], [0, 0, 1, 1], [], []>} : vector<6x64xf32>, vector<64x128xf32>, vector<6x128xf32> -> vector<6x128xf32>
    %c0_42 = arith.constant 0 : index
    %c1_43 = arith.constant 1 : index
    %c0_44 = arith.constant 0 : index
    %c0_45 = arith.constant 0 : index
    %40 = vector.load %arg2[%c0_42, %c1_43, %c0_44, %c0_45] : memref<1x4x16x64xf32, #tpu.memory_space<vmem>>, vector<1x1x6x64xf32>
    %41 = vector.shape_cast %40 : vector<1x1x6x64xf32> to vector<6x64xf32>
    %c1_46 = arith.constant 1 : index
    %c0_47 = arith.constant 0 : index
    %c0_48 = arith.constant 0 : index
    %42 = vector.load %arg3[%c1_46, %c0_47, %c0_48] : memref<9x64x128xf32, #tpu.memory_space<vmem>>, vector<1x64x128xf32>
    %43 = vector.shape_cast %42 : vector<1x64x128xf32> to vector<64x128xf32>
    %cst_49 = arith.constant dense<0.000000e+00> : vector<6x128xf32>
    %44 = tpu.matmul %41, %43, %cst_49 {dimension_numbers = #tpu.dot_dimension_numbers<[1], [0], [0], [1], [0, 0, 1, 1], [], []>} : vector<6x64xf32>, vector<64x128xf32>, vector<6x128xf32> -> vector<6x128xf32>
    %45 = arith.addf %28, %44 : vector<6x128xf32>
    %c0_50 = arith.constant 0 : index
    %c0_51 = arith.constant 0 : index
    %c0_52 = arith.constant 0 : index
    %46 = vector.load %arg3[%c0_50, %c0_51, %c0_52] : memref<9x64x128xf32, #tpu.memory_space<vmem>>, vector<1x64x128xf32>
    %47 = vector.shape_cast %46 : vector<1x64x128xf32> to vector<64x128xf32>
    %cst_53 = arith.constant dense<0.000000e+00> : vector<6x128xf32>
    %48 = tpu.matmul %41, %47, %cst_53 {dimension_numbers = #tpu.dot_dimension_numbers<[1], [0], [0], [1], [0, 0, 1, 1], [], []>} : vector<6x64xf32>, vector<64x128xf32>, vector<6x128xf32> -> vector<6x128xf32>
    %49 = arith.addf %32, %48 : vector<6x128xf32>
    %c0_54 = arith.constant 0 : index
    %c1_55 = arith.constant 1 : index
    %c1_56 = arith.constant 1 : index
    %c0_57 = arith.constant 0 : index
    %50 = vector.load %arg2[%c0_54, %c1_55, %c1_56, %c0_57] : memref<1x4x16x64xf32, #tpu.memory_space<vmem>>, vector<1x1x6x64xf32>
    %51 = vector.shape_cast %50 : vector<1x1x6x64xf32> to vector<6x64xf32>
    %c2_58 = arith.constant 2 : index
    %c0_59 = arith.constant 0 : index
    %c0_60 = arith.constant 0 : index
    %52 = vector.load %arg3[%c2_58, %c0_59, %c0_60] : memref<9x64x128xf32, #tpu.memory_space<vmem>>, vector<1x64x128xf32>
    %53 = vector.shape_cast %52 : vector<1x64x128xf32> to vector<64x128xf32>
    %cst_61 = arith.constant dense<0.000000e+00> : vector<6x128xf32>
    %54 = tpu.matmul %51, %53, %cst_61 {dimension_numbers = #tpu.dot_dimension_numbers<[1], [0], [0], [1], [0, 0, 1, 1], [], []>} : vector<6x64xf32>, vector<64x128xf32>, vector<6x128xf32> -> vector<6x128xf32>
    %55 = arith.addf %49, %54 : vector<6x128xf32>
    %c0_62 = arith.constant 0 : index
    %c1_63 = arith.constant 1 : index
    %c3_64 = arith.constant 3 : index
    %c0_65 = arith.constant 0 : index
    %56 = vector.load %arg2[%c0_62, %c1_63, %c3_64, %c0_65] : memref<1x4x16x64xf32, #tpu.memory_space<vmem>>, vector<1x1x6x64xf32>
    %57 = vector.shape_cast %56 : vector<1x1x6x64xf32> to vector<6x64xf32>
    %c7_66 = arith.constant 7 : index
    %c0_67 = arith.constant 0 : index
    %c0_68 = arith.constant 0 : index
    %58 = vector.load %arg3[%c7_66, %c0_67, %c0_68] : memref<9x64x128xf32, #tpu.memory_space<vmem>>, vector<1x64x128xf32>
    %59 = vector.shape_cast %58 : vector<1x64x128xf32> to vector<64x128xf32>
    %cst_69 = arith.constant dense<0.000000e+00> : vector<6x128xf32>
    %60 = tpu.matmul %57, %59, %cst_69 {dimension_numbers = #tpu.dot_dimension_numbers<[1], [0], [0], [1], [0, 0, 1, 1], [], []>} : vector<6x64xf32>, vector<64x128xf32>, vector<6x128xf32> -> vector<6x128xf32>
    %61 = arith.addf %45, %60 : vector<6x128xf32>
    %c6_70 = arith.constant 6 : index
    %c0_71 = arith.constant 0 : index
    %c0_72 = arith.constant 0 : index
    %62 = vector.load %arg3[%c6_70, %c0_71, %c0_72] : memref<9x64x128xf32, #tpu.memory_space<vmem>>, vector<1x64x128xf32>
    %63 = vector.shape_cast %62 : vector<1x64x128xf32> to vector<64x128xf32>
    %cst_73 = arith.constant dense<0.000000e+00> : vector<6x128xf32>
    %64 = tpu.matmul %57, %63, %cst_73 {dimension_numbers = #tpu.dot_dimension_numbers<[1], [0], [0], [1], [0, 0, 1, 1], [], []>} : vector<6x64xf32>, vector<64x128xf32>, vector<6x128xf32> -> vector<6x128xf32>
    %65 = arith.addf %55, %64 : vector<6x128xf32>
    %c4_74 = arith.constant 4 : index
    %c0_75 = arith.constant 0 : index
    %c0_76 = arith.constant 0 : index
    %66 = vector.load %arg3[%c4_74, %c0_75, %c0_76] : memref<9x64x128xf32, #tpu.memory_space<vmem>>, vector<1x64x128xf32>
    %67 = vector.shape_cast %66 : vector<1x64x128xf32> to vector<64x128xf32>
    %cst_77 = arith.constant dense<0.000000e+00> : vector<6x128xf32>
    %68 = tpu.matmul %57, %67, %cst_77 {dimension_numbers = #tpu.dot_dimension_numbers<[1], [0], [0], [1], [0, 0, 1, 1], [], []>} : vector<6x64xf32>, vector<64x128xf32>, vector<6x128xf32> -> vector<6x128xf32>
    %69 = arith.addf %36, %68 : vector<6x128xf32>
    %c3_78 = arith.constant 3 : index
    %c0_79 = arith.constant 0 : index
    %c0_80 = arith.constant 0 : index
    %70 = vector.load %arg3[%c3_78, %c0_79, %c0_80] : memref<9x64x128xf32, #tpu.memory_space<vmem>>, vector<1x64x128xf32>
    %71 = vector.shape_cast %70 : vector<1x64x128xf32> to vector<64x128xf32>
    %cst_81 = arith.constant dense<0.000000e+00> : vector<6x128xf32>
    %72 = tpu.matmul %57, %71, %cst_81 {dimension_numbers = #tpu.dot_dimension_numbers<[1], [0], [0], [1], [0, 0, 1, 1], [], []>} : vector<6x64xf32>, vector<64x128xf32>, vector<6x128xf32> -> vector<6x128xf32>
    %73 = arith.addf %39, %72 : vector<6x128xf32>
    %c0_82 = arith.constant 0 : index
    %c1_83 = arith.constant 1 : index
    %c4_84 = arith.constant 4 : index
    %c0_85 = arith.constant 0 : index
    %74 = vector.load %arg2[%c0_82, %c1_83, %c4_84, %c0_85] : memref<1x4x16x64xf32, #tpu.memory_space<vmem>>, vector<1x1x6x64xf32>
    %75 = vector.shape_cast %74 : vector<1x1x6x64xf32> to vector<6x64xf32>
    %c8_86 = arith.constant 8 : index
    %c0_87 = arith.constant 0 : index
    %c0_88 = arith.constant 0 : index
    %76 = vector.load %arg3[%c8_86, %c0_87, %c0_88] : memref<9x64x128xf32, #tpu.memory_space<vmem>>, vector<1x64x128xf32>
    %77 = vector.shape_cast %76 : vector<1x64x128xf32> to vector<64x128xf32>
    %cst_89 = arith.constant dense<0.000000e+00> : vector<6x128xf32>
    %78 = tpu.matmul %75, %77, %cst_89 {dimension_numbers = #tpu.dot_dimension_numbers<[1], [0], [0], [1], [0, 0, 1, 1], [], []>} : vector<6x64xf32>, vector<64x128xf32>, vector<6x128xf32> -> vector<6x128xf32>
    %79 = arith.addf %65, %78 : vector<6x128xf32>
    %c5_90 = arith.constant 5 : index
    %c0_91 = arith.constant 0 : index
    %c0_92 = arith.constant 0 : index
    %80 = vector.load %arg3[%c5_90, %c0_91, %c0_92] : memref<9x64x128xf32, #tpu.memory_space<vmem>>, vector<1x64x128xf32>
    %81 = vector.shape_cast %80 : vector<1x64x128xf32> to vector<64x128xf32>
    %cst_93 = arith.constant dense<0.000000e+00> : vector<6x128xf32>
    %82 = tpu.matmul %75, %81, %cst_93 {dimension_numbers = #tpu.dot_dimension_numbers<[1], [0], [0], [1], [0, 0, 1, 1], [], []>} : vector<6x64xf32>, vector<64x128xf32>, vector<6x128xf32> -> vector<6x128xf32>
    %83 = arith.addf %73, %82 : vector<6x128xf32>
    %c0_94 = arith.constant 0 : index
    %c2_95 = arith.constant 2 : index
    %c0_96 = arith.constant 0 : index
    %c0_97 = arith.constant 0 : index
    %84 = vector.load %arg2[%c0_94, %c2_95, %c0_96, %c0_97] : memref<1x4x16x64xf32, #tpu.memory_space<vmem>>, vector<1x1x6x64xf32>
    %85 = vector.shape_cast %84 : vector<1x1x6x64xf32> to vector<6x64xf32>
    %c3_98 = arith.constant 3 : index
    %c0_99 = arith.constant 0 : index
    %c0_100 = arith.constant 0 : index
    %86 = vector.load %arg3[%c3_98, %c0_99, %c0_100] : memref<9x64x128xf32, #tpu.memory_space<vmem>>, vector<1x64x128xf32>
    %87 = vector.shape_cast %86 : vector<1x64x128xf32> to vector<64x128xf32>
    %cst_101 = arith.constant dense<0.000000e+00> : vector<6x128xf32>
    %88 = tpu.matmul %85, %87, %cst_101 {dimension_numbers = #tpu.dot_dimension_numbers<[1], [0], [0], [1], [0, 0, 1, 1], [], []>} : vector<6x64xf32>, vector<64x128xf32>, vector<6x128xf32> -> vector<6x128xf32>
    %89 = arith.addf %61, %88 : vector<6x128xf32>
    %c0_102 = arith.constant 0 : index
    %c0_103 = arith.constant 0 : index
    %c0_104 = arith.constant 0 : index
    %90 = vector.load %arg3[%c0_102, %c0_103, %c0_104] : memref<9x64x128xf32, #tpu.memory_space<vmem>>, vector<1x64x128xf32>
    %91 = vector.shape_cast %90 : vector<1x64x128xf32> to vector<64x128xf32>
    %cst_105 = arith.constant dense<0.000000e+00> : vector<6x128xf32>
    %92 = tpu.matmul %85, %91, %cst_105 {dimension_numbers = #tpu.dot_dimension_numbers<[1], [0], [0], [1], [0, 0, 1, 1], [], []>} : vector<6x64xf32>, vector<64x128xf32>, vector<6x128xf32> -> vector<6x128xf32>
    %93 = arith.addf %69, %92 : vector<6x128xf32>
    %c0_106 = arith.constant 0 : index
    %c2_107 = arith.constant 2 : index
    %c1_108 = arith.constant 1 : index
    %c0_109 = arith.constant 0 : index
    %94 = vector.load %arg2[%c0_106, %c2_107, %c1_108, %c0_109] : memref<1x4x16x64xf32, #tpu.memory_space<vmem>>, vector<1x1x6x64xf32>
    %95 = vector.shape_cast %94 : vector<1x1x6x64xf32> to vector<6x64xf32>
    %c5_110 = arith.constant 5 : index
    %c0_111 = arith.constant 0 : index
    %c0_112 = arith.constant 0 : index
    %96 = vector.load %arg3[%c5_110, %c0_111, %c0_112] : memref<9x64x128xf32, #tpu.memory_space<vmem>>, vector<1x64x128xf32>
    %97 = vector.shape_cast %96 : vector<1x64x128xf32> to vector<64x128xf32>
    %cst_113 = arith.constant dense<0.000000e+00> : vector<6x128xf32>
    %98 = tpu.matmul %95, %97, %cst_113 {dimension_numbers = #tpu.dot_dimension_numbers<[1], [0], [0], [1], [0, 0, 1, 1], [], []>} : vector<6x64xf32>, vector<64x128xf32>, vector<6x128xf32> -> vector<6x128xf32>
    %99 = arith.addf %89, %98 : vector<6x128xf32>
    %c4_114 = arith.constant 4 : index
    %c0_115 = arith.constant 0 : index
    %c0_116 = arith.constant 0 : index
    %100 = vector.load %arg3[%c4_114, %c0_115, %c0_116] : memref<9x64x128xf32, #tpu.memory_space<vmem>>, vector<1x64x128xf32>
    %101 = vector.shape_cast %100 : vector<1x64x128xf32> to vector<64x128xf32>
    %cst_117 = arith.constant dense<0.000000e+00> : vector<6x128xf32>
    %102 = tpu.matmul %95, %101, %cst_117 {dimension_numbers = #tpu.dot_dimension_numbers<[1], [0], [0], [1], [0, 0, 1, 1], [], []>} : vector<6x64xf32>, vector<64x128xf32>, vector<6x128xf32> -> vector<6x128xf32>
    %103 = arith.addf %79, %102 : vector<6x128xf32>
    %c2_118 = arith.constant 2 : index
    %c0_119 = arith.constant 0 : index
    %c0_120 = arith.constant 0 : index
    %104 = vector.load %arg3[%c2_118, %c0_119, %c0_120] : memref<9x64x128xf32, #tpu.memory_space<vmem>>, vector<1x64x128xf32>
    %105 = vector.shape_cast %104 : vector<1x64x128xf32> to vector<64x128xf32>
    %cst_121 = arith.constant dense<0.000000e+00> : vector<6x128xf32>
    %106 = tpu.matmul %95, %105, %cst_121 {dimension_numbers = #tpu.dot_dimension_numbers<[1], [0], [0], [1], [0, 0, 1, 1], [], []>} : vector<6x64xf32>, vector<64x128xf32>, vector<6x128xf32> -> vector<6x128xf32>
    %107 = arith.addf %93, %106 : vector<6x128xf32>
    %c1_122 = arith.constant 1 : index
    %c0_123 = arith.constant 0 : index
    %c0_124 = arith.constant 0 : index
    %108 = vector.load %arg3[%c1_122, %c0_123, %c0_124] : memref<9x64x128xf32, #tpu.memory_space<vmem>>, vector<1x64x128xf32>
    %109 = vector.shape_cast %108 : vector<1x64x128xf32> to vector<64x128xf32>
    %cst_125 = arith.constant dense<0.000000e+00> : vector<6x128xf32>
    %110 = tpu.matmul %95, %109, %cst_125 {dimension_numbers = #tpu.dot_dimension_numbers<[1], [0], [0], [1], [0, 0, 1, 1], [], []>} : vector<6x64xf32>, vector<64x128xf32>, vector<6x128xf32> -> vector<6x128xf32>
    %111 = arith.addf %83, %110 : vector<6x128xf32>
    %c0_126 = arith.constant 0 : index
    %c2_127 = arith.constant 2 : index
    %c3_128 = arith.constant 3 : index
    %c0_129 = arith.constant 0 : index
    %112 = vector.load %arg2[%c0_126, %c2_127, %c3_128, %c0_129] : memref<1x4x16x64xf32, #tpu.memory_space<vmem>>, vector<1x1x6x64xf32>
    %113 = vector.shape_cast %112 : vector<1x1x6x64xf32> to vector<6x64xf32>
    %c6_130 = arith.constant 6 : index
    %c0_131 = arith.constant 0 : index
    %c0_132 = arith.constant 0 : index
    %114 = vector.load %arg3[%c6_130, %c0_131, %c0_132] : memref<9x64x128xf32, #tpu.memory_space<vmem>>, vector<1x64x128xf32>
    %115 = vector.shape_cast %114 : vector<1x64x128xf32> to vector<64x128xf32>
    %cst_133 = arith.constant dense<0.000000e+00> : vector<6x128xf32>
    %116 = tpu.matmul %113, %115, %cst_133 {dimension_numbers = #tpu.dot_dimension_numbers<[1], [0], [0], [1], [0, 0, 1, 1], [], []>} : vector<6x64xf32>, vector<64x128xf32>, vector<6x128xf32> -> vector<6x128xf32>
    %117 = arith.addf %107, %116 : vector<6x128xf32>
    %c0_134 = arith.constant 0 : index
    %c2_135 = arith.constant 2 : index
    %c4_136 = arith.constant 4 : index
    %c0_137 = arith.constant 0 : index
    %118 = vector.load %arg2[%c0_134, %c2_135, %c4_136, %c0_137] : memref<1x4x16x64xf32, #tpu.memory_space<vmem>>, vector<1x1x6x64xf32>
    %119 = vector.shape_cast %118 : vector<1x1x6x64xf32> to vector<6x64xf32>
    %c8_138 = arith.constant 8 : index
    %c0_139 = arith.constant 0 : index
    %c0_140 = arith.constant 0 : index
    %120 = vector.load %arg3[%c8_138, %c0_139, %c0_140] : memref<9x64x128xf32, #tpu.memory_space<vmem>>, vector<1x64x128xf32>
    %121 = vector.shape_cast %120 : vector<1x64x128xf32> to vector<64x128xf32>
    %cst_141 = arith.constant dense<0.000000e+00> : vector<6x128xf32>
    %122 = tpu.matmul %119, %121, %cst_141 {dimension_numbers = #tpu.dot_dimension_numbers<[1], [0], [0], [1], [0, 0, 1, 1], [], []>} : vector<6x64xf32>, vector<64x128xf32>, vector<6x128xf32> -> vector<6x128xf32>
    %123 = arith.addf %117, %122 : vector<6x128xf32>
    %c7_142 = arith.constant 7 : index
    %c0_143 = arith.constant 0 : index
    %c0_144 = arith.constant 0 : index
    %124 = vector.load %arg3[%c7_142, %c0_143, %c0_144] : memref<9x64x128xf32, #tpu.memory_space<vmem>>, vector<1x64x128xf32>
    %125 = vector.shape_cast %124 : vector<1x64x128xf32> to vector<64x128xf32>
    %cst_145 = arith.constant dense<0.000000e+00> : vector<6x128xf32>
    %126 = tpu.matmul %119, %125, %cst_145 {dimension_numbers = #tpu.dot_dimension_numbers<[1], [0], [0], [1], [0, 0, 1, 1], [], []>} : vector<6x64xf32>, vector<64x128xf32>, vector<6x128xf32> -> vector<6x128xf32>
    %127 = arith.addf %111, %126 : vector<6x128xf32>
    %c0_146 = arith.constant 0 : index
    %c3_147 = arith.constant 3 : index
    %c0_148 = arith.constant 0 : index
    %c0_149 = arith.constant 0 : index
    %128 = vector.load %arg2[%c0_146, %c3_147, %c0_148, %c0_149] : memref<1x4x16x64xf32, #tpu.memory_space<vmem>>, vector<1x1x6x64xf32>
    %129 = vector.shape_cast %128 : vector<1x1x6x64xf32> to vector<6x64xf32>
    %c4_150 = arith.constant 4 : index
    %c0_151 = arith.constant 0 : index
    %c0_152 = arith.constant 0 : index
    %130 = vector.load %arg3[%c4_150, %c0_151, %c0_152] : memref<9x64x128xf32, #tpu.memory_space<vmem>>, vector<1x64x128xf32>
    %131 = vector.shape_cast %130 : vector<1x64x128xf32> to vector<64x128xf32>
    %cst_153 = arith.constant dense<0.000000e+00> : vector<6x128xf32>
    %132 = tpu.matmul %129, %131, %cst_153 {dimension_numbers = #tpu.dot_dimension_numbers<[1], [0], [0], [1], [0, 0, 1, 1], [], []>} : vector<6x64xf32>, vector<64x128xf32>, vector<6x128xf32> -> vector<6x128xf32>
    %133 = arith.addf %99, %132 : vector<6x128xf32>
    %c3_154 = arith.constant 3 : index
    %c0_155 = arith.constant 0 : index
    %c0_156 = arith.constant 0 : index
    %134 = vector.load %arg3[%c3_154, %c0_155, %c0_156] : memref<9x64x128xf32, #tpu.memory_space<vmem>>, vector<1x64x128xf32>
    %135 = vector.shape_cast %134 : vector<1x64x128xf32> to vector<64x128xf32>
    %cst_157 = arith.constant dense<0.000000e+00> : vector<6x128xf32>
    %136 = tpu.matmul %129, %135, %cst_157 {dimension_numbers = #tpu.dot_dimension_numbers<[1], [0], [0], [1], [0, 0, 1, 1], [], []>} : vector<6x64xf32>, vector<64x128xf32>, vector<6x128xf32> -> vector<6x128xf32>
    %137 = arith.addf %103, %136 : vector<6x128xf32>
    %c1_158 = arith.constant 1 : index
    %c0_159 = arith.constant 0 : index
    %c0_160 = arith.constant 0 : index
    %138 = vector.load %arg3[%c1_158, %c0_159, %c0_160] : memref<9x64x128xf32, #tpu.memory_space<vmem>>, vector<1x64x128xf32>
    %139 = vector.shape_cast %138 : vector<1x64x128xf32> to vector<64x128xf32>
    %cst_161 = arith.constant dense<0.000000e+00> : vector<6x128xf32>
    %140 = tpu.matmul %129, %139, %cst_161 {dimension_numbers = #tpu.dot_dimension_numbers<[1], [0], [0], [1], [0, 0, 1, 1], [], []>} : vector<6x64xf32>, vector<64x128xf32>, vector<6x128xf32> -> vector<6x128xf32>
    %141 = arith.addf %123, %140 : vector<6x128xf32>
    %c0_162 = arith.constant 0 : index
    %c0_163 = arith.constant 0 : index
    %c0_164 = arith.constant 0 : index
    %142 = vector.load %arg3[%c0_162, %c0_163, %c0_164] : memref<9x64x128xf32, #tpu.memory_space<vmem>>, vector<1x64x128xf32>
    %143 = vector.shape_cast %142 : vector<1x64x128xf32> to vector<64x128xf32>
    %cst_165 = arith.constant dense<0.000000e+00> : vector<6x128xf32>
    %144 = tpu.matmul %129, %143, %cst_165 {dimension_numbers = #tpu.dot_dimension_numbers<[1], [0], [0], [1], [0, 0, 1, 1], [], []>} : vector<6x64xf32>, vector<64x128xf32>, vector<6x128xf32> -> vector<6x128xf32>
    %145 = arith.addf %127, %144 : vector<6x128xf32>
    %c0_166 = arith.constant 0 : index
    %c3_167 = arith.constant 3 : index
    %c1_168 = arith.constant 1 : index
    %c0_169 = arith.constant 0 : index
    %146 = vector.load %arg2[%c0_166, %c3_167, %c1_168, %c0_169] : memref<1x4x16x64xf32, #tpu.memory_space<vmem>>, vector<1x1x6x64xf32>
    %147 = vector.shape_cast %146 : vector<1x1x6x64xf32> to vector<6x64xf32>
    %c5_170 = arith.constant 5 : index
    %c0_171 = arith.constant 0 : index
    %c0_172 = arith.constant 0 : index
    %148 = vector.load %arg3[%c5_170, %c0_171, %c0_172] : memref<9x64x128xf32, #tpu.memory_space<vmem>>, vector<1x64x128xf32>
    %149 = vector.shape_cast %148 : vector<1x64x128xf32> to vector<64x128xf32>
    %cst_173 = arith.constant dense<0.000000e+00> : vector<6x128xf32>
    %150 = tpu.matmul %147, %149, %cst_173 {dimension_numbers = #tpu.dot_dimension_numbers<[1], [0], [0], [1], [0, 0, 1, 1], [], []>} : vector<6x64xf32>, vector<64x128xf32>, vector<6x128xf32> -> vector<6x128xf32>
    %151 = arith.addf %137, %150 : vector<6x128xf32>
    %c2_174 = arith.constant 2 : index
    %c0_175 = arith.constant 0 : index
    %c0_176 = arith.constant 0 : index
    %152 = vector.load %arg3[%c2_174, %c0_175, %c0_176] : memref<9x64x128xf32, #tpu.memory_space<vmem>>, vector<1x64x128xf32>
    %153 = vector.shape_cast %152 : vector<1x64x128xf32> to vector<64x128xf32>
    %cst_177 = arith.constant dense<0.000000e+00> : vector<6x128xf32>
    %154 = tpu.matmul %147, %153, %cst_177 {dimension_numbers = #tpu.dot_dimension_numbers<[1], [0], [0], [1], [0, 0, 1, 1], [], []>} : vector<6x64xf32>, vector<64x128xf32>, vector<6x128xf32> -> vector<6x128xf32>
    %155 = arith.addf %145, %154 : vector<6x128xf32>
    %c0_178 = arith.constant 0 : index
    %c3_179 = arith.constant 3 : index
    %c3_180 = arith.constant 3 : index
    %c0_181 = arith.constant 0 : index
    %156 = vector.load %arg2[%c0_178, %c3_179, %c3_180, %c0_181] : memref<1x4x16x64xf32, #tpu.memory_space<vmem>>, vector<1x1x6x64xf32>
    %157 = vector.shape_cast %156 : vector<1x1x6x64xf32> to vector<6x64xf32>
    %c7_182 = arith.constant 7 : index
    %c0_183 = arith.constant 0 : index
    %c0_184 = arith.constant 0 : index
    %158 = vector.load %arg3[%c7_182, %c0_183, %c0_184] : memref<9x64x128xf32, #tpu.memory_space<vmem>>, vector<1x64x128xf32>
    %159 = vector.shape_cast %158 : vector<1x64x128xf32> to vector<64x128xf32>
    %cst_185 = arith.constant dense<0.000000e+00> : vector<6x128xf32>
    %160 = tpu.matmul %157, %159, %cst_185 {dimension_numbers = #tpu.dot_dimension_numbers<[1], [0], [0], [1], [0, 0, 1, 1], [], []>} : vector<6x64xf32>, vector<64x128xf32>, vector<6x128xf32> -> vector<6x128xf32>
    %161 = arith.addf %141, %160 : vector<6x128xf32>
    %c6_186 = arith.constant 6 : index
    %c0_187 = arith.constant 0 : index
    %c0_188 = arith.constant 0 : index
    %162 = vector.load %arg3[%c6_186, %c0_187, %c0_188] : memref<9x64x128xf32, #tpu.memory_space<vmem>>, vector<1x64x128xf32>
    %163 = vector.shape_cast %162 : vector<1x64x128xf32> to vector<64x128xf32>
    %cst_189 = arith.constant dense<0.000000e+00> : vector<6x128xf32>
    %164 = tpu.matmul %157, %163, %cst_189 {dimension_numbers = #tpu.dot_dimension_numbers<[1], [0], [0], [1], [0, 0, 1, 1], [], []>} : vector<6x64xf32>, vector<64x128xf32>, vector<6x128xf32> -> vector<6x128xf32>
    %165 = arith.addf %155, %164 : vector<6x128xf32>
    %c0_190 = arith.constant 0 : index
    %c3_191 = arith.constant 3 : index
    %c4_192 = arith.constant 4 : index
    %c0_193 = arith.constant 0 : index
    %166 = vector.load %arg2[%c0_190, %c3_191, %c4_192, %c0_193] : memref<1x4x16x64xf32, #tpu.memory_space<vmem>>, vector<1x1x6x64xf32>
    %167 = vector.shape_cast %166 : vector<1x1x6x64xf32> to vector<6x64xf32>
    %c8_194 = arith.constant 8 : index
    %c0_195 = arith.constant 0 : index
    %c0_196 = arith.constant 0 : index
    %168 = vector.load %arg3[%c8_194, %c0_195, %c0_196] : memref<9x64x128xf32, #tpu.memory_space<vmem>>, vector<1x64x128xf32>
    %169 = vector.shape_cast %168 : vector<1x64x128xf32> to vector<64x128xf32>
    %cst_197 = arith.constant dense<0.000000e+00> : vector<6x128xf32>
    %170 = tpu.matmul %167, %169, %cst_197 {dimension_numbers = #tpu.dot_dimension_numbers<[1], [0], [0], [1], [0, 0, 1, 1], [], []>} : vector<6x64xf32>, vector<64x128xf32>, vector<6x128xf32> -> vector<6x128xf32>
    %171 = arith.addf %165, %170 : vector<6x128xf32>
    %172 = arith.maximumf %133, %151 : vector<6x128xf32>
    %173 = arith.maximumf %161, %171 : vector<6x128xf32>
    %174 = arith.maximumf %172, %173 : vector<6x128xf32>
    %c0_198 = arith.constant 0 : index
    %c0_199 = arith.constant 0 : index
    %175 = vector.load %arg4[%c0_198, %c0_199] : memref<1x128xf32, #tpu.memory_space<vmem>>, vector<1x128xf32>
    %176 = vector.broadcast %175 : vector<1x128xf32> to vector<6x128xf32>
    %177 = arith.addf %174, %176 : vector<6x128xf32>
    %cst_200 = arith.constant 0.000000e+00 : f32
    %178 = vector.broadcast %cst_200 : f32 to vector<6x128xf32>
    %179 = arith.maximumf %177, %178 : vector<6x128xf32>
    %c0_201 = arith.constant 0 : index
    %c0_202 = arith.constant 0 : index
    %c0_203 = arith.constant 0 : index
    %180 = vector.load %arg5[%c0_201, %c0_202, %c0_203] : memref<1x6x128xf32, #tpu.memory_space<vmem>>, vector<1x6x128xf32>
    %181 = vector.shape_cast %180 : vector<1x6x128xf32> to vector<6x128xf32>
    %182 = vector.shape_cast %179 : vector<6x128xf32> to vector<1x6x128xf32>
    tpu.vector_store %arg5[%c0_201, %c0_202, %c0_203], %182 {strides = array<i32>} : memref<1x6x128xf32, #tpu.memory_space<vmem>>, vector<1x6x128xf32>,
    return
  }
  func.func @transform_0(%arg0: i32, %arg1: i32) -> (i32, i32, i32, i32) {
    %c0_i32 = arith.constant 0 : i32
    %c0_i32_0 = arith.constant 0 : i32
    %c0_i32_1 = arith.constant 0 : i32
    %c0_i32_2 = arith.constant 0 : i32
    return %arg0, %c0_i32, %c0_i32_0, %c0_i32_1 : i32, i32, i32, i32
  }
  func.func @transform_1(%arg0: i32, %arg1: i32) -> (i32, i32, i32) {
    %c0_i32 = arith.constant 0 : i32
    %c0_i32_0 = arith.constant 0 : i32
    %c0_i32_1 = arith.constant 0 : i32
    %c0_i32_2 = arith.constant 0 : i32
    return %c0_i32, %c0_i32_0, %c0_i32_1 : i32, i32, i32
  }
  func.func @transform_2(%arg0: i32, %arg1: i32) -> (i32, i32) {
    %c0_i32 = arith.constant 0 : i32
    %c0_i32_0 = arith.constant 0 : i32
    %c0_i32_1 = arith.constant 0 : i32
    return %c0_i32, %c0_i32_0 : i32, i32
  }
  func.func @transform_3(%arg0: i32, %arg1: i32) -> (i32, i32, i32) {
    %c0_i32 = arith.constant 0 : i32
    %c0_i32_0 = arith.constant 0 : i32
    return %arg0, %arg1, %c0_i32 : i32, i32, i32
  }
}

module attributes {stable_mosaic.version = 11 : i64} {
  func.func @_fc_fused_kernel(%arg0: i32, %arg1: i32, %arg2: memref<1x1x512xf32, #tpu.memory_space<vmem>>, %arg3: memref<512x256xf32, #tpu.memory_space<vmem>>, %arg4: memref<1x256xf32, #tpu.memory_space<vmem>>, %arg5: memref<256x128xf32, #tpu.memory_space<vmem>>, %arg6: memref<1x128xf32, #tpu.memory_space<vmem>>, %arg7: memref<1x1x128xf32, #tpu.memory_space<vmem>>, %arg8: memref<1x256xf32, #tpu.memory_space<vmem>>) attributes {dimension_semantics = [#tpu.dimension_semantics<parallel>, #tpu.dimension_semantics<arbitrary>], iteration_bounds = array<i64: 2, 1>, scalar_prefetch = 0 : i64, scratch_operands = 1 : i64, tpu.core_type = #tpu.core_type<tc>, window_params = [{transform_indices = @transform_0, window_bounds = array<i64: 1, 1, 512>}, {transform_indices = @transform_1, window_bounds = array<i64: 512, 256>}, {pipeline_mode = #tpu.pipeline_mode<synchronous>, transform_indices = @transform_2, window_bounds = array<i64: 1, 256>}, {pipeline_mode = #tpu.pipeline_mode<synchronous>, transform_indices = @transform_3, window_bounds = array<i64: 256, 128>}, {pipeline_mode = #tpu.pipeline_mode<synchronous>, transform_indices = @transform_4, window_bounds = array<i64: 1, 128>}, {transform_indices = @transform_5, window_bounds = array<i64: 1, 1, 128>}]} {
    %c0_i32 = arith.constant 0 : i32
    %0 = arith.cmpi eq, %arg1, %c0_i32 : i32
    %1 = arith.extui %0 : i1 to i32
    %c0_i32_0 = arith.constant 0 : i32
    %2 = arith.cmpi ne, %1, %c0_i32_0 : i32
    scf.if %2 {
      %cst_11 = arith.constant 0.000000e+00 : f32
      %13 = vector.broadcast %cst_11 : f32 to vector<1x256xf32>
      %c0_12 = arith.constant 0 : index
      %c0_13 = arith.constant 0 : index
      %14 = vector.load %arg8[%c0_12, %c0_13] : memref<1x256xf32, #tpu.memory_space<vmem>>, vector<1x256xf32>
      tpu.vector_store %arg8[%c0_12, %c0_13], %13 {strides = array<i32>} : memref<1x256xf32, #tpu.memory_space<vmem>>, vector<1x256xf32>,
    } else {
    }
    %c0 = arith.constant 0 : index
    %c0_1 = arith.constant 0 : index
    %3 = vector.load %arg8[%c0, %c0_1] : memref<1x256xf32, #tpu.memory_space<vmem>>, vector<1x256xf32>
    %c0_2 = arith.constant 0 : index
    %c0_3 = arith.constant 0 : index
    %c0_4 = arith.constant 0 : index
    %4 = vector.load %arg2[%c0_2, %c0_3, %c0_4] : memref<1x1x512xf32, #tpu.memory_space<vmem>>, vector<1x1x512xf32>
    %5 = vector.shape_cast %4 : vector<1x1x512xf32> to vector<1x512xf32>
    %c0_5 = arith.constant 0 : index
    %c0_6 = arith.constant 0 : index
    %6 = vector.load %arg3[%c0_5, %c0_6] : memref<512x256xf32, #tpu.memory_space<vmem>>, vector<512x256xf32>
    %cst = arith.constant dense<0.000000e+00> : vector<1x256xf32>
    %7 = tpu.matmul %5, %6, %cst {dimension_numbers = #tpu.dot_dimension_numbers<[1], [0], [0], [1], [0, 0, 1, 1], [], []>} : vector<1x512xf32>, vector<512x256xf32>, vector<1x256xf32> -> vector<1x256xf32>
    %8 = arith.addf %3, %7 : vector<1x256xf32>
    %c0_7 = arith.constant 0 : index
    %c0_8 = arith.constant 0 : index
    %9 = vector.load %arg8[%c0_7, %c0_8] : memref<1x256xf32, #tpu.memory_space<vmem>>, vector<1x256xf32>
    tpu.vector_store %arg8[%c0_7, %c0_8], %8 {strides = array<i32>} : memref<1x256xf32, #tpu.memory_space<vmem>>, vector<1x256xf32>,
    %c0_i32_9 = arith.constant 0 : i32
    %10 = arith.cmpi eq, %arg1, %c0_i32_9 : i32
    %11 = arith.extui %10 : i1 to i32
    %c0_i32_10 = arith.constant 0 : i32
    %12 = arith.cmpi ne, %11, %c0_i32_10 : i32
    scf.if %12 {
      %c0_11 = arith.constant 0 : index
      %c0_12 = arith.constant 0 : index
      %13 = vector.load %arg8[%c0_11, %c0_12] : memref<1x256xf32, #tpu.memory_space<vmem>>, vector<1x256xf32>
      %c0_13 = arith.constant 0 : index
      %c0_14 = arith.constant 0 : index
      %14 = vector.load %arg4[%c0_13, %c0_14] : memref<1x256xf32, #tpu.memory_space<vmem>>, vector<1x256xf32>
      %15 = arith.addf %13, %14 : vector<1x256xf32>
      %cst_15 = arith.constant 0.000000e+00 : f32
      %16 = vector.broadcast %cst_15 : f32 to vector<1x256xf32>
      %17 = arith.maximumf %15, %16 : vector<1x256xf32>
      %c0_16 = arith.constant 0 : index
      %c0_17 = arith.constant 0 : index
      %18 = vector.load %arg5[%c0_16, %c0_17] : memref<256x128xf32, #tpu.memory_space<vmem>>, vector<256x128xf32>
      %cst_18 = arith.constant dense<0.000000e+00> : vector<1x128xf32>
      %19 = tpu.matmul %17, %18, %cst_18 {dimension_numbers = #tpu.dot_dimension_numbers<[1], [0], [0], [1], [0, 0, 1, 1], [], []>} : vector<1x256xf32>, vector<256x128xf32>, vector<1x128xf32> -> vector<1x128xf32>
      %c0_19 = arith.constant 0 : index
      %c0_20 = arith.constant 0 : index
      %20 = vector.load %arg6[%c0_19, %c0_20] : memref<1x128xf32, #tpu.memory_space<vmem>>, vector<1x128xf32>
      %21 = arith.addf %19, %20 : vector<1x128xf32>
      %c0_21 = arith.constant 0 : index
      %c0_22 = arith.constant 0 : index
      %c0_23 = arith.constant 0 : index
      %22 = vector.load %arg7[%c0_21, %c0_22, %c0_23] : memref<1x1x128xf32, #tpu.memory_space<vmem>>, vector<1x1x128xf32>
      %23 = vector.shape_cast %22 : vector<1x1x128xf32> to vector<1x128xf32>
      %24 = vector.shape_cast %21 : vector<1x128xf32> to vector<1x1x128xf32>
      tpu.vector_store %arg7[%c0_21, %c0_22, %c0_23], %24 {strides = array<i32>} : memref<1x1x128xf32, #tpu.memory_space<vmem>>, vector<1x1x128xf32>,
    } else {
    }
    return
  }
  func.func @transform_0(%arg0: i32, %arg1: i32) -> (i32, i32, i32) {
    %c0_i32 = arith.constant 0 : i32
    %c0_i32_0 = arith.constant 0 : i32
    return %arg0, %c0_i32, %arg1 : i32, i32, i32
  }
  func.func @transform_1(%arg0: i32, %arg1: i32) -> (i32, i32) {
    %c0_i32 = arith.constant 0 : i32
    %c0_i32_0 = arith.constant 0 : i32
    return %arg1, %c0_i32 : i32, i32
  }
  func.func @transform_2(%arg0: i32, %arg1: i32) -> (i32, i32) {
    %c0_i32 = arith.constant 0 : i32
    %c0_i32_0 = arith.constant 0 : i32
    %c0_i32_1 = arith.constant 0 : i32
    return %c0_i32, %c0_i32_0 : i32, i32
  }
  func.func @transform_3(%arg0: i32, %arg1: i32) -> (i32, i32) {
    %c0_i32 = arith.constant 0 : i32
    %c0_i32_0 = arith.constant 0 : i32
    %c0_i32_1 = arith.constant 0 : i32
    return %c0_i32, %c0_i32_0 : i32, i32
  }
  func.func @transform_4(%arg0: i32, %arg1: i32) -> (i32, i32) {
    %c0_i32 = arith.constant 0 : i32
    %c0_i32_0 = arith.constant 0 : i32
    %c0_i32_1 = arith.constant 0 : i32
    return %c0_i32, %c0_i32_0 : i32, i32
  }
  func.func @transform_5(%arg0: i32, %arg1: i32) -> (i32, i32, i32) {
    %c0_i32 = arith.constant 0 : i32
    %c0_i32_0 = arith.constant 0 : i32
    %c0_i32_1 = arith.constant 0 : i32
    return %arg0, %c0_i32, %c0_i32_0 : i32, i32, i32
  }
}

</mosaic_0001>

<llo_original>
// kernel: chord_detector_forward.4
$region0: #{chord_detector_forward.4}
  #allocation0 [shape = 'u32[]', space=smem, size = 0x4, offset = 0x4, fixed_abs, tag = 'smem constant byte address 0x4 - core index']
  #allocation1 [shape = 'u32[144,128]{1,0:T(1,128)}', space=vmem, size = 0x12000, scoped, tag = 'internal scratch']
  %s0 = inlined_call_operand.vmem [shape: f32[2,4,88,1], index: 0, kind: input, shape index: {}]
  %s1 = inlined_call_operand.vmem [shape: f32[9,1,32], index: 1, kind: input, shape index: {}]
  %s2 = inlined_call_operand.vmem [shape: f32[1,32], index: 2, kind: input, shape index: {}]
  %s3 = inlined_call_operand.vmem [shape: f32[2,72,32], index: 3, kind: output, shape index: {}]
  %s4 = sld [smem:[#allocation0]]
  $region45: #{chord_detector_forward.4} parent=0
    _
  %s6 = ssub.s32 1, %s4
  %s7 = scalar_select 0, %s6, %s4
  loop: start=0, step=1, limit=4
  $region2: #{chord_detector_forward.4} parent=0 // loop_pre_header
    _
  $region3: #{chord_detector_forward.4} parent=0 // loop_header
    %s9 = sphi 0, %s13
    %p10 = scmp.ge.s32.totalorder %s9, 4
    %s16 = sphi 0, %s28
    %s17 = sphi 0, %s24
    %s18 = sphi 0, %s16
    %s19 = sphi 0, %s17
    %s20 = sphi 0, %s18
    %s21 = sphi 0, %s19
    %s31 = sphi 0, %s33
    %s34 = sphi 0, %s31
    %s35 = sphi 0, %s34
    %s51 = sphi 0, %s35
    %s55 = sphi 0, %s55
    %s57 = sphi 0, %s55
    %s58 = sphi 0, %s57
    %s72 = sphi 0, %s58
    %s76 = sphi 0, %s76
    %s78 = sphi 0, %s76
    %s79 = sphi 0, %s78
    %s93 = sphi 0, %s79
    %s101 = sphi 0, %s103
    %s104 = sphi 0, %s101
    %s105 = sphi 0, %s104
    %s121 = sphi 0, %s105
  $region4: #{chord_detector_forward.4} parent=0 // loop_header_branch
    %12 = sbr.rel (%p10) target = $region8
  $region5: #{chord_detector_forward.4} parent=0 // loop_body
    %s14 = ssub.s32 %s9, 1
    %s15 = ssub.s32 %s9, 2
    %s22 = sadd.s32 1, %s17
    %p23 = scmp.ge.s32.totalorder %s22, 1
    %s24 = scalar_select %p23, 0, %s22
    %s25 = sadd.s32 1, %s16
    %s26 = scalar_select %p23, %s25, %s16
    %p27 = scmp.ge.s32.totalorder %s26, 2
    %s28 = scalar_select %p27, 0, %s26
    %s29 = ssub.s32 %s16, %s28
    %p30 = scmp.eq.s32.totalorder %s29, 0
    %s32 = sadd.s32 %s31, 1
    %s33 = scalar_select %p30, %s31, %s32
    %p36 = pneg %p30
    %p37 = scmp.eq.s32.totalorder %s9, 1
    %p38 = por %p36, %p37
    %p39 = scmp.ne.s32.totalorder %s31, %s34
    %p40 = scmp.eq.s32.totalorder %s9, 0
    %p41 = por %p39, %p40
    %p42 = scmp.ne.s32.totalorder %s31, %s34
    %p43 = scmp.eq.s32.totalorder %s14, 1
    %p44 = por %p42, %p43
    %p45 = scmp.ne.s32.totalorder %s34, %s35
    %p46 = scmp.eq.s32.totalorder %s14, 0
    %p47 = por %p45, %p46
    %p48 = scmp.ne.s32.totalorder %s34, %s35
    %p49 = scmp.eq.s32.totalorder %s15, 1
    %p50 = por %p48, %p49
    %p52 = scmp.ne.s32.totalorder %s35, %s51
    %p53 = scmp.eq.s32.totalorder %s15, 0
    %p54 = por %p52, %p53
    %s56 = sadd.s32 %s55, 1
    %p59 = scmp.eq.s32.totalorder %s9, 1
    %p60 = scmp.ne.s32.totalorder %s55, %s57
    %p61 = scmp.eq.s32.totalorder %s9, 0
    %p62 = por %p60, %p61
    %p63 = scmp.ne.s32.totalorder %s55, %s57
    %p64 = scmp.eq.s32.totalorder %s14, 1
    %p65 = por %p63, %p64
    %p66 = scmp.ne.s32.totalorder %s57, %s58
    %p67 = scmp.eq.s32.totalorder %s14, 0
    %p68 = por %p66, %p67
    %p69 = scmp.ne.s32.totalorder %s57, %s58
    %p70 = scmp.eq.s32.totalorder %s15, 1
    %p71 = por %p69, %p70
    %p73 = scmp.ne.s32.totalorder %s58, %s72
    %p74 = scmp.eq.s32.totalorder %s15, 0
    %p75 = por %p73, %p74
    %s77 = sadd.s32 %s76, 1
    %p80 = scmp.eq.s32.totalorder %s9, 1
    %p81 = scmp.ne.s32.totalorder %s76, %s78
    %p82 = scmp.eq.s32.totalorder %s9, 0
    %p83 = por %p81, %p82
    %p84 = scmp.ne.s32.totalorder %s76, %s78
    %p85 = scmp.eq.s32.totalorder %s14, 1
    %p86 = por %p84, %p85
    %p87 = scmp.ne.s32.totalorder %s78, %s79
    %p88 = scmp.eq.s32.totalorder %s14, 0
    %p89 = por %p87, %p88
    %p90 = scmp.ne.s32.totalorder %s78, %s79
    %p91 = scmp.eq.s32.totalorder %s15, 1
    %p92 = por %p90, %p91
    %p94 = scmp.ne.s32.totalorder %s79, %s93
    %p95 = scmp.eq.s32.totalorder %s15, 0
    %p96 = por %p94, %p95
    %s97 = ssub.s32 %s16, %s28
    %s98 = ssub.s32 %s17, %s24
    %s99 = sor.u32 %s97, %s98
    %p100 = scmp.eq.s32.totalorder %s99, 0
    %s102 = sadd.s32 %s101, 1
    %s103 = scalar_select %p100, %s101, %s102
    %p106 = pneg %p100
    %p107 = scmp.eq.s32.totalorder %s9, 1
    %p108 = por %p106, %p107
    %p109 = scmp.ne.s32.totalorder %s101, %s104
    %p110 = scmp.eq.s32.totalorder %s9, 0
    %p111 = por %p109, %p110
    %p112 = scmp.ne.s32.totalorder %s101, %s104
    %p113 = scmp.eq.s32.totalorder %s14, 1
    %p114 = por %p112, %p113
    %p115 = scmp.ne.s32.totalorder %s104, %s105
    %p116 = scmp.eq.s32.totalorder %s14, 0
    %p117 = por %p115, %p116
    %p118 = scmp.ne.s32.totalorder %s104, %s105
    %p119 = scmp.eq.s32.totalorder %s15, 1
    %p120 = por %p118, %p119
    %p122 = scmp.ne.s32.totalorder %s105, %s121
    %p123 = scmp.eq.s32.totalorder %s15, 0
    %p124 = por %p122, %p123
    %p125 = scmp.le.s32.totalorder 1, %s9
    %p126 = scmp.lt.s32.totalorder %s9, 3
    %p127 = pnand %p125, %p126
    %p128 = pneg %p127
    // Predicated region
    $region9: #{chord_detector_forward.4} parent=5 // pred_check
      _
    $region10: #{chord_detector_forward.4} parent=5 // pred_check_branch
      %130 = sbr.rel (%p127) target = $region12
    $region11: #{chord_detector_forward.4} parent=5 // pred_region
      %s131 = ssub.s32 %s9, 1
      // Predicated region
      $region13: #{chord_detector_forward.4} parent=11 // pred_check
        %p132 = pneg %p68
      $region14: #{chord_detector_forward.4} parent=11 // pred_check_branch
        %134 = sbr.rel (%p132) target = $region16
      $region15: #{chord_detector_forward.4} parent=11 // pred_region
        _
      $region16: #{chord_detector_forward.4} parent=11 // pred_fallthru
        _
      // Predicated region
      $region17: #{chord_detector_forward.4} parent=11 // pred_check
        %p135 = pneg %p89
      $region18: #{chord_detector_forward.4} parent=11 // pred_check_branch
        %137 = sbr.rel (%p135) target = $region20
      $region19: #{chord_detector_forward.4} parent=11 // pred_region
        _
      $region20: #{chord_detector_forward.4} parent=11 // pred_fallthru
        _
    $region12: #{chord_detector_forward.4} parent=5 // pred_fallthru
      _
    %p138 = scmp.lt.s32.totalorder %s9, 2
    // Predicated region
    $region21: #{chord_detector_forward.4} parent=5 // pred_check
      %p139 = pneg %p138
    $region22: #{chord_detector_forward.4} parent=5 // pred_check_branch
      %141 = sbr.rel (%p139) target = $region24
    $region23: #{chord_detector_forward.4} parent=5 // pred_region
      // Predicated region
      $region25: #{chord_detector_forward.4} parent=23 // pred_check
        %p142 = pneg %p41
      $region26: #{chord_detector_forward.4} parent=23 // pred_check_branch
        %144 = sbr.rel (%p142) target = $region28
      $region27: #{chord_detector_forward.4} parent=23 // pred_region
        %p145 = scmp.lt.s32.totalorder %s16, 1
        %s146 = scalar_select %p145, %s16, 1
        %s147 = smul.addr %s146, 44
        %s148 = smul.addr %s147, 8
        %s149 = scalar_lea.vmem %s0, %s148
      $region28: #{chord_detector_forward.4} parent=23 // pred_fallthru
        _
    $region24: #{chord_detector_forward.4} parent=5 // pred_fallthru
      _
    %p150 = scmp.le.s32.totalorder 1, %s9
    %p151 = scmp.lt.s32.totalorder %s9, 3
    %p152 = pnand %p150, %p151
    %p153 = pneg %p152
    // Predicated region
    $region29: #{chord_detector_forward.4} parent=5 // pred_check
      _
    $region30: #{chord_detector_forward.4} parent=5 // pred_check_branch
      %155 = sbr.rel (%p152) target = $region32
    $region31: #{chord_detector_forward.4} parent=5 // pred_region
      %s156 = ssub.s32 %s9, 1
      %p157 = scmp.lt.s32.totalorder %s18, 1
      %s158 = scalar_select %p157, %s18, 1
      %s159 = smul.addr %s158, 44
      %s160 = smul.addr %s159, 8
      %s161 = scalar_lea.vmem %s0, %s160
      %p162 = pneg %p47
      %p163 = pneg %p44
      %p164 = pneg %p68
      %p165 = pneg %p65
      %p166 = pneg %p89
      %p167 = pneg %p86
      %p168 = pneg %p117
      %p169 = pneg %p114
      %s170 = smul.u32 9, %s19
      %p171 = scmp.lt.s32.totalorder %s18, 1
      %s172 = scalar_select %p171, %s18, 1
      %p173 = scmp.lt.s32.totalorder %s170, 8
      %s174 = scalar_select %p173, %s170, 8
      %s175 = smul.addr %s172, 9
      %s176 = sadd.s32 %s174, %s175
      %s177 = smul.addr %s176, 8
      %s178 = scalar_lea.vmem %s3, %s177
      %p179 = scmp.lt.s32.totalorder %s18, 1
      %s180 = scalar_select %p179, %s18, 1
      %s181 = smul.addr %s180, 44
      %s182 = smul.addr %s181, 8
      %s183 = scalar_lea.vmem %s0, %s182
      %s184 = smul.u32 9, %s19
      %p185 = scmp.lt.s32.totalorder %s18, 1
      %s186 = scalar_select %p185, %s18, 1
      %p187 = scmp.lt.s32.totalorder %s184, 8
      %s188 = scalar_select %p187, %s184, 8
      %s189 = smul.addr %s186, 9
      %s190 = sadd.s32 %s188, %s189
      %s191 = smul.addr %s190, 8
      %s192 = scalar_lea.vmem %s3, %s191
      %s193 = smul.u32 9, %s19
      %v194 = vld [vmem:[%s183] sm:$0xff]
      %v195 = vld [vmem:[%s183 + $0x8] sm:$0xff]
      %v196 = vld [vmem:[%s183 + $0x10] sm:$0xff]
      %v197 = vld [vmem:[%s183 + $0x18] sm:$0xff]
      %v198 = vld [vmem:[%s183 + $0x20] sm:$0xff]
      %v199 = vld [vmem:[%s183 + $0x28] sm:$0xff]
      %v200 = vld [vmem:[%s183 + $0x30] sm:$0xff]
      %v201 = vld [vmem:[%s183 + $0x38] sm:$0xff]
      %v202 = vld [vmem:[%s183 + $0x40] sm:$0xff]
      %v203 = vld [vmem:[%s1] sm:$0x1]
      %205 = vset.pattern.permute.xlu0 0
      %206 = vperm.xlu0 %205, %v194
      %v207 = vpop.permute.xlu0 %206
      %210 = vset.pattern.permute.xlu0 0
      %211 = vperm.xlu0 %210, %v195
      %v212 = vpop.permute.xlu0 %211
      %215 = vset.pattern.permute.xlu0 0
      %216 = vperm.xlu0 %215, %v196
      %v217 = vpop.permute.xlu0 %216
      %220 = vset.pattern.permute.xlu0 0
      %221 = vperm.xlu0 %220, %v197
      %v222 = vpop.permute.xlu0 %221
      %225 = vset.pattern.permute.xlu0 0
      %226 = vperm.xlu0 %225, %v198
      %v227 = vpop.permute.xlu0 %226
      %230 = vset.pattern.permute.xlu0 0
      %231 = vperm.xlu0 %230, %v199
      %v232 = vpop.permute.xlu0 %231
      %235 = vset.pattern.permute.xlu0 0
      %236 = vperm.xlu0 %235, %v200
      %v237 = vpop.permute.xlu0 %236
      %240 = vset.pattern.permute.xlu0 0
      %241 = vperm.xlu0 %240, %v201
      %v242 = vpop.permute.xlu0 %241
      %245 = vset.pattern.permute.xlu0 0
      %246 = vperm.xlu0 %245, %v202
      %v247 = vpop.permute.xlu0 %246
      %v250 = vlaneseq
      %v251 = vshrl.u32 %v250, 7
      %v252 = vsub.s32 0, %v251
      %v253 = vrot.slane %v203, %v252
      %v255 = vmul.f32 %v207, %v253
      %v256 = vmul.f32 %v212, %v253
      %v257 = vmul.f32 %v217, %v253
      %v258 = vmul.f32 %v222, %v253
      %v259 = vmul.f32 %v227, %v253
      %v260 = vmul.f32 %v232, %v253
      %v261 = vmul.f32 %v237, %v253
      %v262 = vmul.f32 %v242, %v253
      %v263 = vmul.f32 %v247, %v253
      %v264 = vld [vmem:[%s183 + $0x1] sm:$0xff]
      %v265 = vld [vmem:[%s183 + $0x9] sm:$0xff]
      %v266 = vld [vmem:[%s183 + $0x11] sm:$0xff]
      %v267 = vld [vmem:[%s183 + $0x19] sm:$0xff]
      %v268 = vld [vmem:[%s183 + $0x21] sm:$0xff]
      %v269 = vld [vmem:[%s183 + $0x29] sm:$0xff]
      %v270 = vld [vmem:[%s183 + $0x31] sm:$0xff]
      %v271 = vld [vmem:[%s183 + $0x39] sm:$0xff]
      %v272 = vld [vmem:[%s183 + $0x41] sm:$0xff]
      %s273 = scalar_lea.vmem %s1, 2
      %v274 = vld [vmem:[%s273] sm:$0x1]
      %276 = vset.pattern.permute.xlu0 0
      %277 = vperm.xlu0 %276, %v264
      %v278 = vpop.permute.xlu0 %277
      %281 = vset.pattern.permute.xlu0 0
      %282 = vperm.xlu0 %281, %v265
      %v283 = vpop.permute.xlu0 %282
      %286 = vset.pattern.permute.xlu0 0
      %287 = vperm.xlu0 %286, %v266
      %v288 = vpop.permute.xlu0 %287
      %291 = vset.pattern.permute.xlu0 0
      %292 = vperm.xlu0 %291, %v267
      %v293 = vpop.permute.xlu0 %292
      %296 = vset.pattern.permute.xlu0 0
      %297 = vperm.xlu0 %296, %v268
      %v298 = vpop.permute.xlu0 %297
      %301 = vset.pattern.permute.xlu0 0
      %302 = vperm.xlu0 %301, %v269
      %v303 = vpop.permute.xlu0 %302
      %306 = vset.pattern.permute.xlu0 0
      %307 = vperm.xlu0 %306, %v270
      %v308 = vpop.permute.xlu0 %307
      %311 = vset.pattern.permute.xlu0 0
      %312 = vperm.xlu0 %311, %v271
      %v313 = vpop.permute.xlu0 %312
      %316 = vset.pattern.permute.xlu0 0
      %317 = vperm.xlu0 %316, %v272
      %v318 = vpop.permute.xlu0 %317
      %v321 = vlaneseq
      %v322 = vshrl.u32 %v321, 7
      %v323 = vsub.s32 0, %v322
      %v324 = vrot.slane %v274, %v323
      %v326 = vmul.f32 %v278, %v324
      %v327 = vmul.f32 %v283, %v324
      %v328 = vmul.f32 %v288, %v324
      %v329 = vmul.f32 %v293, %v324
      %v330 = vmul.f32 %v298, %v324
      %v331 = vmul.f32 %v303, %v324
      %v332 = vmul.f32 %v308, %v324
      %v333 = vmul.f32 %v313, %v324
      %v334 = vmul.f32 %v318, %v324
      %v335 = vadd.f32 %v255, %v326
      %v336 = vadd.f32 %v256, %v327
      %v337 = vadd.f32 %v257, %v328
      %v338 = vadd.f32 %v258, %v329
      %v339 = vadd.f32 %v259, %v330
      %v340 = vadd.f32 %v260, %v331
      %v341 = vadd.f32 %v261, %v332
      %v342 = vadd.f32 %v262, %v333
      %v343 = vadd.f32 %v263, %v334
      %s344 = scalar_lea.vmem %s1, 1
      %v345 = vld [vmem:[%s344] sm:$0x1]
      %v347 = vlaneseq
      %v348 = vshrl.u32 %v347, 7
      %v349 = vsub.s32 0, %v348
      %v350 = vrot.slane %v345, %v349
      %v352 = vmul.f32 %v278, %v350
      %v353 = vmul.f32 %v283, %v350
      %v354 = vmul.f32 %v288, %v350
      %v355 = vmul.f32 %v293, %v350
      %v356 = vmul.f32 %v298, %v350
      %v357 = vmul.f32 %v303, %v350
      %v358 = vmul.f32 %v308, %v350
      %v359 = vmul.f32 %v313, %v350
      %v360 = vmul.f32 %v318, %v350
      %v361 = vld [vmem:[%s183 + $0x9] sm:$0xff]
      %v362 = vld [vmem:[%s183 + $0x11] sm:$0xff]
      %v363 = vld [vmem:[%s183 + $0x19] sm:$0xff]
      %v364 = vld [vmem:[%s183 + $0x21] sm:$0xff]
      %v365 = vld [vmem:[%s183 + $0x29] sm:$0xff]
      %v366 = vld [vmem:[%s183 + $0x31] sm:$0xff]
      %v367 = vld [vmem:[%s183 + $0x39] sm:$0xff]
      %v368 = vld [vmem:[%s183 + $0x41] sm:$0xff]
      %v369 = vld [vmem:[%s183 + $0x49] sm:$0xff]
      %s370 = scalar_lea.vmem %s1, 6
      %v371 = vld [vmem:[%s370] sm:$0x1]
      %373 = vset.pattern.permute.xlu0 0
      %374 = vperm.xlu0 %373, %v361
      %v375 = vpop.permute.xlu0 %374
      %378 = vset.pattern.permute.xlu0 0
      %379 = vperm.xlu0 %378, %v362
      %v380 = vpop.permute.xlu0 %379
      %383 = vset.pattern.permute.xlu0 0
      %384 = vperm.xlu0 %383, %v363
      %v385 = vpop.permute.xlu0 %384
      %388 = vset.pattern.permute.xlu0 0
      %389 = vperm.xlu0 %388, %v364
      %v390 = vpop.permute.xlu0 %389
      %393 = vset.pattern.permute.xlu0 0
      %394 = vperm.xlu0 %393, %v365
      %v395 = vpop.permute.xlu0 %394
      %398 = vset.pattern.permute.xlu0 0
      %399 = vperm.xlu0 %398, %v366
      %v400 = vpop.permute.xlu0 %399
      %403 = vset.pattern.permute.xlu0 0
      %404 = vperm.xlu0 %403, %v367
      %v405 = vpop.permute.xlu0 %404
      %408 = vset.pattern.permute.xlu0 0
      %409 = vperm.xlu0 %408, %v368
      %v410 = vpop.permute.xlu0 %409
      %413 = vset.pattern.permute.xlu0 0
      %414 = vperm.xlu0 %413, %v369
      %v415 = vpop.permute.xlu0 %414
      %v418 = vlaneseq
      %v419 = vshrl.u32 %v418, 7
      %v420 = vsub.s32 0, %v419
      %v421 = vrot.slane %v371, %v420
      %v423 = vmul.f32 %v375, %v421
      %v424 = vmul.f32 %v380, %v421
      %v425 = vmul.f32 %v385, %v421
      %v426 = vmul.f32 %v390, %v421
      %v427 = vmul.f32 %v395, %v421
      %v428 = vmul.f32 %v400, %v421
      %v429 = vmul.f32 %v405, %v421
      %v430 = vmul.f32 %v410, %v421
      %v431 = vmul.f32 %v415, %v421
      %v432 = vadd.f32 %v335, %v423
      %v433 = vadd.f32 %v336, %v424
      %v434 = vadd.f32 %v337, %v425
      %v435 = vadd.f32 %v338, %v426
      %v436 = vadd.f32 %v339, %v427
      %v437 = vadd.f32 %v340, %v428
      %v438 = vadd.f32 %v341, %v429
      %v439 = vadd.f32 %v342, %v430
      %v440 = vadd.f32 %v343, %v431
      %s441 = scalar_lea.vmem %s1, 3
      %v442 = vld [vmem:[%s441] sm:$0x1]
      %v444 = vlaneseq
      %v445 = vshrl.u32 %v444, 7
      %v446 = vsub.s32 0, %v445
      %v447 = vrot.slane %v442, %v446
      %v449 = vmul.f32 %v375, %v447
      %v450 = vmul.f32 %v380, %v447
      %v451 = vmul.f32 %v385, %v447
      %v452 = vmul.f32 %v390, %v447
      %v453 = vmul.f32 %v395, %v447
      %v454 = vmul.f32 %v400, %v447
      %v455 = vmul.f32 %v405, %v447
      %v456 = vmul.f32 %v410, %v447
      %v457 = vmul.f32 %v415, %v447
      %v458 = vld [vmem:[%s183 + $0xa] sm:$0xff]
      %v459 = vld [vmem:[%s183 + $0x12] sm:$0xff]
      %v460 = vld [vmem:[%s183 + $0x1a] sm:$0xff]
      %v461 = vld [vmem:[%s183 + $0x22] sm:$0xff]
      %v462 = vld [vmem:[%s183 + $0x2a] sm:$0xff]
      %v463 = vld [vmem:[%s183 + $0x32] sm:$0xff]
      %v464 = vld [vmem:[%s183 + $0x3a] sm:$0xff]
      %v465 = vld [vmem:[%s183 + $0x42] sm:$0xff]
      %v466 = vld [vmem:[%s183 + $0x4a] sm:$0xff]
      %s467 = scalar_lea.vmem %s1, 8
      %v468 = vld [vmem:[%s467] sm:$0x1]
      %470 = vset.pattern.permute.xlu0 0
      %471 = vperm.xlu0 %470, %v458
      %v472 = vpop.permute.xlu0 %471
      %475 = vset.pattern.permute.xlu0 0
      %476 = vperm.xlu0 %475, %v459
      %v477 = vpop.permute.xlu0 %476
      %480 = vset.pattern.permute.xlu0 0
      %481 = vperm.xlu0 %480, %v460
      %v482 = vpop.permute.xlu0 %481
      %485 = vset.pattern.permute.xlu0 0
      %486 = vperm.xlu0 %485, %v461
      %v487 = vpop.permute.xlu0 %486
      %490 = vset.pattern.permute.xlu0 0
      %491 = vperm.xlu0 %490, %v462
      %v492 = vpop.permute.xlu0 %491
      %495 = vset.pattern.permute.xlu0 0
      %496 = vperm.xlu0 %495, %v463
      %v497 = vpop.permute.xlu0 %496
      %500 = vset.pattern.permute.xlu0 0
      %501 = vperm.xlu0 %500, %v464
      %v502 = vpop.permute.xlu0 %501
      %505 = vset.pattern.permute.xlu0 0
      %506 = vperm.xlu0 %505, %v465
      %v507 = vpop.permute.xlu0 %506
      %510 = vset.pattern.permute.xlu0 0
      %511 = vperm.xlu0 %510, %v466
      %v512 = vpop.permute.xlu0 %511
      %v515 = vlaneseq
      %v516 = vshrl.u32 %v515, 7
      %v517 = vsub.s32 0, %v516
      %v518 = vrot.slane %v468, %v517
      %v520 = vmul.f32 %v472, %v518
      %v521 = vmul.f32 %v477, %v518
      %v522 = vmul.f32 %v482, %v518
      %v523 = vmul.f32 %v487, %v518
      %v524 = vmul.f32 %v492, %v518
      %v525 = vmul.f32 %v497, %v518
      %v526 = vmul.f32 %v502, %v518
      %v527 = vmul.f32 %v507, %v518
      %v528 = vmul.f32 %v512, %v518
      %v529 = vadd.f32 %v432, %v520
      %v530 = vadd.f32 %v433, %v521
      %v531 = vadd.f32 %v434, %v522
      %v532 = vadd.f32 %v435, %v523
      %v533 = vadd.f32 %v436, %v524
      %v534 = vadd.f32 %v437, %v525
      %v535 = vadd.f32 %v438, %v526
      %v536 = vadd.f32 %v439, %v527
      %v537 = vadd.f32 %v440, %v528
      %s538 = scalar_lea.vmem %s1, 7
      %v539 = vld [vmem:[%s538] sm:$0x1]
      %v541 = vlaneseq
      %v542 = vshrl.u32 %v541, 7
      %v543 = vsub.s32 0, %v542
      %v544 = vrot.slane %v539, %v543
      %v546 = vmul.f32 %v472, %v544
      %v547 = vmul.f32 %v477, %v544
      %v548 = vmul.f32 %v482, %v544
      %v549 = vmul.f32 %v487, %v544
      %v550 = vmul.f32 %v492, %v544
      %v551 = vmul.f32 %v497, %v544
      %v552 = vmul.f32 %v502, %v544
      %v553 = vmul.f32 %v507, %v544
      %v554 = vmul.f32 %v512, %v544
      %v555 = vadd.f32 %v352, %v546
      %v556 = vadd.f32 %v353, %v547
      %v557 = vadd.f32 %v354, %v548
      %v558 = vadd.f32 %v355, %v549
      %v559 = vadd.f32 %v356, %v550
      %v560 = vadd.f32 %v357, %v551
      %v561 = vadd.f32 %v358, %v552
      %v562 = vadd.f32 %v359, %v553
      %v563 = vadd.f32 %v360, %v554
      %s564 = scalar_lea.vmem %s1, 5
      %v565 = vld [vmem:[%s564] sm:$0x1]
      %v567 = vlaneseq
      %v568 = vshrl.u32 %v567, 7
      %v569 = vsub.s32 0, %v568
      %v570 = vrot.slane %v565, %v569
      %v572 = vmul.f32 %v472, %v570
      %v573 = vmul.f32 %v477, %v570
      %v574 = vmul.f32 %v482, %v570
      %v575 = vmul.f32 %v487, %v570
      %v576 = vmul.f32 %v492, %v570
      %v577 = vmul.f32 %v497, %v570
      %v578 = vmul.f32 %v502, %v570
      %v579 = vmul.f32 %v507, %v570
      %v580 = vmul.f32 %v512, %v570
      %v581 = vadd.f32 %v449, %v572
      %v582 = vadd.f32 %v450, %v573
      %v583 = vadd.f32 %v451, %v574
      %v584 = vadd.f32 %v452, %v575
      %v585 = vadd.f32 %v453, %v576
      %v586 = vadd.f32 %v454, %v577
      %v587 = vadd.f32 %v455, %v578
      %v588 = vadd.f32 %v456, %v579
      %v589 = vadd.f32 %v457, %v580
      %s590 = scalar_lea.vmem %s1, 4
      %v591 = vld [vmem:[%s590] sm:$0x1]
      %v593 = vlaneseq
      %v594 = vshrl.u32 %v593, 7
      %v595 = vsub.s32 0, %v594
      %v596 = vrot.slane %v591, %v595
      %v598 = vmul.f32 %v472, %v596
      %v599 = vmul.f32 %v477, %v596
      %v600 = vmul.f32 %v482, %v596
      %v601 = vmul.f32 %v487, %v596
      %v602 = vmul.f32 %v492, %v596
      %v603 = vmul.f32 %v497, %v596
      %v604 = vmul.f32 %v502, %v596
      %v605 = vmul.f32 %v507, %v596
      %v606 = vmul.f32 %v512, %v596
      %s607 = scalar_lea.vmem %s183, 88
      %v608 = vld [vmem:[%s607] sm:$0xff]
      %v609 = vld [vmem:[%s607 + $0x8] sm:$0xff]
      %v610 = vld [vmem:[%s607 + $0x10] sm:$0xff]
      %v611 = vld [vmem:[%s607 + $0x18] sm:$0xff]
      %v612 = vld [vmem:[%s607 + $0x20] sm:$0xff]
      %v613 = vld [vmem:[%s607 + $0x28] sm:$0xff]
      %v614 = vld [vmem:[%s607 + $0x30] sm:$0xff]
      %v615 = vld [vmem:[%s607 + $0x38] sm:$0xff]
      %v616 = vld [vmem:[%s607 + $0x40] sm:$0xff]
      %618 = vset.pattern.permute.xlu0 0
      %619 = vperm.xlu0 %618, %v608
      %v620 = vpop.permute.xlu0 %619
      %623 = vset.pattern.permute.xlu0 0
      %624 = vperm.xlu0 %623, %v609
      %v625 = vpop.permute.xlu0 %624
      %628 = vset.pattern.permute.xlu0 0
      %629 = vperm.xlu0 %628, %v610
      %v630 = vpop.permute.xlu0 %629
      %633 = vset.pattern.permute.xlu0 0
      %634 = vperm.xlu0 %633, %v611
      %v635 = vpop.permute.xlu0 %634
      %638 = vset.pattern.permute.xlu0 0
      %639 = vperm.xlu0 %638, %v612
      %v640 = vpop.permute.xlu0 %639
      %643 = vset.pattern.permute.xlu0 0
      %644 = vperm.xlu0 %643, %v613
      %v645 = vpop.permute.xlu0 %644
      %648 = vset.pattern.permute.xlu0 0
      %649 = vperm.xlu0 %648, %v614
      %v650 = vpop.permute.xlu0 %649
      %653 = vset.pattern.permute.xlu0 0
      %654 = vperm.xlu0 %653, %v615
      %v655 = vpop.permute.xlu0 %654
      %658 = vset.pattern.permute.xlu0 0
      %659 = vperm.xlu0 %658, %v616
      %v660 = vpop.permute.xlu0 %659
      %v662 = vmul.f32 %v620, %v350
      %v663 = vmul.f32 %v625, %v350
      %v664 = vmul.f32 %v630, %v350
      %v665 = vmul.f32 %v635, %v350
      %v666 = vmul.f32 %v640, %v350
      %v667 = vmul.f32 %v645, %v350
      %v668 = vmul.f32 %v650, %v350
      %v669 = vmul.f32 %v655, %v350
      %v670 = vmul.f32 %v660, %v350
      %v671 = vadd.f32 %v529, %v662
      %v672 = vadd.f32 %v530, %v663
      %v673 = vadd.f32 %v531, %v664
      %v674 = vadd.f32 %v532, %v665
      %v675 = vadd.f32 %v533, %v666
      %v676 = vadd.f32 %v534, %v667
      %v677 = vadd.f32 %v535, %v668
      %v678 = vadd.f32 %v536, %v669
      %v679 = vadd.f32 %v537, %v670
      %v680 = vmul.f32 %v620, %v253
      %v681 = vmul.f32 %v625, %v253
      %v682 = vmul.f32 %v630, %v253
      %v683 = vmul.f32 %v635, %v253
      %v684 = vmul.f32 %v640, %v253
      %v685 = vmul.f32 %v645, %v253
      %v686 = vmul.f32 %v650, %v253
      %v687 = vmul.f32 %v655, %v253
      %v688 = vmul.f32 %v660, %v253
      %v689 = vadd.f32 %v555, %v680
      %v690 = vadd.f32 %v556, %v681
      %v691 = vadd.f32 %v557, %v682
      %v692 = vadd.f32 %v558, %v683
      %v693 = vadd.f32 %v559, %v684
      %v694 = vadd.f32 %v560, %v685
      %v695 = vadd.f32 %v561, %v686
      %v696 = vadd.f32 %v562, %v687
      %v697 = vadd.f32 %v563, %v688
      %v698 = vld [vmem:[%s607 + $0x1] sm:$0xff]
      %v699 = vld [vmem:[%s607 + $0x9] sm:$0xff]
      %v700 = vld [vmem:[%s607 + $0x11] sm:$0xff]
      %v701 = vld [vmem:[%s607 + $0x19] sm:$0xff]
      %v702 = vld [vmem:[%s607 + $0x21] sm:$0xff]
      %v703 = vld [vmem:[%s607 + $0x29] sm:$0xff]
      %v704 = vld [vmem:[%s607 + $0x31] sm:$0xff]
      %v705 = vld [vmem:[%s607 + $0x39] sm:$0xff]
      %v706 = vld [vmem:[%s607 + $0x41] sm:$0xff]
      %708 = vset.pattern.permute.xlu0 0
      %709 = vperm.xlu0 %708, %v698
      %v710 = vpop.permute.xlu0 %709
      %713 = vset.pattern.permute.xlu0 0
      %714 = vperm.xlu0 %713, %v699
      %v715 = vpop.permute.xlu0 %714
      %718 = vset.pattern.permute.xlu0 0
      %719 = vperm.xlu0 %718, %v700
      %v720 = vpop.permute.xlu0 %719
      %723 = vset.pattern.permute.xlu0 0
      %724 = vperm.xlu0 %723, %v701
      %v725 = vpop.permute.xlu0 %724
      %728 = vset.pattern.permute.xlu0 0
      %729 = vperm.xlu0 %728, %v702
      %v730 = vpop.permute.xlu0 %729
      %733 = vset.pattern.permute.xlu0 0
      %734 = vperm.xlu0 %733, %v703
      %v735 = vpop.permute.xlu0 %734
      %738 = vset.pattern.permute.xlu0 0
      %739 = vperm.xlu0 %738, %v704
      %v740 = vpop.permute.xlu0 %739
      %743 = vset.pattern.permute.xlu0 0
      %744 = vperm.xlu0 %743, %v705
      %v745 = vpop.permute.xlu0 %744
      %748 = vset.pattern.permute.xlu0 0
      %749 = vperm.xlu0 %748, %v706
      %v750 = vpop.permute.xlu0 %749
      %v752 = vmul.f32 %v710, %v324
      %v753 = vmul.f32 %v715, %v324
      %v754 = vmul.f32 %v720, %v324
      %v755 = vmul.f32 %v725, %v324
      %v756 = vmul.f32 %v730, %v324
      %v757 = vmul.f32 %v735, %v324
      %v758 = vmul.f32 %v740, %v324
      %v759 = vmul.f32 %v745, %v324
      %v760 = vmul.f32 %v750, %v324
      %v761 = vadd.f32 %v689, %v752
      %v762 = vadd.f32 %v690, %v753
      %v763 = vadd.f32 %v691, %v754
      %v764 = vadd.f32 %v692, %v755
      %v765 = vadd.f32 %v693, %v756
      %v766 = vadd.f32 %v694, %v757
      %v767 = vadd.f32 %v695, %v758
      %v768 = vadd.f32 %v696, %v759
      %v769 = vadd.f32 %v697, %v760
      %v770 = vld [vmem:[%s607 + $0x9] sm:$0xff]
      %v771 = vld [vmem:[%s607 + $0x11] sm:$0xff]
      %v772 = vld [vmem:[%s607 + $0x19] sm:$0xff]
      %v773 = vld [vmem:[%s607 + $0x21] sm:$0xff]
      %v774 = vld [vmem:[%s607 + $0x29] sm:$0xff]
      %v775 = vld [vmem:[%s607 + $0x31] sm:$0xff]
      %v776 = vld [vmem:[%s607 + $0x39] sm:$0xff]
      %v777 = vld [vmem:[%s607 + $0x41] sm:$0xff]
      %v778 = vld [vmem:[%s607 + $0x49] sm:$0xff]
      %780 = vset.pattern.permute.xlu0 0
      %781 = vperm.xlu0 %780, %v770
      %v782 = vpop.permute.xlu0 %781
      %785 = vset.pattern.permute.xlu0 0
      %786 = vperm.xlu0 %785, %v771
      %v787 = vpop.permute.xlu0 %786
      %790 = vset.pattern.permute.xlu0 0
      %791 = vperm.xlu0 %790, %v772
      %v792 = vpop.permute.xlu0 %791
      %795 = vset.pattern.permute.xlu0 0
      %796 = vperm.xlu0 %795, %v773
      %v797 = vpop.permute.xlu0 %796
      %800 = vset.pattern.permute.xlu0 0
      %801 = vperm.xlu0 %800, %v774
      %v802 = vpop.permute.xlu0 %801
      %805 = vset.pattern.permute.xlu0 0
      %806 = vperm.xlu0 %805, %v775
      %v807 = vpop.permute.xlu0 %806
      %810 = vset.pattern.permute.xlu0 0
      %811 = vperm.xlu0 %810, %v776
      %v812 = vpop.permute.xlu0 %811
      %815 = vset.pattern.permute.xlu0 0
      %816 = vperm.xlu0 %815, %v777
      %v817 = vpop.permute.xlu0 %816
      %820 = vset.pattern.permute.xlu0 0
      %821 = vperm.xlu0 %820, %v778
      %v822 = vpop.permute.xlu0 %821
      %v824 = vmul.f32 %v782, %v544
      %v825 = vmul.f32 %v787, %v544
      %v826 = vmul.f32 %v792, %v544
      %v827 = vmul.f32 %v797, %v544
      %v828 = vmul.f32 %v802, %v544
      %v829 = vmul.f32 %v807, %v544
      %v830 = vmul.f32 %v812, %v544
      %v831 = vmul.f32 %v817, %v544
      %v832 = vmul.f32 %v822, %v544
      %v833 = vadd.f32 %v671, %v824
      %v834 = vadd.f32 %v672, %v825
      %v835 = vadd.f32 %v673, %v826
      %v836 = vadd.f32 %v674, %v827
      %v837 = vadd.f32 %v675, %v828
      %v838 = vadd.f32 %v676, %v829
      %v839 = vadd.f32 %v677, %v830
      %v840 = vadd.f32 %v678, %v831
      %v841 = vadd.f32 %v679, %v832
      %v842 = vmul.f32 %v782, %v421
      %v843 = vmul.f32 %v787, %v421
      %v844 = vmul.f32 %v792, %v421
      %v845 = vmul.f32 %v797, %v421
      %v846 = vmul.f32 %v802, %v421
      %v847 = vmul.f32 %v807, %v421
      %v848 = vmul.f32 %v812, %v421
      %v849 = vmul.f32 %v817, %v421
      %v850 = vmul.f32 %v822, %v421
      %v851 = vadd.f32 %v761, %v842
      %v852 = vadd.f32 %v762, %v843
      %v853 = vadd.f32 %v763, %v844
      %v854 = vadd.f32 %v764, %v845
      %v855 = vadd.f32 %v765, %v846
      %v856 = vadd.f32 %v766, %v847
      %v857 = vadd.f32 %v767, %v848
      %v858 = vadd.f32 %v768, %v849
      %v859 = vadd.f32 %v769, %v850
      %v860 = vmul.f32 %v782, %v596
      %v861 = vmul.f32 %v787, %v596
      %v862 = vmul.f32 %v792, %v596
      %v863 = vmul.f32 %v797, %v596
      %v864 = vmul.f32 %v802, %v596
      %v865 = vmul.f32 %v807, %v596
      %v866 = vmul.f32 %v812, %v596
      %v867 = vmul.f32 %v817, %v596
      %v868 = vmul.f32 %v822, %v596
      %v869 = vadd.f32 %v581, %v860
      %v870 = vadd.f32 %v582, %v861
      %v871 = vadd.f32 %v583, %v862
      %v872 = vadd.f32 %v584, %v863
      %v873 = vadd.f32 %v585, %v864
      %v874 = vadd.f32 %v586, %v865
      %v875 = vadd.f32 %v587, %v866
      %v876 = vadd.f32 %v588, %v867
      %v877 = vadd.f32 %v589, %v868
      %v878 = vmul.f32 %v782, %v447
      %v879 = vmul.f32 %v787, %v447
      %v880 = vmul.f32 %v792, %v447
      %v881 = vmul.f32 %v797, %v447
      %v882 = vmul.f32 %v802, %v447
      %v883 = vmul.f32 %v807, %v447
      %v884 = vmul.f32 %v812, %v447
      %v885 = vmul.f32 %v817, %v447
      %v886 = vmul.f32 %v822, %v447
      %v887 = vadd.f32 %v598, %v878
      %v888 = vadd.f32 %v599, %v879
      %v889 = vadd.f32 %v600, %v880
      %v890 = vadd.f32 %v601, %v881
      %v891 = vadd.f32 %v602, %v882
      %v892 = vadd.f32 %v603, %v883
      %v893 = vadd.f32 %v604, %v884
      %v894 = vadd.f32 %v605, %v885
      %v895 = vadd.f32 %v606, %v886
      %v896 = vld [vmem:[%s607 + $0xa] sm:$0xff]
      %v897 = vld [vmem:[%s607 + $0x12] sm:$0xff]
      %v898 = vld [vmem:[%s607 + $0x1a] sm:$0xff]
      %v899 = vld [vmem:[%s607 + $0x22] sm:$0xff]
      %v900 = vld [vmem:[%s607 + $0x2a] sm:$0xff]
      %v901 = vld [vmem:[%s607 + $0x32] sm:$0xff]
      %v902 = vld [vmem:[%s607 + $0x3a] sm:$0xff]
      %v903 = vld [vmem:[%s607 + $0x42] sm:$0xff]
      %v904 = vld [vmem:[%s607 + $0x4a] sm:$0xff]
      %906 = vset.pattern.permute.xlu0 0
      %907 = vperm.xlu0 %906, %v896
      %v908 = vpop.permute.xlu0 %907
      %911 = vset.pattern.permute.xlu0 0
      %912 = vperm.xlu0 %911, %v897
      %v913 = vpop.permute.xlu0 %912
      %916 = vset.pattern.permute.xlu0 0
      %917 = vperm.xlu0 %916, %v898
      %v918 = vpop.permute.xlu0 %917
      %921 = vset.pattern.permute.xlu0 0
      %922 = vperm.xlu0 %921, %v899
      %v923 = vpop.permute.xlu0 %922
      %926 = vset.pattern.permute.xlu0 0
      %927 = vperm.xlu0 %926, %v900
      %v928 = vpop.permute.xlu0 %927
      %931 = vset.pattern.permute.xlu0 0
      %932 = vperm.xlu0 %931, %v901
      %v933 = vpop.permute.xlu0 %932
      %936 = vset.pattern.permute.xlu0 0
      %937 = vperm.xlu0 %936, %v902
      %v938 = vpop.permute.xlu0 %937
      %941 = vset.pattern.permute.xlu0 0
      %942 = vperm.xlu0 %941, %v903
      %v943 = vpop.permute.xlu0 %942
      %946 = vset.pattern.permute.xlu0 0
      %947 = vperm.xlu0 %946, %v904
      %v948 = vpop.permute.xlu0 %947
      %v950 = vmul.f32 %v908, %v518
      %v951 = vmul.f32 %v913, %v518
      %v952 = vmul.f32 %v918, %v518
      %v953 = vmul.f32 %v923, %v518
      %v954 = vmul.f32 %v928, %v518
      %v955 = vmul.f32 %v933, %v518
      %v956 = vmul.f32 %v938, %v518
      %v957 = vmul.f32 %v943, %v518
      %v958 = vmul.f32 %v948, %v518
      %v959 = vadd.f32 %v851, %v950
      %v960 = vadd.f32 %v852, %v951
      %v961 = vadd.f32 %v853, %v952
      %v962 = vadd.f32 %v854, %v953
      %v963 = vadd.f32 %v855, %v954
      %v964 = vadd.f32 %v856, %v955
      %v965 = vadd.f32 %v857, %v956
      %v966 = vadd.f32 %v858, %v957
      %v967 = vadd.f32 %v859, %v958
      %v968 = vmul.f32 %v908, %v570
      %v969 = vmul.f32 %v913, %v570
      %v970 = vmul.f32 %v918, %v570
      %v971 = vmul.f32 %v923, %v570
      %v972 = vmul.f32 %v928, %v570
      %v973 = vmul.f32 %v933, %v570
      %v974 = vmul.f32 %v938, %v570
      %v975 = vmul.f32 %v943, %v570
      %v976 = vmul.f32 %v948, %v570
      %v977 = vadd.f32 %v887, %v968
      %v978 = vadd.f32 %v888, %v969
      %v979 = vadd.f32 %v889, %v970
      %v980 = vadd.f32 %v890, %v971
      %v981 = vadd.f32 %v891, %v972
      %v982 = vadd.f32 %v892, %v973
      %v983 = vadd.f32 %v893, %v974
      %v984 = vadd.f32 %v894, %v975
      %v985 = vadd.f32 %v895, %v976
      %s986 = scalar_lea.vmem %s183, 176
      %v987 = vld [vmem:[%s986] sm:$0xff]
      %v988 = vld [vmem:[%s986 + $0x8] sm:$0xff]
      %v989 = vld [vmem:[%s986 + $0x10] sm:$0xff]
      %v990 = vld [vmem:[%s986 + $0x18] sm:$0xff]
      %v991 = vld [vmem:[%s986 + $0x20] sm:$0xff]
      %v992 = vld [vmem:[%s986 + $0x28] sm:$0xff]
      %v993 = vld [vmem:[%s986 + $0x30] sm:$0xff]
      %v994 = vld [vmem:[%s986 + $0x38] sm:$0xff]
      %v995 = vld [vmem:[%s986 + $0x40] sm:$0xff]
      %997 = vset.pattern.permute.xlu0 0
      %998 = vperm.xlu0 %997, %v987
      %v999 = vpop.permute.xlu0 %998
      %1002 = vset.pattern.permute.xlu0 0
      %1003 = vperm.xlu0 %1002, %v988
      %v1004 = vpop.permute.xlu0 %1003
      %1007 = vset.pattern.permute.xlu0 0
      %1008 = vperm.xlu0 %1007, %v989
      %v1009 = vpop.permute.xlu0 %1008
      %1012 = vset.pattern.permute.xlu0 0
      %1013 = vperm.xlu0 %1012, %v990
      %v1014 = vpop.permute.xlu0 %1013
      %1017 = vset.pattern.permute.xlu0 0
      %1018 = vperm.xlu0 %1017, %v991
      %v1019 = vpop.permute.xlu0 %1018
      %1022 = vset.pattern.permute.xlu0 0
      %1023 = vperm.xlu0 %1022, %v992
      %v1024 = vpop.permute.xlu0 %1023
      %1027 = vset.pattern.permute.xlu0 0
      %1028 = vperm.xlu0 %1027, %v993
      %v1029 = vpop.permute.xlu0 %1028
      %1032 = vset.pattern.permute.xlu0 0
      %1033 = vperm.xlu0 %1032, %v994
      %v1034 = vpop.permute.xlu0 %1033
      %1037 = vset.pattern.permute.xlu0 0
      %1038 = vperm.xlu0 %1037, %v995
      %v1039 = vpop.permute.xlu0 %1038
      %v1041 = vmul.f32 %v999, %v447
      %v1042 = vmul.f32 %v1004, %v447
      %v1043 = vmul.f32 %v1009, %v447
      %v1044 = vmul.f32 %v1014, %v447
      %v1045 = vmul.f32 %v1019, %v447
      %v1046 = vmul.f32 %v1024, %v447
      %v1047 = vmul.f32 %v1029, %v447
      %v1048 = vmul.f32 %v1034, %v447
      %v1049 = vmul.f32 %v1039, %v447
      %v1050 = vadd.f32 %v833, %v1041
      %v1051 = vadd.f32 %v834, %v1042
      %v1052 = vadd.f32 %v835, %v1043
      %v1053 = vadd.f32 %v836, %v1044
      %v1054 = vadd.f32 %v837, %v1045
      %v1055 = vadd.f32 %v838, %v1046
      %v1056 = vadd.f32 %v839, %v1047
      %v1057 = vadd.f32 %v840, %v1048
      %v1058 = vadd.f32 %v841, %v1049
      %v1059 = vmul.f32 %v999, %v253
      %v1060 = vmul.f32 %v1004, %v253
      %v1061 = vmul.f32 %v1009, %v253
      %v1062 = vmul.f32 %v1014, %v253
      %v1063 = vmul.f32 %v1019, %v253
      %v1064 = vmul.f32 %v1024, %v253
      %v1065 = vmul.f32 %v1029, %v253
      %v1066 = vmul.f32 %v1034, %v253
      %v1067 = vmul.f32 %v1039, %v253
      %v1068 = vadd.f32 %v869, %v1059
      %v1069 = vadd.f32 %v870, %v1060
      %v1070 = vadd.f32 %v871, %v1061
      %v1071 = vadd.f32 %v872, %v1062
      %v1072 = vadd.f32 %v873, %v1063
      %v1073 = vadd.f32 %v874, %v1064
      %v1074 = vadd.f32 %v875, %v1065
      %v1075 = vadd.f32 %v876, %v1066
      %v1076 = vadd.f32 %v877, %v1067
      %v1077 = vld [vmem:[%s986 + $0x1] sm:$0xff]
      %v1078 = vld [vmem:[%s986 + $0x9] sm:$0xff]
      %v1079 = vld [vmem:[%s986 + $0x11] sm:$0xff]
      %v1080 = vld [vmem:[%s986 + $0x19] sm:$0xff]
      %v1081 = vld [vmem:[%s986 + $0x21] sm:$0xff]
      %v1082 = vld [vmem:[%s986 + $0x29] sm:$0xff]
      %v1083 = vld [vmem:[%s986 + $0x31] sm:$0xff]
      %v1084 = vld [vmem:[%s986 + $0x39] sm:$0xff]
      %v1085 = vld [vmem:[%s986 + $0x41] sm:$0xff]
      %1087 = vset.pattern.permute.xlu0 0
      %1088 = vperm.xlu0 %1087, %v1077
      %v1089 = vpop.permute.xlu0 %1088
      %1092 = vset.pattern.permute.xlu0 0
      %1093 = vperm.xlu0 %1092, %v1078
      %v1094 = vpop.permute.xlu0 %1093
      %1097 = vset.pattern.permute.xlu0 0
      %1098 = vperm.xlu0 %1097, %v1079
      %v1099 = vpop.permute.xlu0 %1098
      %1102 = vset.pattern.permute.xlu0 0
      %1103 = vperm.xlu0 %1102, %v1080
      %v1104 = vpop.permute.xlu0 %1103
      %1107 = vset.pattern.permute.xlu0 0
      %1108 = vperm.xlu0 %1107, %v1081
      %v1109 = vpop.permute.xlu0 %1108
      %1112 = vset.pattern.permute.xlu0 0
      %1113 = vperm.xlu0 %1112, %v1082
      %v1114 = vpop.permute.xlu0 %1113
      %1117 = vset.pattern.permute.xlu0 0
      %1118 = vperm.xlu0 %1117, %v1083
      %v1119 = vpop.permute.xlu0 %1118
      %1122 = vset.pattern.permute.xlu0 0
      %1123 = vperm.xlu0 %1122, %v1084
      %v1124 = vpop.permute.xlu0 %1123
      %1127 = vset.pattern.permute.xlu0 0
      %1128 = vperm.xlu0 %1127, %v1085
      %v1129 = vpop.permute.xlu0 %1128
      %v1131 = vmul.f32 %v1089, %v570
      %v1132 = vmul.f32 %v1094, %v570
      %v1133 = vmul.f32 %v1099, %v570
      %v1134 = vmul.f32 %v1104, %v570
      %v1135 = vmul.f32 %v1109, %v570
      %v1136 = vmul.f32 %v1114, %v570
      %v1137 = vmul.f32 %v1119, %v570
      %v1138 = vmul.f32 %v1124, %v570
      %v1139 = vmul.f32 %v1129, %v570
      %v1140 = vadd.f32 %v1050, %v1131
      %v1141 = vadd.f32 %v1051, %v1132
      %v1142 = vadd.f32 %v1052, %v1133
      %v1143 = vadd.f32 %v1053, %v1134
      %v1144 = vadd.f32 %v1054, %v1135
      %v1145 = vadd.f32 %v1055, %v1136
      %v1146 = vadd.f32 %v1056, %v1137
      %v1147 = vadd.f32 %v1057, %v1138
      %v1148 = vadd.f32 %v1058, %v1139
      %v1149 = vmul.f32 %v1089, %v596
      %v1150 = vmul.f32 %v1094, %v596
      %v1151 = vmul.f32 %v1099, %v596
      %v1152 = vmul.f32 %v1104, %v596
      %v1153 = vmul.f32 %v1109, %v596
      %v1154 = vmul.f32 %v1114, %v596
      %v1155 = vmul.f32 %v1119, %v596
      %v1156 = vmul.f32 %v1124, %v596
      %v1157 = vmul.f32 %v1129, %v596
      %v1158 = vadd.f32 %v959, %v1149
      %v1159 = vadd.f32 %v960, %v1150
      %v1160 = vadd.f32 %v961, %v1151
      %v1161 = vadd.f32 %v962, %v1152
      %v1162 = vadd.f32 %v963, %v1153
      %v1163 = vadd.f32 %v964, %v1154
      %v1164 = vadd.f32 %v965, %v1155
      %v1165 = vadd.f32 %v966, %v1156
      %v1166 = vadd.f32 %v967, %v1157
      %v1167 = vmul.f32 %v1089, %v324
      %v1168 = vmul.f32 %v1094, %v324
      %v1169 = vmul.f32 %v1099, %v324
      %v1170 = vmul.f32 %v1104, %v324
      %v1171 = vmul.f32 %v1109, %v324
      %v1172 = vmul.f32 %v1114, %v324
      %v1173 = vmul.f32 %v1119, %v324
      %v1174 = vmul.f32 %v1124, %v324
      %v1175 = vmul.f32 %v1129, %v324
      %v1176 = vadd.f32 %v1068, %v1167
      %v1177 = vadd.f32 %v1069, %v1168
      %v1178 = vadd.f32 %v1070, %v1169
      %v1179 = vadd.f32 %v1071, %v1170
      %v1180 = vadd.f32 %v1072, %v1171
      %v1181 = vadd.f32 %v1073, %v1172
      %v1182 = vadd.f32 %v1074, %v1173
      %v1183 = vadd.f32 %v1075, %v1174
      %v1184 = vadd.f32 %v1076, %v1175
      %v1185 = vmul.f32 %v1089, %v350
      %v1186 = vmul.f32 %v1094, %v350
      %v1187 = vmul.f32 %v1099, %v350
      %v1188 = vmul.f32 %v1104, %v350
      %v1189 = vmul.f32 %v1109, %v350
      %v1190 = vmul.f32 %v1114, %v350
      %v1191 = vmul.f32 %v1119, %v350
      %v1192 = vmul.f32 %v1124, %v350
      %v1193 = vmul.f32 %v1129, %v350
      %v1194 = vadd.f32 %v977, %v1185
      %v1195 = vadd.f32 %v978, %v1186
      %v1196 = vadd.f32 %v979, %v1187
      %v1197 = vadd.f32 %v980, %v1188
      %v1198 = vadd.f32 %v981, %v1189
      %v1199 = vadd.f32 %v982, %v1190
      %v1200 = vadd.f32 %v983, %v1191
      %v1201 = vadd.f32 %v984, %v1192
      %v1202 = vadd.f32 %v985, %v1193
      %v1203 = vld [vmem:[%s986 + $0x9] sm:$0xff]
      %v1204 = vld [vmem:[%s986 + $0x11] sm:$0xff]
      %v1205 = vld [vmem:[%s986 + $0x19] sm:$0xff]
      %v1206 = vld [vmem:[%s986 + $0x21] sm:$0xff]
      %v1207 = vld [vmem:[%s986 + $0x29] sm:$0xff]
      %v1208 = vld [vmem:[%s986 + $0x31] sm:$0xff]
      %v1209 = vld [vmem:[%s986 + $0x39] sm:$0xff]
      %v1210 = vld [vmem:[%s986 + $0x41] sm:$0xff]
      %v1211 = vld [vmem:[%s986 + $0x49] sm:$0xff]
      %1213 = vset.pattern.permute.xlu0 0
      %1214 = vperm.xlu0 %1213, %v1203
      %v1215 = vpop.permute.xlu0 %1214
      %1218 = vset.pattern.permute.xlu0 0
      %1219 = vperm.xlu0 %1218, %v1204
      %v1220 = vpop.permute.xlu0 %1219
      %1223 = vset.pattern.permute.xlu0 0
      %1224 = vperm.xlu0 %1223, %v1205
      %v1225 = vpop.permute.xlu0 %1224
      %1228 = vset.pattern.permute.xlu0 0
      %1229 = vperm.xlu0 %1228, %v1206
      %v1230 = vpop.permute.xlu0 %1229
      %1233 = vset.pattern.permute.xlu0 0
      %1234 = vperm.xlu0 %1233, %v1207
      %v1235 = vpop.permute.xlu0 %1234
      %1238 = vset.pattern.permute.xlu0 0
      %1239 = vperm.xlu0 %1238, %v1208
      %v1240 = vpop.permute.xlu0 %1239
      %1243 = vset.pattern.permute.xlu0 0
      %1244 = vperm.xlu0 %1243, %v1209
      %v1245 = vpop.permute.xlu0 %1244
      %1248 = vset.pattern.permute.xlu0 0
      %1249 = vperm.xlu0 %1248, %v1210
      %v1250 = vpop.permute.xlu0 %1249
      %1253 = vset.pattern.permute.xlu0 0
      %1254 = vperm.xlu0 %1253, %v1211
      %v1255 = vpop.permute.xlu0 %1254
      %v1257 = vmul.f32 %v1215, %v421
      %v1258 = vmul.f32 %v1220, %v421
      %v1259 = vmul.f32 %v1225, %v421
      %v1260 = vmul.f32 %v1230, %v421
      %v1261 = vmul.f32 %v1235, %v421
      %v1262 = vmul.f32 %v1240, %v421
      %v1263 = vmul.f32 %v1245, %v421
      %v1264 = vmul.f32 %v1250, %v421
      %v1265 = vmul.f32 %v1255, %v421
      %v1266 = vadd.f32 %v1176, %v1257
      %v1267 = vadd.f32 %v1177, %v1258
      %v1268 = vadd.f32 %v1178, %v1259
      %v1269 = vadd.f32 %v1179, %v1260
      %v1270 = vadd.f32 %v1180, %v1261
      %v1271 = vadd.f32 %v1181, %v1262
      %v1272 = vadd.f32 %v1182, %v1263
      %v1273 = vadd.f32 %v1183, %v1264
      %v1274 = vadd.f32 %v1184, %v1265
      %v1275 = vld [vmem:[%s986 + $0xa] sm:$0xff]
      %v1276 = vld [vmem:[%s986 + $0x12] sm:$0xff]
      %v1277 = vld [vmem:[%s986 + $0x1a] sm:$0xff]
      %v1278 = vld [vmem:[%s986 + $0x22] sm:$0xff]
      %v1279 = vld [vmem:[%s986 + $0x2a] sm:$0xff]
      %v1280 = vld [vmem:[%s986 + $0x32] sm:$0xff]
      %v1281 = vld [vmem:[%s986 + $0x3a] sm:$0xff]
      %v1282 = vld [vmem:[%s986 + $0x42] sm:$0xff]
      %v1283 = vld [vmem:[%s986 + $0x4a] sm:$0xff]
      %1285 = vset.pattern.permute.xlu0 0
      %1286 = vperm.xlu0 %1285, %v1275
      %v1287 = vpop.permute.xlu0 %1286
      %1290 = vset.pattern.permute.xlu0 0
      %1291 = vperm.xlu0 %1290, %v1276
      %v1292 = vpop.permute.xlu0 %1291
      %1295 = vset.pattern.permute.xlu0 0
      %1296 = vperm.xlu0 %1295, %v1277
      %v1297 = vpop.permute.xlu0 %1296
      %1300 = vset.pattern.permute.xlu0 0
      %1301 = vperm.xlu0 %1300, %v1278
      %v1302 = vpop.permute.xlu0 %1301
      %1305 = vset.pattern.permute.xlu0 0
      %1306 = vperm.xlu0 %1305, %v1279
      %v1307 = vpop.permute.xlu0 %1306
      %1310 = vset.pattern.permute.xlu0 0
      %1311 = vperm.xlu0 %1310, %v1280
      %v1312 = vpop.permute.xlu0 %1311
      %1315 = vset.pattern.permute.xlu0 0
      %1316 = vperm.xlu0 %1315, %v1281
      %v1317 = vpop.permute.xlu0 %1316
      %1320 = vset.pattern.permute.xlu0 0
      %1321 = vperm.xlu0 %1320, %v1282
      %v1322 = vpop.permute.xlu0 %1321
      %1325 = vset.pattern.permute.xlu0 0
      %1326 = vperm.xlu0 %1325, %v1283
      %v1327 = vpop.permute.xlu0 %1326
      %v1329 = vmul.f32 %v1287, %v518
      %v1330 = vmul.f32 %v1292, %v518
      %v1331 = vmul.f32 %v1297, %v518
      %v1332 = vmul.f32 %v1302, %v518
      %v1333 = vmul.f32 %v1307, %v518
      %v1334 = vmul.f32 %v1312, %v518
      %v1335 = vmul.f32 %v1317, %v518
      %v1336 = vmul.f32 %v1322, %v518
      %v1337 = vmul.f32 %v1327, %v518
      %v1338 = vadd.f32 %v1266, %v1329
      %v1339 = vadd.f32 %v1267, %v1330
      %v1340 = vadd.f32 %v1268, %v1331
      %v1341 = vadd.f32 %v1269, %v1332
      %v1342 = vadd.f32 %v1270, %v1333
      %v1343 = vadd.f32 %v1271, %v1334
      %v1344 = vadd.f32 %v1272, %v1335
      %v1345 = vadd.f32 %v1273, %v1336
      %v1346 = vadd.f32 %v1274, %v1337
      %v1347 = vmul.f32 %v1287, %v544
      %v1348 = vmul.f32 %v1292, %v544
      %v1349 = vmul.f32 %v1297, %v544
      %v1350 = vmul.f32 %v1302, %v544
      %v1351 = vmul.f32 %v1307, %v544
      %v1352 = vmul.f32 %v1312, %v544
      %v1353 = vmul.f32 %v1317, %v544
      %v1354 = vmul.f32 %v1322, %v544
      %v1355 = vmul.f32 %v1327, %v544
      %v1356 = vadd.f32 %v1194, %v1347
      %v1357 = vadd.f32 %v1195, %v1348
      %v1358 = vadd.f32 %v1196, %v1349
      %v1359 = vadd.f32 %v1197, %v1350
      %v1360 = vadd.f32 %v1198, %v1351
      %v1361 = vadd.f32 %v1199, %v1352
      %v1362 = vadd.f32 %v1200, %v1353
      %v1363 = vadd.f32 %v1201, %v1354
      %v1364 = vadd.f32 %v1202, %v1355
      %s1365 = scalar_lea.vmem %s183, 264
      %v1366 = vld [vmem:[%s1365] sm:$0xff]
      %v1367 = vld [vmem:[%s1365 + $0x8] sm:$0xff]
      %v1368 = vld [vmem:[%s1365 + $0x10] sm:$0xff]
      %v1369 = vld [vmem:[%s1365 + $0x18] sm:$0xff]
      %v1370 = vld [vmem:[%s1365 + $0x20] sm:$0xff]
      %v1371 = vld [vmem:[%s1365 + $0x28] sm:$0xff]
      %v1372 = vld [vmem:[%s1365 + $0x30] sm:$0xff]
      %v1373 = vld [vmem:[%s1365 + $0x38] sm:$0xff]
      %v1374 = vld [vmem:[%s1365 + $0x40] sm:$0xff]
      %1376 = vset.pattern.permute.xlu0 0
      %1377 = vperm.xlu0 %1376, %v1366
      %v1378 = vpop.permute.xlu0 %1377
      %1381 = vset.pattern.permute.xlu0 0
      %1382 = vperm.xlu0 %1381, %v1367
      %v1383 = vpop.permute.xlu0 %1382
      %1386 = vset.pattern.permute.xlu0 0
      %1387 = vperm.xlu0 %1386, %v1368
      %v1388 = vpop.permute.xlu0 %1387
      %1391 = vset.pattern.permute.xlu0 0
      %1392 = vperm.xlu0 %1391, %v1369
      %v1393 = vpop.permute.xlu0 %1392
      %1396 = vset.pattern.permute.xlu0 0
      %1397 = vperm.xlu0 %1396, %v1370
      %v1398 = vpop.permute.xlu0 %1397
      %1401 = vset.pattern.permute.xlu0 0
      %1402 = vperm.xlu0 %1401, %v1371
      %v1403 = vpop.permute.xlu0 %1402
      %1406 = vset.pattern.permute.xlu0 0
      %1407 = vperm.xlu0 %1406, %v1372
      %v1408 = vpop.permute.xlu0 %1407
      %1411 = vset.pattern.permute.xlu0 0
      %1412 = vperm.xlu0 %1411, %v1373
      %v1413 = vpop.permute.xlu0 %1412
      %1416 = vset.pattern.permute.xlu0 0
      %1417 = vperm.xlu0 %1416, %v1374
      %v1418 = vpop.permute.xlu0 %1417
      %v1420 = vmul.f32 %v1378, %v596
      %v1421 = vmul.f32 %v1383, %v596
      %v1422 = vmul.f32 %v1388, %v596
      %v1423 = vmul.f32 %v1393, %v596
      %v1424 = vmul.f32 %v1398, %v596
      %v1425 = vmul.f32 %v1403, %v596
      %v1426 = vmul.f32 %v1408, %v596
      %v1427 = vmul.f32 %v1413, %v596
      %v1428 = vmul.f32 %v1418, %v596
      %v1429 = vadd.f32 %v1140, %v1420
      %v1430 = vadd.f32 %v1141, %v1421
      %v1431 = vadd.f32 %v1142, %v1422
      %v1432 = vadd.f32 %v1143, %v1423
      %v1433 = vadd.f32 %v1144, %v1424
      %v1434 = vadd.f32 %v1145, %v1425
      %v1435 = vadd.f32 %v1146, %v1426
      %v1436 = vadd.f32 %v1147, %v1427
      %v1437 = vadd.f32 %v1148, %v1428
      %v1438 = vmul.f32 %v1378, %v447
      %v1439 = vmul.f32 %v1383, %v447
      %v1440 = vmul.f32 %v1388, %v447
      %v1441 = vmul.f32 %v1393, %v447
      %v1442 = vmul.f32 %v1398, %v447
      %v1443 = vmul.f32 %v1403, %v447
      %v1444 = vmul.f32 %v1408, %v447
      %v1445 = vmul.f32 %v1413, %v447
      %v1446 = vmul.f32 %v1418, %v447
      %v1447 = vadd.f32 %v1158, %v1438
      %v1448 = vadd.f32 %v1159, %v1439
      %v1449 = vadd.f32 %v1160, %v1440
      %v1450 = vadd.f32 %v1161, %v1441
      %v1451 = vadd.f32 %v1162, %v1442
      %v1452 = vadd.f32 %v1163, %v1443
      %v1453 = vadd.f32 %v1164, %v1444
      %v1454 = vadd.f32 %v1165, %v1445
      %v1455 = vadd.f32 %v1166, %v1446
      %v1456 = vmul.f32 %v1378, %v350
      %v1457 = vmul.f32 %v1383, %v350
      %v1458 = vmul.f32 %v1388, %v350
      %v1459 = vmul.f32 %v1393, %v350
      %v1460 = vmul.f32 %v1398, %v350
      %v1461 = vmul.f32 %v1403, %v350
      %v1462 = vmul.f32 %v1408, %v350
      %v1463 = vmul.f32 %v1413, %v350
      %v1464 = vmul.f32 %v1418, %v350
      %v1465 = vadd.f32 %v1338, %v1456
      %v1466 = vadd.f32 %v1339, %v1457
      %v1467 = vadd.f32 %v1340, %v1458
      %v1468 = vadd.f32 %v1341, %v1459
      %v1469 = vadd.f32 %v1342, %v1460
      %v1470 = vadd.f32 %v1343, %v1461
      %v1471 = vadd.f32 %v1344, %v1462
      %v1472 = vadd.f32 %v1345, %v1463
      %v1473 = vadd.f32 %v1346, %v1464
      %v1474 = vmul.f32 %v1378, %v253
      %v1475 = vmul.f32 %v1383, %v253
      %v1476 = vmul.f32 %v1388, %v253
      %v1477 = vmul.f32 %v1393, %v253
      %v1478 = vmul.f32 %v1398, %v253
      %v1479 = vmul.f32 %v1403, %v253
      %v1480 = vmul.f32 %v1408, %v253
      %v1481 = vmul.f32 %v1413, %v253
      %v1482 = vmul.f32 %v1418, %v253
      %v1483 = vadd.f32 %v1356, %v1474
      %v1484 = vadd.f32 %v1357, %v1475
      %v1485 = vadd.f32 %v1358, %v1476
      %v1486 = vadd.f32 %v1359, %v1477
      %v1487 = vadd.f32 %v1360, %v1478
      %v1488 = vadd.f32 %v1361, %v1479
      %v1489 = vadd.f32 %v1362, %v1480
      %v1490 = vadd.f32 %v1363, %v1481
      %v1491 = vadd.f32 %v1364, %v1482
      %v1492 = vld [vmem:[%s1365 + $0x1] sm:$0xff]
      %v1493 = vld [vmem:[%s1365 + $0x9] sm:$0xff]
      %v1494 = vld [vmem:[%s1365 + $0x11] sm:$0xff]
      %v1495 = vld [vmem:[%s1365 + $0x19] sm:$0xff]
      %v1496 = vld [vmem:[%s1365 + $0x21] sm:$0xff]
      %v1497 = vld [vmem:[%s1365 + $0x29] sm:$0xff]
      %v1498 = vld [vmem:[%s1365 + $0x31] sm:$0xff]
      %v1499 = vld [vmem:[%s1365 + $0x39] sm:$0xff]
      %v1500 = vld [vmem:[%s1365 + $0x41] sm:$0xff]
      %1502 = vset.pattern.permute.xlu0 0
      %1503 = vperm.xlu0 %1502, %v1492
      %v1504 = vpop.permute.xlu0 %1503
      %1507 = vset.pattern.permute.xlu0 0
      %1508 = vperm.xlu0 %1507, %v1493
      %v1509 = vpop.permute.xlu0 %1508
      %1512 = vset.pattern.permute.xlu0 0
      %1513 = vperm.xlu0 %1512, %v1494
      %v1514 = vpop.permute.xlu0 %1513
      %1517 = vset.pattern.permute.xlu0 0
      %1518 = vperm.xlu0 %1517, %v1495
      %v1519 = vpop.permute.xlu0 %1518
      %1522 = vset.pattern.permute.xlu0 0
      %1523 = vperm.xlu0 %1522, %v1496
      %v1524 = vpop.permute.xlu0 %1523
      %1527 = vset.pattern.permute.xlu0 0
      %1528 = vperm.xlu0 %1527, %v1497
      %v1529 = vpop.permute.xlu0 %1528
      %1532 = vset.pattern.permute.xlu0 0
      %1533 = vperm.xlu0 %1532, %v1498
      %v1534 = vpop.permute.xlu0 %1533
      %1537 = vset.pattern.permute.xlu0 0
      %1538 = vperm.xlu0 %1537, %v1499
      %v1539 = vpop.permute.xlu0 %1538
      %1542 = vset.pattern.permute.xlu0 0
      %1543 = vperm.xlu0 %1542, %v1500
      %v1544 = vpop.permute.xlu0 %1543
      %v1546 = vmul.f32 %v1504, %v570
      %v1547 = vmul.f32 %v1509, %v570
      %v1548 = vmul.f32 %v1514, %v570
      %v1549 = vmul.f32 %v1519, %v570
      %v1550 = vmul.f32 %v1524, %v570
      %v1551 = vmul.f32 %v1529, %v570
      %v1552 = vmul.f32 %v1534, %v570
      %v1553 = vmul.f32 %v1539, %v570
      %v1554 = vmul.f32 %v1544, %v570
      %v1555 = vadd.f32 %v1447, %v1546
      %v1556 = vadd.f32 %v1448, %v1547
      %v1557 = vadd.f32 %v1449, %v1548
      %v1558 = vadd.f32 %v1450, %v1549
      %v1559 = vadd.f32 %v1451, %v1550
      %v1560 = vadd.f32 %v1452, %v1551
      %v1561 = vadd.f32 %v1453, %v1552
      %v1562 = vadd.f32 %v1454, %v1553
      %v1563 = vadd.f32 %v1455, %v1554
      %v1564 = vmul.f32 %v1504, %v324
      %v1565 = vmul.f32 %v1509, %v324
      %v1566 = vmul.f32 %v1514, %v324
      %v1567 = vmul.f32 %v1519, %v324
      %v1568 = vmul.f32 %v1524, %v324
      %v1569 = vmul.f32 %v1529, %v324
      %v1570 = vmul.f32 %v1534, %v324
      %v1571 = vmul.f32 %v1539, %v324
      %v1572 = vmul.f32 %v1544, %v324
      %v1573 = vadd.f32 %v1483, %v1564
      %v1574 = vadd.f32 %v1484, %v1565
      %v1575 = vadd.f32 %v1485, %v1566
      %v1576 = vadd.f32 %v1486, %v1567
      %v1577 = vadd.f32 %v1487, %v1568
      %v1578 = vadd.f32 %v1488, %v1569
      %v1579 = vadd.f32 %v1489, %v1570
      %v1580 = vadd.f32 %v1490, %v1571
      %v1581 = vadd.f32 %v1491, %v1572
      %v1582 = vld [vmem:[%s1365 + $0x9] sm:$0xff]
      %v1583 = vld [vmem:[%s1365 + $0x11] sm:$0xff]
      %v1584 = vld [vmem:[%s1365 + $0x19] sm:$0xff]
      %v1585 = vld [vmem:[%s1365 + $0x21] sm:$0xff]
      %v1586 = vld [vmem:[%s1365 + $0x29] sm:$0xff]
      %v1587 = vld [vmem:[%s1365 + $0x31] sm:$0xff]
      %v1588 = vld [vmem:[%s1365 + $0x39] sm:$0xff]
      %v1589 = vld [vmem:[%s1365 + $0x41] sm:$0xff]
      %v1590 = vld [vmem:[%s1365 + $0x49] sm:$0xff]
      %1592 = vset.pattern.permute.xlu0 0
      %1593 = vperm.xlu0 %1592, %v1582
      %v1594 = vpop.permute.xlu0 %1593
      %1597 = vset.pattern.permute.xlu0 0
      %1598 = vperm.xlu0 %1597, %v1583
      %v1599 = vpop.permute.xlu0 %1598
      %1602 = vset.pattern.permute.xlu0 0
      %1603 = vperm.xlu0 %1602, %v1584
      %v1604 = vpop.permute.xlu0 %1603
      %1607 = vset.pattern.permute.xlu0 0
      %1608 = vperm.xlu0 %1607, %v1585
      %v1609 = vpop.permute.xlu0 %1608
      %1612 = vset.pattern.permute.xlu0 0
      %1613 = vperm.xlu0 %1612, %v1586
      %v1614 = vpop.permute.xlu0 %1613
      %1617 = vset.pattern.permute.xlu0 0
      %1618 = vperm.xlu0 %1617, %v1587
      %v1619 = vpop.permute.xlu0 %1618
      %1622 = vset.pattern.permute.xlu0 0
      %1623 = vperm.xlu0 %1622, %v1588
      %v1624 = vpop.permute.xlu0 %1623
      %1627 = vset.pattern.permute.xlu0 0
      %1628 = vperm.xlu0 %1627, %v1589
      %v1629 = vpop.permute.xlu0 %1628
      %1632 = vset.pattern.permute.xlu0 0
      %1633 = vperm.xlu0 %1632, %v1590
      %v1634 = vpop.permute.xlu0 %1633
      %v1636 = vmul.f32 %v1594, %v544
      %v1637 = vmul.f32 %v1599, %v544
      %v1638 = vmul.f32 %v1604, %v544
      %v1639 = vmul.f32 %v1609, %v544
      %v1640 = vmul.f32 %v1614, %v544
      %v1641 = vmul.f32 %v1619, %v544
      %v1642 = vmul.f32 %v1624, %v544
      %v1643 = vmul.f32 %v1629, %v544
      %v1644 = vmul.f32 %v1634, %v544
      %v1645 = vadd.f32 %v1465, %v1636
      %v1646 = vadd.f32 %v1466, %v1637
      %v1647 = vadd.f32 %v1467, %v1638
      %v1648 = vadd.f32 %v1468, %v1639
      %v1649 = vadd.f32 %v1469, %v1640
      %v1650 = vadd.f32 %v1470, %v1641
      %v1651 = vadd.f32 %v1471, %v1642
      %v1652 = vadd.f32 %v1472, %v1643
      %v1653 = vadd.f32 %v1473, %v1644
      %v1654 = vmul.f32 %v1594, %v421
      %v1655 = vmul.f32 %v1599, %v421
      %v1656 = vmul.f32 %v1604, %v421
      %v1657 = vmul.f32 %v1609, %v421
      %v1658 = vmul.f32 %v1614, %v421
      %v1659 = vmul.f32 %v1619, %v421
      %v1660 = vmul.f32 %v1624, %v421
      %v1661 = vmul.f32 %v1629, %v421
      %v1662 = vmul.f32 %v1634, %v421
      %v1663 = vadd.f32 %v1573, %v1654
      %v1664 = vadd.f32 %v1574, %v1655
      %v1665 = vadd.f32 %v1575, %v1656
      %v1666 = vadd.f32 %v1576, %v1657
      %v1667 = vadd.f32 %v1577, %v1658
      %v1668 = vadd.f32 %v1578, %v1659
      %v1669 = vadd.f32 %v1579, %v1660
      %v1670 = vadd.f32 %v1580, %v1661
      %v1671 = vadd.f32 %v1581, %v1662
      %v1672 = vld [vmem:[%s1365 + $0xa] sm:$0xff]
      %v1673 = vld [vmem:[%s1365 + $0x12] sm:$0xff]
      %v1674 = vld [vmem:[%s1365 + $0x1a] sm:$0xff]
      %v1675 = vld [vmem:[%s1365 + $0x22] sm:$0xff]
      %v1676 = vld [vmem:[%s1365 + $0x2a] sm:$0xff]
      %v1677 = vld [vmem:[%s1365 + $0x32] sm:$0xff]
      %v1678 = vld [vmem:[%s1365 + $0x3a] sm:$0xff]
      %v1679 = vld [vmem:[%s1365 + $0x42] sm:$0xff]
      %v1680 = vld [vmem:[%s1365 + $0x4a] sm:$0xff]
      %1682 = vset.pattern.permute.xlu0 0
      %1683 = vperm.xlu0 %1682, %v1672
      %v1684 = vpop.permute.xlu0 %1683
      %1687 = vset.pattern.permute.xlu0 0
      %1688 = vperm.xlu0 %1687, %v1673
      %v1689 = vpop.permute.xlu0 %1688
      %1692 = vset.pattern.permute.xlu0 0
      %1693 = vperm.xlu0 %1692, %v1674
      %v1694 = vpop.permute.xlu0 %1693
      %1697 = vset.pattern.permute.xlu0 0
      %1698 = vperm.xlu0 %1697, %v1675
      %v1699 = vpop.permute.xlu0 %1698
      %1702 = vset.pattern.permute.xlu0 0
      %1703 = vperm.xlu0 %1702, %v1676
      %v1704 = vpop.permute.xlu0 %1703
      %1707 = vset.pattern.permute.xlu0 0
      %1708 = vperm.xlu0 %1707, %v1677
      %v1709 = vpop.permute.xlu0 %1708
      %1712 = vset.pattern.permute.xlu0 0
      %1713 = vperm.xlu0 %1712, %v1678
      %v1714 = vpop.permute.xlu0 %1713
      %1717 = vset.pattern.permute.xlu0 0
      %1718 = vperm.xlu0 %1717, %v1679
      %v1719 = vpop.permute.xlu0 %1718
      %1722 = vset.pattern.permute.xlu0 0
      %1723 = vperm.xlu0 %1722, %v1680
      %v1724 = vpop.permute.xlu0 %1723
      %v1726 = vmul.f32 %v1684, %v518
      %v1727 = vmul.f32 %v1689, %v518
      %v1728 = vmul.f32 %v1694, %v518
      %v1729 = vmul.f32 %v1699, %v518
      %v1730 = vmul.f32 %v1704, %v518
      %v1731 = vmul.f32 %v1709, %v518
      %v1732 = vmul.f32 %v1714, %v518
      %v1733 = vmul.f32 %v1719, %v518
      %v1734 = vmul.f32 %v1724, %v518
      %v1735 = vadd.f32 %v1663, %v1726
      %v1736 = vadd.f32 %v1664, %v1727
      %v1737 = vadd.f32 %v1665, %v1728
      %v1738 = vadd.f32 %v1666, %v1729
      %v1739 = vadd.f32 %v1667, %v1730
      %v1740 = vadd.f32 %v1668, %v1731
      %v1741 = vadd.f32 %v1669, %v1732
      %v1742 = vadd.f32 %v1670, %v1733
      %v1743 = vadd.f32 %v1671, %v1734
      %v1744 = vmax.f32 %v1429, %v1555
      %v1745 = vmax.f32 %v1430, %v1556
      %v1746 = vmax.f32 %v1431, %v1557
      %v1747 = vmax.f32 %v1432, %v1558
      %v1748 = vmax.f32 %v1433, %v1559
      %v1749 = vmax.f32 %v1434, %v1560
      %v1750 = vmax.f32 %v1435, %v1561
      %v1751 = vmax.f32 %v1436, %v1562
      %v1752 = vmax.f32 %v1437, %v1563
      %v1753 = vmax.f32 %v1645, %v1735
      %v1754 = vmax.f32 %v1646, %v1736
      %v1755 = vmax.f32 %v1647, %v1737
      %v1756 = vmax.f32 %v1648, %v1738
      %v1757 = vmax.f32 %v1649, %v1739
      %v1758 = vmax.f32 %v1650, %v1740
      %v1759 = vmax.f32 %v1651, %v1741
      %v1760 = vmax.f32 %v1652, %v1742
      %v1761 = vmax.f32 %v1653, %v1743
      %v1762 = vmax.f32 %v1744, %v1753
      %v1763 = vmax.f32 %v1745, %v1754
      %v1764 = vmax.f32 %v1746, %v1755
      %v1765 = vmax.f32 %v1747, %v1756
      %v1766 = vmax.f32 %v1748, %v1757
      %v1767 = vmax.f32 %v1749, %v1758
      %v1768 = vmax.f32 %v1750, %v1759
      %v1769 = vmax.f32 %v1751, %v1760
      %v1770 = vmax.f32 %v1752, %v1761
      %v1771 = vld [vmem:[%s2] sm:$0x1]
      %v1773 = vlaneseq
      %v1774 = vshrl.u32 %v1773, 7
      %v1775 = vsub.s32 0, %v1774
      %v1776 = vrot.slane %v1771, %v1775
      %v1778 = vadd.f32 %v1762, %v1776
      %v1779 = vadd.f32 %v1763, %v1776
      %v1780 = vadd.f32 %v1764, %v1776
      %v1781 = vadd.f32 %v1765, %v1776
      %v1782 = vadd.f32 %v1766, %v1776
      %v1783 = vadd.f32 %v1767, %v1776
      %v1784 = vadd.f32 %v1768, %v1776
      %v1785 = vadd.f32 %v1769, %v1776
      %v1786 = vadd.f32 %v1770, %v1776
      %v1787 = vmax.f32 %v1778, 0.0
      %v1788 = vmax.f32 %v1779, 0.0
      %v1789 = vmax.f32 %v1780, 0.0
      %v1790 = vmax.f32 %v1781, 0.0
      %v1791 = vmax.f32 %v1782, 0.0
      %v1792 = vmax.f32 %v1783, 0.0
      %v1793 = vmax.f32 %v1784, 0.0
      %v1794 = vmax.f32 %v1785, 0.0
      %v1795 = vmax.f32 %v1786, 0.0
      %vm1796 = vcmask 261120
      %1797 = vst.msk [vmem:[%s192] sm:$0xff] %vm1796, %v1787
      %1798 = vst.msk [vmem:[%s192 + $0x8] sm:$0xff] %vm1796, %v1788
      %1799 = vst.msk [vmem:[%s192 + $0x10] sm:$0xff] %vm1796, %v1789
      %1800 = vst.msk [vmem:[%s192 + $0x18] sm:$0xff] %vm1796, %v1790
      %1801 = vst.msk [vmem:[%s192 + $0x20] sm:$0xff] %vm1796, %v1791
      %1802 = vst.msk [vmem:[%s192 + $0x28] sm:$0xff] %vm1796, %v1792
      %1803 = vst.msk [vmem:[%s192 + $0x30] sm:$0xff] %vm1796, %v1793
      %1804 = vst.msk [vmem:[%s192 + $0x38] sm:$0xff] %vm1796, %v1794
      %1805 = vst.msk [vmem:[%s192 + $0x40] sm:$0xff] %vm1796, %v1795
      %s1806 = smul.u32 9, %s19
      %p1807 = scmp.lt.s32.totalorder %s18, 1
      %s1808 = scalar_select %p1807, %s18, 1
      %p1809 = scmp.lt.s32.totalorder %s1806, 8
      %s1810 = scalar_select %p1809, %s1806, 8
      %s1811 = smul.addr %s1808, 9
      %s1812 = sadd.s32 %s1810, %s1811
      %s1813 = smul.addr %s1812, 8
      %s1814 = scalar_lea.vmem %s3, %s1813
      // Predicated region
      $region33: #{chord_detector_forward.4} parent=31 // pred_check
        %p1815 = pneg %p114
      $region34: #{chord_detector_forward.4} parent=31 // pred_check_branch
        %1817 = sbr.rel (%p1815) target = $region36
      $region35: #{chord_detector_forward.4} parent=31 // pred_region
        %s1818 = smul.u32 9, %s19
      $region36: #{chord_detector_forward.4} parent=31 // pred_fallthru
        _
    $region32: #{chord_detector_forward.4} parent=5 // pred_fallthru
      _
    %p1819 = scmp.le.s32.totalorder 2, %s9
    // Predicated region
    $region37: #{chord_detector_forward.4} parent=5 // pred_check
      %p1820 = pneg %p1819
    $region38: #{chord_detector_forward.4} parent=5 // pred_check_branch
      %1822 = sbr.rel (%p1820) target = $region40
    $region39: #{chord_detector_forward.4} parent=5 // pred_region
      %s1823 = ssub.s32 %s9, 2
      // Predicated region
      $region41: #{chord_detector_forward.4} parent=39 // pred_check
        %p1824 = pneg %p120
      $region42: #{chord_detector_forward.4} parent=39 // pred_check_branch
        %1826 = sbr.rel (%p1824) target = $region44
      $region43: #{chord_detector_forward.4} parent=39 // pred_region
        %s1827 = smul.u32 9, %s21
        %p1828 = scmp.lt.s32.totalorder %s20, 1
        %s1829 = scalar_select %p1828, %s20, 1
        %p1830 = scmp.lt.s32.totalorder %s1827, 8
        %s1831 = scalar_select %p1830, %s1827, 8
        %s1832 = smul.addr %s1829, 9
        %s1833 = sadd.s32 %s1831, %s1832
        %s1834 = smul.addr %s1833, 8
        %s1835 = scalar_lea.vmem %s3, %s1834
      $region44: #{chord_detector_forward.4} parent=39 // pred_fallthru
        _
    $region40: #{chord_detector_forward.4} parent=5 // pred_fallthru
      _
  $region6: #{chord_detector_forward.4} parent=0 // loop_footer
    %s13 = sadd.s32 1, %s9
  $region7: #{chord_detector_forward.4} parent=0 // loop_footer_branch
    %8 = sbr.rel target = $region3
  $region8: #{chord_detector_forward.4} parent=0 // loop_exit
    _

// kernel: chord_detector_forward.7
$region0: #{chord_detector_forward.7}
  #allocation0 [shape = 'u32[]', space=smem, size = 0x4, offset = 0x4, fixed_abs, tag = 'smem constant byte address 0x4 - core index']
  #allocation1 [shape = 'u32[144,128]{1,0:T(1,128)}', space=vmem, size = 0x12000, scoped, tag = 'internal scratch']
  #allocation2 [shape = 'f32[1,256]{1,0:T(1,128)}', space=vmem, size = 0x400, scoped, tag = 'scratch operand']
  %s0 = inlined_call_operand.vmem [shape: f32[2,1,512], index: 0, kind: input, shape index: {}]
  %s1 = inlined_call_operand.vmem [shape: f32[512,256], index: 1, kind: input, shape index: {}]
  %s2 = inlined_call_operand.vmem [shape: f32[1,256], index: 2, kind: input, shape index: {}]
  %s3 = inlined_call_operand.vmem [shape: f32[256,128], index: 3, kind: input, shape index: {}]
  %s4 = inlined_call_operand.vmem [shape: f32[1,128], index: 4, kind: input, shape index: {}]
  %s5 = inlined_call_operand.hbm [shape: f32[2,1,128], index: 5, kind: output, shape index: {}]
  %s6 = sld [smem:[#allocation0]]
  $region61: #{chord_detector_forward.7} parent=0
    _
  %s8 = ssub.s32 1, %s6
  %s9 = scalar_select 0, %s8, %s6
  $region1: #{chord_detector_forward.7} parent=0
    #allocation3 [shape = 'u8[1024]{0}', space=vmem, size = 0x400, scoped, tag = 'output window, operand 0']
    #allocation4 [shape = 's32[2]{0}', space=sflag, size = 0x8, scoped, tag = 'scoped memory for chord_detector_forward.7']
    %10 = vsyncpa [#allocation4], 0
    %s11 = scalar_lea.sflag [#allocation4], 1
    %12 = vsyncpa %s11, 0
    loop: start=0, step=1, limit=4
    $region2: #{chord_detector_forward.7} parent=1 // loop_pre_header
      _
    $region3: #{chord_detector_forward.7} parent=1 // loop_header
      %s14 = sphi 0, %s18
      %p15 = scmp.ge.s32.totalorder %s14, 4
      %s21 = sphi 0, %s33
      %s22 = sphi 0, %s29
      %s23 = sphi 0, %s21
      %s24 = sphi 0, %s22
      %s25 = sphi 0, %s23
      %s26 = sphi 0, %s24
      %s38 = sphi 0, %s40
      %s41 = sphi 0, %s38
      %s42 = sphi 0, %s41
      %s58 = sphi 0, %s42
      %s64 = sphi 0, %s66
      %s67 = sphi 0, %s64
      %s68 = sphi 0, %s67
      %s84 = sphi 0, %s68
      %s88 = sphi 0, %s88
      %s90 = sphi 0, %s88
      %s91 = sphi 0, %s90
      %s105 = sphi 0, %s91
      %s109 = sphi 0, %s109
      %s111 = sphi 0, %s109
      %s112 = sphi 0, %s111
      %s126 = sphi 0, %s112
      %s130 = sphi 0, %s130
      %s132 = sphi 0, %s130
      %s133 = sphi 0, %s132
      %s147 = sphi 0, %s133
      %s153 = sphi 0, %s155
      %s156 = sphi 0, %s153
      %s157 = sphi 0, %s156
      %s173 = sphi 0, %s157
    $region4: #{chord_detector_forward.7} parent=1 // loop_header_branch
      %17 = sbr.rel (%p15) target = $region8
    $region5: #{chord_detector_forward.7} parent=1 // loop_body
      %s19 = ssub.s32 %s14, 1
      %s20 = ssub.s32 %s14, 2
      %s27 = sadd.s32 1, %s22
      %p28 = scmp.ge.s32.totalorder %s27, 1
      %s29 = scalar_select %p28, 0, %s27
      %s30 = sadd.s32 1, %s21
      %s31 = scalar_select %p28, %s30, %s21
      %p32 = scmp.ge.s32.totalorder %s31, 2
      %s33 = scalar_select %p32, 0, %s31
      %s34 = ssub.s32 %s21, %s33
      %s35 = ssub.s32 %s22, %s29
      %s36 = sor.u32 %s34, %s35
      %p37 = scmp.eq.s32.totalorder %s36, 0
      %s39 = sadd.s32 %s38, 1
      %s40 = scalar_select %p37, %s38, %s39
      %p43 = pneg %p37
      %p44 = scmp.eq.s32.totalorder %s14, 1
      %p45 = por %p43, %p44
      %p46 = scmp.ne.s32.totalorder %s38, %s41
      %p47 = scmp.eq.s32.totalorder %s14, 0
      %p48 = por %p46, %p47
      %p49 = scmp.ne.s32.totalorder %s38, %s41
      %p50 = scmp.eq.s32.totalorder %s19, 1
      %p51 = por %p49, %p50
      %p52 = scmp.ne.s32.totalorder %s41, %s42
      %p53 = scmp.eq.s32.totalorder %s19, 0
      %p54 = por %p52, %p53
      %p55 = scmp.ne.s32.totalorder %s41, %s42
      %p56 = scmp.eq.s32.totalorder %s20, 1
      %p57 = por %p55, %p56
      %p59 = scmp.ne.s32.totalorder %s42, %s58
      %p60 = scmp.eq.s32.totalorder %s20, 0
      %p61 = por %p59, %p60
      %s62 = ssub.s32 %s22, %s29
      %p63 = scmp.eq.s32.totalorder %s62, 0
      %s65 = sadd.s32 %s64, 1
      %s66 = scalar_select %p63, %s64, %s65
      %p69 = pneg %p63
      %p70 = scmp.eq.s32.totalorder %s14, 1
      %p71 = por %p69, %p70
      %p72 = scmp.ne.s32.totalorder %s64, %s67
      %p73 = scmp.eq.s32.totalorder %s14, 0
      %p74 = por %p72, %p73
      %p75 = scmp.ne.s32.totalorder %s64, %s67
      %p76 = scmp.eq.s32.totalorder %s19, 1
      %p77 = por %p75, %p76
      %p78 = scmp.ne.s32.totalorder %s67, %s68
      %p79 = scmp.eq.s32.totalorder %s19, 0
      %p80 = por %p78, %p79
      %p81 = scmp.ne.s32.totalorder %s67, %s68
      %p82 = scmp.eq.s32.totalorder %s20, 1
      %p83 = por %p81, %p82
      %p85 = scmp.ne.s32.totalorder %s68, %s84
      %p86 = scmp.eq.s32.totalorder %s20, 0
      %p87 = por %p85, %p86
      %s89 = sadd.s32 %s88, 1
      %p92 = scmp.eq.s32.totalorder %s14, 1
      %p93 = scmp.ne.s32.totalorder %s88, %s90
      %p94 = scmp.eq.s32.totalorder %s14, 0
      %p95 = por %p93, %p94
      %p96 = scmp.ne.s32.totalorder %s88, %s90
      %p97 = scmp.eq.s32.totalorder %s19, 1
      %p98 = por %p96, %p97
      %p99 = scmp.ne.s32.totalorder %s90, %s91
      %p100 = scmp.eq.s32.totalorder %s19, 0
      %p101 = por %p99, %p100
      %p102 = scmp.ne.s32.totalorder %s90, %s91
      %p103 = scmp.eq.s32.totalorder %s20, 1
      %p104 = por %p102, %p103
      %p106 = scmp.ne.s32.totalorder %s91, %s105
      %p107 = scmp.eq.s32.totalorder %s20, 0
      %p108 = por %p106, %p107
      %s110 = sadd.s32 %s109, 1
      %p113 = scmp.eq.s32.totalorder %s14, 1
      %p114 = scmp.ne.s32.totalorder %s109, %s111
      %p115 = scmp.eq.s32.totalorder %s14, 0
      %p116 = por %p114, %p115
      %p117 = scmp.ne.s32.totalorder %s109, %s111
      %p118 = scmp.eq.s32.totalorder %s19, 1
      %p119 = por %p117, %p118
      %p120 = scmp.ne.s32.totalorder %s111, %s112
      %p121 = scmp.eq.s32.totalorder %s19, 0
      %p122 = por %p120, %p121
      %p123 = scmp.ne.s32.totalorder %s111, %s112
      %p124 = scmp.eq.s32.totalorder %s20, 1
      %p125 = por %p123, %p124
      %p127 = scmp.ne.s32.totalorder %s112, %s126
      %p128 = scmp.eq.s32.totalorder %s20, 0
      %p129 = por %p127, %p128
      %s131 = sadd.s32 %s130, 1
      %p134 = scmp.eq.s32.totalorder %s14, 1
      %p135 = scmp.ne.s32.totalorder %s130, %s132
      %p136 = scmp.eq.s32.totalorder %s14, 0
      %p137 = por %p135, %p136
      %p138 = scmp.ne.s32.totalorder %s130, %s132
      %p139 = scmp.eq.s32.totalorder %s19, 1
      %p140 = por %p138, %p139
      %p141 = scmp.ne.s32.totalorder %s132, %s133
      %p142 = scmp.eq.s32.totalorder %s19, 0
      %p143 = por %p141, %p142
      %p144 = scmp.ne.s32.totalorder %s132, %s133
      %p145 = scmp.eq.s32.totalorder %s20, 1
      %p146 = por %p144, %p145
      %p148 = scmp.ne.s32.totalorder %s133, %s147
      %p149 = scmp.eq.s32.totalorder %s20, 0
      %p150 = por %p148, %p149
      %s151 = ssub.s32 %s21, %s33
      %p152 = scmp.eq.s32.totalorder %s151, 0
      %s154 = sadd.s32 %s153, 1
      %s155 = scalar_select %p152, %s153, %s154
      %p158 = pneg %p152
      %p159 = scmp.eq.s32.totalorder %s14, 1
      %p160 = por %p158, %p159
      %p161 = scmp.ne.s32.totalorder %s153, %s156
      %p162 = scmp.eq.s32.totalorder %s14, 0
      %p163 = por %p161, %p162
      %p164 = scmp.ne.s32.totalorder %s153, %s156
      %p165 = scmp.eq.s32.totalorder %s19, 1
      %p166 = por %p164, %p165
      %p167 = scmp.ne.s32.totalorder %s156, %s157
      %p168 = scmp.eq.s32.totalorder %s19, 0
      %p169 = por %p167, %p168
      %p170 = scmp.ne.s32.totalorder %s156, %s157
      %p171 = scmp.eq.s32.totalorder %s20, 1
      %p172 = por %p170, %p171
      %p174 = scmp.ne.s32.totalorder %s157, %s173
      %p175 = scmp.eq.s32.totalorder %s20, 0
      %p176 = por %p174, %p175
      %p177 = scmp.le.s32.totalorder 1, %s14
      %p178 = scmp.lt.s32.totalorder %s14, 3
      %p179 = pnand %p177, %p178
      %p180 = pneg %p179
      // Predicated region
      $region9: #{chord_detector_forward.7} parent=5 // pred_check
        _
      $region10: #{chord_detector_forward.7} parent=5 // pred_check_branch
        %182 = sbr.rel (%p179) target = $region12
      $region11: #{chord_detector_forward.7} parent=5 // pred_region
        %s183 = ssub.s32 %s14, 1
        // Predicated region
        $region13: #{chord_detector_forward.7} parent=11 // pred_check
          %p184 = pneg %p80
        $region14: #{chord_detector_forward.7} parent=11 // pred_check_branch
          %186 = sbr.rel (%p184) target = $region16
        $region15: #{chord_detector_forward.7} parent=11 // pred_region
          %s187 = smul.u32 64, %s24
          %p188 = scmp.lt.s32.totalorder %s187, 63
          %s189 = scalar_select %p188, %s187, 63
          %s190 = smul.addr %s189, 2
          %s191 = smul.addr %s190, 8
          %s192 = scalar_lea.vmem %s1, %s191
          %s193 = smul.u32 64, %s24
        $region16: #{chord_detector_forward.7} parent=11 // pred_fallthru
          _
        // Predicated region
        $region17: #{chord_detector_forward.7} parent=11 // pred_check
          %p194 = pneg %p101
        $region18: #{chord_detector_forward.7} parent=11 // pred_check_branch
          %196 = sbr.rel (%p194) target = $region20
        $region19: #{chord_detector_forward.7} parent=11 // pred_region
          _
        $region20: #{chord_detector_forward.7} parent=11 // pred_fallthru
          _
        // Predicated region
        $region21: #{chord_detector_forward.7} parent=11 // pred_check
          %p197 = pneg %p122
        $region22: #{chord_detector_forward.7} parent=11 // pred_check_branch
          %199 = sbr.rel (%p197) target = $region24
        $region23: #{chord_detector_forward.7} parent=11 // pred_region
          _
        $region24: #{chord_detector_forward.7} parent=11 // pred_fallthru
          _
        // Predicated region
        $region25: #{chord_detector_forward.7} parent=11 // pred_check
          %p200 = pneg %p143
        $region26: #{chord_detector_forward.7} parent=11 // pred_check_branch
          %202 = sbr.rel (%p200) target = $region28
        $region27: #{chord_detector_forward.7} parent=11 // pred_region
          _
        $region28: #{chord_detector_forward.7} parent=11 // pred_fallthru
          _
      $region12: #{chord_detector_forward.7} parent=5 // pred_fallthru
        _
      %p203 = scmp.lt.s32.totalorder %s14, 2
      // Predicated region
      $region29: #{chord_detector_forward.7} parent=5 // pred_check
        %p204 = pneg %p203
      $region30: #{chord_detector_forward.7} parent=5 // pred_check_branch
        %206 = sbr.rel (%p204) target = $region32
      $region31: #{chord_detector_forward.7} parent=5 // pred_region
        // Predicated region
        $region33: #{chord_detector_forward.7} parent=31 // pred_check
          %p207 = pneg %p48
        $region34: #{chord_detector_forward.7} parent=31 // pred_check_branch
          %209 = sbr.rel (%p207) target = $region36
        $region35: #{chord_detector_forward.7} parent=31 // pred_region
          %s210 = smul.u32 4, %s22
          %p211 = scmp.lt.s32.totalorder %s21, 1
          %s212 = scalar_select %p211, %s21, 1
          %p213 = scmp.lt.s32.totalorder %s210, 3
          %s214 = scalar_select %p213, %s210, 3
          %s215 = smul.addr %s212, 4
          %s216 = sadd.s32 %s214, %s215
          %s217 = scalar_lea.vmem %s0, %s216
          %s218 = smul.u32 4, %s22
        $region36: #{chord_detector_forward.7} parent=31 // pred_fallthru
          _
      $region32: #{chord_detector_forward.7} parent=5 // pred_fallthru
        _
      %p219 = scmp.le.s32.totalorder 1, %s14
      %p220 = scmp.lt.s32.totalorder %s14, 3
      %p221 = pnand %p219, %p220
      %p222 = pneg %p221
      // Predicated region
      $region37: #{chord_detector_forward.7} parent=5 // pred_check
        _
      $region38: #{chord_detector_forward.7} parent=5 // pred_check_branch
        %224 = sbr.rel (%p221) target = $region40
      $region39: #{chord_detector_forward.7} parent=5 // pred_region
        %s225 = ssub.s32 %s14, 1
        %s226 = smul.u32 4, %s24
        %p227 = scmp.lt.s32.totalorder %s23, 1
        %s228 = scalar_select %p227, %s23, 1
        %p229 = scmp.lt.s32.totalorder %s226, 3
        %s230 = scalar_select %p229, %s226, 3
        %s231 = smul.addr %s228, 4
        %s232 = sadd.s32 %s230, %s231
        %s233 = scalar_lea.vmem %s0, %s232
        %p234 = pneg %p54
        %p235 = pneg %p51
        %s236 = smul.u32 64, %s24
        %p237 = scmp.lt.s32.totalorder %s236, 63
        %s238 = scalar_select %p237, %s236, 63
        %s239 = smul.addr %s238, 2
        %s240 = smul.addr %s239, 8
        %s241 = scalar_lea.vmem %s1, %s240
        %p242 = pneg %p80
        %p243 = pneg %p77
        %p244 = pneg %p101
        %p245 = pneg %p98
        %p246 = pneg %p122
        %p247 = pneg %p119
        %p248 = pneg %p143
        %p249 = pneg %p140
        %p250 = pneg %p169
        %p251 = pneg %p166
        %s252 = sand.u32 %s156, 1
        %s253 = scalar_lea.sflag [#allocation4], %s252
        %s254 = sand.u32 %s156, 1
        %s255 = scalar_lea.vmem [#allocation3], %s254
        %s256 = smul.u32 4, %s24
        %p257 = scmp.lt.s32.totalorder %s23, 1
        %s258 = scalar_select %p257, %s23, 1
        %p259 = scmp.lt.s32.totalorder %s256, 3
        %s260 = scalar_select %p259, %s256, 3
        %s261 = smul.addr %s258, 4
        %s262 = sadd.s32 %s260, %s261
        %s263 = scalar_lea.vmem %s0, %s262
        %s264 = smul.u32 4, %s24
        %s265 = smul.u32 64, %s24
        %p266 = scmp.lt.s32.totalorder %s265, 63
        %s267 = scalar_select %p266, %s265, 63
        %s268 = smul.addr %s267, 2
        %s269 = smul.addr %s268, 8
        %s270 = scalar_lea.vmem %s1, %s269
        %s271 = smul.u32 64, %s24
        %p272 = scmp.eq.s32.totalorder %s24, 0
        // Predicated region
        $region41: #{chord_detector_forward.7} parent=39 // pred_check
          %p273 = pneg %p272
        $region42: #{chord_detector_forward.7} parent=39 // pred_check_branch
          %275 = sbr.rel (%p273) target = $region44
        $region43: #{chord_detector_forward.7} parent=39 // pred_region
          %v276 = vlaneseq
          %vm277 = vcmp.ge.s32.totalorder %v276, 0
          %vm278 = vcmp.lt.s32.totalorder %v276, 256
          %vm279 = vmand %vm277, %vm278
          %280 = vst.msk [vmem:[#allocation2] sm:$0x3] %vm279, 0.0
        $region44: #{chord_detector_forward.7} parent=39 // pred_fallthru
          _
        %v281 = vld [vmem:[#allocation2] sm:$0x3]
        %v282 = vld [vmem:[%s263] sm:$0xf]
        %v283 = vld [vmem:[%s270] sm:$0xff]
        %v284 = vld [vmem:[%s270 + $0x8] sm:$0xff]
        %v285 = vld [vmem:[%s270 + $0x10] sm:$0xff]
        %v286 = vld [vmem:[%s270 + $0x18] sm:$0xff]
        %v287 = vld [vmem:[%s270 + $0x20] sm:$0xff]
        %v288 = vld [vmem:[%s270 + $0x28] sm:$0xff]
        %v289 = vld [vmem:[%s270 + $0x30] sm:$0xff]
        %v290 = vld [vmem:[%s270 + $0x38] sm:$0xff]
        %v291 = vld [vmem:[%s270 + $0x40] sm:$0xff]
        %v292 = vld [vmem:[%s270 + $0x48] sm:$0xff]
        %v293 = vld [vmem:[%s270 + $0x50] sm:$0xff]
        %v294 = vld [vmem:[%s270 + $0x58] sm:$0xff]
        %v295 = vld [vmem:[%s270 + $0x60] sm:$0xff]
        %v296 = vld [vmem:[%s270 + $0x68] sm:$0xff]
        %v297 = vld [vmem:[%s270 + $0x70] sm:$0xff]
        %v298 = vld [vmem:[%s270 + $0x78] sm:$0xff]
        %v299 = vld [vmem:[%s270 + $0x80] sm:$0xff]
        %v300 = vld [vmem:[%s270 + $0x88] sm:$0xff]
        %v301 = vld [vmem:[%s270 + $0x90] sm:$0xff]
        %v302 = vld [vmem:[%s270 + $0x98] sm:$0xff]
        %v303 = vld [vmem:[%s270 + $0xa0] sm:$0xff]
        %v304 = vld [vmem:[%s270 + $0xa8] sm:$0xff]
        %v305 = vld [vmem:[%s270 + $0xb0] sm:$0xff]
        %v306 = vld [vmem:[%s270 + $0xb8] sm:$0xff]
        %v307 = vld [vmem:[%s270 + $0xc0] sm:$0xff]
        %v308 = vld [vmem:[%s270 + $0xc8] sm:$0xff]
        %v309 = vld [vmem:[%s270 + $0xd0] sm:$0xff]
        %v310 = vld [vmem:[%s270 + $0xd8] sm:$0xff]
        %v311 = vld [vmem:[%s270 + $0xe0] sm:$0xff]
        %v312 = vld [vmem:[%s270 + $0xe8] sm:$0xff]
        %v313 = vld [vmem:[%s270 + $0xf0] sm:$0xff]
        %v314 = vld [vmem:[%s270 + $0xf8] sm:$0xff]
        %v315 = vld [vmem:[%s270 + $0x100] sm:$0xff]
        %v316 = vld [vmem:[%s270 + $0x108] sm:$0xff]
        %v317 = vld [vmem:[%s270 + $0x110] sm:$0xff]
        %v318 = vld [vmem:[%s270 + $0x118] sm:$0xff]
        %v319 = vld [vmem:[%s270 + $0x120] sm:$0xff]
        %v320 = vld [vmem:[%s270 + $0x128] sm:$0xff]
        %v321 = vld [vmem:[%s270 + $0x130] sm:$0xff]
        %v322 = vld [vmem:[%s270 + $0x138] sm:$0xff]
        %v323 = vld [vmem:[%s270 + $0x140] sm:$0xff]
        %v324 = vld [vmem:[%s270 + $0x148] sm:$0xff]
        %v325 = vld [vmem:[%s270 + $0x150] sm:$0xff]
        %v326 = vld [vmem:[%s270 + $0x158] sm:$0xff]
        %v327 = vld [vmem:[%s270 + $0x160] sm:$0xff]
        %v328 = vld [vmem:[%s270 + $0x168] sm:$0xff]
        %v329 = vld [vmem:[%s270 + $0x170] sm:$0xff]
        %v330 = vld [vmem:[%s270 + $0x178] sm:$0xff]
        %v331 = vld [vmem:[%s270 + $0x180] sm:$0xff]
        %v332 = vld [vmem:[%s270 + $0x188] sm:$0xff]
        %v333 = vld [vmem:[%s270 + $0x190] sm:$0xff]
        %v334 = vld [vmem:[%s270 + $0x198] sm:$0xff]
        %v335 = vld [vmem:[%s270 + $0x1a0] sm:$0xff]
        %v336 = vld [vmem:[%s270 + $0x1a8] sm:$0xff]
        %v337 = vld [vmem:[%s270 + $0x1b0] sm:$0xff]
        %v338 = vld [vmem:[%s270 + $0x1b8] sm:$0xff]
        %v339 = vld [vmem:[%s270 + $0x1c0] sm:$0xff]
        %v340 = vld [vmem:[%s270 + $0x1c8] sm:$0xff]
        %v341 = vld [vmem:[%s270 + $0x1d0] sm:$0xff]
        %v342 = vld [vmem:[%s270 + $0x1d8] sm:$0xff]
        %v343 = vld [vmem:[%s270 + $0x1e0] sm:$0xff]
        %v344 = vld [vmem:[%s270 + $0x1e8] sm:$0xff]
        %v345 = vld [vmem:[%s270 + $0x1f0] sm:$0xff]
        %v346 = vld [vmem:[%s270 + $0x1f8] sm:$0xff]
        %v347 = vld [vmem:[%s270 + $0x200] sm:$0xff]
        %v348 = vld [vmem:[%s270 + $0x208] sm:$0xff]
        %v349 = vld [vmem:[%s270 + $0x210] sm:$0xff]
        %v350 = vld [vmem:[%s270 + $0x218] sm:$0xff]
        %v351 = vld [vmem:[%s270 + $0x220] sm:$0xff]
        %v352 = vld [vmem:[%s270 + $0x228] sm:$0xff]
        %v353 = vld [vmem:[%s270 + $0x230] sm:$0xff]
        %v354 = vld [vmem:[%s270 + $0x238] sm:$0xff]
        %v355 = vld [vmem:[%s270 + $0x240] sm:$0xff]
        %v356 = vld [vmem:[%s270 + $0x248] sm:$0xff]
        %v357 = vld [vmem:[%s270 + $0x250] sm:$0xff]
        %v358 = vld [vmem:[%s270 + $0x258] sm:$0xff]
        %v359 = vld [vmem:[%s270 + $0x260] sm:$0xff]
        %v360 = vld [vmem:[%s270 + $0x268] sm:$0xff]
        %v361 = vld [vmem:[%s270 + $0x270] sm:$0xff]
        %v362 = vld [vmem:[%s270 + $0x278] sm:$0xff]
        %v363 = vld [vmem:[%s270 + $0x280] sm:$0xff]
        %v364 = vld [vmem:[%s270 + $0x288] sm:$0xff]
        %v365 = vld [vmem:[%s270 + $0x290] sm:$0xff]
        %v366 = vld [vmem:[%s270 + $0x298] sm:$0xff]
        %v367 = vld [vmem:[%s270 + $0x2a0] sm:$0xff]
        %v368 = vld [vmem:[%s270 + $0x2a8] sm:$0xff]
        %v369 = vld [vmem:[%s270 + $0x2b0] sm:$0xff]
        %v370 = vld [vmem:[%s270 + $0x2b8] sm:$0xff]
        %v371 = vld [vmem:[%s270 + $0x2c0] sm:$0xff]
        %v372 = vld [vmem:[%s270 + $0x2c8] sm:$0xff]
        %v373 = vld [vmem:[%s270 + $0x2d0] sm:$0xff]
        %v374 = vld [vmem:[%s270 + $0x2d8] sm:$0xff]
        %v375 = vld [vmem:[%s270 + $0x2e0] sm:$0xff]
        %v376 = vld [vmem:[%s270 + $0x2e8] sm:$0xff]
        %v377 = vld [vmem:[%s270 + $0x2f0] sm:$0xff]
        %v378 = vld [vmem:[%s270 + $0x2f8] sm:$0xff]
        %v379 = vld [vmem:[%s270 + $0x300] sm:$0xff]
        %v380 = vld [vmem:[%s270 + $0x308] sm:$0xff]
        %v381 = vld [vmem:[%s270 + $0x310] sm:$0xff]
        %v382 = vld [vmem:[%s270 + $0x318] sm:$0xff]
        %v383 = vld [vmem:[%s270 + $0x320] sm:$0xff]
        %v384 = vld [vmem:[%s270 + $0x328] sm:$0xff]
        %v385 = vld [vmem:[%s270 + $0x330] sm:$0xff]
        %v386 = vld [vmem:[%s270 + $0x338] sm:$0xff]
        %v387 = vld [vmem:[%s270 + $0x340] sm:$0xff]
        %v388 = vld [vmem:[%s270 + $0x348] sm:$0xff]
        %v389 = vld [vmem:[%s270 + $0x350] sm:$0xff]
        %v390 = vld [vmem:[%s270 + $0x358] sm:$0xff]
        %v391 = vld [vmem:[%s270 + $0x360] sm:$0xff]
        %v392 = vld [vmem:[%s270 + $0x368] sm:$0xff]
        %v393 = vld [vmem:[%s270 + $0x370] sm:$0xff]
        %v394 = vld [vmem:[%s270 + $0x378] sm:$0xff]
        %v395 = vld [vmem:[%s270 + $0x380] sm:$0xff]
        %v396 = vld [vmem:[%s270 + $0x388] sm:$0xff]
        %v397 = vld [vmem:[%s270 + $0x390] sm:$0xff]
        %v398 = vld [vmem:[%s270 + $0x398] sm:$0xff]
        %v399 = vld [vmem:[%s270 + $0x3a0] sm:$0xff]
        %v400 = vld [vmem:[%s270 + $0x3a8] sm:$0xff]
        %v401 = vld [vmem:[%s270 + $0x3b0] sm:$0xff]
        %v402 = vld [vmem:[%s270 + $0x3b8] sm:$0xff]
        %v403 = vld [vmem:[%s270 + $0x3c0] sm:$0xff]
        %v404 = vld [vmem:[%s270 + $0x3c8] sm:$0xff]
        %v405 = vld [vmem:[%s270 + $0x3d0] sm:$0xff]
        %v406 = vld [vmem:[%s270 + $0x3d8] sm:$0xff]
        %v407 = vld [vmem:[%s270 + $0x3e0] sm:$0xff]
        %v408 = vld [vmem:[%s270 + $0x3e8] sm:$0xff]
        %v409 = vld [vmem:[%s270 + $0x3f0] sm:$0xff]
        %v410 = vld [vmem:[%s270 + $0x3f8] sm:$0xff]
        %v412 = vlaneseq
        %v413 = vshrl.u32 %v412, 7
        %v414 = vsub.s32 0, %v413
        %v415 = vrot.slane %v282, %v414
        %v416 = vlaneseq
        %v417 = vshrl.u32 %v416, 7
        %v418 = vsub.s32 1, %v417
        %v419 = vrot.slane %v282, %v418
        %v420 = vlaneseq
        %v421 = vshrl.u32 %v420, 7
        %v422 = vsub.s32 2, %v421
        %v423 = vrot.slane %v282, %v422
        %v424 = vlaneseq
        %v425 = vshrl.u32 %v424, 7
        %v426 = vsub.s32 3, %v425
        %v427 = vrot.slane %v282, %v426
        %432 = vmatprep.subr.mxu0 %v284
        %433 = vmatpush1.msra.mxu0 %v283
        %434 = vmatprep.subr.mxu0 %v286
        %435 = vmatpush1.msra.mxu0 %v285
        %436 = vmatprep.subr.mxu0 %v288
        %437 = vmatpush1.msra.mxu0 %v287
        %438 = vmatprep.subr.mxu0 %v290
        %439 = vmatpush1.msra.mxu0 %v289
        %440 = vmatprep.subr.mxu0 %v292
        %441 = vmatpush1.msra.mxu0 %v291
        %442 = vmatprep.subr.mxu0 %v294
        %443 = vmatpush1.msra.mxu0 %v293
        %444 = vmatprep.subr.mxu0 %v296
        %445 = vmatpush1.msra.mxu0 %v295
        %446 = vmatprep.subr.mxu0 %v298
        %447 = vmatpush1.msra.mxu0 %v297
        %448 = vmatprep.subr.mxu0 %v300
        %449 = vmatpush1.msra.mxu0 %v299
        %450 = vmatprep.subr.mxu0 %v302
        %451 = vmatpush1.msra.mxu0 %v301
        %452 = vmatprep.subr.mxu0 %v304
        %453 = vmatpush1.msra.mxu0 %v303
        %454 = vmatprep.subr.mxu0 %v306
        %455 = vmatpush1.msra.mxu0 %v305
        %456 = vmatprep.subr.mxu0 %v308
        %457 = vmatpush1.msra.mxu0 %v307
        %458 = vmatprep.subr.mxu0 %v310
        %459 = vmatpush1.msra.mxu0 %v309
        %460 = vmatprep.subr.mxu0 %v312
        %461 = vmatpush1.msra.mxu0 %v311
        %462 = vmatprep.subr.mxu0 %v314
        %463 = vmatpush1.msra.mxu0 %v313
        %464 = vmatprep.subr.mxu0 %v316
        %465 = vmatpush1.msra.mxu0 %v315
        %466 = vmatprep.subr.mxu0 %v318
        %467 = vmatpush1.msra.mxu0 %v317
        %468 = vmatprep.subr.mxu0 %v320
        %469 = vmatpush1.msra.mxu0 %v319
        %470 = vmatprep.subr.mxu0 %v322
        %471 = vmatpush1.msra.mxu0 %v321
        %472 = vmatprep.subr.mxu0 %v324
        %473 = vmatpush1.msra.mxu0 %v323
        %474 = vmatprep.subr.mxu0 %v326
        %475 = vmatpush1.msra.mxu0 %v325
        %476 = vmatprep.subr.mxu0 %v328
        %477 = vmatpush1.msra.mxu0 %v327
        %478 = vmatprep.subr.mxu0 %v330
        %479 = vmatpush1.msra.mxu0 %v329
        %480 = vmatprep.subr.mxu0 %v332
        %481 = vmatpush1.msra.mxu0 %v331
        %482 = vmatprep.subr.mxu0 %v334
        %483 = vmatpush1.msra.mxu0 %v333
        %484 = vmatprep.subr.mxu0 %v336
        %485 = vmatpush1.msra.mxu0 %v335
        %486 = vmatprep.subr.mxu0 %v338
        %487 = vmatpush1.msra.mxu0 %v337
        %488 = vmatprep.subr.mxu0 %v340
        %489 = vmatpush1.msra.mxu0 %v339
        %490 = vmatprep.subr.mxu0 %v342
        %491 = vmatpush1.msra.mxu0 %v341
        %492 = vmatprep.subr.mxu0 %v344
        %493 = vmatpush1.msra.mxu0 %v343
        %494 = vmatprep.subr.mxu0 %v346
        %495 = vmatpush1.msra.mxu0 %v345
        %496 = vmatprep.mubr.f32.mxu0 %v419
        %497 = vmatmul.mubr.f32.gmra.mrb[0].mxu0 %v415
        %v498 = vpop.f32.mrb[0].mxu0
        %v499 = vadd.f32 0.0, %v498
        %v500 = vpop.f32.mrb[0].mxu0
        %v501 = vadd.f32 0.0, %v500
        %502 = vdwg.mxu0
        %503 = vmatprep.subr.mxu0 %v348
        %504 = vmatpush1.msra.mxu0 %v347
        %505 = vmatprep.subr.mxu0 %v350
        %506 = vmatpush1.msra.mxu0 %v349
        %507 = vmatprep.subr.mxu0 %v352
        %508 = vmatpush1.msra.mxu0 %v351
        %509 = vmatprep.subr.mxu0 %v354
        %510 = vmatpush1.msra.mxu0 %v353
        %511 = vmatprep.subr.mxu0 %v356
        %512 = vmatpush1.msra.mxu0 %v355
        %513 = vmatprep.subr.mxu0 %v358
        %514 = vmatpush1.msra.mxu0 %v357
        %515 = vmatprep.subr.mxu0 %v360
        %516 = vmatpush1.msra.mxu0 %v359
        %517 = vmatprep.subr.mxu0 %v362
        %518 = vmatpush1.msra.mxu0 %v361
        %519 = vmatprep.subr.mxu0 %v364
        %520 = vmatpush1.msra.mxu0 %v363
        %521 = vmatprep.subr.mxu0 %v366
        %522 = vmatpush1.msra.mxu0 %v365
        %523 = vmatprep.subr.mxu0 %v368
        %524 = vmatpush1.msra.mxu0 %v367
        %525 = vmatprep.subr.mxu0 %v370
        %526 = vmatpush1.msra.mxu0 %v369
        %527 = vmatprep.subr.mxu0 %v372
        %528 = vmatpush1.msra.mxu0 %v371
        %529 = vmatprep.subr.mxu0 %v374
        %530 = vmatpush1.msra.mxu0 %v373
        %531 = vmatprep.subr.mxu0 %v376
        %532 = vmatpush1.msra.mxu0 %v375
        %533 = vmatprep.subr.mxu0 %v378
        %534 = vmatpush1.msra.mxu0 %v377
        %535 = vmatprep.subr.mxu0 %v380
        %536 = vmatpush1.msra.mxu0 %v379
        %537 = vmatprep.subr.mxu0 %v382
        %538 = vmatpush1.msra.mxu0 %v381
        %539 = vmatprep.subr.mxu0 %v384
        %540 = vmatpush1.msra.mxu0 %v383
        %541 = vmatprep.subr.mxu0 %v386
        %542 = vmatpush1.msra.mxu0 %v385
        %543 = vmatprep.subr.mxu0 %v388
        %544 = vmatpush1.msra.mxu0 %v387
        %545 = vmatprep.subr.mxu0 %v390
        %546 = vmatpush1.msra.mxu0 %v389
        %547 = vmatprep.subr.mxu0 %v392
        %548 = vmatpush1.msra.mxu0 %v391
        %549 = vmatprep.subr.mxu0 %v394
        %550 = vmatpush1.msra.mxu0 %v393
        %551 = vmatprep.subr.mxu0 %v396
        %552 = vmatpush1.msra.mxu0 %v395
        %553 = vmatprep.subr.mxu0 %v398
        %554 = vmatpush1.msra.mxu0 %v397
        %555 = vmatprep.subr.mxu0 %v400
        %556 = vmatpush1.msra.mxu0 %v399
        %557 = vmatprep.subr.mxu0 %v402
        %558 = vmatpush1.msra.mxu0 %v401
        %559 = vmatprep.subr.mxu0 %v404
        %560 = vmatpush1.msra.mxu0 %v403
        %561 = vmatprep.subr.mxu0 %v406
        %562 = vmatpush1.msra.mxu0 %v405
        %563 = vmatprep.subr.mxu0 %v408
        %564 = vmatpush1.msra.mxu0 %v407
        %565 = vmatprep.subr.mxu0 %v410
        %566 = vmatpush1.msra.mxu0 %v409
        %567 = vmatprep.mubr.f32.mxu0 %v427
        %568 = vmatmul.mubr.f32.gmra.mrb[0].mxu0 %v423
        %v569 = vpop.f32.mrb[0].mxu0
        %v570 = vadd.f32 %v499, %v569
        %v571 = vpop.f32.mrb[0].mxu0
        %v572 = vadd.f32 %v501, %v571
        %573 = vdwg.mxu0
        %v576 = vcombine.low %v570, %v572
        %v578 = vunpack.c.l.s4 1966171168
        %v579 = vunpack.c.0.s8 %v578
        %v580 = vlaneseq
        %v581 = vshrl.u32 %v580, 7
        %v582 = vsub.s32 %v579, %v581
        %v583 = vrot.slane %v576, %v582
        %v585 = vunpack.c.l.s4 1966171168
        %v586 = vunpack.c.0.s8 %v585
        %v587 = vlaneseq
        %v588 = vshrl.u32 %v587, 7
        %v589 = vsub.s32 %v586, %v588
        %v590 = vrot.slane %v583, %v589
        %v592 = vadd.f32 %v281, %v590
        %v593 = vlaneseq
        %vm594 = vcmp.ge.s32.totalorder %v593, 0
        %vm595 = vcmp.lt.s32.totalorder %v593, 256
        %vm596 = vmand %vm594, %vm595
        %597 = vst.msk [vmem:[#allocation2] sm:$0x3] %vm596, %v592
        // Predicated region
        $region45: #{chord_detector_forward.7} parent=39 // pred_check
          %p598 = pneg %p272
        $region46: #{chord_detector_forward.7} parent=39 // pred_check_branch
          %600 = sbr.rel (%p598) target = $region48
        $region47: #{chord_detector_forward.7} parent=39 // pred_region
          %v601 = vld [vmem:[#allocation2] sm:$0x3]
          %v602 = vld [vmem:[%s2] sm:$0x3]
          %v603 = vadd.f32 %v601, %v602
          %v604 = vmax.f32 %v603, 0.0
          %v605 = vld [vmem:[%s3] sm:$0xff]
          %v606 = vld [vmem:[%s3 + $0x8] sm:$0xff]
          %v607 = vld [vmem:[%s3 + $0x10] sm:$0xff]
          %v608 = vld [vmem:[%s3 + $0x18] sm:$0xff]
          %v609 = vld [vmem:[%s3 + $0x20] sm:$0xff]
          %v610 = vld [vmem:[%s3 + $0x28] sm:$0xff]
          %v611 = vld [vmem:[%s3 + $0x30] sm:$0xff]
          %v612 = vld [vmem:[%s3 + $0x38] sm:$0xff]
          %v613 = vld [vmem:[%s3 + $0x40] sm:$0xff]
          %v614 = vld [vmem:[%s3 + $0x48] sm:$0xff]
          %v615 = vld [vmem:[%s3 + $0x50] sm:$0xff]
          %v616 = vld [vmem:[%s3 + $0x58] sm:$0xff]
          %v617 = vld [vmem:[%s3 + $0x60] sm:$0xff]
          %v618 = vld [vmem:[%s3 + $0x68] sm:$0xff]
          %v619 = vld [vmem:[%s3 + $0x70] sm:$0xff]
          %v620 = vld [vmem:[%s3 + $0x78] sm:$0xff]
          %v621 = vld [vmem:[%s3 + $0x80] sm:$0xff]
          %v622 = vld [vmem:[%s3 + $0x88] sm:$0xff]
          %v623 = vld [vmem:[%s3 + $0x90] sm:$0xff]
          %v624 = vld [vmem:[%s3 + $0x98] sm:$0xff]
          %v625 = vld [vmem:[%s3 + $0xa0] sm:$0xff]
          %v626 = vld [vmem:[%s3 + $0xa8] sm:$0xff]
          %v627 = vld [vmem:[%s3 + $0xb0] sm:$0xff]
          %v628 = vld [vmem:[%s3 + $0xb8] sm:$0xff]
          %v629 = vld [vmem:[%s3 + $0xc0] sm:$0xff]
          %v630 = vld [vmem:[%s3 + $0xc8] sm:$0xff]
          %v631 = vld [vmem:[%s3 + $0xd0] sm:$0xff]
          %v632 = vld [vmem:[%s3 + $0xd8] sm:$0xff]
          %v633 = vld [vmem:[%s3 + $0xe0] sm:$0xff]
          %v634 = vld [vmem:[%s3 + $0xe8] sm:$0xff]
          %v635 = vld [vmem:[%s3 + $0xf0] sm:$0xff]
          %v636 = vld [vmem:[%s3 + $0xf8] sm:$0xff]
          %v637 = vld [vmem:[%s4] sm:$0x1]
          %v639 = vlaneseq
          %v640 = vshrl.u32 %v639, 7
          %v641 = vsub.s32 0, %v640
          %v642 = vrot.slane %v604, %v641
          %v643 = vlaneseq
          %v644 = vshrl.u32 %v643, 7
          %v645 = vsub.s32 1, %v644
          %v646 = vrot.slane %v604, %v645
          %649 = vmatprep.subr.mxu0 0.0
          %650 = vmatpush1.msra.mxu0 %v605
          %651 = vmatprep.subr.mxu0 0.0
          %652 = vmatpush1.msra.mxu0 %v606
          %653 = vmatprep.subr.mxu0 0.0
          %654 = vmatpush1.msra.mxu0 %v607
          %655 = vmatprep.subr.mxu0 0.0
          %656 = vmatpush1.msra.mxu0 %v608
          %657 = vmatprep.subr.mxu0 0.0
          %658 = vmatpush1.msra.mxu0 %v609
          %659 = vmatprep.subr.mxu0 0.0
          %660 = vmatpush1.msra.mxu0 %v610
          %661 = vmatprep.subr.mxu0 0.0
          %662 = vmatpush1.msra.mxu0 %v611
          %663 = vmatprep.subr.mxu0 0.0
          %664 = vmatpush1.msra.mxu0 %v612
          %665 = vmatprep.subr.mxu0 0.0
          %666 = vmatpush1.msra.mxu0 %v613
          %667 = vmatprep.subr.mxu0 0.0
          %668 = vmatpush1.msra.mxu0 %v614
          %669 = vmatprep.subr.mxu0 0.0
          %670 = vmatpush1.msra.mxu0 %v615
          %671 = vmatprep.subr.mxu0 0.0
          %672 = vmatpush1.msra.mxu0 %v616
          %673 = vmatprep.subr.mxu0 0.0
          %674 = vmatpush1.msra.mxu0 %v617
          %675 = vmatprep.subr.mxu0 0.0
          %676 = vmatpush1.msra.mxu0 %v618
          %677 = vmatprep.subr.mxu0 0.0
          %678 = vmatpush1.msra.mxu0 %v619
          %679 = vmatprep.subr.mxu0 0.0
          %680 = vmatpush1.msra.mxu0 %v620
          %681 = vmatprep.subr.mxu0 0.0
          %682 = vmatpush1.msra.mxu0 %v621
          %683 = vmatprep.subr.mxu0 0.0
          %684 = vmatpush1.msra.mxu0 %v622
          %685 = vmatprep.subr.mxu0 0.0
          %686 = vmatpush1.msra.mxu0 %v623
          %687 = vmatprep.subr.mxu0 0.0
          %688 = vmatpush1.msra.mxu0 %v624
          %689 = vmatprep.subr.mxu0 0.0
          %690 = vmatpush1.msra.mxu0 %v625
          %691 = vmatprep.subr.mxu0 0.0
          %692 = vmatpush1.msra.mxu0 %v626
          %693 = vmatprep.subr.mxu0 0.0
          %694 = vmatpush1.msra.mxu0 %v627
          %695 = vmatprep.subr.mxu0 0.0
          %696 = vmatpush1.msra.mxu0 %v628
          %697 = vmatprep.subr.mxu0 0.0
          %698 = vmatpush1.msra.mxu0 %v629
          %699 = vmatprep.subr.mxu0 0.0
          %700 = vmatpush1.msra.mxu0 %v630
          %701 = vmatprep.subr.mxu0 0.0
          %702 = vmatpush1.msra.mxu0 %v631
          %703 = vmatprep.subr.mxu0 0.0
          %704 = vmatpush1.msra.mxu0 %v632
          %705 = vmatprep.subr.mxu0 0.0
          %706 = vmatpush1.msra.mxu0 %v633
          %707 = vmatprep.subr.mxu0 0.0
          %708 = vmatpush1.msra.mxu0 %v634
          %709 = vmatprep.subr.mxu0 0.0
          %710 = vmatpush1.msra.mxu0 %v635
          %711 = vmatprep.subr.mxu0 0.0
          %712 = vmatpush1.msra.mxu0 %v636
          %713 = vmatprep.mubr.f32.mxu0 %v646
          %714 = vmatmul.mubr.f32.gmra.mrb[0].mxu0 %v642
          %v715 = vpop.f32.mrb[0].mxu0
          %v716 = vadd.f32 %v637, %v715
          %v717 = vpop.f32.mrb[0].mxu0
          %718 = vdwg.mxu0
          %719 = vst [vmem:[%s255] sm:$0x1] %v716
        $region48: #{chord_detector_forward.7} parent=39 // pred_fallthru
          _
        %s720 = sand.u32 %s156, 1
        %s721 = scalar_lea.sflag [#allocation4], %s720
        %s722 = sand.u32 %s156, 1
        %s723 = scalar_lea.vmem [#allocation3], %s722
        // Predicated region
        $region49: #{chord_detector_forward.7} parent=39 // pred_check
          %p724 = pneg %p166
        $region50: #{chord_detector_forward.7} parent=39 // pred_check_branch
          %726 = sbr.rel (%p724) target = $region52
        $region51: #{chord_detector_forward.7} parent=39 // pred_region
          %s728 = ssub.s32 16, 16
          %729 = vsyncadd %s721, %s728
          %s730 = smul.addr %s23, 16
          %s731 = scalar_lea.hbm %s5, %s730
          %s733 = sshll.u32 %s723, 4
          %s734 = int_to_ptr.vmem [resolvable:$true] %s733
          %736 = dma.vmem_to_hbm [thread:$0]  %s734, 16, %s731, %s721
        $region52: #{chord_detector_forward.7} parent=39 // pred_fallthru
          _
      $region40: #{chord_detector_forward.7} parent=5 // pred_fallthru
        _
      %p737 = scmp.le.s32.totalorder 2, %s14
      // Predicated region
      $region53: #{chord_detector_forward.7} parent=5 // pred_check
        %p738 = pneg %p737
      $region54: #{chord_detector_forward.7} parent=5 // pred_check_branch
        %740 = sbr.rel (%p738) target = $region56
      $region55: #{chord_detector_forward.7} parent=5 // pred_region
        %s741 = ssub.s32 %s14, 2
        // Predicated region
        $region57: #{chord_detector_forward.7} parent=55 // pred_check
          %p742 = pneg %p172
        $region58: #{chord_detector_forward.7} parent=55 // pred_check_branch
          %744 = sbr.rel (%p742) target = $region60
        $region59: #{chord_detector_forward.7} parent=55 // pred_region
          %s745 = sand.u32 %s157, 1
          %s746 = scalar_lea.sflag [#allocation4], %s745
          %s747 = sand.u32 %s157, 1
          %s748 = scalar_lea.vmem [#allocation3], %s747
          %749 = dma.done %s746, 16
        $region60: #{chord_detector_forward.7} parent=55 // pred_fallthru
          _
      $region56: #{chord_detector_forward.7} parent=5 // pred_fallthru
        _
    $region6: #{chord_detector_forward.7} parent=1 // loop_footer
      %s18 = sadd.s32 1, %s14
    $region7: #{chord_detector_forward.7} parent=1 // loop_footer_branch
      %13 = sbr.rel target = $region3
    $region8: #{chord_detector_forward.7} parent=1 // loop_exit
      _
    %750 = vsyncpa [#allocation4], 1
    %s751 = scalar_lea.sflag [#allocation4], 1
    %752 = vsyncpa %s751, 1

// kernel: chord_detector_forward.6
$region0: #{chord_detector_forward.6}
  #allocation0 [shape = 'u32[]', space=smem, size = 0x4, offset = 0x4, fixed_abs, tag = 'smem constant byte address 0x4 - core index']
  #allocation1 [shape = 'u32[144,128]{1,0:T(1,128)}', space=vmem, size = 0x12000, scoped, tag = 'internal scratch']
  %s0 = inlined_call_operand.vmem [shape: f32[2,4,16,64], index: 0, kind: input, shape index: {}]
  %s1 = inlined_call_operand.vmem [shape: f32[9,64,128], index: 1, kind: input, shape index: {}]
  %s2 = inlined_call_operand.vmem [shape: f32[1,128], index: 2, kind: input, shape index: {}]
  %s3 = inlined_call_operand.vmem [shape: f32[2,6,128], index: 3, kind: output, shape index: {}]
  %s4 = sld [smem:[#allocation0]]
  $region45: #{chord_detector_forward.6} parent=0
    _
  %s6 = ssub.s32 1, %s4
  %s7 = scalar_select 0, %s6, %s4
  loop: start=0, step=1, limit=4
  $region2: #{chord_detector_forward.6} parent=0 // loop_pre_header
    _
  $region3: #{chord_detector_forward.6} parent=0 // loop_header
    %s9 = sphi 0, %s13
    %p10 = scmp.ge.s32.totalorder %s9, 4
    %s16 = sphi 0, %s28
    %s17 = sphi 0, %s24
    %s18 = sphi 0, %s16
    %s19 = sphi 0, %s17
    %s20 = sphi 0, %s18
    %s21 = sphi 0, %s19
    %s31 = sphi 0, %s33
    %s34 = sphi 0, %s31
    %s35 = sphi 0, %s34
    %s51 = sphi 0, %s35
    %s55 = sphi 0, %s55
    %s57 = sphi 0, %s55
    %s58 = sphi 0, %s57
    %s72 = sphi 0, %s58
    %s76 = sphi 0, %s76
    %s78 = sphi 0, %s76
    %s79 = sphi 0, %s78
    %s93 = sphi 0, %s79
    %s101 = sphi 0, %s103
    %s104 = sphi 0, %s101
    %s105 = sphi 0, %s104
    %s121 = sphi 0, %s105
  $region4: #{chord_detector_forward.6} parent=0 // loop_header_branch
    %12 = sbr.rel (%p10) target = $region8
  $region5: #{chord_detector_forward.6} parent=0 // loop_body
    %s14 = ssub.s32 %s9, 1
    %s15 = ssub.s32 %s9, 2
    %s22 = sadd.s32 1, %s17
    %p23 = scmp.ge.s32.totalorder %s22, 1
    %s24 = scalar_select %p23, 0, %s22
    %s25 = sadd.s32 1, %s16
    %s26 = scalar_select %p23, %s25, %s16
    %p27 = scmp.ge.s32.totalorder %s26, 2
    %s28 = scalar_select %p27, 0, %s26
    %s29 = ssub.s32 %s16, %s28
    %p30 = scmp.eq.s32.totalorder %s29, 0
    %s32 = sadd.s32 %s31, 1
    %s33 = scalar_select %p30, %s31, %s32
    %p36 = pneg %p30
    %p37 = scmp.eq.s32.totalorder %s9, 1
    %p38 = por %p36, %p37
    %p39 = scmp.ne.s32.totalorder %s31, %s34
    %p40 = scmp.eq.s32.totalorder %s9, 0
    %p41 = por %p39, %p40
    %p42 = scmp.ne.s32.totalorder %s31, %s34
    %p43 = scmp.eq.s32.totalorder %s14, 1
    %p44 = por %p42, %p43
    %p45 = scmp.ne.s32.totalorder %s34, %s35
    %p46 = scmp.eq.s32.totalorder %s14, 0
    %p47 = por %p45, %p46
    %p48 = scmp.ne.s32.totalorder %s34, %s35
    %p49 = scmp.eq.s32.totalorder %s15, 1
    %p50 = por %p48, %p49
    %p52 = scmp.ne.s32.totalorder %s35, %s51
    %p53 = scmp.eq.s32.totalorder %s15, 0
    %p54 = por %p52, %p53
    %s56 = sadd.s32 %s55, 1
    %p59 = scmp.eq.s32.totalorder %s9, 1
    %p60 = scmp.ne.s32.totalorder %s55, %s57
    %p61 = scmp.eq.s32.totalorder %s9, 0
    %p62 = por %p60, %p61
    %p63 = scmp.ne.s32.totalorder %s55, %s57
    %p64 = scmp.eq.s32.totalorder %s14, 1
    %p65 = por %p63, %p64
    %p66 = scmp.ne.s32.totalorder %s57, %s58
    %p67 = scmp.eq.s32.totalorder %s14, 0
    %p68 = por %p66, %p67
    %p69 = scmp.ne.s32.totalorder %s57, %s58
    %p70 = scmp.eq.s32.totalorder %s15, 1
    %p71 = por %p69, %p70
    %p73 = scmp.ne.s32.totalorder %s58, %s72
    %p74 = scmp.eq.s32.totalorder %s15, 0
    %p75 = por %p73, %p74
    %s77 = sadd.s32 %s76, 1
    %p80 = scmp.eq.s32.totalorder %s9, 1
    %p81 = scmp.ne.s32.totalorder %s76, %s78
    %p82 = scmp.eq.s32.totalorder %s9, 0
    %p83 = por %p81, %p82
    %p84 = scmp.ne.s32.totalorder %s76, %s78
    %p85 = scmp.eq.s32.totalorder %s14, 1
    %p86 = por %p84, %p85
    %p87 = scmp.ne.s32.totalorder %s78, %s79
    %p88 = scmp.eq.s32.totalorder %s14, 0
    %p89 = por %p87, %p88
    %p90 = scmp.ne.s32.totalorder %s78, %s79
    %p91 = scmp.eq.s32.totalorder %s15, 1
    %p92 = por %p90, %p91
    %p94 = scmp.ne.s32.totalorder %s79, %s93
    %p95 = scmp.eq.s32.totalorder %s15, 0
    %p96 = por %p94, %p95
    %s97 = ssub.s32 %s16, %s28
    %s98 = ssub.s32 %s17, %s24
    %s99 = sor.u32 %s97, %s98
    %p100 = scmp.eq.s32.totalorder %s99, 0
    %s102 = sadd.s32 %s101, 1
    %s103 = scalar_select %p100, %s101, %s102
    %p106 = pneg %p100
    %p107 = scmp.eq.s32.totalorder %s9, 1
    %p108 = por %p106, %p107
    %p109 = scmp.ne.s32.totalorder %s101, %s104
    %p110 = scmp.eq.s32.totalorder %s9, 0
    %p111 = por %p109, %p110
    %p112 = scmp.ne.s32.totalorder %s101, %s104
    %p113 = scmp.eq.s32.totalorder %s14, 1
    %p114 = por %p112, %p113
    %p115 = scmp.ne.s32.totalorder %s104, %s105
    %p116 = scmp.eq.s32.totalorder %s14, 0
    %p117 = por %p115, %p116
    %p118 = scmp.ne.s32.totalorder %s104, %s105
    %p119 = scmp.eq.s32.totalorder %s15, 1
    %p120 = por %p118, %p119
    %p122 = scmp.ne.s32.totalorder %s105, %s121
    %p123 = scmp.eq.s32.totalorder %s15, 0
    %p124 = por %p122, %p123
    %p125 = scmp.le.s32.totalorder 1, %s9
    %p126 = scmp.lt.s32.totalorder %s9, 3
    %p127 = pnand %p125, %p126
    %p128 = pneg %p127
    // Predicated region
    $region9: #{chord_detector_forward.6} parent=5 // pred_check
      _
    $region10: #{chord_detector_forward.6} parent=5 // pred_check_branch
      %130 = sbr.rel (%p127) target = $region12
    $region11: #{chord_detector_forward.6} parent=5 // pred_region
      %s131 = ssub.s32 %s9, 1
      // Predicated region
      $region13: #{chord_detector_forward.6} parent=11 // pred_check
        %p132 = pneg %p68
      $region14: #{chord_detector_forward.6} parent=11 // pred_check_branch
        %134 = sbr.rel (%p132) target = $region16
      $region15: #{chord_detector_forward.6} parent=11 // pred_region
        _
      $region16: #{chord_detector_forward.6} parent=11 // pred_fallthru
        _
      // Predicated region
      $region17: #{chord_detector_forward.6} parent=11 // pred_check
        %p135 = pneg %p89
      $region18: #{chord_detector_forward.6} parent=11 // pred_check_branch
        %137 = sbr.rel (%p135) target = $region20
      $region19: #{chord_detector_forward.6} parent=11 // pred_region
        _
      $region20: #{chord_detector_forward.6} parent=11 // pred_fallthru
        _
    $region12: #{chord_detector_forward.6} parent=5 // pred_fallthru
      _
    %p138 = scmp.lt.s32.totalorder %s9, 2
    // Predicated region
    $region21: #{chord_detector_forward.6} parent=5 // pred_check
      %p139 = pneg %p138
    $region22: #{chord_detector_forward.6} parent=5 // pred_check_branch
      %141 = sbr.rel (%p139) target = $region24
    $region23: #{chord_detector_forward.6} parent=5 // pred_region
      // Predicated region
      $region25: #{chord_detector_forward.6} parent=23 // pred_check
        %p142 = pneg %p41
      $region26: #{chord_detector_forward.6} parent=23 // pred_check_branch
        %144 = sbr.rel (%p142) target = $region28
      $region27: #{chord_detector_forward.6} parent=23 // pred_region
        %p145 = scmp.lt.s32.totalorder %s16, 1
        %s146 = scalar_select %p145, %s16, 1
        %s147 = smul.addr %s146, 8
        %s148 = smul.addr %s147, 8
        %s149 = scalar_lea.vmem %s0, %s148
      $region28: #{chord_detector_forward.6} parent=23 // pred_fallthru
        _
    $region24: #{chord_detector_forward.6} parent=5 // pred_fallthru
      _
    %p150 = scmp.le.s32.totalorder 1, %s9
    %p151 = scmp.lt.s32.totalorder %s9, 3
    %p152 = pnand %p150, %p151
    %p153 = pneg %p152
    // Predicated region
    $region29: #{chord_detector_forward.6} parent=5 // pred_check
      _
    $region30: #{chord_detector_forward.6} parent=5 // pred_check_branch
      %155 = sbr.rel (%p152) target = $region32
    $region31: #{chord_detector_forward.6} parent=5 // pred_region
      %s156 = ssub.s32 %s9, 1
      %p157 = scmp.lt.s32.totalorder %s18, 1
      %s158 = scalar_select %p157, %s18, 1
      %s159 = smul.addr %s158, 8
      %s160 = smul.addr %s159, 8
      %s161 = scalar_lea.vmem %s0, %s160
      %p162 = pneg %p47
      %p163 = pneg %p44
      %p164 = pneg %p68
      %p165 = pneg %p65
      %p166 = pneg %p89
      %p167 = pneg %p86
      %p168 = pneg %p117
      %p169 = pneg %p114
      %p170 = scmp.lt.s32.totalorder %s18, 1
      %s171 = scalar_select %p170, %s18, 1
      %p172 = scmp.lt.s32.totalorder %s19, 0
      %s173 = scalar_select %p172, %s19, 0
      %s174 = sadd.s32 %s173, %s171
      %s175 = smul.addr %s174, 8
      %s176 = scalar_lea.vmem %s3, %s175
      %p177 = scmp.lt.s32.totalorder %s18, 1
      %s178 = scalar_select %p177, %s18, 1
      %s179 = smul.addr %s178, 8
      %s180 = smul.addr %s179, 8
      %s181 = scalar_lea.vmem %s0, %s180
      %p182 = scmp.lt.s32.totalorder %s18, 1
      %s183 = scalar_select %p182, %s18, 1
      %p184 = scmp.lt.s32.totalorder %s19, 0
      %s185 = scalar_select %p184, %s19, 0
      %s186 = sadd.s32 %s185, %s183
      %s187 = smul.addr %s186, 8
      %s188 = scalar_lea.vmem %s3, %s187
      %v189 = vld [vmem:[%s181] sm:$0x3f]
      %v190 = vld [vmem:[%s1] sm:$0xff]
      %v191 = vld [vmem:[%s1 + $0x8] sm:$0xff]
      %v192 = vld [vmem:[%s1 + $0x10] sm:$0xff]
      %v193 = vld [vmem:[%s1 + $0x18] sm:$0xff]
      %v194 = vld [vmem:[%s1 + $0x20] sm:$0xff]
      %v195 = vld [vmem:[%s1 + $0x28] sm:$0xff]
      %v196 = vld [vmem:[%s1 + $0x30] sm:$0xff]
      %v197 = vld [vmem:[%s1 + $0x38] sm:$0xff]
      %v198 = vld [vmem:[%s181 + $0x1] sm:$0x3f]
      %s199 = scalar_lea.vmem %s1, 128
      %v200 = vld [vmem:[%s199] sm:$0xff]
      %v201 = vld [vmem:[%s199 + $0x8] sm:$0xff]
      %v202 = vld [vmem:[%s199 + $0x10] sm:$0xff]
      %v203 = vld [vmem:[%s199 + $0x18] sm:$0xff]
      %v204 = vld [vmem:[%s199 + $0x20] sm:$0xff]
      %v205 = vld [vmem:[%s199 + $0x28] sm:$0xff]
      %v206 = vld [vmem:[%s199 + $0x30] sm:$0xff]
      %v207 = vld [vmem:[%s199 + $0x38] sm:$0xff]
      %vm208 = vcmask 523264
      %v210 = vsel %vm208, %v198, 0
      %212 = vmatprep.subr.mxu0 0.0
      %213 = vmatpush1.msra.mxu0 %v200
      %214 = vmatprep.subr.mxu0 0.0
      %215 = vmatpush1.msra.mxu0 %v201
      %216 = vmatprep.subr.mxu0 0.0
      %217 = vmatpush1.msra.mxu0 %v202
      %218 = vmatprep.subr.mxu0 0.0
      %219 = vmatpush1.msra.mxu0 %v203
      %220 = vmatprep.subr.mxu0 0.0
      %221 = vmatpush1.msra.mxu0 %v204
      %222 = vmatprep.subr.mxu0 0.0
      %223 = vmatpush1.msra.mxu0 %v205
      %224 = vmatprep.subr.mxu0 0.0
      %225 = vmatpush1.msra.mxu0 %v206
      %226 = vmatprep.subr.mxu0 0.0
      %227 = vmatpush1.msra.mxu0 %v207
      %228 = vmatprep.subr.mxu0 0.0
      %229 = vmatpush1.msra.mxu0 0.0
      %230 = vmatprep.subr.mxu0 0.0
      %231 = vmatpush1.msra.mxu0 0.0
      %232 = vmatprep.subr.mxu0 0.0
      %233 = vmatpush1.msra.mxu0 0.0
      %234 = vmatprep.subr.mxu0 0.0
      %235 = vmatpush1.msra.mxu0 0.0
      %236 = vmatprep.subr.mxu0 0.0
      %237 = vmatpush1.msra.mxu0 0.0
      %238 = vmatprep.subr.mxu0 0.0
      %239 = vmatpush1.msra.mxu0 0.0
      %240 = vmatprep.subr.mxu0 0.0
      %241 = vmatpush1.msra.mxu0 0.0
      %242 = vmatprep.subr.mxu0 0.0
      %243 = vmatpush1.msra.mxu0 0.0
      %244 = vmatprep.subr.mxu0 0.0
      %245 = vmatpush1.msra.mxu0 0.0
      %246 = vmatprep.subr.mxu0 0.0
      %247 = vmatpush1.msra.mxu0 0.0
      %248 = vmatprep.subr.mxu0 0.0
      %249 = vmatpush1.msra.mxu0 0.0
      %250 = vmatprep.subr.mxu0 0.0
      %251 = vmatpush1.msra.mxu0 0.0
      %252 = vmatprep.subr.mxu0 0.0
      %253 = vmatpush1.msra.mxu0 0.0
      %254 = vmatprep.subr.mxu0 0.0
      %255 = vmatpush1.msra.mxu0 0.0
      %256 = vmatprep.subr.mxu0 0.0
      %257 = vmatpush1.msra.mxu0 0.0
      %258 = vmatprep.subr.mxu0 0.0
      %259 = vmatpush1.msra.mxu0 0.0
      %260 = vmatprep.subr.mxu0 0.0
      %261 = vmatpush1.msra.mxu0 0.0
      %262 = vmatprep.subr.mxu0 0.0
      %263 = vmatpush1.msra.mxu0 0.0
      %264 = vmatprep.subr.mxu0 0.0
      %265 = vmatpush1.msra.mxu0 0.0
      %266 = vmatprep.subr.mxu0 0.0
      %267 = vmatpush1.msra.mxu0 0.0
      %268 = vmatprep.subr.mxu0 0.0
      %269 = vmatpush1.msra.mxu0 0.0
      %270 = vmatprep.subr.mxu0 0.0
      %271 = vmatpush1.msra.mxu0 0.0
      %272 = vmatprep.subr.mxu0 0.0
      %273 = vmatpush1.msra.mxu0 0.0
      %274 = vmatprep.subr.mxu0 0.0
      %275 = vmatpush1.msra.mxu0 0.0
      %276 = vmatprep.mubr.f32.mxu0 0.0
      %277 = vmatmul.mubr.f32.gmra.mrb[0].mxu0 %v210
      %v278 = vpop.f32.mrb[0].mxu0
      %v279 = vadd.f32 0.0, %v278
      %v280 = vpop.f32.mrb[0].mxu0
      %281 = vdwg.mxu0
      %v283 = vsel %vm208, %v189, 0
      %285 = vmatprep.subr.mxu0 0.0
      %286 = vmatpush1.msra.mxu0 %v190
      %287 = vmatprep.subr.mxu0 0.0
      %288 = vmatpush1.msra.mxu0 %v191
      %289 = vmatprep.subr.mxu0 0.0
      %290 = vmatpush1.msra.mxu0 %v192
      %291 = vmatprep.subr.mxu0 0.0
      %292 = vmatpush1.msra.mxu0 %v193
      %293 = vmatprep.subr.mxu0 0.0
      %294 = vmatpush1.msra.mxu0 %v194
      %295 = vmatprep.subr.mxu0 0.0
      %296 = vmatpush1.msra.mxu0 %v195
      %297 = vmatprep.subr.mxu0 0.0
      %298 = vmatpush1.msra.mxu0 %v196
      %299 = vmatprep.subr.mxu0 0.0
      %300 = vmatpush1.msra.mxu0 %v197
      %301 = vmatprep.subr.mxu0 0.0
      %302 = vmatpush1.msra.mxu0 0.0
      %303 = vmatprep.subr.mxu0 0.0
      %304 = vmatpush1.msra.mxu0 0.0
      %305 = vmatprep.subr.mxu0 0.0
      %306 = vmatpush1.msra.mxu0 0.0
      %307 = vmatprep.subr.mxu0 0.0
      %308 = vmatpush1.msra.mxu0 0.0
      %309 = vmatprep.subr.mxu0 0.0
      %310 = vmatpush1.msra.mxu0 0.0
      %311 = vmatprep.subr.mxu0 0.0
      %312 = vmatpush1.msra.mxu0 0.0
      %313 = vmatprep.subr.mxu0 0.0
      %314 = vmatpush1.msra.mxu0 0.0
      %315 = vmatprep.subr.mxu0 0.0
      %316 = vmatpush1.msra.mxu0 0.0
      %317 = vmatprep.subr.mxu0 0.0
      %318 = vmatpush1.msra.mxu0 0.0
      %319 = vmatprep.subr.mxu0 0.0
      %320 = vmatpush1.msra.mxu0 0.0
      %321 = vmatprep.subr.mxu0 0.0
      %322 = vmatpush1.msra.mxu0 0.0
      %323 = vmatprep.subr.mxu0 0.0
      %324 = vmatpush1.msra.mxu0 0.0
      %325 = vmatprep.subr.mxu0 0.0
      %326 = vmatpush1.msra.mxu0 0.0
      %327 = vmatprep.subr.mxu0 0.0
      %328 = vmatpush1.msra.mxu0 0.0
      %329 = vmatprep.subr.mxu0 0.0
      %330 = vmatpush1.msra.mxu0 0.0
      %331 = vmatprep.subr.mxu0 0.0
      %332 = vmatpush1.msra.mxu0 0.0
      %333 = vmatprep.subr.mxu0 0.0
      %334 = vmatpush1.msra.mxu0 0.0
      %335 = vmatprep.subr.mxu0 0.0
      %336 = vmatpush1.msra.mxu0 0.0
      %337 = vmatprep.subr.mxu0 0.0
      %338 = vmatpush1.msra.mxu0 0.0
      %339 = vmatprep.subr.mxu0 0.0
      %340 = vmatpush1.msra.mxu0 0.0
      %341 = vmatprep.subr.mxu0 0.0
      %342 = vmatpush1.msra.mxu0 0.0
      %343 = vmatprep.subr.mxu0 0.0
      %344 = vmatpush1.msra.mxu0 0.0
      %345 = vmatprep.subr.mxu0 0.0
      %346 = vmatpush1.msra.mxu0 0.0
      %347 = vmatprep.subr.mxu0 0.0
      %348 = vmatpush1.msra.mxu0 0.0
      %349 = vmatprep.mubr.f32.mxu0 0.0
      %350 = vmatmul.mubr.f32.gmra.mrb[0].mxu0 %v283
      %v351 = vpop.f32.mrb[0].mxu0
      %v352 = vadd.f32 %v279, %v351
      %v353 = vpop.f32.mrb[0].mxu0
      %354 = vdwg.mxu0
      %s355 = scalar_lea.vmem %s1, 64
      %v356 = vld [vmem:[%s355] sm:$0xff]
      %v357 = vld [vmem:[%s355 + $0x8] sm:$0xff]
      %v358 = vld [vmem:[%s355 + $0x10] sm:$0xff]
      %v359 = vld [vmem:[%s355 + $0x18] sm:$0xff]
      %v360 = vld [vmem:[%s355 + $0x20] sm:$0xff]
      %v361 = vld [vmem:[%s355 + $0x28] sm:$0xff]
      %v362 = vld [vmem:[%s355 + $0x30] sm:$0xff]
      %v363 = vld [vmem:[%s355 + $0x38] sm:$0xff]
      %v364 = vld [vmem:[%s181 + $0x3] sm:$0x3f]
      %s365 = scalar_lea.vmem %s1, 384
      %v366 = vld [vmem:[%s365] sm:$0xff]
      %v367 = vld [vmem:[%s365 + $0x8] sm:$0xff]
      %v368 = vld [vmem:[%s365 + $0x10] sm:$0xff]
      %v369 = vld [vmem:[%s365 + $0x18] sm:$0xff]
      %v370 = vld [vmem:[%s365 + $0x20] sm:$0xff]
      %v371 = vld [vmem:[%s365 + $0x28] sm:$0xff]
      %v372 = vld [vmem:[%s365 + $0x30] sm:$0xff]
      %v373 = vld [vmem:[%s365 + $0x38] sm:$0xff]
      %v375 = vsel %vm208, %v364, 0
      %377 = vmatprep.subr.mxu0 0.0
      %378 = vmatpush1.msra.mxu0 %v366
      %379 = vmatprep.subr.mxu0 0.0
      %380 = vmatpush1.msra.mxu0 %v367
      %381 = vmatprep.subr.mxu0 0.0
      %382 = vmatpush1.msra.mxu0 %v368
      %383 = vmatprep.subr.mxu0 0.0
      %384 = vmatpush1.msra.mxu0 %v369
      %385 = vmatprep.subr.mxu0 0.0
      %386 = vmatpush1.msra.mxu0 %v370
      %387 = vmatprep.subr.mxu0 0.0
      %388 = vmatpush1.msra.mxu0 %v371
      %389 = vmatprep.subr.mxu0 0.0
      %390 = vmatpush1.msra.mxu0 %v372
      %391 = vmatprep.subr.mxu0 0.0
      %392 = vmatpush1.msra.mxu0 %v373
      %393 = vmatprep.subr.mxu0 0.0
      %394 = vmatpush1.msra.mxu0 0.0
      %395 = vmatprep.subr.mxu0 0.0
      %396 = vmatpush1.msra.mxu0 0.0
      %397 = vmatprep.subr.mxu0 0.0
      %398 = vmatpush1.msra.mxu0 0.0
      %399 = vmatprep.subr.mxu0 0.0
      %400 = vmatpush1.msra.mxu0 0.0
      %401 = vmatprep.subr.mxu0 0.0
      %402 = vmatpush1.msra.mxu0 0.0
      %403 = vmatprep.subr.mxu0 0.0
      %404 = vmatpush1.msra.mxu0 0.0
      %405 = vmatprep.subr.mxu0 0.0
      %406 = vmatpush1.msra.mxu0 0.0
      %407 = vmatprep.subr.mxu0 0.0
      %408 = vmatpush1.msra.mxu0 0.0
      %409 = vmatprep.subr.mxu0 0.0
      %410 = vmatpush1.msra.mxu0 0.0
      %411 = vmatprep.subr.mxu0 0.0
      %412 = vmatpush1.msra.mxu0 0.0
      %413 = vmatprep.subr.mxu0 0.0
      %414 = vmatpush1.msra.mxu0 0.0
      %415 = vmatprep.subr.mxu0 0.0
      %416 = vmatpush1.msra.mxu0 0.0
      %417 = vmatprep.subr.mxu0 0.0
      %418 = vmatpush1.msra.mxu0 0.0
      %419 = vmatprep.subr.mxu0 0.0
      %420 = vmatpush1.msra.mxu0 0.0
      %421 = vmatprep.subr.mxu0 0.0
      %422 = vmatpush1.msra.mxu0 0.0
      %423 = vmatprep.subr.mxu0 0.0
      %424 = vmatpush1.msra.mxu0 0.0
      %425 = vmatprep.subr.mxu0 0.0
      %426 = vmatpush1.msra.mxu0 0.0
      %427 = vmatprep.subr.mxu0 0.0
      %428 = vmatpush1.msra.mxu0 0.0
      %429 = vmatprep.subr.mxu0 0.0
      %430 = vmatpush1.msra.mxu0 0.0
      %431 = vmatprep.subr.mxu0 0.0
      %432 = vmatpush1.msra.mxu0 0.0
      %433 = vmatprep.subr.mxu0 0.0
      %434 = vmatpush1.msra.mxu0 0.0
      %435 = vmatprep.subr.mxu0 0.0
      %436 = vmatpush1.msra.mxu0 0.0
      %437 = vmatprep.subr.mxu0 0.0
      %438 = vmatpush1.msra.mxu0 0.0
      %439 = vmatprep.subr.mxu0 0.0
      %440 = vmatpush1.msra.mxu0 0.0
      %441 = vmatprep.mubr.f32.mxu0 0.0
      %442 = vmatmul.mubr.f32.gmra.mrb[0].mxu0 %v375
      %v443 = vpop.f32.mrb[0].mxu0
      %v444 = vadd.f32 0.0, %v443
      %v445 = vpop.f32.mrb[0].mxu0
      %446 = vdwg.mxu0
      %v447 = vadd.f32 %v352, %v444
      %s448 = scalar_lea.vmem %s1, 192
      %v449 = vld [vmem:[%s448] sm:$0xff]
      %v450 = vld [vmem:[%s448 + $0x8] sm:$0xff]
      %v451 = vld [vmem:[%s448 + $0x10] sm:$0xff]
      %v452 = vld [vmem:[%s448 + $0x18] sm:$0xff]
      %v453 = vld [vmem:[%s448 + $0x20] sm:$0xff]
      %v454 = vld [vmem:[%s448 + $0x28] sm:$0xff]
      %v455 = vld [vmem:[%s448 + $0x30] sm:$0xff]
      %v456 = vld [vmem:[%s448 + $0x38] sm:$0xff]
      %v457 = vld [vmem:[%s181 + $0x4] sm:$0x3f]
      %s458 = scalar_lea.vmem %s1, 512
      %v459 = vld [vmem:[%s458] sm:$0xff]
      %v460 = vld [vmem:[%s458 + $0x8] sm:$0xff]
      %v461 = vld [vmem:[%s458 + $0x10] sm:$0xff]
      %v462 = vld [vmem:[%s458 + $0x18] sm:$0xff]
      %v463 = vld [vmem:[%s458 + $0x20] sm:$0xff]
      %v464 = vld [vmem:[%s458 + $0x28] sm:$0xff]
      %v465 = vld [vmem:[%s458 + $0x30] sm:$0xff]
      %v466 = vld [vmem:[%s458 + $0x38] sm:$0xff]
      %v468 = vsel %vm208, %v457, 0
      %470 = vmatprep.subr.mxu0 0.0
      %471 = vmatpush1.msra.mxu0 %v459
      %472 = vmatprep.subr.mxu0 0.0
      %473 = vmatpush1.msra.mxu0 %v460
      %474 = vmatprep.subr.mxu0 0.0
      %475 = vmatpush1.msra.mxu0 %v461
      %476 = vmatprep.subr.mxu0 0.0
      %477 = vmatpush1.msra.mxu0 %v462
      %478 = vmatprep.subr.mxu0 0.0
      %479 = vmatpush1.msra.mxu0 %v463
      %480 = vmatprep.subr.mxu0 0.0
      %481 = vmatpush1.msra.mxu0 %v464
      %482 = vmatprep.subr.mxu0 0.0
      %483 = vmatpush1.msra.mxu0 %v465
      %484 = vmatprep.subr.mxu0 0.0
      %485 = vmatpush1.msra.mxu0 %v466
      %486 = vmatprep.subr.mxu0 0.0
      %487 = vmatpush1.msra.mxu0 0.0
      %488 = vmatprep.subr.mxu0 0.0
      %489 = vmatpush1.msra.mxu0 0.0
      %490 = vmatprep.subr.mxu0 0.0
      %491 = vmatpush1.msra.mxu0 0.0
      %492 = vmatprep.subr.mxu0 0.0
      %493 = vmatpush1.msra.mxu0 0.0
      %494 = vmatprep.subr.mxu0 0.0
      %495 = vmatpush1.msra.mxu0 0.0
      %496 = vmatprep.subr.mxu0 0.0
      %497 = vmatpush1.msra.mxu0 0.0
      %498 = vmatprep.subr.mxu0 0.0
      %499 = vmatpush1.msra.mxu0 0.0
      %500 = vmatprep.subr.mxu0 0.0
      %501 = vmatpush1.msra.mxu0 0.0
      %502 = vmatprep.subr.mxu0 0.0
      %503 = vmatpush1.msra.mxu0 0.0
      %504 = vmatprep.subr.mxu0 0.0
      %505 = vmatpush1.msra.mxu0 0.0
      %506 = vmatprep.subr.mxu0 0.0
      %507 = vmatpush1.msra.mxu0 0.0
      %508 = vmatprep.subr.mxu0 0.0
      %509 = vmatpush1.msra.mxu0 0.0
      %510 = vmatprep.subr.mxu0 0.0
      %511 = vmatpush1.msra.mxu0 0.0
      %512 = vmatprep.subr.mxu0 0.0
      %513 = vmatpush1.msra.mxu0 0.0
      %514 = vmatprep.subr.mxu0 0.0
      %515 = vmatpush1.msra.mxu0 0.0
      %516 = vmatprep.subr.mxu0 0.0
      %517 = vmatpush1.msra.mxu0 0.0
      %518 = vmatprep.subr.mxu0 0.0
      %519 = vmatpush1.msra.mxu0 0.0
      %520 = vmatprep.subr.mxu0 0.0
      %521 = vmatpush1.msra.mxu0 0.0
      %522 = vmatprep.subr.mxu0 0.0
      %523 = vmatpush1.msra.mxu0 0.0
      %524 = vmatprep.subr.mxu0 0.0
      %525 = vmatpush1.msra.mxu0 0.0
      %526 = vmatprep.subr.mxu0 0.0
      %527 = vmatpush1.msra.mxu0 0.0
      %528 = vmatprep.subr.mxu0 0.0
      %529 = vmatpush1.msra.mxu0 0.0
      %530 = vmatprep.subr.mxu0 0.0
      %531 = vmatpush1.msra.mxu0 0.0
      %532 = vmatprep.subr.mxu0 0.0
      %533 = vmatpush1.msra.mxu0 0.0
      %534 = vmatprep.mubr.f32.mxu0 0.0
      %535 = vmatmul.mubr.f32.gmra.mrb[0].mxu0 %v468
      %v536 = vpop.f32.mrb[0].mxu0
      %v537 = vadd.f32 0.0, %v536
      %v538 = vpop.f32.mrb[0].mxu0
      %539 = vdwg.mxu0
      %v540 = vadd.f32 %v447, %v537
      %s541 = scalar_lea.vmem %s1, 448
      %v542 = vld [vmem:[%s541] sm:$0xff]
      %v543 = vld [vmem:[%s541 + $0x8] sm:$0xff]
      %v544 = vld [vmem:[%s541 + $0x10] sm:$0xff]
      %v545 = vld [vmem:[%s541 + $0x18] sm:$0xff]
      %v546 = vld [vmem:[%s541 + $0x20] sm:$0xff]
      %v547 = vld [vmem:[%s541 + $0x28] sm:$0xff]
      %v548 = vld [vmem:[%s541 + $0x30] sm:$0xff]
      %v549 = vld [vmem:[%s541 + $0x38] sm:$0xff]
      %550 = vmatprep.subr.mxu0 0.0
      %551 = vmatpush1.msra.mxu0 %v542
      %552 = vmatprep.subr.mxu0 0.0
      %553 = vmatpush1.msra.mxu0 %v543
      %554 = vmatprep.subr.mxu0 0.0
      %555 = vmatpush1.msra.mxu0 %v544
      %556 = vmatprep.subr.mxu0 0.0
      %557 = vmatpush1.msra.mxu0 %v545
      %558 = vmatprep.subr.mxu0 0.0
      %559 = vmatpush1.msra.mxu0 %v546
      %560 = vmatprep.subr.mxu0 0.0
      %561 = vmatpush1.msra.mxu0 %v547
      %562 = vmatprep.subr.mxu0 0.0
      %563 = vmatpush1.msra.mxu0 %v548
      %564 = vmatprep.subr.mxu0 0.0
      %565 = vmatpush1.msra.mxu0 %v549
      %566 = vmatprep.subr.mxu0 0.0
      %567 = vmatpush1.msra.mxu0 0.0
      %568 = vmatprep.subr.mxu0 0.0
      %569 = vmatpush1.msra.mxu0 0.0
      %570 = vmatprep.subr.mxu0 0.0
      %571 = vmatpush1.msra.mxu0 0.0
      %572 = vmatprep.subr.mxu0 0.0
      %573 = vmatpush1.msra.mxu0 0.0
      %574 = vmatprep.subr.mxu0 0.0
      %575 = vmatpush1.msra.mxu0 0.0
      %576 = vmatprep.subr.mxu0 0.0
      %577 = vmatpush1.msra.mxu0 0.0
      %578 = vmatprep.subr.mxu0 0.0
      %579 = vmatpush1.msra.mxu0 0.0
      %580 = vmatprep.subr.mxu0 0.0
      %581 = vmatpush1.msra.mxu0 0.0
      %582 = vmatprep.subr.mxu0 0.0
      %583 = vmatpush1.msra.mxu0 0.0
      %584 = vmatprep.subr.mxu0 0.0
      %585 = vmatpush1.msra.mxu0 0.0
      %586 = vmatprep.subr.mxu0 0.0
      %587 = vmatpush1.msra.mxu0 0.0
      %588 = vmatprep.subr.mxu0 0.0
      %589 = vmatpush1.msra.mxu0 0.0
      %590 = vmatprep.subr.mxu0 0.0
      %591 = vmatpush1.msra.mxu0 0.0
      %592 = vmatprep.subr.mxu0 0.0
      %593 = vmatpush1.msra.mxu0 0.0
      %594 = vmatprep.subr.mxu0 0.0
      %595 = vmatpush1.msra.mxu0 0.0
      %596 = vmatprep.subr.mxu0 0.0
      %597 = vmatpush1.msra.mxu0 0.0
      %598 = vmatprep.subr.mxu0 0.0
      %599 = vmatpush1.msra.mxu0 0.0
      %600 = vmatprep.subr.mxu0 0.0
      %601 = vmatpush1.msra.mxu0 0.0
      %602 = vmatprep.subr.mxu0 0.0
      %603 = vmatpush1.msra.mxu0 0.0
      %604 = vmatprep.subr.mxu0 0.0
      %605 = vmatpush1.msra.mxu0 0.0
      %606 = vmatprep.subr.mxu0 0.0
      %607 = vmatpush1.msra.mxu0 0.0
      %608 = vmatprep.subr.mxu0 0.0
      %609 = vmatpush1.msra.mxu0 0.0
      %610 = vmatprep.subr.mxu0 0.0
      %611 = vmatpush1.msra.mxu0 0.0
      %612 = vmatprep.subr.mxu0 0.0
      %613 = vmatpush1.msra.mxu0 0.0
      %614 = vmatprep.mubr.f32.mxu0 0.0
      %615 = vmatmul.mubr.f32.gmra.mrb[0].mxu0 %v468
      %v616 = vpop.f32.mrb[0].mxu0
      %v617 = vadd.f32 0.0, %v616
      %v618 = vpop.f32.mrb[0].mxu0
      %619 = vdwg.mxu0
      %620 = vmatprep.subr.mxu0 0.0
      %621 = vmatpush1.msra.mxu0 %v356
      %622 = vmatprep.subr.mxu0 0.0
      %623 = vmatpush1.msra.mxu0 %v357
      %624 = vmatprep.subr.mxu0 0.0
      %625 = vmatpush1.msra.mxu0 %v358
      %626 = vmatprep.subr.mxu0 0.0
      %627 = vmatpush1.msra.mxu0 %v359
      %628 = vmatprep.subr.mxu0 0.0
      %629 = vmatpush1.msra.mxu0 %v360
      %630 = vmatprep.subr.mxu0 0.0
      %631 = vmatpush1.msra.mxu0 %v361
      %632 = vmatprep.subr.mxu0 0.0
      %633 = vmatpush1.msra.mxu0 %v362
      %634 = vmatprep.subr.mxu0 0.0
      %635 = vmatpush1.msra.mxu0 %v363
      %636 = vmatprep.subr.mxu0 0.0
      %637 = vmatpush1.msra.mxu0 0.0
      %638 = vmatprep.subr.mxu0 0.0
      %639 = vmatpush1.msra.mxu0 0.0
      %640 = vmatprep.subr.mxu0 0.0
      %641 = vmatpush1.msra.mxu0 0.0
      %642 = vmatprep.subr.mxu0 0.0
      %643 = vmatpush1.msra.mxu0 0.0
      %644 = vmatprep.subr.mxu0 0.0
      %645 = vmatpush1.msra.mxu0 0.0
      %646 = vmatprep.subr.mxu0 0.0
      %647 = vmatpush1.msra.mxu0 0.0
      %648 = vmatprep.subr.mxu0 0.0
      %649 = vmatpush1.msra.mxu0 0.0
      %650 = vmatprep.subr.mxu0 0.0
      %651 = vmatpush1.msra.mxu0 0.0
      %652 = vmatprep.subr.mxu0 0.0
      %653 = vmatpush1.msra.mxu0 0.0
      %654 = vmatprep.subr.mxu0 0.0
      %655 = vmatpush1.msra.mxu0 0.0
      %656 = vmatprep.subr.mxu0 0.0
      %657 = vmatpush1.msra.mxu0 0.0
      %658 = vmatprep.subr.mxu0 0.0
      %659 = vmatpush1.msra.mxu0 0.0
      %660 = vmatprep.subr.mxu0 0.0
      %661 = vmatpush1.msra.mxu0 0.0
      %662 = vmatprep.subr.mxu0 0.0
      %663 = vmatpush1.msra.mxu0 0.0
      %664 = vmatprep.subr.mxu0 0.0
      %665 = vmatpush1.msra.mxu0 0.0
      %666 = vmatprep.subr.mxu0 0.0
      %667 = vmatpush1.msra.mxu0 0.0
      %668 = vmatprep.subr.mxu0 0.0
      %669 = vmatpush1.msra.mxu0 0.0
      %670 = vmatprep.subr.mxu0 0.0
      %671 = vmatpush1.msra.mxu0 0.0
      %672 = vmatprep.subr.mxu0 0.0
      %673 = vmatpush1.msra.mxu0 0.0
      %674 = vmatprep.subr.mxu0 0.0
      %675 = vmatpush1.msra.mxu0 0.0
      %676 = vmatprep.subr.mxu0 0.0
      %677 = vmatpush1.msra.mxu0 0.0
      %678 = vmatprep.subr.mxu0 0.0
      %679 = vmatpush1.msra.mxu0 0.0
      %680 = vmatprep.subr.mxu0 0.0
      %681 = vmatpush1.msra.mxu0 0.0
      %682 = vmatprep.subr.mxu0 0.0
      %683 = vmatpush1.msra.mxu0 0.0
      %684 = vmatprep.mubr.f32.mxu0 0.0
      %685 = vmatmul.mubr.f32.gmra.mrb[0].mxu0 %v210
      %v686 = vpop.f32.mrb[0].mxu0
      %v687 = vadd.f32 %v617, %v686
      %v688 = vpop.f32.mrb[0].mxu0
      %689 = vdwg.mxu0
      %s690 = scalar_lea.vmem %s1, 320
      %v691 = vld [vmem:[%s690] sm:$0xff]
      %v692 = vld [vmem:[%s690 + $0x8] sm:$0xff]
      %v693 = vld [vmem:[%s690 + $0x10] sm:$0xff]
      %v694 = vld [vmem:[%s690 + $0x18] sm:$0xff]
      %v695 = vld [vmem:[%s690 + $0x20] sm:$0xff]
      %v696 = vld [vmem:[%s690 + $0x28] sm:$0xff]
      %v697 = vld [vmem:[%s690 + $0x30] sm:$0xff]
      %v698 = vld [vmem:[%s690 + $0x38] sm:$0xff]
      %699 = vmatprep.subr.mxu0 0.0
      %700 = vmatpush1.msra.mxu0 %v691
      %701 = vmatprep.subr.mxu0 0.0
      %702 = vmatpush1.msra.mxu0 %v692
      %703 = vmatprep.subr.mxu0 0.0
      %704 = vmatpush1.msra.mxu0 %v693
      %705 = vmatprep.subr.mxu0 0.0
      %706 = vmatpush1.msra.mxu0 %v694
      %707 = vmatprep.subr.mxu0 0.0
      %708 = vmatpush1.msra.mxu0 %v695
      %709 = vmatprep.subr.mxu0 0.0
      %710 = vmatpush1.msra.mxu0 %v696
      %711 = vmatprep.subr.mxu0 0.0
      %712 = vmatpush1.msra.mxu0 %v697
      %713 = vmatprep.subr.mxu0 0.0
      %714 = vmatpush1.msra.mxu0 %v698
      %715 = vmatprep.subr.mxu0 0.0
      %716 = vmatpush1.msra.mxu0 0.0
      %717 = vmatprep.subr.mxu0 0.0
      %718 = vmatpush1.msra.mxu0 0.0
      %719 = vmatprep.subr.mxu0 0.0
      %720 = vmatpush1.msra.mxu0 0.0
      %721 = vmatprep.subr.mxu0 0.0
      %722 = vmatpush1.msra.mxu0 0.0
      %723 = vmatprep.subr.mxu0 0.0
      %724 = vmatpush1.msra.mxu0 0.0
      %725 = vmatprep.subr.mxu0 0.0
      %726 = vmatpush1.msra.mxu0 0.0
      %727 = vmatprep.subr.mxu0 0.0
      %728 = vmatpush1.msra.mxu0 0.0
      %729 = vmatprep.subr.mxu0 0.0
      %730 = vmatpush1.msra.mxu0 0.0
      %731 = vmatprep.subr.mxu0 0.0
      %732 = vmatpush1.msra.mxu0 0.0
      %733 = vmatprep.subr.mxu0 0.0
      %734 = vmatpush1.msra.mxu0 0.0
      %735 = vmatprep.subr.mxu0 0.0
      %736 = vmatpush1.msra.mxu0 0.0
      %737 = vmatprep.subr.mxu0 0.0
      %738 = vmatpush1.msra.mxu0 0.0
      %739 = vmatprep.subr.mxu0 0.0
      %740 = vmatpush1.msra.mxu0 0.0
      %741 = vmatprep.subr.mxu0 0.0
      %742 = vmatpush1.msra.mxu0 0.0
      %743 = vmatprep.subr.mxu0 0.0
      %744 = vmatpush1.msra.mxu0 0.0
      %745 = vmatprep.subr.mxu0 0.0
      %746 = vmatpush1.msra.mxu0 0.0
      %747 = vmatprep.subr.mxu0 0.0
      %748 = vmatpush1.msra.mxu0 0.0
      %749 = vmatprep.subr.mxu0 0.0
      %750 = vmatpush1.msra.mxu0 0.0
      %751 = vmatprep.subr.mxu0 0.0
      %752 = vmatpush1.msra.mxu0 0.0
      %753 = vmatprep.subr.mxu0 0.0
      %754 = vmatpush1.msra.mxu0 0.0
      %755 = vmatprep.subr.mxu0 0.0
      %756 = vmatpush1.msra.mxu0 0.0
      %757 = vmatprep.subr.mxu0 0.0
      %758 = vmatpush1.msra.mxu0 0.0
      %759 = vmatprep.subr.mxu0 0.0
      %760 = vmatpush1.msra.mxu0 0.0
      %761 = vmatprep.subr.mxu0 0.0
      %762 = vmatpush1.msra.mxu0 0.0
      %763 = vmatprep.mubr.f32.mxu0 0.0
      %764 = vmatmul.mubr.f32.gmra.mrb[0].mxu0 %v468
      %v765 = vpop.f32.mrb[0].mxu0
      %v766 = vadd.f32 0.0, %v765
      %v767 = vpop.f32.mrb[0].mxu0
      %768 = vdwg.mxu0
      %769 = vmatprep.subr.mxu0 0.0
      %770 = vmatpush1.msra.mxu0 %v449
      %771 = vmatprep.subr.mxu0 0.0
      %772 = vmatpush1.msra.mxu0 %v450
      %773 = vmatprep.subr.mxu0 0.0
      %774 = vmatpush1.msra.mxu0 %v451
      %775 = vmatprep.subr.mxu0 0.0
      %776 = vmatpush1.msra.mxu0 %v452
      %777 = vmatprep.subr.mxu0 0.0
      %778 = vmatpush1.msra.mxu0 %v453
      %779 = vmatprep.subr.mxu0 0.0
      %780 = vmatpush1.msra.mxu0 %v454
      %781 = vmatprep.subr.mxu0 0.0
      %782 = vmatpush1.msra.mxu0 %v455
      %783 = vmatprep.subr.mxu0 0.0
      %784 = vmatpush1.msra.mxu0 %v456
      %785 = vmatprep.subr.mxu0 0.0
      %786 = vmatpush1.msra.mxu0 0.0
      %787 = vmatprep.subr.mxu0 0.0
      %788 = vmatpush1.msra.mxu0 0.0
      %789 = vmatprep.subr.mxu0 0.0
      %790 = vmatpush1.msra.mxu0 0.0
      %791 = vmatprep.subr.mxu0 0.0
      %792 = vmatpush1.msra.mxu0 0.0
      %793 = vmatprep.subr.mxu0 0.0
      %794 = vmatpush1.msra.mxu0 0.0
      %795 = vmatprep.subr.mxu0 0.0
      %796 = vmatpush1.msra.mxu0 0.0
      %797 = vmatprep.subr.mxu0 0.0
      %798 = vmatpush1.msra.mxu0 0.0
      %799 = vmatprep.subr.mxu0 0.0
      %800 = vmatpush1.msra.mxu0 0.0
      %801 = vmatprep.subr.mxu0 0.0
      %802 = vmatpush1.msra.mxu0 0.0
      %803 = vmatprep.subr.mxu0 0.0
      %804 = vmatpush1.msra.mxu0 0.0
      %805 = vmatprep.subr.mxu0 0.0
      %806 = vmatpush1.msra.mxu0 0.0
      %807 = vmatprep.subr.mxu0 0.0
      %808 = vmatpush1.msra.mxu0 0.0
      %809 = vmatprep.subr.mxu0 0.0
      %810 = vmatpush1.msra.mxu0 0.0
      %811 = vmatprep.subr.mxu0 0.0
      %812 = vmatpush1.msra.mxu0 0.0
      %813 = vmatprep.subr.mxu0 0.0
      %814 = vmatpush1.msra.mxu0 0.0
      %815 = vmatprep.subr.mxu0 0.0
      %816 = vmatpush1.msra.mxu0 0.0
      %817 = vmatprep.subr.mxu0 0.0
      %818 = vmatpush1.msra.mxu0 0.0
      %819 = vmatprep.subr.mxu0 0.0
      %820 = vmatpush1.msra.mxu0 0.0
      %821 = vmatprep.subr.mxu0 0.0
      %822 = vmatpush1.msra.mxu0 0.0
      %823 = vmatprep.subr.mxu0 0.0
      %824 = vmatpush1.msra.mxu0 0.0
      %825 = vmatprep.subr.mxu0 0.0
      %826 = vmatpush1.msra.mxu0 0.0
      %827 = vmatprep.subr.mxu0 0.0
      %828 = vmatpush1.msra.mxu0 0.0
      %829 = vmatprep.subr.mxu0 0.0
      %830 = vmatpush1.msra.mxu0 0.0
      %831 = vmatprep.subr.mxu0 0.0
      %832 = vmatpush1.msra.mxu0 0.0
      %833 = vmatprep.mubr.f32.mxu0 0.0
      %834 = vmatmul.mubr.f32.gmra.mrb[0].mxu0 %v375
      %v835 = vpop.f32.mrb[0].mxu0
      %v836 = vadd.f32 %v766, %v835
      %v837 = vpop.f32.mrb[0].mxu0
      %838 = vdwg.mxu0
      %s839 = scalar_lea.vmem %s1, 256
      %v840 = vld [vmem:[%s839] sm:$0xff]
      %v841 = vld [vmem:[%s839 + $0x8] sm:$0xff]
      %v842 = vld [vmem:[%s839 + $0x10] sm:$0xff]
      %v843 = vld [vmem:[%s839 + $0x18] sm:$0xff]
      %v844 = vld [vmem:[%s839 + $0x20] sm:$0xff]
      %v845 = vld [vmem:[%s839 + $0x28] sm:$0xff]
      %v846 = vld [vmem:[%s839 + $0x30] sm:$0xff]
      %v847 = vld [vmem:[%s839 + $0x38] sm:$0xff]
      %s848 = scalar_lea.vmem %s181, 16
      %v849 = vld [vmem:[%s848] sm:$0x3f]
      %v851 = vsel %vm208, %v849, 0
      %853 = vmatprep.subr.mxu0 0.0
      %854 = vmatpush1.msra.mxu0 %v356
      %855 = vmatprep.subr.mxu0 0.0
      %856 = vmatpush1.msra.mxu0 %v357
      %857 = vmatprep.subr.mxu0 0.0
      %858 = vmatpush1.msra.mxu0 %v358
      %859 = vmatprep.subr.mxu0 0.0
      %860 = vmatpush1.msra.mxu0 %v359
      %861 = vmatprep.subr.mxu0 0.0
      %862 = vmatpush1.msra.mxu0 %v360
      %863 = vmatprep.subr.mxu0 0.0
      %864 = vmatpush1.msra.mxu0 %v361
      %865 = vmatprep.subr.mxu0 0.0
      %866 = vmatpush1.msra.mxu0 %v362
      %867 = vmatprep.subr.mxu0 0.0
      %868 = vmatpush1.msra.mxu0 %v363
      %869 = vmatprep.subr.mxu0 0.0
      %870 = vmatpush1.msra.mxu0 0.0
      %871 = vmatprep.subr.mxu0 0.0
      %872 = vmatpush1.msra.mxu0 0.0
      %873 = vmatprep.subr.mxu0 0.0
      %874 = vmatpush1.msra.mxu0 0.0
      %875 = vmatprep.subr.mxu0 0.0
      %876 = vmatpush1.msra.mxu0 0.0
      %877 = vmatprep.subr.mxu0 0.0
      %878 = vmatpush1.msra.mxu0 0.0
      %879 = vmatprep.subr.mxu0 0.0
      %880 = vmatpush1.msra.mxu0 0.0
      %881 = vmatprep.subr.mxu0 0.0
      %882 = vmatpush1.msra.mxu0 0.0
      %883 = vmatprep.subr.mxu0 0.0
      %884 = vmatpush1.msra.mxu0 0.0
      %885 = vmatprep.subr.mxu0 0.0
      %886 = vmatpush1.msra.mxu0 0.0
      %887 = vmatprep.subr.mxu0 0.0
      %888 = vmatpush1.msra.mxu0 0.0
      %889 = vmatprep.subr.mxu0 0.0
      %890 = vmatpush1.msra.mxu0 0.0
      %891 = vmatprep.subr.mxu0 0.0
      %892 = vmatpush1.msra.mxu0 0.0
      %893 = vmatprep.subr.mxu0 0.0
      %894 = vmatpush1.msra.mxu0 0.0
      %895 = vmatprep.subr.mxu0 0.0
      %896 = vmatpush1.msra.mxu0 0.0
      %897 = vmatprep.subr.mxu0 0.0
      %898 = vmatpush1.msra.mxu0 0.0
      %899 = vmatprep.subr.mxu0 0.0
      %900 = vmatpush1.msra.mxu0 0.0
      %901 = vmatprep.subr.mxu0 0.0
      %902 = vmatpush1.msra.mxu0 0.0
      %903 = vmatprep.subr.mxu0 0.0
      %904 = vmatpush1.msra.mxu0 0.0
      %905 = vmatprep.subr.mxu0 0.0
      %906 = vmatpush1.msra.mxu0 0.0
      %907 = vmatprep.subr.mxu0 0.0
      %908 = vmatpush1.msra.mxu0 0.0
      %909 = vmatprep.subr.mxu0 0.0
      %910 = vmatpush1.msra.mxu0 0.0
      %911 = vmatprep.subr.mxu0 0.0
      %912 = vmatpush1.msra.mxu0 0.0
      %913 = vmatprep.subr.mxu0 0.0
      %914 = vmatpush1.msra.mxu0 0.0
      %915 = vmatprep.subr.mxu0 0.0
      %916 = vmatpush1.msra.mxu0 0.0
      %917 = vmatprep.mubr.f32.mxu0 0.0
      %918 = vmatmul.mubr.f32.gmra.mrb[0].mxu0 %v851
      %v919 = vpop.f32.mrb[0].mxu0
      %v920 = vadd.f32 0.0, %v919
      %v921 = vpop.f32.mrb[0].mxu0
      %922 = vdwg.mxu0
      %v923 = vadd.f32 %v540, %v920
      %924 = vmatprep.subr.mxu0 0.0
      %925 = vmatpush1.msra.mxu0 %v190
      %926 = vmatprep.subr.mxu0 0.0
      %927 = vmatpush1.msra.mxu0 %v191
      %928 = vmatprep.subr.mxu0 0.0
      %929 = vmatpush1.msra.mxu0 %v192
      %930 = vmatprep.subr.mxu0 0.0
      %931 = vmatpush1.msra.mxu0 %v193
      %932 = vmatprep.subr.mxu0 0.0
      %933 = vmatpush1.msra.mxu0 %v194
      %934 = vmatprep.subr.mxu0 0.0
      %935 = vmatpush1.msra.mxu0 %v195
      %936 = vmatprep.subr.mxu0 0.0
      %937 = vmatpush1.msra.mxu0 %v196
      %938 = vmatprep.subr.mxu0 0.0
      %939 = vmatpush1.msra.mxu0 %v197
      %940 = vmatprep.subr.mxu0 0.0
      %941 = vmatpush1.msra.mxu0 0.0
      %942 = vmatprep.subr.mxu0 0.0
      %943 = vmatpush1.msra.mxu0 0.0
      %944 = vmatprep.subr.mxu0 0.0
      %945 = vmatpush1.msra.mxu0 0.0
      %946 = vmatprep.subr.mxu0 0.0
      %947 = vmatpush1.msra.mxu0 0.0
      %948 = vmatprep.subr.mxu0 0.0
      %949 = vmatpush1.msra.mxu0 0.0
      %950 = vmatprep.subr.mxu0 0.0
      %951 = vmatpush1.msra.mxu0 0.0
      %952 = vmatprep.subr.mxu0 0.0
      %953 = vmatpush1.msra.mxu0 0.0
      %954 = vmatprep.subr.mxu0 0.0
      %955 = vmatpush1.msra.mxu0 0.0
      %956 = vmatprep.subr.mxu0 0.0
      %957 = vmatpush1.msra.mxu0 0.0
      %958 = vmatprep.subr.mxu0 0.0
      %959 = vmatpush1.msra.mxu0 0.0
      %960 = vmatprep.subr.mxu0 0.0
      %961 = vmatpush1.msra.mxu0 0.0
      %962 = vmatprep.subr.mxu0 0.0
      %963 = vmatpush1.msra.mxu0 0.0
      %964 = vmatprep.subr.mxu0 0.0
      %965 = vmatpush1.msra.mxu0 0.0
      %966 = vmatprep.subr.mxu0 0.0
      %967 = vmatpush1.msra.mxu0 0.0
      %968 = vmatprep.subr.mxu0 0.0
      %969 = vmatpush1.msra.mxu0 0.0
      %970 = vmatprep.subr.mxu0 0.0
      %971 = vmatpush1.msra.mxu0 0.0
      %972 = vmatprep.subr.mxu0 0.0
      %973 = vmatpush1.msra.mxu0 0.0
      %974 = vmatprep.subr.mxu0 0.0
      %975 = vmatpush1.msra.mxu0 0.0
      %976 = vmatprep.subr.mxu0 0.0
      %977 = vmatpush1.msra.mxu0 0.0
      %978 = vmatprep.subr.mxu0 0.0
      %979 = vmatpush1.msra.mxu0 0.0
      %980 = vmatprep.subr.mxu0 0.0
      %981 = vmatpush1.msra.mxu0 0.0
      %982 = vmatprep.subr.mxu0 0.0
      %983 = vmatpush1.msra.mxu0 0.0
      %984 = vmatprep.subr.mxu0 0.0
      %985 = vmatpush1.msra.mxu0 0.0
      %986 = vmatprep.subr.mxu0 0.0
      %987 = vmatpush1.msra.mxu0 0.0
      %988 = vmatprep.mubr.f32.mxu0 0.0
      %989 = vmatmul.mubr.f32.gmra.mrb[0].mxu0 %v851
      %v990 = vpop.f32.mrb[0].mxu0
      %v991 = vadd.f32 0.0, %v990
      %v992 = vpop.f32.mrb[0].mxu0
      %993 = vdwg.mxu0
      %v994 = vadd.f32 %v687, %v991
      %v995 = vld [vmem:[%s848 + $0x1] sm:$0x3f]
      %v997 = vsel %vm208, %v995, 0
      %999 = vmatprep.subr.mxu0 0.0
      %1000 = vmatpush1.msra.mxu0 %v200
      %1001 = vmatprep.subr.mxu0 0.0
      %1002 = vmatpush1.msra.mxu0 %v201
      %1003 = vmatprep.subr.mxu0 0.0
      %1004 = vmatpush1.msra.mxu0 %v202
      %1005 = vmatprep.subr.mxu0 0.0
      %1006 = vmatpush1.msra.mxu0 %v203
      %1007 = vmatprep.subr.mxu0 0.0
      %1008 = vmatpush1.msra.mxu0 %v204
      %1009 = vmatprep.subr.mxu0 0.0
      %1010 = vmatpush1.msra.mxu0 %v205
      %1011 = vmatprep.subr.mxu0 0.0
      %1012 = vmatpush1.msra.mxu0 %v206
      %1013 = vmatprep.subr.mxu0 0.0
      %1014 = vmatpush1.msra.mxu0 %v207
      %1015 = vmatprep.subr.mxu0 0.0
      %1016 = vmatpush1.msra.mxu0 0.0
      %1017 = vmatprep.subr.mxu0 0.0
      %1018 = vmatpush1.msra.mxu0 0.0
      %1019 = vmatprep.subr.mxu0 0.0
      %1020 = vmatpush1.msra.mxu0 0.0
      %1021 = vmatprep.subr.mxu0 0.0
      %1022 = vmatpush1.msra.mxu0 0.0
      %1023 = vmatprep.subr.mxu0 0.0
      %1024 = vmatpush1.msra.mxu0 0.0
      %1025 = vmatprep.subr.mxu0 0.0
      %1026 = vmatpush1.msra.mxu0 0.0
      %1027 = vmatprep.subr.mxu0 0.0
      %1028 = vmatpush1.msra.mxu0 0.0
      %1029 = vmatprep.subr.mxu0 0.0
      %1030 = vmatpush1.msra.mxu0 0.0
      %1031 = vmatprep.subr.mxu0 0.0
      %1032 = vmatpush1.msra.mxu0 0.0
      %1033 = vmatprep.subr.mxu0 0.0
      %1034 = vmatpush1.msra.mxu0 0.0
      %1035 = vmatprep.subr.mxu0 0.0
      %1036 = vmatpush1.msra.mxu0 0.0
      %1037 = vmatprep.subr.mxu0 0.0
      %1038 = vmatpush1.msra.mxu0 0.0
      %1039 = vmatprep.subr.mxu0 0.0
      %1040 = vmatpush1.msra.mxu0 0.0
      %1041 = vmatprep.subr.mxu0 0.0
      %1042 = vmatpush1.msra.mxu0 0.0
      %1043 = vmatprep.subr.mxu0 0.0
      %1044 = vmatpush1.msra.mxu0 0.0
      %1045 = vmatprep.subr.mxu0 0.0
      %1046 = vmatpush1.msra.mxu0 0.0
      %1047 = vmatprep.subr.mxu0 0.0
      %1048 = vmatpush1.msra.mxu0 0.0
      %1049 = vmatprep.subr.mxu0 0.0
      %1050 = vmatpush1.msra.mxu0 0.0
      %1051 = vmatprep.subr.mxu0 0.0
      %1052 = vmatpush1.msra.mxu0 0.0
      %1053 = vmatprep.subr.mxu0 0.0
      %1054 = vmatpush1.msra.mxu0 0.0
      %1055 = vmatprep.subr.mxu0 0.0
      %1056 = vmatpush1.msra.mxu0 0.0
      %1057 = vmatprep.subr.mxu0 0.0
      %1058 = vmatpush1.msra.mxu0 0.0
      %1059 = vmatprep.subr.mxu0 0.0
      %1060 = vmatpush1.msra.mxu0 0.0
      %1061 = vmatprep.subr.mxu0 0.0
      %1062 = vmatpush1.msra.mxu0 0.0
      %1063 = vmatprep.mubr.f32.mxu0 0.0
      %1064 = vmatmul.mubr.f32.gmra.mrb[0].mxu0 %v997
      %v1065 = vpop.f32.mrb[0].mxu0
      %v1066 = vadd.f32 0.0, %v1065
      %v1067 = vpop.f32.mrb[0].mxu0
      %1068 = vdwg.mxu0
      %v1069 = vadd.f32 %v994, %v1066
      %v1070 = vld [vmem:[%s848 + $0x3] sm:$0x3f]
      %v1072 = vsel %vm208, %v1070, 0
      %1074 = vmatprep.subr.mxu0 0.0
      %1075 = vmatpush1.msra.mxu0 %v542
      %1076 = vmatprep.subr.mxu0 0.0
      %1077 = vmatpush1.msra.mxu0 %v543
      %1078 = vmatprep.subr.mxu0 0.0
      %1079 = vmatpush1.msra.mxu0 %v544
      %1080 = vmatprep.subr.mxu0 0.0
      %1081 = vmatpush1.msra.mxu0 %v545
      %1082 = vmatprep.subr.mxu0 0.0
      %1083 = vmatpush1.msra.mxu0 %v546
      %1084 = vmatprep.subr.mxu0 0.0
      %1085 = vmatpush1.msra.mxu0 %v547
      %1086 = vmatprep.subr.mxu0 0.0
      %1087 = vmatpush1.msra.mxu0 %v548
      %1088 = vmatprep.subr.mxu0 0.0
      %1089 = vmatpush1.msra.mxu0 %v549
      %1090 = vmatprep.subr.mxu0 0.0
      %1091 = vmatpush1.msra.mxu0 0.0
      %1092 = vmatprep.subr.mxu0 0.0
      %1093 = vmatpush1.msra.mxu0 0.0
      %1094 = vmatprep.subr.mxu0 0.0
      %1095 = vmatpush1.msra.mxu0 0.0
      %1096 = vmatprep.subr.mxu0 0.0
      %1097 = vmatpush1.msra.mxu0 0.0
      %1098 = vmatprep.subr.mxu0 0.0
      %1099 = vmatpush1.msra.mxu0 0.0
      %1100 = vmatprep.subr.mxu0 0.0
      %1101 = vmatpush1.msra.mxu0 0.0
      %1102 = vmatprep.subr.mxu0 0.0
      %1103 = vmatpush1.msra.mxu0 0.0
      %1104 = vmatprep.subr.mxu0 0.0
      %1105 = vmatpush1.msra.mxu0 0.0
      %1106 = vmatprep.subr.mxu0 0.0
      %1107 = vmatpush1.msra.mxu0 0.0
      %1108 = vmatprep.subr.mxu0 0.0
      %1109 = vmatpush1.msra.mxu0 0.0
      %1110 = vmatprep.subr.mxu0 0.0
      %1111 = vmatpush1.msra.mxu0 0.0
      %1112 = vmatprep.subr.mxu0 0.0
      %1113 = vmatpush1.msra.mxu0 0.0
      %1114 = vmatprep.subr.mxu0 0.0
      %1115 = vmatpush1.msra.mxu0 0.0
      %1116 = vmatprep.subr.mxu0 0.0
      %1117 = vmatpush1.msra.mxu0 0.0
      %1118 = vmatprep.subr.mxu0 0.0
      %1119 = vmatpush1.msra.mxu0 0.0
      %1120 = vmatprep.subr.mxu0 0.0
      %1121 = vmatpush1.msra.mxu0 0.0
      %1122 = vmatprep.subr.mxu0 0.0
      %1123 = vmatpush1.msra.mxu0 0.0
      %1124 = vmatprep.subr.mxu0 0.0
      %1125 = vmatpush1.msra.mxu0 0.0
      %1126 = vmatprep.subr.mxu0 0.0
      %1127 = vmatpush1.msra.mxu0 0.0
      %1128 = vmatprep.subr.mxu0 0.0
      %1129 = vmatpush1.msra.mxu0 0.0
      %1130 = vmatprep.subr.mxu0 0.0
      %1131 = vmatpush1.msra.mxu0 0.0
      %1132 = vmatprep.subr.mxu0 0.0
      %1133 = vmatpush1.msra.mxu0 0.0
      %1134 = vmatprep.subr.mxu0 0.0
      %1135 = vmatpush1.msra.mxu0 0.0
      %1136 = vmatprep.subr.mxu0 0.0
      %1137 = vmatpush1.msra.mxu0 0.0
      %1138 = vmatprep.mubr.f32.mxu0 0.0
      %1139 = vmatmul.mubr.f32.gmra.mrb[0].mxu0 %v1072
      %v1140 = vpop.f32.mrb[0].mxu0
      %v1141 = vadd.f32 0.0, %v1140
      %v1142 = vpop.f32.mrb[0].mxu0
      %1143 = vdwg.mxu0
      %v1144 = vadd.f32 %v923, %v1141
      %1145 = vmatprep.subr.mxu0 0.0
      %1146 = vmatpush1.msra.mxu0 %v366
      %1147 = vmatprep.subr.mxu0 0.0
      %1148 = vmatpush1.msra.mxu0 %v367
      %1149 = vmatprep.subr.mxu0 0.0
      %1150 = vmatpush1.msra.mxu0 %v368
      %1151 = vmatprep.subr.mxu0 0.0
      %1152 = vmatpush1.msra.mxu0 %v369
      %1153 = vmatprep.subr.mxu0 0.0
      %1154 = vmatpush1.msra.mxu0 %v370
      %1155 = vmatprep.subr.mxu0 0.0
      %1156 = vmatpush1.msra.mxu0 %v371
      %1157 = vmatprep.subr.mxu0 0.0
      %1158 = vmatpush1.msra.mxu0 %v372
      %1159 = vmatprep.subr.mxu0 0.0
      %1160 = vmatpush1.msra.mxu0 %v373
      %1161 = vmatprep.subr.mxu0 0.0
      %1162 = vmatpush1.msra.mxu0 0.0
      %1163 = vmatprep.subr.mxu0 0.0
      %1164 = vmatpush1.msra.mxu0 0.0
      %1165 = vmatprep.subr.mxu0 0.0
      %1166 = vmatpush1.msra.mxu0 0.0
      %1167 = vmatprep.subr.mxu0 0.0
      %1168 = vmatpush1.msra.mxu0 0.0
      %1169 = vmatprep.subr.mxu0 0.0
      %1170 = vmatpush1.msra.mxu0 0.0
      %1171 = vmatprep.subr.mxu0 0.0
      %1172 = vmatpush1.msra.mxu0 0.0
      %1173 = vmatprep.subr.mxu0 0.0
      %1174 = vmatpush1.msra.mxu0 0.0
      %1175 = vmatprep.subr.mxu0 0.0
      %1176 = vmatpush1.msra.mxu0 0.0
      %1177 = vmatprep.subr.mxu0 0.0
      %1178 = vmatpush1.msra.mxu0 0.0
      %1179 = vmatprep.subr.mxu0 0.0
      %1180 = vmatpush1.msra.mxu0 0.0
      %1181 = vmatprep.subr.mxu0 0.0
      %1182 = vmatpush1.msra.mxu0 0.0
      %1183 = vmatprep.subr.mxu0 0.0
      %1184 = vmatpush1.msra.mxu0 0.0
      %1185 = vmatprep.subr.mxu0 0.0
      %1186 = vmatpush1.msra.mxu0 0.0
      %1187 = vmatprep.subr.mxu0 0.0
      %1188 = vmatpush1.msra.mxu0 0.0
      %1189 = vmatprep.subr.mxu0 0.0
      %1190 = vmatpush1.msra.mxu0 0.0
      %1191 = vmatprep.subr.mxu0 0.0
      %1192 = vmatpush1.msra.mxu0 0.0
      %1193 = vmatprep.subr.mxu0 0.0
      %1194 = vmatpush1.msra.mxu0 0.0
      %1195 = vmatprep.subr.mxu0 0.0
      %1196 = vmatpush1.msra.mxu0 0.0
      %1197 = vmatprep.subr.mxu0 0.0
      %1198 = vmatpush1.msra.mxu0 0.0
      %1199 = vmatprep.subr.mxu0 0.0
      %1200 = vmatpush1.msra.mxu0 0.0
      %1201 = vmatprep.subr.mxu0 0.0
      %1202 = vmatpush1.msra.mxu0 0.0
      %1203 = vmatprep.subr.mxu0 0.0
      %1204 = vmatpush1.msra.mxu0 0.0
      %1205 = vmatprep.subr.mxu0 0.0
      %1206 = vmatpush1.msra.mxu0 0.0
      %1207 = vmatprep.subr.mxu0 0.0
      %1208 = vmatpush1.msra.mxu0 0.0
      %1209 = vmatprep.mubr.f32.mxu0 0.0
      %1210 = vmatmul.mubr.f32.gmra.mrb[0].mxu0 %v1072
      %v1211 = vpop.f32.mrb[0].mxu0
      %v1212 = vadd.f32 0.0, %v1211
      %v1213 = vpop.f32.mrb[0].mxu0
      %1214 = vdwg.mxu0
      %v1215 = vadd.f32 %v1069, %v1212
      %1216 = vmatprep.subr.mxu0 0.0
      %1217 = vmatpush1.msra.mxu0 %v840
      %1218 = vmatprep.subr.mxu0 0.0
      %1219 = vmatpush1.msra.mxu0 %v841
      %1220 = vmatprep.subr.mxu0 0.0
      %1221 = vmatpush1.msra.mxu0 %v842
      %1222 = vmatprep.subr.mxu0 0.0
      %1223 = vmatpush1.msra.mxu0 %v843
      %1224 = vmatprep.subr.mxu0 0.0
      %1225 = vmatpush1.msra.mxu0 %v844
      %1226 = vmatprep.subr.mxu0 0.0
      %1227 = vmatpush1.msra.mxu0 %v845
      %1228 = vmatprep.subr.mxu0 0.0
      %1229 = vmatpush1.msra.mxu0 %v846
      %1230 = vmatprep.subr.mxu0 0.0
      %1231 = vmatpush1.msra.mxu0 %v847
      %1232 = vmatprep.subr.mxu0 0.0
      %1233 = vmatpush1.msra.mxu0 0.0
      %1234 = vmatprep.subr.mxu0 0.0
      %1235 = vmatpush1.msra.mxu0 0.0
      %1236 = vmatprep.subr.mxu0 0.0
      %1237 = vmatpush1.msra.mxu0 0.0
      %1238 = vmatprep.subr.mxu0 0.0
      %1239 = vmatpush1.msra.mxu0 0.0
      %1240 = vmatprep.subr.mxu0 0.0
      %1241 = vmatpush1.msra.mxu0 0.0
      %1242 = vmatprep.subr.mxu0 0.0
      %1243 = vmatpush1.msra.mxu0 0.0
      %1244 = vmatprep.subr.mxu0 0.0
      %1245 = vmatpush1.msra.mxu0 0.0
      %1246 = vmatprep.subr.mxu0 0.0
      %1247 = vmatpush1.msra.mxu0 0.0
      %1248 = vmatprep.subr.mxu0 0.0
      %1249 = vmatpush1.msra.mxu0 0.0
      %1250 = vmatprep.subr.mxu0 0.0
      %1251 = vmatpush1.msra.mxu0 0.0
      %1252 = vmatprep.subr.mxu0 0.0
      %1253 = vmatpush1.msra.mxu0 0.0
      %1254 = vmatprep.subr.mxu0 0.0
      %1255 = vmatpush1.msra.mxu0 0.0
      %1256 = vmatprep.subr.mxu0 0.0
      %1257 = vmatpush1.msra.mxu0 0.0
      %1258 = vmatprep.subr.mxu0 0.0
      %1259 = vmatpush1.msra.mxu0 0.0
      %1260 = vmatprep.subr.mxu0 0.0
      %1261 = vmatpush1.msra.mxu0 0.0
      %1262 = vmatprep.subr.mxu0 0.0
      %1263 = vmatpush1.msra.mxu0 0.0
      %1264 = vmatprep.subr.mxu0 0.0
      %1265 = vmatpush1.msra.mxu0 0.0
      %1266 = vmatprep.subr.mxu0 0.0
      %1267 = vmatpush1.msra.mxu0 0.0
      %1268 = vmatprep.subr.mxu0 0.0
      %1269 = vmatpush1.msra.mxu0 0.0
      %1270 = vmatprep.subr.mxu0 0.0
      %1271 = vmatpush1.msra.mxu0 0.0
      %1272 = vmatprep.subr.mxu0 0.0
      %1273 = vmatpush1.msra.mxu0 0.0
      %1274 = vmatprep.subr.mxu0 0.0
      %1275 = vmatpush1.msra.mxu0 0.0
      %1276 = vmatprep.subr.mxu0 0.0
      %1277 = vmatpush1.msra.mxu0 0.0
      %1278 = vmatprep.subr.mxu0 0.0
      %1279 = vmatpush1.msra.mxu0 0.0
      %1280 = vmatprep.mubr.f32.mxu0 0.0
      %1281 = vmatmul.mubr.f32.gmra.mrb[0].mxu0 %v1072
      %v1282 = vpop.f32.mrb[0].mxu0
      %v1283 = vadd.f32 0.0, %v1282
      %v1284 = vpop.f32.mrb[0].mxu0
      %1285 = vdwg.mxu0
      %v1286 = vadd.f32 %v836, %v1283
      %1287 = vmatprep.subr.mxu0 0.0
      %1288 = vmatpush1.msra.mxu0 %v449
      %1289 = vmatprep.subr.mxu0 0.0
      %1290 = vmatpush1.msra.mxu0 %v450
      %1291 = vmatprep.subr.mxu0 0.0
      %1292 = vmatpush1.msra.mxu0 %v451
      %1293 = vmatprep.subr.mxu0 0.0
      %1294 = vmatpush1.msra.mxu0 %v452
      %1295 = vmatprep.subr.mxu0 0.0
      %1296 = vmatpush1.msra.mxu0 %v453
      %1297 = vmatprep.subr.mxu0 0.0
      %1298 = vmatpush1.msra.mxu0 %v454
      %1299 = vmatprep.subr.mxu0 0.0
      %1300 = vmatpush1.msra.mxu0 %v455
      %1301 = vmatprep.subr.mxu0 0.0
      %1302 = vmatpush1.msra.mxu0 %v456
      %1303 = vmatprep.subr.mxu0 0.0
      %1304 = vmatpush1.msra.mxu0 0.0
      %1305 = vmatprep.subr.mxu0 0.0
      %1306 = vmatpush1.msra.mxu0 0.0
      %1307 = vmatprep.subr.mxu0 0.0
      %1308 = vmatpush1.msra.mxu0 0.0
      %1309 = vmatprep.subr.mxu0 0.0
      %1310 = vmatpush1.msra.mxu0 0.0
      %1311 = vmatprep.subr.mxu0 0.0
      %1312 = vmatpush1.msra.mxu0 0.0
      %1313 = vmatprep.subr.mxu0 0.0
      %1314 = vmatpush1.msra.mxu0 0.0
      %1315 = vmatprep.subr.mxu0 0.0
      %1316 = vmatpush1.msra.mxu0 0.0
      %1317 = vmatprep.subr.mxu0 0.0
      %1318 = vmatpush1.msra.mxu0 0.0
      %1319 = vmatprep.subr.mxu0 0.0
      %1320 = vmatpush1.msra.mxu0 0.0
      %1321 = vmatprep.subr.mxu0 0.0
      %1322 = vmatpush1.msra.mxu0 0.0
      %1323 = vmatprep.subr.mxu0 0.0
      %1324 = vmatpush1.msra.mxu0 0.0
      %1325 = vmatprep.subr.mxu0 0.0
      %1326 = vmatpush1.msra.mxu0 0.0
      %1327 = vmatprep.subr.mxu0 0.0
      %1328 = vmatpush1.msra.mxu0 0.0
      %1329 = vmatprep.subr.mxu0 0.0
      %1330 = vmatpush1.msra.mxu0 0.0
      %1331 = vmatprep.subr.mxu0 0.0
      %1332 = vmatpush1.msra.mxu0 0.0
      %1333 = vmatprep.subr.mxu0 0.0
      %1334 = vmatpush1.msra.mxu0 0.0
      %1335 = vmatprep.subr.mxu0 0.0
      %1336 = vmatpush1.msra.mxu0 0.0
      %1337 = vmatprep.subr.mxu0 0.0
      %1338 = vmatpush1.msra.mxu0 0.0
      %1339 = vmatprep.subr.mxu0 0.0
      %1340 = vmatpush1.msra.mxu0 0.0
      %1341 = vmatprep.subr.mxu0 0.0
      %1342 = vmatpush1.msra.mxu0 0.0
      %1343 = vmatprep.subr.mxu0 0.0
      %1344 = vmatpush1.msra.mxu0 0.0
      %1345 = vmatprep.subr.mxu0 0.0
      %1346 = vmatpush1.msra.mxu0 0.0
      %1347 = vmatprep.subr.mxu0 0.0
      %1348 = vmatpush1.msra.mxu0 0.0
      %1349 = vmatprep.subr.mxu0 0.0
      %1350 = vmatpush1.msra.mxu0 0.0
      %1351 = vmatprep.mubr.f32.mxu0 0.0
      %1352 = vmatmul.mubr.f32.gmra.mrb[0].mxu0 %v1072
      %v1353 = vpop.f32.mrb[0].mxu0
      %v1354 = vadd.f32 0.0, %v1353
      %v1355 = vpop.f32.mrb[0].mxu0
      %1356 = vdwg.mxu0
      %1357 = vmatprep.subr.mxu0 0.0
      %1358 = vmatpush1.msra.mxu0 %v840
      %1359 = vmatprep.subr.mxu0 0.0
      %1360 = vmatpush1.msra.mxu0 %v841
      %1361 = vmatprep.subr.mxu0 0.0
      %1362 = vmatpush1.msra.mxu0 %v842
      %1363 = vmatprep.subr.mxu0 0.0
      %1364 = vmatpush1.msra.mxu0 %v843
      %1365 = vmatprep.subr.mxu0 0.0
      %1366 = vmatpush1.msra.mxu0 %v844
      %1367 = vmatprep.subr.mxu0 0.0
      %1368 = vmatpush1.msra.mxu0 %v845
      %1369 = vmatprep.subr.mxu0 0.0
      %1370 = vmatpush1.msra.mxu0 %v846
      %1371 = vmatprep.subr.mxu0 0.0
      %1372 = vmatpush1.msra.mxu0 %v847
      %1373 = vmatprep.subr.mxu0 0.0
      %1374 = vmatpush1.msra.mxu0 0.0
      %1375 = vmatprep.subr.mxu0 0.0
      %1376 = vmatpush1.msra.mxu0 0.0
      %1377 = vmatprep.subr.mxu0 0.0
      %1378 = vmatpush1.msra.mxu0 0.0
      %1379 = vmatprep.subr.mxu0 0.0
      %1380 = vmatpush1.msra.mxu0 0.0
      %1381 = vmatprep.subr.mxu0 0.0
      %1382 = vmatpush1.msra.mxu0 0.0
      %1383 = vmatprep.subr.mxu0 0.0
      %1384 = vmatpush1.msra.mxu0 0.0
      %1385 = vmatprep.subr.mxu0 0.0
      %1386 = vmatpush1.msra.mxu0 0.0
      %1387 = vmatprep.subr.mxu0 0.0
      %1388 = vmatpush1.msra.mxu0 0.0
      %1389 = vmatprep.subr.mxu0 0.0
      %1390 = vmatpush1.msra.mxu0 0.0
      %1391 = vmatprep.subr.mxu0 0.0
      %1392 = vmatpush1.msra.mxu0 0.0
      %1393 = vmatprep.subr.mxu0 0.0
      %1394 = vmatpush1.msra.mxu0 0.0
      %1395 = vmatprep.subr.mxu0 0.0
      %1396 = vmatpush1.msra.mxu0 0.0
      %1397 = vmatprep.subr.mxu0 0.0
      %1398 = vmatpush1.msra.mxu0 0.0
      %1399 = vmatprep.subr.mxu0 0.0
      %1400 = vmatpush1.msra.mxu0 0.0
      %1401 = vmatprep.subr.mxu0 0.0
      %1402 = vmatpush1.msra.mxu0 0.0
      %1403 = vmatprep.subr.mxu0 0.0
      %1404 = vmatpush1.msra.mxu0 0.0
      %1405 = vmatprep.subr.mxu0 0.0
      %1406 = vmatpush1.msra.mxu0 0.0
      %1407 = vmatprep.subr.mxu0 0.0
      %1408 = vmatpush1.msra.mxu0 0.0
      %1409 = vmatprep.subr.mxu0 0.0
      %1410 = vmatpush1.msra.mxu0 0.0
      %1411 = vmatprep.subr.mxu0 0.0
      %1412 = vmatpush1.msra.mxu0 0.0
      %1413 = vmatprep.subr.mxu0 0.0
      %1414 = vmatpush1.msra.mxu0 0.0
      %1415 = vmatprep.subr.mxu0 0.0
      %1416 = vmatpush1.msra.mxu0 0.0
      %1417 = vmatprep.subr.mxu0 0.0
      %1418 = vmatpush1.msra.mxu0 0.0
      %1419 = vmatprep.subr.mxu0 0.0
      %1420 = vmatpush1.msra.mxu0 0.0
      %1421 = vmatprep.mubr.f32.mxu0 0.0
      %1422 = vmatmul.mubr.f32.gmra.mrb[0].mxu0 %v468
      %v1423 = vpop.f32.mrb[0].mxu0
      %v1424 = vadd.f32 %v1354, %v1423
      %v1425 = vpop.f32.mrb[0].mxu0
      %1426 = vdwg.mxu0
      %v1427 = vld [vmem:[%s848 + $0x4] sm:$0x3f]
      %v1429 = vsel %vm208, %v1427, 0
      %1431 = vmatprep.subr.mxu0 0.0
      %1432 = vmatpush1.msra.mxu0 %v459
      %1433 = vmatprep.subr.mxu0 0.0
      %1434 = vmatpush1.msra.mxu0 %v460
      %1435 = vmatprep.subr.mxu0 0.0
      %1436 = vmatpush1.msra.mxu0 %v461
      %1437 = vmatprep.subr.mxu0 0.0
      %1438 = vmatpush1.msra.mxu0 %v462
      %1439 = vmatprep.subr.mxu0 0.0
      %1440 = vmatpush1.msra.mxu0 %v463
      %1441 = vmatprep.subr.mxu0 0.0
      %1442 = vmatpush1.msra.mxu0 %v464
      %1443 = vmatprep.subr.mxu0 0.0
      %1444 = vmatpush1.msra.mxu0 %v465
      %1445 = vmatprep.subr.mxu0 0.0
      %1446 = vmatpush1.msra.mxu0 %v466
      %1447 = vmatprep.subr.mxu0 0.0
      %1448 = vmatpush1.msra.mxu0 0.0
      %1449 = vmatprep.subr.mxu0 0.0
      %1450 = vmatpush1.msra.mxu0 0.0
      %1451 = vmatprep.subr.mxu0 0.0
      %1452 = vmatpush1.msra.mxu0 0.0
      %1453 = vmatprep.subr.mxu0 0.0
      %1454 = vmatpush1.msra.mxu0 0.0
      %1455 = vmatprep.subr.mxu0 0.0
      %1456 = vmatpush1.msra.mxu0 0.0
      %1457 = vmatprep.subr.mxu0 0.0
      %1458 = vmatpush1.msra.mxu0 0.0
      %1459 = vmatprep.subr.mxu0 0.0
      %1460 = vmatpush1.msra.mxu0 0.0
      %1461 = vmatprep.subr.mxu0 0.0
      %1462 = vmatpush1.msra.mxu0 0.0
      %1463 = vmatprep.subr.mxu0 0.0
      %1464 = vmatpush1.msra.mxu0 0.0
      %1465 = vmatprep.subr.mxu0 0.0
      %1466 = vmatpush1.msra.mxu0 0.0
      %1467 = vmatprep.subr.mxu0 0.0
      %1468 = vmatpush1.msra.mxu0 0.0
      %1469 = vmatprep.subr.mxu0 0.0
      %1470 = vmatpush1.msra.mxu0 0.0
      %1471 = vmatprep.subr.mxu0 0.0
      %1472 = vmatpush1.msra.mxu0 0.0
      %1473 = vmatprep.subr.mxu0 0.0
      %1474 = vmatpush1.msra.mxu0 0.0
      %1475 = vmatprep.subr.mxu0 0.0
      %1476 = vmatpush1.msra.mxu0 0.0
      %1477 = vmatprep.subr.mxu0 0.0
      %1478 = vmatpush1.msra.mxu0 0.0
      %1479 = vmatprep.subr.mxu0 0.0
      %1480 = vmatpush1.msra.mxu0 0.0
      %1481 = vmatprep.subr.mxu0 0.0
      %1482 = vmatpush1.msra.mxu0 0.0
      %1483 = vmatprep.subr.mxu0 0.0
      %1484 = vmatpush1.msra.mxu0 0.0
      %1485 = vmatprep.subr.mxu0 0.0
      %1486 = vmatpush1.msra.mxu0 0.0
      %1487 = vmatprep.subr.mxu0 0.0
      %1488 = vmatpush1.msra.mxu0 0.0
      %1489 = vmatprep.subr.mxu0 0.0
      %1490 = vmatpush1.msra.mxu0 0.0
      %1491 = vmatprep.subr.mxu0 0.0
      %1492 = vmatpush1.msra.mxu0 0.0
      %1493 = vmatprep.subr.mxu0 0.0
      %1494 = vmatpush1.msra.mxu0 0.0
      %1495 = vmatprep.mubr.f32.mxu0 0.0
      %1496 = vmatmul.mubr.f32.gmra.mrb[0].mxu0 %v1429
      %v1497 = vpop.f32.mrb[0].mxu0
      %v1498 = vadd.f32 0.0, %v1497
      %v1499 = vpop.f32.mrb[0].mxu0
      %1500 = vdwg.mxu0
      %v1501 = vadd.f32 %v1215, %v1498
      %1502 = vmatprep.subr.mxu0 0.0
      %1503 = vmatpush1.msra.mxu0 %v691
      %1504 = vmatprep.subr.mxu0 0.0
      %1505 = vmatpush1.msra.mxu0 %v692
      %1506 = vmatprep.subr.mxu0 0.0
      %1507 = vmatpush1.msra.mxu0 %v693
      %1508 = vmatprep.subr.mxu0 0.0
      %1509 = vmatpush1.msra.mxu0 %v694
      %1510 = vmatprep.subr.mxu0 0.0
      %1511 = vmatpush1.msra.mxu0 %v695
      %1512 = vmatprep.subr.mxu0 0.0
      %1513 = vmatpush1.msra.mxu0 %v696
      %1514 = vmatprep.subr.mxu0 0.0
      %1515 = vmatpush1.msra.mxu0 %v697
      %1516 = vmatprep.subr.mxu0 0.0
      %1517 = vmatpush1.msra.mxu0 %v698
      %1518 = vmatprep.subr.mxu0 0.0
      %1519 = vmatpush1.msra.mxu0 0.0
      %1520 = vmatprep.subr.mxu0 0.0
      %1521 = vmatpush1.msra.mxu0 0.0
      %1522 = vmatprep.subr.mxu0 0.0
      %1523 = vmatpush1.msra.mxu0 0.0
      %1524 = vmatprep.subr.mxu0 0.0
      %1525 = vmatpush1.msra.mxu0 0.0
      %1526 = vmatprep.subr.mxu0 0.0
      %1527 = vmatpush1.msra.mxu0 0.0
      %1528 = vmatprep.subr.mxu0 0.0
      %1529 = vmatpush1.msra.mxu0 0.0
      %1530 = vmatprep.subr.mxu0 0.0
      %1531 = vmatpush1.msra.mxu0 0.0
      %1532 = vmatprep.subr.mxu0 0.0
      %1533 = vmatpush1.msra.mxu0 0.0
      %1534 = vmatprep.subr.mxu0 0.0
      %1535 = vmatpush1.msra.mxu0 0.0
      %1536 = vmatprep.subr.mxu0 0.0
      %1537 = vmatpush1.msra.mxu0 0.0
      %1538 = vmatprep.subr.mxu0 0.0
      %1539 = vmatpush1.msra.mxu0 0.0
      %1540 = vmatprep.subr.mxu0 0.0
      %1541 = vmatpush1.msra.mxu0 0.0
      %1542 = vmatprep.subr.mxu0 0.0
      %1543 = vmatpush1.msra.mxu0 0.0
      %1544 = vmatprep.subr.mxu0 0.0
      %1545 = vmatpush1.msra.mxu0 0.0
      %1546 = vmatprep.subr.mxu0 0.0
      %1547 = vmatpush1.msra.mxu0 0.0
      %1548 = vmatprep.subr.mxu0 0.0
      %1549 = vmatpush1.msra.mxu0 0.0
      %1550 = vmatprep.subr.mxu0 0.0
      %1551 = vmatpush1.msra.mxu0 0.0
      %1552 = vmatprep.subr.mxu0 0.0
      %1553 = vmatpush1.msra.mxu0 0.0
      %1554 = vmatprep.subr.mxu0 0.0
      %1555 = vmatpush1.msra.mxu0 0.0
      %1556 = vmatprep.subr.mxu0 0.0
      %1557 = vmatpush1.msra.mxu0 0.0
      %1558 = vmatprep.subr.mxu0 0.0
      %1559 = vmatpush1.msra.mxu0 0.0
      %1560 = vmatprep.subr.mxu0 0.0
      %1561 = vmatpush1.msra.mxu0 0.0
      %1562 = vmatprep.subr.mxu0 0.0
      %1563 = vmatpush1.msra.mxu0 0.0
      %1564 = vmatprep.subr.mxu0 0.0
      %1565 = vmatpush1.msra.mxu0 0.0
      %1566 = vmatprep.mubr.f32.mxu0 0.0
      %1567 = vmatmul.mubr.f32.gmra.mrb[0].mxu0 %v1429
      %v1568 = vpop.f32.mrb[0].mxu0
      %v1569 = vadd.f32 0.0, %v1568
      %v1570 = vpop.f32.mrb[0].mxu0
      %1571 = vdwg.mxu0
      %v1572 = vadd.f32 %v1424, %v1569
      %s1573 = scalar_lea.vmem %s181, 32
      %v1574 = vld [vmem:[%s1573] sm:$0x3f]
      %v1576 = vsel %vm208, %v1574, 0
      %1578 = vmatprep.subr.mxu0 0.0
      %1579 = vmatpush1.msra.mxu0 %v449
      %1580 = vmatprep.subr.mxu0 0.0
      %1581 = vmatpush1.msra.mxu0 %v450
      %1582 = vmatprep.subr.mxu0 0.0
      %1583 = vmatpush1.msra.mxu0 %v451
      %1584 = vmatprep.subr.mxu0 0.0
      %1585 = vmatpush1.msra.mxu0 %v452
      %1586 = vmatprep.subr.mxu0 0.0
      %1587 = vmatpush1.msra.mxu0 %v453
      %1588 = vmatprep.subr.mxu0 0.0
      %1589 = vmatpush1.msra.mxu0 %v454
      %1590 = vmatprep.subr.mxu0 0.0
      %1591 = vmatpush1.msra.mxu0 %v455
      %1592 = vmatprep.subr.mxu0 0.0
      %1593 = vmatpush1.msra.mxu0 %v456
      %1594 = vmatprep.subr.mxu0 0.0
      %1595 = vmatpush1.msra.mxu0 0.0
      %1596 = vmatprep.subr.mxu0 0.0
      %1597 = vmatpush1.msra.mxu0 0.0
      %1598 = vmatprep.subr.mxu0 0.0
      %1599 = vmatpush1.msra.mxu0 0.0
      %1600 = vmatprep.subr.mxu0 0.0
      %1601 = vmatpush1.msra.mxu0 0.0
      %1602 = vmatprep.subr.mxu0 0.0
      %1603 = vmatpush1.msra.mxu0 0.0
      %1604 = vmatprep.subr.mxu0 0.0
      %1605 = vmatpush1.msra.mxu0 0.0
      %1606 = vmatprep.subr.mxu0 0.0
      %1607 = vmatpush1.msra.mxu0 0.0
      %1608 = vmatprep.subr.mxu0 0.0
      %1609 = vmatpush1.msra.mxu0 0.0
      %1610 = vmatprep.subr.mxu0 0.0
      %1611 = vmatpush1.msra.mxu0 0.0
      %1612 = vmatprep.subr.mxu0 0.0
      %1613 = vmatpush1.msra.mxu0 0.0
      %1614 = vmatprep.subr.mxu0 0.0
      %1615 = vmatpush1.msra.mxu0 0.0
      %1616 = vmatprep.subr.mxu0 0.0
      %1617 = vmatpush1.msra.mxu0 0.0
      %1618 = vmatprep.subr.mxu0 0.0
      %1619 = vmatpush1.msra.mxu0 0.0
      %1620 = vmatprep.subr.mxu0 0.0
      %1621 = vmatpush1.msra.mxu0 0.0
      %1622 = vmatprep.subr.mxu0 0.0
      %1623 = vmatpush1.msra.mxu0 0.0
      %1624 = vmatprep.subr.mxu0 0.0
      %1625 = vmatpush1.msra.mxu0 0.0
      %1626 = vmatprep.subr.mxu0 0.0
      %1627 = vmatpush1.msra.mxu0 0.0
      %1628 = vmatprep.subr.mxu0 0.0
      %1629 = vmatpush1.msra.mxu0 0.0
      %1630 = vmatprep.subr.mxu0 0.0
      %1631 = vmatpush1.msra.mxu0 0.0
      %1632 = vmatprep.subr.mxu0 0.0
      %1633 = vmatpush1.msra.mxu0 0.0
      %1634 = vmatprep.subr.mxu0 0.0
      %1635 = vmatpush1.msra.mxu0 0.0
      %1636 = vmatprep.subr.mxu0 0.0
      %1637 = vmatpush1.msra.mxu0 0.0
      %1638 = vmatprep.subr.mxu0 0.0
      %1639 = vmatpush1.msra.mxu0 0.0
      %1640 = vmatprep.subr.mxu0 0.0
      %1641 = vmatpush1.msra.mxu0 0.0
      %1642 = vmatprep.mubr.f32.mxu0 0.0
      %1643 = vmatmul.mubr.f32.gmra.mrb[0].mxu0 %v1576
      %v1644 = vpop.f32.mrb[0].mxu0
      %v1645 = vadd.f32 0.0, %v1644
      %v1646 = vpop.f32.mrb[0].mxu0
      %1647 = vdwg.mxu0
      %v1648 = vadd.f32 %v1144, %v1645
      %1649 = vmatprep.subr.mxu0 0.0
      %1650 = vmatpush1.msra.mxu0 %v190
      %1651 = vmatprep.subr.mxu0 0.0
      %1652 = vmatpush1.msra.mxu0 %v191
      %1653 = vmatprep.subr.mxu0 0.0
      %1654 = vmatpush1.msra.mxu0 %v192
      %1655 = vmatprep.subr.mxu0 0.0
      %1656 = vmatpush1.msra.mxu0 %v193
      %1657 = vmatprep.subr.mxu0 0.0
      %1658 = vmatpush1.msra.mxu0 %v194
      %1659 = vmatprep.subr.mxu0 0.0
      %1660 = vmatpush1.msra.mxu0 %v195
      %1661 = vmatprep.subr.mxu0 0.0
      %1662 = vmatpush1.msra.mxu0 %v196
      %1663 = vmatprep.subr.mxu0 0.0
      %1664 = vmatpush1.msra.mxu0 %v197
      %1665 = vmatprep.subr.mxu0 0.0
      %1666 = vmatpush1.msra.mxu0 0.0
      %1667 = vmatprep.subr.mxu0 0.0
      %1668 = vmatpush1.msra.mxu0 0.0
      %1669 = vmatprep.subr.mxu0 0.0
      %1670 = vmatpush1.msra.mxu0 0.0
      %1671 = vmatprep.subr.mxu0 0.0
      %1672 = vmatpush1.msra.mxu0 0.0
      %1673 = vmatprep.subr.mxu0 0.0
      %1674 = vmatpush1.msra.mxu0 0.0
      %1675 = vmatprep.subr.mxu0 0.0
      %1676 = vmatpush1.msra.mxu0 0.0
      %1677 = vmatprep.subr.mxu0 0.0
      %1678 = vmatpush1.msra.mxu0 0.0
      %1679 = vmatprep.subr.mxu0 0.0
      %1680 = vmatpush1.msra.mxu0 0.0
      %1681 = vmatprep.subr.mxu0 0.0
      %1682 = vmatpush1.msra.mxu0 0.0
      %1683 = vmatprep.subr.mxu0 0.0
      %1684 = vmatpush1.msra.mxu0 0.0
      %1685 = vmatprep.subr.mxu0 0.0
      %1686 = vmatpush1.msra.mxu0 0.0
      %1687 = vmatprep.subr.mxu0 0.0
      %1688 = vmatpush1.msra.mxu0 0.0
      %1689 = vmatprep.subr.mxu0 0.0
      %1690 = vmatpush1.msra.mxu0 0.0
      %1691 = vmatprep.subr.mxu0 0.0
      %1692 = vmatpush1.msra.mxu0 0.0
      %1693 = vmatprep.subr.mxu0 0.0
      %1694 = vmatpush1.msra.mxu0 0.0
      %1695 = vmatprep.subr.mxu0 0.0
      %1696 = vmatpush1.msra.mxu0 0.0
      %1697 = vmatprep.subr.mxu0 0.0
      %1698 = vmatpush1.msra.mxu0 0.0
      %1699 = vmatprep.subr.mxu0 0.0
      %1700 = vmatpush1.msra.mxu0 0.0
      %1701 = vmatprep.subr.mxu0 0.0
      %1702 = vmatpush1.msra.mxu0 0.0
      %1703 = vmatprep.subr.mxu0 0.0
      %1704 = vmatpush1.msra.mxu0 0.0
      %1705 = vmatprep.subr.mxu0 0.0
      %1706 = vmatpush1.msra.mxu0 0.0
      %1707 = vmatprep.subr.mxu0 0.0
      %1708 = vmatpush1.msra.mxu0 0.0
      %1709 = vmatprep.subr.mxu0 0.0
      %1710 = vmatpush1.msra.mxu0 0.0
      %1711 = vmatprep.subr.mxu0 0.0
      %1712 = vmatpush1.msra.mxu0 0.0
      %1713 = vmatprep.mubr.f32.mxu0 0.0
      %1714 = vmatmul.mubr.f32.gmra.mrb[0].mxu0 %v1576
      %v1715 = vpop.f32.mrb[0].mxu0
      %v1716 = vadd.f32 0.0, %v1715
      %v1717 = vpop.f32.mrb[0].mxu0
      %1718 = vdwg.mxu0
      %v1719 = vadd.f32 %v1286, %v1716
      %v1720 = vld [vmem:[%s1573 + $0x1] sm:$0x3f]
      %v1722 = vsel %vm208, %v1720, 0
      %1724 = vmatprep.subr.mxu0 0.0
      %1725 = vmatpush1.msra.mxu0 %v691
      %1726 = vmatprep.subr.mxu0 0.0
      %1727 = vmatpush1.msra.mxu0 %v692
      %1728 = vmatprep.subr.mxu0 0.0
      %1729 = vmatpush1.msra.mxu0 %v693
      %1730 = vmatprep.subr.mxu0 0.0
      %1731 = vmatpush1.msra.mxu0 %v694
      %1732 = vmatprep.subr.mxu0 0.0
      %1733 = vmatpush1.msra.mxu0 %v695
      %1734 = vmatprep.subr.mxu0 0.0
      %1735 = vmatpush1.msra.mxu0 %v696
      %1736 = vmatprep.subr.mxu0 0.0
      %1737 = vmatpush1.msra.mxu0 %v697
      %1738 = vmatprep.subr.mxu0 0.0
      %1739 = vmatpush1.msra.mxu0 %v698
      %1740 = vmatprep.subr.mxu0 0.0
      %1741 = vmatpush1.msra.mxu0 0.0
      %1742 = vmatprep.subr.mxu0 0.0
      %1743 = vmatpush1.msra.mxu0 0.0
      %1744 = vmatprep.subr.mxu0 0.0
      %1745 = vmatpush1.msra.mxu0 0.0
      %1746 = vmatprep.subr.mxu0 0.0
      %1747 = vmatpush1.msra.mxu0 0.0
      %1748 = vmatprep.subr.mxu0 0.0
      %1749 = vmatpush1.msra.mxu0 0.0
      %1750 = vmatprep.subr.mxu0 0.0
      %1751 = vmatpush1.msra.mxu0 0.0
      %1752 = vmatprep.subr.mxu0 0.0
      %1753 = vmatpush1.msra.mxu0 0.0
      %1754 = vmatprep.subr.mxu0 0.0
      %1755 = vmatpush1.msra.mxu0 0.0
      %1756 = vmatprep.subr.mxu0 0.0
      %1757 = vmatpush1.msra.mxu0 0.0
      %1758 = vmatprep.subr.mxu0 0.0
      %1759 = vmatpush1.msra.mxu0 0.0
      %1760 = vmatprep.subr.mxu0 0.0
      %1761 = vmatpush1.msra.mxu0 0.0
      %1762 = vmatprep.subr.mxu0 0.0
      %1763 = vmatpush1.msra.mxu0 0.0
      %1764 = vmatprep.subr.mxu0 0.0
      %1765 = vmatpush1.msra.mxu0 0.0
      %1766 = vmatprep.subr.mxu0 0.0
      %1767 = vmatpush1.msra.mxu0 0.0
      %1768 = vmatprep.subr.mxu0 0.0
      %1769 = vmatpush1.msra.mxu0 0.0
      %1770 = vmatprep.subr.mxu0 0.0
      %1771 = vmatpush1.msra.mxu0 0.0
      %1772 = vmatprep.subr.mxu0 0.0
      %1773 = vmatpush1.msra.mxu0 0.0
      %1774 = vmatprep.subr.mxu0 0.0
      %1775 = vmatpush1.msra.mxu0 0.0
      %1776 = vmatprep.subr.mxu0 0.0
      %1777 = vmatpush1.msra.mxu0 0.0
      %1778 = vmatprep.subr.mxu0 0.0
      %1779 = vmatpush1.msra.mxu0 0.0
      %1780 = vmatprep.subr.mxu0 0.0
      %1781 = vmatpush1.msra.mxu0 0.0
      %1782 = vmatprep.subr.mxu0 0.0
      %1783 = vmatpush1.msra.mxu0 0.0
      %1784 = vmatprep.subr.mxu0 0.0
      %1785 = vmatpush1.msra.mxu0 0.0
      %1786 = vmatprep.subr.mxu0 0.0
      %1787 = vmatpush1.msra.mxu0 0.0
      %1788 = vmatprep.mubr.f32.mxu0 0.0
      %1789 = vmatmul.mubr.f32.gmra.mrb[0].mxu0 %v1722
      %v1790 = vpop.f32.mrb[0].mxu0
      %v1791 = vadd.f32 0.0, %v1790
      %v1792 = vpop.f32.mrb[0].mxu0
      %1793 = vdwg.mxu0
      %v1794 = vadd.f32 %v1648, %v1791
      %1795 = vmatprep.subr.mxu0 0.0
      %1796 = vmatpush1.msra.mxu0 %v840
      %1797 = vmatprep.subr.mxu0 0.0
      %1798 = vmatpush1.msra.mxu0 %v841
      %1799 = vmatprep.subr.mxu0 0.0
      %1800 = vmatpush1.msra.mxu0 %v842
      %1801 = vmatprep.subr.mxu0 0.0
      %1802 = vmatpush1.msra.mxu0 %v843
      %1803 = vmatprep.subr.mxu0 0.0
      %1804 = vmatpush1.msra.mxu0 %v844
      %1805 = vmatprep.subr.mxu0 0.0
      %1806 = vmatpush1.msra.mxu0 %v845
      %1807 = vmatprep.subr.mxu0 0.0
      %1808 = vmatpush1.msra.mxu0 %v846
      %1809 = vmatprep.subr.mxu0 0.0
      %1810 = vmatpush1.msra.mxu0 %v847
      %1811 = vmatprep.subr.mxu0 0.0
      %1812 = vmatpush1.msra.mxu0 0.0
      %1813 = vmatprep.subr.mxu0 0.0
      %1814 = vmatpush1.msra.mxu0 0.0
      %1815 = vmatprep.subr.mxu0 0.0
      %1816 = vmatpush1.msra.mxu0 0.0
      %1817 = vmatprep.subr.mxu0 0.0
      %1818 = vmatpush1.msra.mxu0 0.0
      %1819 = vmatprep.subr.mxu0 0.0
      %1820 = vmatpush1.msra.mxu0 0.0
      %1821 = vmatprep.subr.mxu0 0.0
      %1822 = vmatpush1.msra.mxu0 0.0
      %1823 = vmatprep.subr.mxu0 0.0
      %1824 = vmatpush1.msra.mxu0 0.0
      %1825 = vmatprep.subr.mxu0 0.0
      %1826 = vmatpush1.msra.mxu0 0.0
      %1827 = vmatprep.subr.mxu0 0.0
      %1828 = vmatpush1.msra.mxu0 0.0
      %1829 = vmatprep.subr.mxu0 0.0
      %1830 = vmatpush1.msra.mxu0 0.0
      %1831 = vmatprep.subr.mxu0 0.0
      %1832 = vmatpush1.msra.mxu0 0.0
      %1833 = vmatprep.subr.mxu0 0.0
      %1834 = vmatpush1.msra.mxu0 0.0
      %1835 = vmatprep.subr.mxu0 0.0
      %1836 = vmatpush1.msra.mxu0 0.0
      %1837 = vmatprep.subr.mxu0 0.0
      %1838 = vmatpush1.msra.mxu0 0.0
      %1839 = vmatprep.subr.mxu0 0.0
      %1840 = vmatpush1.msra.mxu0 0.0
      %1841 = vmatprep.subr.mxu0 0.0
      %1842 = vmatpush1.msra.mxu0 0.0
      %1843 = vmatprep.subr.mxu0 0.0
      %1844 = vmatpush1.msra.mxu0 0.0
      %1845 = vmatprep.subr.mxu0 0.0
      %1846 = vmatpush1.msra.mxu0 0.0
      %1847 = vmatprep.subr.mxu0 0.0
      %1848 = vmatpush1.msra.mxu0 0.0
      %1849 = vmatprep.subr.mxu0 0.0
      %1850 = vmatpush1.msra.mxu0 0.0
      %1851 = vmatprep.subr.mxu0 0.0
      %1852 = vmatpush1.msra.mxu0 0.0
      %1853 = vmatprep.subr.mxu0 0.0
      %1854 = vmatpush1.msra.mxu0 0.0
      %1855 = vmatprep.subr.mxu0 0.0
      %1856 = vmatpush1.msra.mxu0 0.0
      %1857 = vmatprep.subr.mxu0 0.0
      %1858 = vmatpush1.msra.mxu0 0.0
      %1859 = vmatprep.mubr.f32.mxu0 0.0
      %1860 = vmatmul.mubr.f32.gmra.mrb[0].mxu0 %v1722
      %v1861 = vpop.f32.mrb[0].mxu0
      %v1862 = vadd.f32 0.0, %v1861
      %v1863 = vpop.f32.mrb[0].mxu0
      %1864 = vdwg.mxu0
      %v1865 = vadd.f32 %v1501, %v1862
      %1866 = vmatprep.subr.mxu0 0.0
      %1867 = vmatpush1.msra.mxu0 %v200
      %1868 = vmatprep.subr.mxu0 0.0
      %1869 = vmatpush1.msra.mxu0 %v201
      %1870 = vmatprep.subr.mxu0 0.0
      %1871 = vmatpush1.msra.mxu0 %v202
      %1872 = vmatprep.subr.mxu0 0.0
      %1873 = vmatpush1.msra.mxu0 %v203
      %1874 = vmatprep.subr.mxu0 0.0
      %1875 = vmatpush1.msra.mxu0 %v204
      %1876 = vmatprep.subr.mxu0 0.0
      %1877 = vmatpush1.msra.mxu0 %v205
      %1878 = vmatprep.subr.mxu0 0.0
      %1879 = vmatpush1.msra.mxu0 %v206
      %1880 = vmatprep.subr.mxu0 0.0
      %1881 = vmatpush1.msra.mxu0 %v207
      %1882 = vmatprep.subr.mxu0 0.0
      %1883 = vmatpush1.msra.mxu0 0.0
      %1884 = vmatprep.subr.mxu0 0.0
      %1885 = vmatpush1.msra.mxu0 0.0
      %1886 = vmatprep.subr.mxu0 0.0
      %1887 = vmatpush1.msra.mxu0 0.0
      %1888 = vmatprep.subr.mxu0 0.0
      %1889 = vmatpush1.msra.mxu0 0.0
      %1890 = vmatprep.subr.mxu0 0.0
      %1891 = vmatpush1.msra.mxu0 0.0
      %1892 = vmatprep.subr.mxu0 0.0
      %1893 = vmatpush1.msra.mxu0 0.0
      %1894 = vmatprep.subr.mxu0 0.0
      %1895 = vmatpush1.msra.mxu0 0.0
      %1896 = vmatprep.subr.mxu0 0.0
      %1897 = vmatpush1.msra.mxu0 0.0
      %1898 = vmatprep.subr.mxu0 0.0
      %1899 = vmatpush1.msra.mxu0 0.0
      %1900 = vmatprep.subr.mxu0 0.0
      %1901 = vmatpush1.msra.mxu0 0.0
      %1902 = vmatprep.subr.mxu0 0.0
      %1903 = vmatpush1.msra.mxu0 0.0
      %1904 = vmatprep.subr.mxu0 0.0
      %1905 = vmatpush1.msra.mxu0 0.0
      %1906 = vmatprep.subr.mxu0 0.0
      %1907 = vmatpush1.msra.mxu0 0.0
      %1908 = vmatprep.subr.mxu0 0.0
      %1909 = vmatpush1.msra.mxu0 0.0
      %1910 = vmatprep.subr.mxu0 0.0
      %1911 = vmatpush1.msra.mxu0 0.0
      %1912 = vmatprep.subr.mxu0 0.0
      %1913 = vmatpush1.msra.mxu0 0.0
      %1914 = vmatprep.subr.mxu0 0.0
      %1915 = vmatpush1.msra.mxu0 0.0
      %1916 = vmatprep.subr.mxu0 0.0
      %1917 = vmatpush1.msra.mxu0 0.0
      %1918 = vmatprep.subr.mxu0 0.0
      %1919 = vmatpush1.msra.mxu0 0.0
      %1920 = vmatprep.subr.mxu0 0.0
      %1921 = vmatpush1.msra.mxu0 0.0
      %1922 = vmatprep.subr.mxu0 0.0
      %1923 = vmatpush1.msra.mxu0 0.0
      %1924 = vmatprep.subr.mxu0 0.0
      %1925 = vmatpush1.msra.mxu0 0.0
      %1926 = vmatprep.subr.mxu0 0.0
      %1927 = vmatpush1.msra.mxu0 0.0
      %1928 = vmatprep.subr.mxu0 0.0
      %1929 = vmatpush1.msra.mxu0 0.0
      %1930 = vmatprep.mubr.f32.mxu0 0.0
      %1931 = vmatmul.mubr.f32.gmra.mrb[0].mxu0 %v1722
      %v1932 = vpop.f32.mrb[0].mxu0
      %v1933 = vadd.f32 0.0, %v1932
      %v1934 = vpop.f32.mrb[0].mxu0
      %1935 = vdwg.mxu0
      %v1936 = vadd.f32 %v1719, %v1933
      %1937 = vmatprep.subr.mxu0 0.0
      %1938 = vmatpush1.msra.mxu0 %v356
      %1939 = vmatprep.subr.mxu0 0.0
      %1940 = vmatpush1.msra.mxu0 %v357
      %1941 = vmatprep.subr.mxu0 0.0
      %1942 = vmatpush1.msra.mxu0 %v358
      %1943 = vmatprep.subr.mxu0 0.0
      %1944 = vmatpush1.msra.mxu0 %v359
      %1945 = vmatprep.subr.mxu0 0.0
      %1946 = vmatpush1.msra.mxu0 %v360
      %1947 = vmatprep.subr.mxu0 0.0
      %1948 = vmatpush1.msra.mxu0 %v361
      %1949 = vmatprep.subr.mxu0 0.0
      %1950 = vmatpush1.msra.mxu0 %v362
      %1951 = vmatprep.subr.mxu0 0.0
      %1952 = vmatpush1.msra.mxu0 %v363
      %1953 = vmatprep.subr.mxu0 0.0
      %1954 = vmatpush1.msra.mxu0 0.0
      %1955 = vmatprep.subr.mxu0 0.0
      %1956 = vmatpush1.msra.mxu0 0.0
      %1957 = vmatprep.subr.mxu0 0.0
      %1958 = vmatpush1.msra.mxu0 0.0
      %1959 = vmatprep.subr.mxu0 0.0
      %1960 = vmatpush1.msra.mxu0 0.0
      %1961 = vmatprep.subr.mxu0 0.0
      %1962 = vmatpush1.msra.mxu0 0.0
      %1963 = vmatprep.subr.mxu0 0.0
      %1964 = vmatpush1.msra.mxu0 0.0
      %1965 = vmatprep.subr.mxu0 0.0
      %1966 = vmatpush1.msra.mxu0 0.0
      %1967 = vmatprep.subr.mxu0 0.0
      %1968 = vmatpush1.msra.mxu0 0.0
      %1969 = vmatprep.subr.mxu0 0.0
      %1970 = vmatpush1.msra.mxu0 0.0
      %1971 = vmatprep.subr.mxu0 0.0
      %1972 = vmatpush1.msra.mxu0 0.0
      %1973 = vmatprep.subr.mxu0 0.0
      %1974 = vmatpush1.msra.mxu0 0.0
      %1975 = vmatprep.subr.mxu0 0.0
      %1976 = vmatpush1.msra.mxu0 0.0
      %1977 = vmatprep.subr.mxu0 0.0
      %1978 = vmatpush1.msra.mxu0 0.0
      %1979 = vmatprep.subr.mxu0 0.0
      %1980 = vmatpush1.msra.mxu0 0.0
      %1981 = vmatprep.subr.mxu0 0.0
      %1982 = vmatpush1.msra.mxu0 0.0
      %1983 = vmatprep.subr.mxu0 0.0
      %1984 = vmatpush1.msra.mxu0 0.0
      %1985 = vmatprep.subr.mxu0 0.0
      %1986 = vmatpush1.msra.mxu0 0.0
      %1987 = vmatprep.subr.mxu0 0.0
      %1988 = vmatpush1.msra.mxu0 0.0
      %1989 = vmatprep.subr.mxu0 0.0
      %1990 = vmatpush1.msra.mxu0 0.0
      %1991 = vmatprep.subr.mxu0 0.0
      %1992 = vmatpush1.msra.mxu0 0.0
      %1993 = vmatprep.subr.mxu0 0.0
      %1994 = vmatpush1.msra.mxu0 0.0
      %1995 = vmatprep.subr.mxu0 0.0
      %1996 = vmatpush1.msra.mxu0 0.0
      %1997 = vmatprep.subr.mxu0 0.0
      %1998 = vmatpush1.msra.mxu0 0.0
      %1999 = vmatprep.subr.mxu0 0.0
      %2000 = vmatpush1.msra.mxu0 0.0
      %2001 = vmatprep.mubr.f32.mxu0 0.0
      %2002 = vmatmul.mubr.f32.gmra.mrb[0].mxu0 %v1722
      %v2003 = vpop.f32.mrb[0].mxu0
      %v2004 = vadd.f32 0.0, %v2003
      %v2005 = vpop.f32.mrb[0].mxu0
      %2006 = vdwg.mxu0
      %v2007 = vadd.f32 %v1572, %v2004
      %v2008 = vld [vmem:[%s1573 + $0x3] sm:$0x3f]
      %v2010 = vsel %vm208, %v2008, 0
      %2012 = vmatprep.subr.mxu0 0.0
      %2013 = vmatpush1.msra.mxu0 %v366
      %2014 = vmatprep.subr.mxu0 0.0
      %2015 = vmatpush1.msra.mxu0 %v367
      %2016 = vmatprep.subr.mxu0 0.0
      %2017 = vmatpush1.msra.mxu0 %v368
      %2018 = vmatprep.subr.mxu0 0.0
      %2019 = vmatpush1.msra.mxu0 %v369
      %2020 = vmatprep.subr.mxu0 0.0
      %2021 = vmatpush1.msra.mxu0 %v370
      %2022 = vmatprep.subr.mxu0 0.0
      %2023 = vmatpush1.msra.mxu0 %v371
      %2024 = vmatprep.subr.mxu0 0.0
      %2025 = vmatpush1.msra.mxu0 %v372
      %2026 = vmatprep.subr.mxu0 0.0
      %2027 = vmatpush1.msra.mxu0 %v373
      %2028 = vmatprep.subr.mxu0 0.0
      %2029 = vmatpush1.msra.mxu0 0.0
      %2030 = vmatprep.subr.mxu0 0.0
      %2031 = vmatpush1.msra.mxu0 0.0
      %2032 = vmatprep.subr.mxu0 0.0
      %2033 = vmatpush1.msra.mxu0 0.0
      %2034 = vmatprep.subr.mxu0 0.0
      %2035 = vmatpush1.msra.mxu0 0.0
      %2036 = vmatprep.subr.mxu0 0.0
      %2037 = vmatpush1.msra.mxu0 0.0
      %2038 = vmatprep.subr.mxu0 0.0
      %2039 = vmatpush1.msra.mxu0 0.0
      %2040 = vmatprep.subr.mxu0 0.0
      %2041 = vmatpush1.msra.mxu0 0.0
      %2042 = vmatprep.subr.mxu0 0.0
      %2043 = vmatpush1.msra.mxu0 0.0
      %2044 = vmatprep.subr.mxu0 0.0
      %2045 = vmatpush1.msra.mxu0 0.0
      %2046 = vmatprep.subr.mxu0 0.0
      %2047 = vmatpush1.msra.mxu0 0.0
      %2048 = vmatprep.subr.mxu0 0.0
      %2049 = vmatpush1.msra.mxu0 0.0
      %2050 = vmatprep.subr.mxu0 0.0
      %2051 = vmatpush1.msra.mxu0 0.0
      %2052 = vmatprep.subr.mxu0 0.0
      %2053 = vmatpush1.msra.mxu0 0.0
      %2054 = vmatprep.subr.mxu0 0.0
      %2055 = vmatpush1.msra.mxu0 0.0
      %2056 = vmatprep.subr.mxu0 0.0
      %2057 = vmatpush1.msra.mxu0 0.0
      %2058 = vmatprep.subr.mxu0 0.0
      %2059 = vmatpush1.msra.mxu0 0.0
      %2060 = vmatprep.subr.mxu0 0.0
      %2061 = vmatpush1.msra.mxu0 0.0
      %2062 = vmatprep.subr.mxu0 0.0
      %2063 = vmatpush1.msra.mxu0 0.0
      %2064 = vmatprep.subr.mxu0 0.0
      %2065 = vmatpush1.msra.mxu0 0.0
      %2066 = vmatprep.subr.mxu0 0.0
      %2067 = vmatpush1.msra.mxu0 0.0
      %2068 = vmatprep.subr.mxu0 0.0
      %2069 = vmatpush1.msra.mxu0 0.0
      %2070 = vmatprep.subr.mxu0 0.0
      %2071 = vmatpush1.msra.mxu0 0.0
      %2072 = vmatprep.subr.mxu0 0.0
      %2073 = vmatpush1.msra.mxu0 0.0
      %2074 = vmatprep.subr.mxu0 0.0
      %2075 = vmatpush1.msra.mxu0 0.0
      %2076 = vmatprep.mubr.f32.mxu0 0.0
      %2077 = vmatmul.mubr.f32.gmra.mrb[0].mxu0 %v2010
      %v2078 = vpop.f32.mrb[0].mxu0
      %v2079 = vadd.f32 0.0, %v2078
      %v2080 = vpop.f32.mrb[0].mxu0
      %2081 = vdwg.mxu0
      %v2082 = vadd.f32 %v1936, %v2079
      %v2083 = vld [vmem:[%s1573 + $0x4] sm:$0x3f]
      %v2085 = vsel %vm208, %v2083, 0
      %2087 = vmatprep.subr.mxu0 0.0
      %2088 = vmatpush1.msra.mxu0 %v459
      %2089 = vmatprep.subr.mxu0 0.0
      %2090 = vmatpush1.msra.mxu0 %v460
      %2091 = vmatprep.subr.mxu0 0.0
      %2092 = vmatpush1.msra.mxu0 %v461
      %2093 = vmatprep.subr.mxu0 0.0
      %2094 = vmatpush1.msra.mxu0 %v462
      %2095 = vmatprep.subr.mxu0 0.0
      %2096 = vmatpush1.msra.mxu0 %v463
      %2097 = vmatprep.subr.mxu0 0.0
      %2098 = vmatpush1.msra.mxu0 %v464
      %2099 = vmatprep.subr.mxu0 0.0
      %2100 = vmatpush1.msra.mxu0 %v465
      %2101 = vmatprep.subr.mxu0 0.0
      %2102 = vmatpush1.msra.mxu0 %v466
      %2103 = vmatprep.subr.mxu0 0.0
      %2104 = vmatpush1.msra.mxu0 0.0
      %2105 = vmatprep.subr.mxu0 0.0
      %2106 = vmatpush1.msra.mxu0 0.0
      %2107 = vmatprep.subr.mxu0 0.0
      %2108 = vmatpush1.msra.mxu0 0.0
      %2109 = vmatprep.subr.mxu0 0.0
      %2110 = vmatpush1.msra.mxu0 0.0
      %2111 = vmatprep.subr.mxu0 0.0
      %2112 = vmatpush1.msra.mxu0 0.0
      %2113 = vmatprep.subr.mxu0 0.0
      %2114 = vmatpush1.msra.mxu0 0.0
      %2115 = vmatprep.subr.mxu0 0.0
      %2116 = vmatpush1.msra.mxu0 0.0
      %2117 = vmatprep.subr.mxu0 0.0
      %2118 = vmatpush1.msra.mxu0 0.0
      %2119 = vmatprep.subr.mxu0 0.0
      %2120 = vmatpush1.msra.mxu0 0.0
      %2121 = vmatprep.subr.mxu0 0.0
      %2122 = vmatpush1.msra.mxu0 0.0
      %2123 = vmatprep.subr.mxu0 0.0
      %2124 = vmatpush1.msra.mxu0 0.0
      %2125 = vmatprep.subr.mxu0 0.0
      %2126 = vmatpush1.msra.mxu0 0.0
      %2127 = vmatprep.subr.mxu0 0.0
      %2128 = vmatpush1.msra.mxu0 0.0
      %2129 = vmatprep.subr.mxu0 0.0
      %2130 = vmatpush1.msra.mxu0 0.0
      %2131 = vmatprep.subr.mxu0 0.0
      %2132 = vmatpush1.msra.mxu0 0.0
      %2133 = vmatprep.subr.mxu0 0.0
      %2134 = vmatpush1.msra.mxu0 0.0
      %2135 = vmatprep.subr.mxu0 0.0
      %2136 = vmatpush1.msra.mxu0 0.0
      %2137 = vmatprep.subr.mxu0 0.0
      %2138 = vmatpush1.msra.mxu0 0.0
      %2139 = vmatprep.subr.mxu0 0.0
      %2140 = vmatpush1.msra.mxu0 0.0
      %2141 = vmatprep.subr.mxu0 0.0
      %2142 = vmatpush1.msra.mxu0 0.0
      %2143 = vmatprep.subr.mxu0 0.0
      %2144 = vmatpush1.msra.mxu0 0.0
      %2145 = vmatprep.subr.mxu0 0.0
      %2146 = vmatpush1.msra.mxu0 0.0
      %2147 = vmatprep.subr.mxu0 0.0
      %2148 = vmatpush1.msra.mxu0 0.0
      %2149 = vmatprep.subr.mxu0 0.0
      %2150 = vmatpush1.msra.mxu0 0.0
      %2151 = vmatprep.mubr.f32.mxu0 0.0
      %2152 = vmatmul.mubr.f32.gmra.mrb[0].mxu0 %v2085
      %v2153 = vpop.f32.mrb[0].mxu0
      %v2154 = vadd.f32 0.0, %v2153
      %v2155 = vpop.f32.mrb[0].mxu0
      %2156 = vdwg.mxu0
      %v2157 = vadd.f32 %v2082, %v2154
      %2158 = vmatprep.subr.mxu0 0.0
      %2159 = vmatpush1.msra.mxu0 %v542
      %2160 = vmatprep.subr.mxu0 0.0
      %2161 = vmatpush1.msra.mxu0 %v543
      %2162 = vmatprep.subr.mxu0 0.0
      %2163 = vmatpush1.msra.mxu0 %v544
      %2164 = vmatprep.subr.mxu0 0.0
      %2165 = vmatpush1.msra.mxu0 %v545
      %2166 = vmatprep.subr.mxu0 0.0
      %2167 = vmatpush1.msra.mxu0 %v546
      %2168 = vmatprep.subr.mxu0 0.0
      %2169 = vmatpush1.msra.mxu0 %v547
      %2170 = vmatprep.subr.mxu0 0.0
      %2171 = vmatpush1.msra.mxu0 %v548
      %2172 = vmatprep.subr.mxu0 0.0
      %2173 = vmatpush1.msra.mxu0 %v549
      %2174 = vmatprep.subr.mxu0 0.0
      %2175 = vmatpush1.msra.mxu0 0.0
      %2176 = vmatprep.subr.mxu0 0.0
      %2177 = vmatpush1.msra.mxu0 0.0
      %2178 = vmatprep.subr.mxu0 0.0
      %2179 = vmatpush1.msra.mxu0 0.0
      %2180 = vmatprep.subr.mxu0 0.0
      %2181 = vmatpush1.msra.mxu0 0.0
      %2182 = vmatprep.subr.mxu0 0.0
      %2183 = vmatpush1.msra.mxu0 0.0
      %2184 = vmatprep.subr.mxu0 0.0
      %2185 = vmatpush1.msra.mxu0 0.0
      %2186 = vmatprep.subr.mxu0 0.0
      %2187 = vmatpush1.msra.mxu0 0.0
      %2188 = vmatprep.subr.mxu0 0.0
      %2189 = vmatpush1.msra.mxu0 0.0
      %2190 = vmatprep.subr.mxu0 0.0
      %2191 = vmatpush1.msra.mxu0 0.0
      %2192 = vmatprep.subr.mxu0 0.0
      %2193 = vmatpush1.msra.mxu0 0.0
      %2194 = vmatprep.subr.mxu0 0.0
      %2195 = vmatpush1.msra.mxu0 0.0
      %2196 = vmatprep.subr.mxu0 0.0
      %2197 = vmatpush1.msra.mxu0 0.0
      %2198 = vmatprep.subr.mxu0 0.0
      %2199 = vmatpush1.msra.mxu0 0.0
      %2200 = vmatprep.subr.mxu0 0.0
      %2201 = vmatpush1.msra.mxu0 0.0
      %2202 = vmatprep.subr.mxu0 0.0
      %2203 = vmatpush1.msra.mxu0 0.0
      %2204 = vmatprep.subr.mxu0 0.0
      %2205 = vmatpush1.msra.mxu0 0.0
      %2206 = vmatprep.subr.mxu0 0.0
      %2207 = vmatpush1.msra.mxu0 0.0
      %2208 = vmatprep.subr.mxu0 0.0
      %2209 = vmatpush1.msra.mxu0 0.0
      %2210 = vmatprep.subr.mxu0 0.0
      %2211 = vmatpush1.msra.mxu0 0.0
      %2212 = vmatprep.subr.mxu0 0.0
      %2213 = vmatpush1.msra.mxu0 0.0
      %2214 = vmatprep.subr.mxu0 0.0
      %2215 = vmatpush1.msra.mxu0 0.0
      %2216 = vmatprep.subr.mxu0 0.0
      %2217 = vmatpush1.msra.mxu0 0.0
      %2218 = vmatprep.subr.mxu0 0.0
      %2219 = vmatpush1.msra.mxu0 0.0
      %2220 = vmatprep.subr.mxu0 0.0
      %2221 = vmatpush1.msra.mxu0 0.0
      %2222 = vmatprep.mubr.f32.mxu0 0.0
      %2223 = vmatmul.mubr.f32.gmra.mrb[0].mxu0 %v2085
      %v2224 = vpop.f32.mrb[0].mxu0
      %v2225 = vadd.f32 0.0, %v2224
      %v2226 = vpop.f32.mrb[0].mxu0
      %2227 = vdwg.mxu0
      %v2228 = vadd.f32 %v2007, %v2225
      %s2229 = scalar_lea.vmem %s181, 48
      %v2230 = vld [vmem:[%s2229] sm:$0x3f]
      %v2232 = vsel %vm208, %v2230, 0
      %2234 = vmatprep.subr.mxu0 0.0
      %2235 = vmatpush1.msra.mxu0 %v840
      %2236 = vmatprep.subr.mxu0 0.0
      %2237 = vmatpush1.msra.mxu0 %v841
      %2238 = vmatprep.subr.mxu0 0.0
      %2239 = vmatpush1.msra.mxu0 %v842
      %2240 = vmatprep.subr.mxu0 0.0
      %2241 = vmatpush1.msra.mxu0 %v843
      %2242 = vmatprep.subr.mxu0 0.0
      %2243 = vmatpush1.msra.mxu0 %v844
      %2244 = vmatprep.subr.mxu0 0.0
      %2245 = vmatpush1.msra.mxu0 %v845
      %2246 = vmatprep.subr.mxu0 0.0
      %2247 = vmatpush1.msra.mxu0 %v846
      %2248 = vmatprep.subr.mxu0 0.0
      %2249 = vmatpush1.msra.mxu0 %v847
      %2250 = vmatprep.subr.mxu0 0.0
      %2251 = vmatpush1.msra.mxu0 0.0
      %2252 = vmatprep.subr.mxu0 0.0
      %2253 = vmatpush1.msra.mxu0 0.0
      %2254 = vmatprep.subr.mxu0 0.0
      %2255 = vmatpush1.msra.mxu0 0.0
      %2256 = vmatprep.subr.mxu0 0.0
      %2257 = vmatpush1.msra.mxu0 0.0
      %2258 = vmatprep.subr.mxu0 0.0
      %2259 = vmatpush1.msra.mxu0 0.0
      %2260 = vmatprep.subr.mxu0 0.0
      %2261 = vmatpush1.msra.mxu0 0.0
      %2262 = vmatprep.subr.mxu0 0.0
      %2263 = vmatpush1.msra.mxu0 0.0
      %2264 = vmatprep.subr.mxu0 0.0
      %2265 = vmatpush1.msra.mxu0 0.0
      %2266 = vmatprep.subr.mxu0 0.0
      %2267 = vmatpush1.msra.mxu0 0.0
      %2268 = vmatprep.subr.mxu0 0.0
      %2269 = vmatpush1.msra.mxu0 0.0
      %2270 = vmatprep.subr.mxu0 0.0
      %2271 = vmatpush1.msra.mxu0 0.0
      %2272 = vmatprep.subr.mxu0 0.0
      %2273 = vmatpush1.msra.mxu0 0.0
      %2274 = vmatprep.subr.mxu0 0.0
      %2275 = vmatpush1.msra.mxu0 0.0
      %2276 = vmatprep.subr.mxu0 0.0
      %2277 = vmatpush1.msra.mxu0 0.0
      %2278 = vmatprep.subr.mxu0 0.0
      %2279 = vmatpush1.msra.mxu0 0.0
      %2280 = vmatprep.subr.mxu0 0.0
      %2281 = vmatpush1.msra.mxu0 0.0
      %2282 = vmatprep.subr.mxu0 0.0
      %2283 = vmatpush1.msra.mxu0 0.0
      %2284 = vmatprep.subr.mxu0 0.0
      %2285 = vmatpush1.msra.mxu0 0.0
      %2286 = vmatprep.subr.mxu0 0.0
      %2287 = vmatpush1.msra.mxu0 0.0
      %2288 = vmatprep.subr.mxu0 0.0
      %2289 = vmatpush1.msra.mxu0 0.0
      %2290 = vmatprep.subr.mxu0 0.0
      %2291 = vmatpush1.msra.mxu0 0.0
      %2292 = vmatprep.subr.mxu0 0.0
      %2293 = vmatpush1.msra.mxu0 0.0
      %2294 = vmatprep.subr.mxu0 0.0
      %2295 = vmatpush1.msra.mxu0 0.0
      %2296 = vmatprep.subr.mxu0 0.0
      %2297 = vmatpush1.msra.mxu0 0.0
      %2298 = vmatprep.mubr.f32.mxu0 0.0
      %2299 = vmatmul.mubr.f32.gmra.mrb[0].mxu0 %v2232
      %v2300 = vpop.f32.mrb[0].mxu0
      %v2301 = vadd.f32 0.0, %v2300
      %v2302 = vpop.f32.mrb[0].mxu0
      %2303 = vdwg.mxu0
      %v2304 = vadd.f32 %v1794, %v2301
      %2305 = vmatprep.subr.mxu0 0.0
      %2306 = vmatpush1.msra.mxu0 %v449
      %2307 = vmatprep.subr.mxu0 0.0
      %2308 = vmatpush1.msra.mxu0 %v450
      %2309 = vmatprep.subr.mxu0 0.0
      %2310 = vmatpush1.msra.mxu0 %v451
      %2311 = vmatprep.subr.mxu0 0.0
      %2312 = vmatpush1.msra.mxu0 %v452
      %2313 = vmatprep.subr.mxu0 0.0
      %2314 = vmatpush1.msra.mxu0 %v453
      %2315 = vmatprep.subr.mxu0 0.0
      %2316 = vmatpush1.msra.mxu0 %v454
      %2317 = vmatprep.subr.mxu0 0.0
      %2318 = vmatpush1.msra.mxu0 %v455
      %2319 = vmatprep.subr.mxu0 0.0
      %2320 = vmatpush1.msra.mxu0 %v456
      %2321 = vmatprep.subr.mxu0 0.0
      %2322 = vmatpush1.msra.mxu0 0.0
      %2323 = vmatprep.subr.mxu0 0.0
      %2324 = vmatpush1.msra.mxu0 0.0
      %2325 = vmatprep.subr.mxu0 0.0
      %2326 = vmatpush1.msra.mxu0 0.0
      %2327 = vmatprep.subr.mxu0 0.0
      %2328 = vmatpush1.msra.mxu0 0.0
      %2329 = vmatprep.subr.mxu0 0.0
      %2330 = vmatpush1.msra.mxu0 0.0
      %2331 = vmatprep.subr.mxu0 0.0
      %2332 = vmatpush1.msra.mxu0 0.0
      %2333 = vmatprep.subr.mxu0 0.0
      %2334 = vmatpush1.msra.mxu0 0.0
      %2335 = vmatprep.subr.mxu0 0.0
      %2336 = vmatpush1.msra.mxu0 0.0
      %2337 = vmatprep.subr.mxu0 0.0
      %2338 = vmatpush1.msra.mxu0 0.0
      %2339 = vmatprep.subr.mxu0 0.0
      %2340 = vmatpush1.msra.mxu0 0.0
      %2341 = vmatprep.subr.mxu0 0.0
      %2342 = vmatpush1.msra.mxu0 0.0
      %2343 = vmatprep.subr.mxu0 0.0
      %2344 = vmatpush1.msra.mxu0 0.0
      %2345 = vmatprep.subr.mxu0 0.0
      %2346 = vmatpush1.msra.mxu0 0.0
      %2347 = vmatprep.subr.mxu0 0.0
      %2348 = vmatpush1.msra.mxu0 0.0
      %2349 = vmatprep.subr.mxu0 0.0
      %2350 = vmatpush1.msra.mxu0 0.0
      %2351 = vmatprep.subr.mxu0 0.0
      %2352 = vmatpush1.msra.mxu0 0.0
      %2353 = vmatprep.subr.mxu0 0.0
      %2354 = vmatpush1.msra.mxu0 0.0
      %2355 = vmatprep.subr.mxu0 0.0
      %2356 = vmatpush1.msra.mxu0 0.0
      %2357 = vmatprep.subr.mxu0 0.0
      %2358 = vmatpush1.msra.mxu0 0.0
      %2359 = vmatprep.subr.mxu0 0.0
      %2360 = vmatpush1.msra.mxu0 0.0
      %2361 = vmatprep.subr.mxu0 0.0
      %2362 = vmatpush1.msra.mxu0 0.0
      %2363 = vmatprep.subr.mxu0 0.0
      %2364 = vmatpush1.msra.mxu0 0.0
      %2365 = vmatprep.subr.mxu0 0.0
      %2366 = vmatpush1.msra.mxu0 0.0
      %2367 = vmatprep.subr.mxu0 0.0
      %2368 = vmatpush1.msra.mxu0 0.0
      %2369 = vmatprep.mubr.f32.mxu0 0.0
      %2370 = vmatmul.mubr.f32.gmra.mrb[0].mxu0 %v2232
      %v2371 = vpop.f32.mrb[0].mxu0
      %v2372 = vadd.f32 0.0, %v2371
      %v2373 = vpop.f32.mrb[0].mxu0
      %2374 = vdwg.mxu0
      %v2375 = vadd.f32 %v1865, %v2372
      %2376 = vmatprep.subr.mxu0 0.0
      %2377 = vmatpush1.msra.mxu0 %v356
      %2378 = vmatprep.subr.mxu0 0.0
      %2379 = vmatpush1.msra.mxu0 %v357
      %2380 = vmatprep.subr.mxu0 0.0
      %2381 = vmatpush1.msra.mxu0 %v358
      %2382 = vmatprep.subr.mxu0 0.0
      %2383 = vmatpush1.msra.mxu0 %v359
      %2384 = vmatprep.subr.mxu0 0.0
      %2385 = vmatpush1.msra.mxu0 %v360
      %2386 = vmatprep.subr.mxu0 0.0
      %2387 = vmatpush1.msra.mxu0 %v361
      %2388 = vmatprep.subr.mxu0 0.0
      %2389 = vmatpush1.msra.mxu0 %v362
      %2390 = vmatprep.subr.mxu0 0.0
      %2391 = vmatpush1.msra.mxu0 %v363
      %2392 = vmatprep.subr.mxu0 0.0
      %2393 = vmatpush1.msra.mxu0 0.0
      %2394 = vmatprep.subr.mxu0 0.0
      %2395 = vmatpush1.msra.mxu0 0.0
      %2396 = vmatprep.subr.mxu0 0.0
      %2397 = vmatpush1.msra.mxu0 0.0
      %2398 = vmatprep.subr.mxu0 0.0
      %2399 = vmatpush1.msra.mxu0 0.0
      %2400 = vmatprep.subr.mxu0 0.0
      %2401 = vmatpush1.msra.mxu0 0.0
      %2402 = vmatprep.subr.mxu0 0.0
      %2403 = vmatpush1.msra.mxu0 0.0
      %2404 = vmatprep.subr.mxu0 0.0
      %2405 = vmatpush1.msra.mxu0 0.0
      %2406 = vmatprep.subr.mxu0 0.0
      %2407 = vmatpush1.msra.mxu0 0.0
      %2408 = vmatprep.subr.mxu0 0.0
      %2409 = vmatpush1.msra.mxu0 0.0
      %2410 = vmatprep.subr.mxu0 0.0
      %2411 = vmatpush1.msra.mxu0 0.0
      %2412 = vmatprep.subr.mxu0 0.0
      %2413 = vmatpush1.msra.mxu0 0.0
      %2414 = vmatprep.subr.mxu0 0.0
      %2415 = vmatpush1.msra.mxu0 0.0
      %2416 = vmatprep.subr.mxu0 0.0
      %2417 = vmatpush1.msra.mxu0 0.0
      %2418 = vmatprep.subr.mxu0 0.0
      %2419 = vmatpush1.msra.mxu0 0.0
      %2420 = vmatprep.subr.mxu0 0.0
      %2421 = vmatpush1.msra.mxu0 0.0
      %2422 = vmatprep.subr.mxu0 0.0
      %2423 = vmatpush1.msra.mxu0 0.0
      %2424 = vmatprep.subr.mxu0 0.0
      %2425 = vmatpush1.msra.mxu0 0.0
      %2426 = vmatprep.subr.mxu0 0.0
      %2427 = vmatpush1.msra.mxu0 0.0
      %2428 = vmatprep.subr.mxu0 0.0
      %2429 = vmatpush1.msra.mxu0 0.0
      %2430 = vmatprep.subr.mxu0 0.0
      %2431 = vmatpush1.msra.mxu0 0.0
      %2432 = vmatprep.subr.mxu0 0.0
      %2433 = vmatpush1.msra.mxu0 0.0
      %2434 = vmatprep.subr.mxu0 0.0
      %2435 = vmatpush1.msra.mxu0 0.0
      %2436 = vmatprep.subr.mxu0 0.0
      %2437 = vmatpush1.msra.mxu0 0.0
      %2438 = vmatprep.subr.mxu0 0.0
      %2439 = vmatpush1.msra.mxu0 0.0
      %2440 = vmatprep.mubr.f32.mxu0 0.0
      %2441 = vmatmul.mubr.f32.gmra.mrb[0].mxu0 %v2232
      %v2442 = vpop.f32.mrb[0].mxu0
      %v2443 = vadd.f32 0.0, %v2442
      %v2444 = vpop.f32.mrb[0].mxu0
      %2445 = vdwg.mxu0
      %v2446 = vadd.f32 %v2157, %v2443
      %2447 = vmatprep.subr.mxu0 0.0
      %2448 = vmatpush1.msra.mxu0 %v190
      %2449 = vmatprep.subr.mxu0 0.0
      %2450 = vmatpush1.msra.mxu0 %v191
      %2451 = vmatprep.subr.mxu0 0.0
      %2452 = vmatpush1.msra.mxu0 %v192
      %2453 = vmatprep.subr.mxu0 0.0
      %2454 = vmatpush1.msra.mxu0 %v193
      %2455 = vmatprep.subr.mxu0 0.0
      %2456 = vmatpush1.msra.mxu0 %v194
      %2457 = vmatprep.subr.mxu0 0.0
      %2458 = vmatpush1.msra.mxu0 %v195
      %2459 = vmatprep.subr.mxu0 0.0
      %2460 = vmatpush1.msra.mxu0 %v196
      %2461 = vmatprep.subr.mxu0 0.0
      %2462 = vmatpush1.msra.mxu0 %v197
      %2463 = vmatprep.subr.mxu0 0.0
      %2464 = vmatpush1.msra.mxu0 0.0
      %2465 = vmatprep.subr.mxu0 0.0
      %2466 = vmatpush1.msra.mxu0 0.0
      %2467 = vmatprep.subr.mxu0 0.0
      %2468 = vmatpush1.msra.mxu0 0.0
      %2469 = vmatprep.subr.mxu0 0.0
      %2470 = vmatpush1.msra.mxu0 0.0
      %2471 = vmatprep.subr.mxu0 0.0
      %2472 = vmatpush1.msra.mxu0 0.0
      %2473 = vmatprep.subr.mxu0 0.0
      %2474 = vmatpush1.msra.mxu0 0.0
      %2475 = vmatprep.subr.mxu0 0.0
      %2476 = vmatpush1.msra.mxu0 0.0
      %2477 = vmatprep.subr.mxu0 0.0
      %2478 = vmatpush1.msra.mxu0 0.0
      %2479 = vmatprep.subr.mxu0 0.0
      %2480 = vmatpush1.msra.mxu0 0.0
      %2481 = vmatprep.subr.mxu0 0.0
      %2482 = vmatpush1.msra.mxu0 0.0
      %2483 = vmatprep.subr.mxu0 0.0
      %2484 = vmatpush1.msra.mxu0 0.0
      %2485 = vmatprep.subr.mxu0 0.0
      %2486 = vmatpush1.msra.mxu0 0.0
      %2487 = vmatprep.subr.mxu0 0.0
      %2488 = vmatpush1.msra.mxu0 0.0
      %2489 = vmatprep.subr.mxu0 0.0
      %2490 = vmatpush1.msra.mxu0 0.0
      %2491 = vmatprep.subr.mxu0 0.0
      %2492 = vmatpush1.msra.mxu0 0.0
      %2493 = vmatprep.subr.mxu0 0.0
      %2494 = vmatpush1.msra.mxu0 0.0
      %2495 = vmatprep.subr.mxu0 0.0
      %2496 = vmatpush1.msra.mxu0 0.0
      %2497 = vmatprep.subr.mxu0 0.0
      %2498 = vmatpush1.msra.mxu0 0.0
      %2499 = vmatprep.subr.mxu0 0.0
      %2500 = vmatpush1.msra.mxu0 0.0
      %2501 = vmatprep.subr.mxu0 0.0
      %2502 = vmatpush1.msra.mxu0 0.0
      %2503 = vmatprep.subr.mxu0 0.0
      %2504 = vmatpush1.msra.mxu0 0.0
      %2505 = vmatprep.subr.mxu0 0.0
      %2506 = vmatpush1.msra.mxu0 0.0
      %2507 = vmatprep.subr.mxu0 0.0
      %2508 = vmatpush1.msra.mxu0 0.0
      %2509 = vmatprep.subr.mxu0 0.0
      %2510 = vmatpush1.msra.mxu0 0.0
      %2511 = vmatprep.mubr.f32.mxu0 0.0
      %2512 = vmatmul.mubr.f32.gmra.mrb[0].mxu0 %v2232
      %v2513 = vpop.f32.mrb[0].mxu0
      %v2514 = vadd.f32 0.0, %v2513
      %v2515 = vpop.f32.mrb[0].mxu0
      %2516 = vdwg.mxu0
      %v2517 = vadd.f32 %v2228, %v2514
      %v2518 = vld [vmem:[%s2229 + $0x1] sm:$0x3f]
      %v2520 = vsel %vm208, %v2518, 0
      %2522 = vmatprep.subr.mxu0 0.0
      %2523 = vmatpush1.msra.mxu0 %v691
      %2524 = vmatprep.subr.mxu0 0.0
      %2525 = vmatpush1.msra.mxu0 %v692
      %2526 = vmatprep.subr.mxu0 0.0
      %2527 = vmatpush1.msra.mxu0 %v693
      %2528 = vmatprep.subr.mxu0 0.0
      %2529 = vmatpush1.msra.mxu0 %v694
      %2530 = vmatprep.subr.mxu0 0.0
      %2531 = vmatpush1.msra.mxu0 %v695
      %2532 = vmatprep.subr.mxu0 0.0
      %2533 = vmatpush1.msra.mxu0 %v696
      %2534 = vmatprep.subr.mxu0 0.0
      %2535 = vmatpush1.msra.mxu0 %v697
      %2536 = vmatprep.subr.mxu0 0.0
      %2537 = vmatpush1.msra.mxu0 %v698
      %2538 = vmatprep.subr.mxu0 0.0
      %2539 = vmatpush1.msra.mxu0 0.0
      %2540 = vmatprep.subr.mxu0 0.0
      %2541 = vmatpush1.msra.mxu0 0.0
      %2542 = vmatprep.subr.mxu0 0.0
      %2543 = vmatpush1.msra.mxu0 0.0
      %2544 = vmatprep.subr.mxu0 0.0
      %2545 = vmatpush1.msra.mxu0 0.0
      %2546 = vmatprep.subr.mxu0 0.0
      %2547 = vmatpush1.msra.mxu0 0.0
      %2548 = vmatprep.subr.mxu0 0.0
      %2549 = vmatpush1.msra.mxu0 0.0
      %2550 = vmatprep.subr.mxu0 0.0
      %2551 = vmatpush1.msra.mxu0 0.0
      %2552 = vmatprep.subr.mxu0 0.0
      %2553 = vmatpush1.msra.mxu0 0.0
      %2554 = vmatprep.subr.mxu0 0.0
      %2555 = vmatpush1.msra.mxu0 0.0
      %2556 = vmatprep.subr.mxu0 0.0
      %2557 = vmatpush1.msra.mxu0 0.0
      %2558 = vmatprep.subr.mxu0 0.0
      %2559 = vmatpush1.msra.mxu0 0.0
      %2560 = vmatprep.subr.mxu0 0.0
      %2561 = vmatpush1.msra.mxu0 0.0
      %2562 = vmatprep.subr.mxu0 0.0
      %2563 = vmatpush1.msra.mxu0 0.0
      %2564 = vmatprep.subr.mxu0 0.0
      %2565 = vmatpush1.msra.mxu0 0.0
      %2566 = vmatprep.subr.mxu0 0.0
      %2567 = vmatpush1.msra.mxu0 0.0
      %2568 = vmatprep.subr.mxu0 0.0
      %2569 = vmatpush1.msra.mxu0 0.0
      %2570 = vmatprep.subr.mxu0 0.0
      %2571 = vmatpush1.msra.mxu0 0.0
      %2572 = vmatprep.subr.mxu0 0.0
      %2573 = vmatpush1.msra.mxu0 0.0
      %2574 = vmatprep.subr.mxu0 0.0
      %2575 = vmatpush1.msra.mxu0 0.0
      %2576 = vmatprep.subr.mxu0 0.0
      %2577 = vmatpush1.msra.mxu0 0.0
      %2578 = vmatprep.subr.mxu0 0.0
      %2579 = vmatpush1.msra.mxu0 0.0
      %2580 = vmatprep.subr.mxu0 0.0
      %2581 = vmatpush1.msra.mxu0 0.0
      %2582 = vmatprep.subr.mxu0 0.0
      %2583 = vmatpush1.msra.mxu0 0.0
      %2584 = vmatprep.subr.mxu0 0.0
      %2585 = vmatpush1.msra.mxu0 0.0
      %2586 = vmatprep.mubr.f32.mxu0 0.0
      %2587 = vmatmul.mubr.f32.gmra.mrb[0].mxu0 %v2520
      %v2588 = vpop.f32.mrb[0].mxu0
      %v2589 = vadd.f32 0.0, %v2588
      %v2590 = vpop.f32.mrb[0].mxu0
      %2591 = vdwg.mxu0
      %v2592 = vadd.f32 %v2375, %v2589
      %2593 = vmatprep.subr.mxu0 0.0
      %2594 = vmatpush1.msra.mxu0 %v200
      %2595 = vmatprep.subr.mxu0 0.0
      %2596 = vmatpush1.msra.mxu0 %v201
      %2597 = vmatprep.subr.mxu0 0.0
      %2598 = vmatpush1.msra.mxu0 %v202
      %2599 = vmatprep.subr.mxu0 0.0
      %2600 = vmatpush1.msra.mxu0 %v203
      %2601 = vmatprep.subr.mxu0 0.0
      %2602 = vmatpush1.msra.mxu0 %v204
      %2603 = vmatprep.subr.mxu0 0.0
      %2604 = vmatpush1.msra.mxu0 %v205
      %2605 = vmatprep.subr.mxu0 0.0
      %2606 = vmatpush1.msra.mxu0 %v206
      %2607 = vmatprep.subr.mxu0 0.0
      %2608 = vmatpush1.msra.mxu0 %v207
      %2609 = vmatprep.subr.mxu0 0.0
      %2610 = vmatpush1.msra.mxu0 0.0
      %2611 = vmatprep.subr.mxu0 0.0
      %2612 = vmatpush1.msra.mxu0 0.0
      %2613 = vmatprep.subr.mxu0 0.0
      %2614 = vmatpush1.msra.mxu0 0.0
      %2615 = vmatprep.subr.mxu0 0.0
      %2616 = vmatpush1.msra.mxu0 0.0
      %2617 = vmatprep.subr.mxu0 0.0
      %2618 = vmatpush1.msra.mxu0 0.0
      %2619 = vmatprep.subr.mxu0 0.0
      %2620 = vmatpush1.msra.mxu0 0.0
      %2621 = vmatprep.subr.mxu0 0.0
      %2622 = vmatpush1.msra.mxu0 0.0
      %2623 = vmatprep.subr.mxu0 0.0
      %2624 = vmatpush1.msra.mxu0 0.0
      %2625 = vmatprep.subr.mxu0 0.0
      %2626 = vmatpush1.msra.mxu0 0.0
      %2627 = vmatprep.subr.mxu0 0.0
      %2628 = vmatpush1.msra.mxu0 0.0
      %2629 = vmatprep.subr.mxu0 0.0
      %2630 = vmatpush1.msra.mxu0 0.0
      %2631 = vmatprep.subr.mxu0 0.0
      %2632 = vmatpush1.msra.mxu0 0.0
      %2633 = vmatprep.subr.mxu0 0.0
      %2634 = vmatpush1.msra.mxu0 0.0
      %2635 = vmatprep.subr.mxu0 0.0
      %2636 = vmatpush1.msra.mxu0 0.0
      %2637 = vmatprep.subr.mxu0 0.0
      %2638 = vmatpush1.msra.mxu0 0.0
      %2639 = vmatprep.subr.mxu0 0.0
      %2640 = vmatpush1.msra.mxu0 0.0
      %2641 = vmatprep.subr.mxu0 0.0
      %2642 = vmatpush1.msra.mxu0 0.0
      %2643 = vmatprep.subr.mxu0 0.0
      %2644 = vmatpush1.msra.mxu0 0.0
      %2645 = vmatprep.subr.mxu0 0.0
      %2646 = vmatpush1.msra.mxu0 0.0
      %2647 = vmatprep.subr.mxu0 0.0
      %2648 = vmatpush1.msra.mxu0 0.0
      %2649 = vmatprep.subr.mxu0 0.0
      %2650 = vmatpush1.msra.mxu0 0.0
      %2651 = vmatprep.subr.mxu0 0.0
      %2652 = vmatpush1.msra.mxu0 0.0
      %2653 = vmatprep.subr.mxu0 0.0
      %2654 = vmatpush1.msra.mxu0 0.0
      %2655 = vmatprep.subr.mxu0 0.0
      %2656 = vmatpush1.msra.mxu0 0.0
      %2657 = vmatprep.mubr.f32.mxu0 0.0
      %2658 = vmatmul.mubr.f32.gmra.mrb[0].mxu0 %v2520
      %v2659 = vpop.f32.mrb[0].mxu0
      %v2660 = vadd.f32 0.0, %v2659
      %v2661 = vpop.f32.mrb[0].mxu0
      %2662 = vdwg.mxu0
      %v2663 = vadd.f32 %v2517, %v2660
      %v2664 = vld [vmem:[%s2229 + $0x3] sm:$0x3f]
      %v2666 = vsel %vm208, %v2664, 0
      %2668 = vmatprep.subr.mxu0 0.0
      %2669 = vmatpush1.msra.mxu0 %v542
      %2670 = vmatprep.subr.mxu0 0.0
      %2671 = vmatpush1.msra.mxu0 %v543
      %2672 = vmatprep.subr.mxu0 0.0
      %2673 = vmatpush1.msra.mxu0 %v544
      %2674 = vmatprep.subr.mxu0 0.0
      %2675 = vmatpush1.msra.mxu0 %v545
      %2676 = vmatprep.subr.mxu0 0.0
      %2677 = vmatpush1.msra.mxu0 %v546
      %2678 = vmatprep.subr.mxu0 0.0
      %2679 = vmatpush1.msra.mxu0 %v547
      %2680 = vmatprep.subr.mxu0 0.0
      %2681 = vmatpush1.msra.mxu0 %v548
      %2682 = vmatprep.subr.mxu0 0.0
      %2683 = vmatpush1.msra.mxu0 %v549
      %2684 = vmatprep.subr.mxu0 0.0
      %2685 = vmatpush1.msra.mxu0 0.0
      %2686 = vmatprep.subr.mxu0 0.0
      %2687 = vmatpush1.msra.mxu0 0.0
      %2688 = vmatprep.subr.mxu0 0.0
      %2689 = vmatpush1.msra.mxu0 0.0
      %2690 = vmatprep.subr.mxu0 0.0
      %2691 = vmatpush1.msra.mxu0 0.0
      %2692 = vmatprep.subr.mxu0 0.0
      %2693 = vmatpush1.msra.mxu0 0.0
      %2694 = vmatprep.subr.mxu0 0.0
      %2695 = vmatpush1.msra.mxu0 0.0
      %2696 = vmatprep.subr.mxu0 0.0
      %2697 = vmatpush1.msra.mxu0 0.0
      %2698 = vmatprep.subr.mxu0 0.0
      %2699 = vmatpush1.msra.mxu0 0.0
      %2700 = vmatprep.subr.mxu0 0.0
      %2701 = vmatpush1.msra.mxu0 0.0
      %2702 = vmatprep.subr.mxu0 0.0
      %2703 = vmatpush1.msra.mxu0 0.0
      %2704 = vmatprep.subr.mxu0 0.0
      %2705 = vmatpush1.msra.mxu0 0.0
      %2706 = vmatprep.subr.mxu0 0.0
      %2707 = vmatpush1.msra.mxu0 0.0
      %2708 = vmatprep.subr.mxu0 0.0
      %2709 = vmatpush1.msra.mxu0 0.0
      %2710 = vmatprep.subr.mxu0 0.0
      %2711 = vmatpush1.msra.mxu0 0.0
      %2712 = vmatprep.subr.mxu0 0.0
      %2713 = vmatpush1.msra.mxu0 0.0
      %2714 = vmatprep.subr.mxu0 0.0
      %2715 = vmatpush1.msra.mxu0 0.0
      %2716 = vmatprep.subr.mxu0 0.0
      %2717 = vmatpush1.msra.mxu0 0.0
      %2718 = vmatprep.subr.mxu0 0.0
      %2719 = vmatpush1.msra.mxu0 0.0
      %2720 = vmatprep.subr.mxu0 0.0
      %2721 = vmatpush1.msra.mxu0 0.0
      %2722 = vmatprep.subr.mxu0 0.0
      %2723 = vmatpush1.msra.mxu0 0.0
      %2724 = vmatprep.subr.mxu0 0.0
      %2725 = vmatpush1.msra.mxu0 0.0
      %2726 = vmatprep.subr.mxu0 0.0
      %2727 = vmatpush1.msra.mxu0 0.0
      %2728 = vmatprep.subr.mxu0 0.0
      %2729 = vmatpush1.msra.mxu0 0.0
      %2730 = vmatprep.subr.mxu0 0.0
      %2731 = vmatpush1.msra.mxu0 0.0
      %2732 = vmatprep.mubr.f32.mxu0 0.0
      %2733 = vmatmul.mubr.f32.gmra.mrb[0].mxu0 %v2666
      %v2734 = vpop.f32.mrb[0].mxu0
      %v2735 = vadd.f32 0.0, %v2734
      %v2736 = vpop.f32.mrb[0].mxu0
      %2737 = vdwg.mxu0
      %v2738 = vadd.f32 %v2446, %v2735
      %2739 = vmatprep.subr.mxu0 0.0
      %2740 = vmatpush1.msra.mxu0 %v366
      %2741 = vmatprep.subr.mxu0 0.0
      %2742 = vmatpush1.msra.mxu0 %v367
      %2743 = vmatprep.subr.mxu0 0.0
      %2744 = vmatpush1.msra.mxu0 %v368
      %2745 = vmatprep.subr.mxu0 0.0
      %2746 = vmatpush1.msra.mxu0 %v369
      %2747 = vmatprep.subr.mxu0 0.0
      %2748 = vmatpush1.msra.mxu0 %v370
      %2749 = vmatprep.subr.mxu0 0.0
      %2750 = vmatpush1.msra.mxu0 %v371
      %2751 = vmatprep.subr.mxu0 0.0
      %2752 = vmatpush1.msra.mxu0 %v372
      %2753 = vmatprep.subr.mxu0 0.0
      %2754 = vmatpush1.msra.mxu0 %v373
      %2755 = vmatprep.subr.mxu0 0.0
      %2756 = vmatpush1.msra.mxu0 0.0
      %2757 = vmatprep.subr.mxu0 0.0
      %2758 = vmatpush1.msra.mxu0 0.0
      %2759 = vmatprep.subr.mxu0 0.0
      %2760 = vmatpush1.msra.mxu0 0.0
      %2761 = vmatprep.subr.mxu0 0.0
      %2762 = vmatpush1.msra.mxu0 0.0
      %2763 = vmatprep.subr.mxu0 0.0
      %2764 = vmatpush1.msra.mxu0 0.0
      %2765 = vmatprep.subr.mxu0 0.0
      %2766 = vmatpush1.msra.mxu0 0.0
      %2767 = vmatprep.subr.mxu0 0.0
      %2768 = vmatpush1.msra.mxu0 0.0
      %2769 = vmatprep.subr.mxu0 0.0
      %2770 = vmatpush1.msra.mxu0 0.0
      %2771 = vmatprep.subr.mxu0 0.0
      %2772 = vmatpush1.msra.mxu0 0.0
      %2773 = vmatprep.subr.mxu0 0.0
      %2774 = vmatpush1.msra.mxu0 0.0
      %2775 = vmatprep.subr.mxu0 0.0
      %2776 = vmatpush1.msra.mxu0 0.0
      %2777 = vmatprep.subr.mxu0 0.0
      %2778 = vmatpush1.msra.mxu0 0.0
      %2779 = vmatprep.subr.mxu0 0.0
      %2780 = vmatpush1.msra.mxu0 0.0
      %2781 = vmatprep.subr.mxu0 0.0
      %2782 = vmatpush1.msra.mxu0 0.0
      %2783 = vmatprep.subr.mxu0 0.0
      %2784 = vmatpush1.msra.mxu0 0.0
      %2785 = vmatprep.subr.mxu0 0.0
      %2786 = vmatpush1.msra.mxu0 0.0
      %2787 = vmatprep.subr.mxu0 0.0
      %2788 = vmatpush1.msra.mxu0 0.0
      %2789 = vmatprep.subr.mxu0 0.0
      %2790 = vmatpush1.msra.mxu0 0.0
      %2791 = vmatprep.subr.mxu0 0.0
      %2792 = vmatpush1.msra.mxu0 0.0
      %2793 = vmatprep.subr.mxu0 0.0
      %2794 = vmatpush1.msra.mxu0 0.0
      %2795 = vmatprep.subr.mxu0 0.0
      %2796 = vmatpush1.msra.mxu0 0.0
      %2797 = vmatprep.subr.mxu0 0.0
      %2798 = vmatpush1.msra.mxu0 0.0
      %2799 = vmatprep.subr.mxu0 0.0
      %2800 = vmatpush1.msra.mxu0 0.0
      %2801 = vmatprep.subr.mxu0 0.0
      %2802 = vmatpush1.msra.mxu0 0.0
      %2803 = vmatprep.mubr.f32.mxu0 0.0
      %2804 = vmatmul.mubr.f32.gmra.mrb[0].mxu0 %v2666
      %v2805 = vpop.f32.mrb[0].mxu0
      %v2806 = vadd.f32 0.0, %v2805
      %v2807 = vpop.f32.mrb[0].mxu0
      %2808 = vdwg.mxu0
      %v2809 = vadd.f32 %v2663, %v2806
      %v2810 = vld [vmem:[%s2229 + $0x4] sm:$0x3f]
      %v2812 = vsel %vm208, %v2810, 0
      %2814 = vmatprep.subr.mxu0 0.0
      %2815 = vmatpush1.msra.mxu0 %v459
      %2816 = vmatprep.subr.mxu0 0.0
      %2817 = vmatpush1.msra.mxu0 %v460
      %2818 = vmatprep.subr.mxu0 0.0
      %2819 = vmatpush1.msra.mxu0 %v461
      %2820 = vmatprep.subr.mxu0 0.0
      %2821 = vmatpush1.msra.mxu0 %v462
      %2822 = vmatprep.subr.mxu0 0.0
      %2823 = vmatpush1.msra.mxu0 %v463
      %2824 = vmatprep.subr.mxu0 0.0
      %2825 = vmatpush1.msra.mxu0 %v464
      %2826 = vmatprep.subr.mxu0 0.0
      %2827 = vmatpush1.msra.mxu0 %v465
      %2828 = vmatprep.subr.mxu0 0.0
      %2829 = vmatpush1.msra.mxu0 %v466
      %2830 = vmatprep.subr.mxu0 0.0
      %2831 = vmatpush1.msra.mxu0 0.0
      %2832 = vmatprep.subr.mxu0 0.0
      %2833 = vmatpush1.msra.mxu0 0.0
      %2834 = vmatprep.subr.mxu0 0.0
      %2835 = vmatpush1.msra.mxu0 0.0
      %2836 = vmatprep.subr.mxu0 0.0
      %2837 = vmatpush1.msra.mxu0 0.0
      %2838 = vmatprep.subr.mxu0 0.0
      %2839 = vmatpush1.msra.mxu0 0.0
      %2840 = vmatprep.subr.mxu0 0.0
      %2841 = vmatpush1.msra.mxu0 0.0
      %2842 = vmatprep.subr.mxu0 0.0
      %2843 = vmatpush1.msra.mxu0 0.0
      %2844 = vmatprep.subr.mxu0 0.0
      %2845 = vmatpush1.msra.mxu0 0.0
      %2846 = vmatprep.subr.mxu0 0.0
      %2847 = vmatpush1.msra.mxu0 0.0
      %2848 = vmatprep.subr.mxu0 0.0
      %2849 = vmatpush1.msra.mxu0 0.0
      %2850 = vmatprep.subr.mxu0 0.0
      %2851 = vmatpush1.msra.mxu0 0.0
      %2852 = vmatprep.subr.mxu0 0.0
      %2853 = vmatpush1.msra.mxu0 0.0
      %2854 = vmatprep.subr.mxu0 0.0
      %2855 = vmatpush1.msra.mxu0 0.0
      %2856 = vmatprep.subr.mxu0 0.0
      %2857 = vmatpush1.msra.mxu0 0.0
      %2858 = vmatprep.subr.mxu0 0.0
      %2859 = vmatpush1.msra.mxu0 0.0
      %2860 = vmatprep.subr.mxu0 0.0
      %2861 = vmatpush1.msra.mxu0 0.0
      %2862 = vmatprep.subr.mxu0 0.0
      %2863 = vmatpush1.msra.mxu0 0.0
      %2864 = vmatprep.subr.mxu0 0.0
      %2865 = vmatpush1.msra.mxu0 0.0
      %2866 = vmatprep.subr.mxu0 0.0
      %2867 = vmatpush1.msra.mxu0 0.0
      %2868 = vmatprep.subr.mxu0 0.0
      %2869 = vmatpush1.msra.mxu0 0.0
      %2870 = vmatprep.subr.mxu0 0.0
      %2871 = vmatpush1.msra.mxu0 0.0
      %2872 = vmatprep.subr.mxu0 0.0
      %2873 = vmatpush1.msra.mxu0 0.0
      %2874 = vmatprep.subr.mxu0 0.0
      %2875 = vmatpush1.msra.mxu0 0.0
      %2876 = vmatprep.subr.mxu0 0.0
      %2877 = vmatpush1.msra.mxu0 0.0
      %2878 = vmatprep.mubr.f32.mxu0 0.0
      %2879 = vmatmul.mubr.f32.gmra.mrb[0].mxu0 %v2812
      %v2880 = vpop.f32.mrb[0].mxu0
      %v2881 = vadd.f32 0.0, %v2880
      %v2882 = vpop.f32.mrb[0].mxu0
      %2883 = vdwg.mxu0
      %v2884 = vadd.f32 %v2809, %v2881
      %v2885 = vmax.f32 %v2304, %v2592
      %v2886 = vmax.f32 %v2738, %v2884
      %v2887 = vmax.f32 %v2885, %v2886
      %v2888 = vld [vmem:[%s2] sm:$0x1]
      %v2890 = vlaneseq
      %v2891 = vshrl.u32 %v2890, 7
      %v2892 = vsub.s32 0, %v2891
      %v2893 = vrot.slane %v2888, %v2892
      %v2895 = vadd.f32 %v2887, %v2893
      %v2896 = vmax.f32 %v2895, 0.0
      %2897 = vst [vmem:[%s188] sm:$0x3f] %v2896
      %p2898 = scmp.lt.s32.totalorder %s18, 1
      %s2899 = scalar_select %p2898, %s18, 1
      %p2900 = scmp.lt.s32.totalorder %s19, 0
      %s2901 = scalar_select %p2900, %s19, 0
      %s2902 = sadd.s32 %s2901, %s2899
      %s2903 = smul.addr %s2902, 8
      %s2904 = scalar_lea.vmem %s3, %s2903
      // Predicated region
      $region33: #{chord_detector_forward.6} parent=31 // pred_check
        %p2905 = pneg %p114
      $region34: #{chord_detector_forward.6} parent=31 // pred_check_branch
        %2907 = sbr.rel (%p2905) target = $region36
      $region35: #{chord_detector_forward.6} parent=31 // pred_region
        _
      $region36: #{chord_detector_forward.6} parent=31 // pred_fallthru
        _
    $region32: #{chord_detector_forward.6} parent=5 // pred_fallthru
      _
    %p2908 = scmp.le.s32.totalorder 2, %s9
    // Predicated region
    $region37: #{chord_detector_forward.6} parent=5 // pred_check
      %p2909 = pneg %p2908
    $region38: #{chord_detector_forward.6} parent=5 // pred_check_branch
      %2911 = sbr.rel (%p2909) target = $region40
    $region39: #{chord_detector_forward.6} parent=5 // pred_region
      %s2912 = ssub.s32 %s9, 2
      // Predicated region
      $region41: #{chord_detector_forward.6} parent=39 // pred_check
        %p2913 = pneg %p120
      $region42: #{chord_detector_forward.6} parent=39 // pred_check_branch
        %2915 = sbr.rel (%p2913) target = $region44
      $region43: #{chord_detector_forward.6} parent=39 // pred_region
        %p2916 = scmp.lt.s32.totalorder %s20, 1
        %s2917 = scalar_select %p2916, %s20, 1
        %p2918 = scmp.lt.s32.totalorder %s21, 0
        %s2919 = scalar_select %p2918, %s21, 0
        %s2920 = sadd.s32 %s2919, %s2917
        %s2921 = smul.addr %s2920, 8
        %s2922 = scalar_lea.vmem %s3, %s2921
      $region44: #{chord_detector_forward.6} parent=39 // pred_fallthru
        _
    $region40: #{chord_detector_forward.6} parent=5 // pred_fallthru
      _
  $region6: #{chord_detector_forward.6} parent=0 // loop_footer
    %s13 = sadd.s32 1, %s9
  $region7: #{chord_detector_forward.6} parent=0 // loop_footer_branch
    %8 = sbr.rel target = $region3
  $region8: #{chord_detector_forward.6} parent=0 // loop_exit
    _

// kernel: chord_detector_forward.5
$region0: #{chord_detector_forward.5}
  #allocation0 [shape = 'u32[]', space=smem, size = 0x4, offset = 0x4, fixed_abs, tag = 'smem constant byte address 0x4 - core index']
  #allocation1 [shape = 'u32[144,128]{1,0:T(1,128)}', space=vmem, size = 0x12000, scoped, tag = 'internal scratch']
  %s0 = inlined_call_operand.vmem [shape: f32[2,4,32,32], index: 0, kind: input, shape index: {}]
  %s1 = inlined_call_operand.vmem [shape: f32[9,32,64], index: 1, kind: input, shape index: {}]
  %s2 = inlined_call_operand.vmem [shape: f32[1,64], index: 2, kind: input, shape index: {}]
  %s3 = inlined_call_operand.vmem [shape: f32[2,20,64], index: 3, kind: output, shape index: {}]
  %s4 = sld [smem:[#allocation0]]
  $region45: #{chord_detector_forward.5} parent=0
    _
  %s6 = ssub.s32 1, %s4
  %s7 = scalar_select 0, %s6, %s4
  loop: start=0, step=1, limit=4
  $region2: #{chord_detector_forward.5} parent=0 // loop_pre_header
    _
  $region3: #{chord_detector_forward.5} parent=0 // loop_header
    %s9 = sphi 0, %s13
    %p10 = scmp.ge.s32.totalorder %s9, 4
    %s16 = sphi 0, %s28
    %s17 = sphi 0, %s24
    %s18 = sphi 0, %s16
    %s19 = sphi 0, %s17
    %s20 = sphi 0, %s18
    %s21 = sphi 0, %s19
    %s31 = sphi 0, %s33
    %s34 = sphi 0, %s31
    %s35 = sphi 0, %s34
    %s51 = sphi 0, %s35
    %s55 = sphi 0, %s55
    %s57 = sphi 0, %s55
    %s58 = sphi 0, %s57
    %s72 = sphi 0, %s58
    %s76 = sphi 0, %s76
    %s78 = sphi 0, %s76
    %s79 = sphi 0, %s78
    %s93 = sphi 0, %s79
    %s101 = sphi 0, %s103
    %s104 = sphi 0, %s101
    %s105 = sphi 0, %s104
    %s121 = sphi 0, %s105
  $region4: #{chord_detector_forward.5} parent=0 // loop_header_branch
    %12 = sbr.rel (%p10) target = $region8
  $region5: #{chord_detector_forward.5} parent=0 // loop_body
    %s14 = ssub.s32 %s9, 1
    %s15 = ssub.s32 %s9, 2
    %s22 = sadd.s32 1, %s17
    %p23 = scmp.ge.s32.totalorder %s22, 1
    %s24 = scalar_select %p23, 0, %s22
    %s25 = sadd.s32 1, %s16
    %s26 = scalar_select %p23, %s25, %s16
    %p27 = scmp.ge.s32.totalorder %s26, 2
    %s28 = scalar_select %p27, 0, %s26
    %s29 = ssub.s32 %s16, %s28
    %p30 = scmp.eq.s32.totalorder %s29, 0
    %s32 = sadd.s32 %s31, 1
    %s33 = scalar_select %p30, %s31, %s32
    %p36 = pneg %p30
    %p37 = scmp.eq.s32.totalorder %s9, 1
    %p38 = por %p36, %p37
    %p39 = scmp.ne.s32.totalorder %s31, %s34
    %p40 = scmp.eq.s32.totalorder %s9, 0
    %p41 = por %p39, %p40
    %p42 = scmp.ne.s32.totalorder %s31, %s34
    %p43 = scmp.eq.s32.totalorder %s14, 1
    %p44 = por %p42, %p43
    %p45 = scmp.ne.s32.totalorder %s34, %s35
    %p46 = scmp.eq.s32.totalorder %s14, 0
    %p47 = por %p45, %p46
    %p48 = scmp.ne.s32.totalorder %s34, %s35
    %p49 = scmp.eq.s32.totalorder %s15, 1
    %p50 = por %p48, %p49
    %p52 = scmp.ne.s32.totalorder %s35, %s51
    %p53 = scmp.eq.s32.totalorder %s15, 0
    %p54 = por %p52, %p53
    %s56 = sadd.s32 %s55, 1
    %p59 = scmp.eq.s32.totalorder %s9, 1
    %p60 = scmp.ne.s32.totalorder %s55, %s57
    %p61 = scmp.eq.s32.totalorder %s9, 0
    %p62 = por %p60, %p61
    %p63 = scmp.ne.s32.totalorder %s55, %s57
    %p64 = scmp.eq.s32.totalorder %s14, 1
    %p65 = por %p63, %p64
    %p66 = scmp.ne.s32.totalorder %s57, %s58
    %p67 = scmp.eq.s32.totalorder %s14, 0
    %p68 = por %p66, %p67
    %p69 = scmp.ne.s32.totalorder %s57, %s58
    %p70 = scmp.eq.s32.totalorder %s15, 1
    %p71 = por %p69, %p70
    %p73 = scmp.ne.s32.totalorder %s58, %s72
    %p74 = scmp.eq.s32.totalorder %s15, 0
    %p75 = por %p73, %p74
    %s77 = sadd.s32 %s76, 1
    %p80 = scmp.eq.s32.totalorder %s9, 1
    %p81 = scmp.ne.s32.totalorder %s76, %s78
    %p82 = scmp.eq.s32.totalorder %s9, 0
    %p83 = por %p81, %p82
    %p84 = scmp.ne.s32.totalorder %s76, %s78
    %p85 = scmp.eq.s32.totalorder %s14, 1
    %p86 = por %p84, %p85
    %p87 = scmp.ne.s32.totalorder %s78, %s79
    %p88 = scmp.eq.s32.totalorder %s14, 0
    %p89 = por %p87, %p88
    %p90 = scmp.ne.s32.totalorder %s78, %s79
    %p91 = scmp.eq.s32.totalorder %s15, 1
    %p92 = por %p90, %p91
    %p94 = scmp.ne.s32.totalorder %s79, %s93
    %p95 = scmp.eq.s32.totalorder %s15, 0
    %p96 = por %p94, %p95
    %s97 = ssub.s32 %s16, %s28
    %s98 = ssub.s32 %s17, %s24
    %s99 = sor.u32 %s97, %s98
    %p100 = scmp.eq.s32.totalorder %s99, 0
    %s102 = sadd.s32 %s101, 1
    %s103 = scalar_select %p100, %s101, %s102
    %p106 = pneg %p100
    %p107 = scmp.eq.s32.totalorder %s9, 1
    %p108 = por %p106, %p107
    %p109 = scmp.ne.s32.totalorder %s101, %s104
    %p110 = scmp.eq.s32.totalorder %s9, 0
    %p111 = por %p109, %p110
    %p112 = scmp.ne.s32.totalorder %s101, %s104
    %p113 = scmp.eq.s32.totalorder %s14, 1
    %p114 = por %p112, %p113
    %p115 = scmp.ne.s32.totalorder %s104, %s105
    %p116 = scmp.eq.s32.totalorder %s14, 0
    %p117 = por %p115, %p116
    %p118 = scmp.ne.s32.totalorder %s104, %s105
    %p119 = scmp.eq.s32.totalorder %s15, 1
    %p120 = por %p118, %p119
    %p122 = scmp.ne.s32.totalorder %s105, %s121
    %p123 = scmp.eq.s32.totalorder %s15, 0
    %p124 = por %p122, %p123
    %p125 = scmp.le.s32.totalorder 1, %s9
    %p126 = scmp.lt.s32.totalorder %s9, 3
    %p127 = pnand %p125, %p126
    %p128 = pneg %p127
    // Predicated region
    $region9: #{chord_detector_forward.5} parent=5 // pred_check
      _
    $region10: #{chord_detector_forward.5} parent=5 // pred_check_branch
      %130 = sbr.rel (%p127) target = $region12
    $region11: #{chord_detector_forward.5} parent=5 // pred_region
      %s131 = ssub.s32 %s9, 1
      // Predicated region
      $region13: #{chord_detector_forward.5} parent=11 // pred_check
        %p132 = pneg %p68
      $region14: #{chord_detector_forward.5} parent=11 // pred_check_branch
        %134 = sbr.rel (%p132) target = $region16
      $region15: #{chord_detector_forward.5} parent=11 // pred_region
        _
      $region16: #{chord_detector_forward.5} parent=11 // pred_fallthru
        _
      // Predicated region
      $region17: #{chord_detector_forward.5} parent=11 // pred_check
        %p135 = pneg %p89
      $region18: #{chord_detector_forward.5} parent=11 // pred_check_branch
        %137 = sbr.rel (%p135) target = $region20
      $region19: #{chord_detector_forward.5} parent=11 // pred_region
        _
      $region20: #{chord_detector_forward.5} parent=11 // pred_fallthru
        _
    $region12: #{chord_detector_forward.5} parent=5 // pred_fallthru
      _
    %p138 = scmp.lt.s32.totalorder %s9, 2
    // Predicated region
    $region21: #{chord_detector_forward.5} parent=5 // pred_check
      %p139 = pneg %p138
    $region22: #{chord_detector_forward.5} parent=5 // pred_check_branch
      %141 = sbr.rel (%p139) target = $region24
    $region23: #{chord_detector_forward.5} parent=5 // pred_region
      // Predicated region
      $region25: #{chord_detector_forward.5} parent=23 // pred_check
        %p142 = pneg %p41
      $region26: #{chord_detector_forward.5} parent=23 // pred_check_branch
        %144 = sbr.rel (%p142) target = $region28
      $region27: #{chord_detector_forward.5} parent=23 // pred_region
        %p145 = scmp.lt.s32.totalorder %s16, 1
        %s146 = scalar_select %p145, %s16, 1
        %s147 = smul.addr %s146, 16
        %s148 = smul.addr %s147, 8
        %s149 = scalar_lea.vmem %s0, %s148
      $region28: #{chord_detector_forward.5} parent=23 // pred_fallthru
        _
    $region24: #{chord_detector_forward.5} parent=5 // pred_fallthru
      _
    %p150 = scmp.le.s32.totalorder 1, %s9
    %p151 = scmp.lt.s32.totalorder %s9, 3
    %p152 = pnand %p150, %p151
    %p153 = pneg %p152
    // Predicated region
    $region29: #{chord_detector_forward.5} parent=5 // pred_check
      _
    $region30: #{chord_detector_forward.5} parent=5 // pred_check_branch
      %155 = sbr.rel (%p152) target = $region32
    $region31: #{chord_detector_forward.5} parent=5 // pred_region
      %s156 = ssub.s32 %s9, 1
      %p157 = scmp.lt.s32.totalorder %s18, 1
      %s158 = scalar_select %p157, %s18, 1
      %s159 = smul.addr %s158, 16
      %s160 = smul.addr %s159, 8
      %s161 = scalar_lea.vmem %s0, %s160
      %p162 = pneg %p47
      %p163 = pneg %p44
      %p164 = pneg %p68
      %p165 = pneg %p65
      %p166 = pneg %p89
      %p167 = pneg %p86
      %p168 = pneg %p117
      %p169 = pneg %p114
      %s170 = smul.u32 3, %s19
      %p171 = scmp.lt.s32.totalorder %s18, 1
      %s172 = scalar_select %p171, %s18, 1
      %p173 = scmp.lt.s32.totalorder %s170, 2
      %s174 = scalar_select %p173, %s170, 2
      %s175 = smul.addr %s172, 3
      %s176 = sadd.s32 %s174, %s175
      %s177 = smul.addr %s176, 8
      %s178 = scalar_lea.vmem %s3, %s177
      %p179 = scmp.lt.s32.totalorder %s18, 1
      %s180 = scalar_select %p179, %s18, 1
      %s181 = smul.addr %s180, 16
      %s182 = smul.addr %s181, 8
      %s183 = scalar_lea.vmem %s0, %s182
      %s184 = smul.u32 3, %s19
      %p185 = scmp.lt.s32.totalorder %s18, 1
      %s186 = scalar_select %p185, %s18, 1
      %p187 = scmp.lt.s32.totalorder %s184, 2
      %s188 = scalar_select %p187, %s184, 2
      %s189 = smul.addr %s186, 3
      %s190 = sadd.s32 %s188, %s189
      %s191 = smul.addr %s190, 8
      %s192 = scalar_lea.vmem %s3, %s191
      %s193 = smul.u32 3, %s19
      %v194 = vld [vmem:[%s183] sm:$0xff]
      %v195 = vld [vmem:[%s183 + $0x8] sm:$0xff]
      %v196 = vld [vmem:[%s183 + $0x10] sm:$0xf]
      %v197 = vld [vmem:[%s1] sm:$0xff]
      %v198 = vld [vmem:[%s1 + $0x8] sm:$0xff]
      %v199 = vld [vmem:[%s1 + $0x10] sm:$0xff]
      %v200 = vld [vmem:[%s1 + $0x18] sm:$0xff]
      %v201 = vld [vmem:[%s183 + $0x1] sm:$0xff]
      %v202 = vld [vmem:[%s183 + $0x9] sm:$0xff]
      %v203 = vld [vmem:[%s183 + $0x11] sm:$0xf]
      %s204 = scalar_lea.vmem %s1, 64
      %v205 = vld [vmem:[%s204] sm:$0xff]
      %v206 = vld [vmem:[%s204 + $0x8] sm:$0xff]
      %v207 = vld [vmem:[%s204 + $0x10] sm:$0xff]
      %v208 = vld [vmem:[%s204 + $0x18] sm:$0xff]
      %vm209 = vcmask 261120
      %v211 = vsel %vm209, %v201, 0
      %v214 = vsel %vm209, %v202, 0
      %v217 = vsel %vm209, %v203, 0
      %219 = vmatprep.subr.mxu0 0.0
      %220 = vmatpush1.msra.mxu0 %v205
      %221 = vmatprep.subr.mxu0 0.0
      %222 = vmatpush1.msra.mxu0 %v206
      %223 = vmatprep.subr.mxu0 0.0
      %224 = vmatpush1.msra.mxu0 %v207
      %225 = vmatprep.subr.mxu0 0.0
      %226 = vmatpush1.msra.mxu0 %v208
      %227 = vmatprep.subr.mxu0 0.0
      %228 = vmatpush1.msra.mxu0 0.0
      %229 = vmatprep.subr.mxu0 0.0
      %230 = vmatpush1.msra.mxu0 0.0
      %231 = vmatprep.subr.mxu0 0.0
      %232 = vmatpush1.msra.mxu0 0.0
      %233 = vmatprep.subr.mxu0 0.0
      %234 = vmatpush1.msra.mxu0 0.0
      %235 = vmatprep.subr.mxu0 0.0
      %236 = vmatpush1.msra.mxu0 0.0
      %237 = vmatprep.subr.mxu0 0.0
      %238 = vmatpush1.msra.mxu0 0.0
      %239 = vmatprep.subr.mxu0 0.0
      %240 = vmatpush1.msra.mxu0 0.0
      %241 = vmatprep.subr.mxu0 0.0
      %242 = vmatpush1.msra.mxu0 0.0
      %243 = vmatprep.subr.mxu0 0.0
      %244 = vmatpush1.msra.mxu0 0.0
      %245 = vmatprep.subr.mxu0 0.0
      %246 = vmatpush1.msra.mxu0 0.0
      %247 = vmatprep.subr.mxu0 0.0
      %248 = vmatpush1.msra.mxu0 0.0
      %249 = vmatprep.subr.mxu0 0.0
      %250 = vmatpush1.msra.mxu0 0.0
      %251 = vmatprep.subr.mxu0 0.0
      %252 = vmatpush1.msra.mxu0 0.0
      %253 = vmatprep.subr.mxu0 0.0
      %254 = vmatpush1.msra.mxu0 0.0
      %255 = vmatprep.subr.mxu0 0.0
      %256 = vmatpush1.msra.mxu0 0.0
      %257 = vmatprep.subr.mxu0 0.0
      %258 = vmatpush1.msra.mxu0 0.0
      %259 = vmatprep.subr.mxu0 0.0
      %260 = vmatpush1.msra.mxu0 0.0
      %261 = vmatprep.subr.mxu0 0.0
      %262 = vmatpush1.msra.mxu0 0.0
      %263 = vmatprep.subr.mxu0 0.0
      %264 = vmatpush1.msra.mxu0 0.0
      %265 = vmatprep.subr.mxu0 0.0
      %266 = vmatpush1.msra.mxu0 0.0
      %267 = vmatprep.subr.mxu0 0.0
      %268 = vmatpush1.msra.mxu0 0.0
      %269 = vmatprep.subr.mxu0 0.0
      %270 = vmatpush1.msra.mxu0 0.0
      %271 = vmatprep.subr.mxu0 0.0
      %272 = vmatpush1.msra.mxu0 0.0
      %273 = vmatprep.subr.mxu0 0.0
      %274 = vmatpush1.msra.mxu0 0.0
      %275 = vmatprep.subr.mxu0 0.0
      %276 = vmatpush1.msra.mxu0 0.0
      %277 = vmatprep.subr.mxu0 0.0
      %278 = vmatpush1.msra.mxu0 0.0
      %279 = vmatprep.subr.mxu0 0.0
      %280 = vmatpush1.msra.mxu0 0.0
      %281 = vmatprep.subr.mxu0 0.0
      %282 = vmatpush1.msra.mxu0 0.0
      %283 = vmatprep.mubr.f32.mxu0 0.0
      %284 = vmatmul.mubr.f32.gmra.mrb[0].mxu0 %v211
      %v285 = vpop.f32.mrb[0].mxu0
      %v286 = vadd.f32 0.0, %v285
      %v287 = vpop.f32.mrb[0].mxu0
      %288 = vmatprep.mubr.f32.mxu0 0.0
      %289 = vmatmul.mubr.f32.gmra.mrb[0].mxu0 %v214
      %v290 = vpop.f32.mrb[0].mxu0
      %v291 = vadd.f32 0.0, %v290
      %v292 = vpop.f32.mrb[0].mxu0
      %293 = vmatprep.mubr.f32.mxu0 0.0
      %294 = vmatmul.mubr.f32.gmra.mrb[0].mxu0 %v217
      %v295 = vpop.f32.mrb[0].mxu0
      %v296 = vadd.f32 0.0, %v295
      %v297 = vpop.f32.mrb[0].mxu0
      %298 = vdwg.mxu0
      %v300 = vsel %vm209, %v194, 0
      %v303 = vsel %vm209, %v195, 0
      %v306 = vsel %vm209, %v196, 0
      %308 = vmatprep.subr.mxu0 0.0
      %309 = vmatpush1.msra.mxu0 %v197
      %310 = vmatprep.subr.mxu0 0.0
      %311 = vmatpush1.msra.mxu0 %v198
      %312 = vmatprep.subr.mxu0 0.0
      %313 = vmatpush1.msra.mxu0 %v199
      %314 = vmatprep.subr.mxu0 0.0
      %315 = vmatpush1.msra.mxu0 %v200
      %316 = vmatprep.subr.mxu0 0.0
      %317 = vmatpush1.msra.mxu0 0.0
      %318 = vmatprep.subr.mxu0 0.0
      %319 = vmatpush1.msra.mxu0 0.0
      %320 = vmatprep.subr.mxu0 0.0
      %321 = vmatpush1.msra.mxu0 0.0
      %322 = vmatprep.subr.mxu0 0.0
      %323 = vmatpush1.msra.mxu0 0.0
      %324 = vmatprep.subr.mxu0 0.0
      %325 = vmatpush1.msra.mxu0 0.0
      %326 = vmatprep.subr.mxu0 0.0
      %327 = vmatpush1.msra.mxu0 0.0
      %328 = vmatprep.subr.mxu0 0.0
      %329 = vmatpush1.msra.mxu0 0.0
      %330 = vmatprep.subr.mxu0 0.0
      %331 = vmatpush1.msra.mxu0 0.0
      %332 = vmatprep.subr.mxu0 0.0
      %333 = vmatpush1.msra.mxu0 0.0
      %334 = vmatprep.subr.mxu0 0.0
      %335 = vmatpush1.msra.mxu0 0.0
      %336 = vmatprep.subr.mxu0 0.0
      %337 = vmatpush1.msra.mxu0 0.0
      %338 = vmatprep.subr.mxu0 0.0
      %339 = vmatpush1.msra.mxu0 0.0
      %340 = vmatprep.subr.mxu0 0.0
      %341 = vmatpush1.msra.mxu0 0.0
      %342 = vmatprep.subr.mxu0 0.0
      %343 = vmatpush1.msra.mxu0 0.0
      %344 = vmatprep.subr.mxu0 0.0
      %345 = vmatpush1.msra.mxu0 0.0
      %346 = vmatprep.subr.mxu0 0.0
      %347 = vmatpush1.msra.mxu0 0.0
      %348 = vmatprep.subr.mxu0 0.0
      %349 = vmatpush1.msra.mxu0 0.0
      %350 = vmatprep.subr.mxu0 0.0
      %351 = vmatpush1.msra.mxu0 0.0
      %352 = vmatprep.subr.mxu0 0.0
      %353 = vmatpush1.msra.mxu0 0.0
      %354 = vmatprep.subr.mxu0 0.0
      %355 = vmatpush1.msra.mxu0 0.0
      %356 = vmatprep.subr.mxu0 0.0
      %357 = vmatpush1.msra.mxu0 0.0
      %358 = vmatprep.subr.mxu0 0.0
      %359 = vmatpush1.msra.mxu0 0.0
      %360 = vmatprep.subr.mxu0 0.0
      %361 = vmatpush1.msra.mxu0 0.0
      %362 = vmatprep.subr.mxu0 0.0
      %363 = vmatpush1.msra.mxu0 0.0
      %364 = vmatprep.subr.mxu0 0.0
      %365 = vmatpush1.msra.mxu0 0.0
      %366 = vmatprep.subr.mxu0 0.0
      %367 = vmatpush1.msra.mxu0 0.0
      %368 = vmatprep.subr.mxu0 0.0
      %369 = vmatpush1.msra.mxu0 0.0
      %370 = vmatprep.subr.mxu0 0.0
      %371 = vmatpush1.msra.mxu0 0.0
      %372 = vmatprep.mubr.f32.mxu0 0.0
      %373 = vmatmul.mubr.f32.gmra.mrb[0].mxu0 %v300
      %v374 = vpop.f32.mrb[0].mxu0
      %v375 = vadd.f32 %v286, %v374
      %v376 = vpop.f32.mrb[0].mxu0
      %377 = vmatprep.mubr.f32.mxu0 0.0
      %378 = vmatmul.mubr.f32.gmra.mrb[0].mxu0 %v303
      %v379 = vpop.f32.mrb[0].mxu0
      %v380 = vadd.f32 %v291, %v379
      %v381 = vpop.f32.mrb[0].mxu0
      %382 = vmatprep.mubr.f32.mxu0 0.0
      %383 = vmatmul.mubr.f32.gmra.mrb[0].mxu0 %v306
      %v384 = vpop.f32.mrb[0].mxu0
      %v385 = vadd.f32 %v296, %v384
      %v386 = vpop.f32.mrb[0].mxu0
      %387 = vdwg.mxu0
      %s388 = scalar_lea.vmem %s1, 32
      %v389 = vld [vmem:[%s388] sm:$0xff]
      %v390 = vld [vmem:[%s388 + $0x8] sm:$0xff]
      %v391 = vld [vmem:[%s388 + $0x10] sm:$0xff]
      %v392 = vld [vmem:[%s388 + $0x18] sm:$0xff]
      %v393 = vld [vmem:[%s183 + $0x5] sm:$0xff]
      %v394 = vld [vmem:[%s183 + $0xd] sm:$0xff]
      %v395 = vld [vmem:[%s183 + $0x15] sm:$0xf]
      %s396 = scalar_lea.vmem %s1, 192
      %v397 = vld [vmem:[%s396] sm:$0xff]
      %v398 = vld [vmem:[%s396 + $0x8] sm:$0xff]
      %v399 = vld [vmem:[%s396 + $0x10] sm:$0xff]
      %v400 = vld [vmem:[%s396 + $0x18] sm:$0xff]
      %v402 = vsel %vm209, %v393, 0
      %v405 = vsel %vm209, %v394, 0
      %v408 = vsel %vm209, %v395, 0
      %410 = vmatprep.subr.mxu0 0.0
      %411 = vmatpush1.msra.mxu0 %v397
      %412 = vmatprep.subr.mxu0 0.0
      %413 = vmatpush1.msra.mxu0 %v398
      %414 = vmatprep.subr.mxu0 0.0
      %415 = vmatpush1.msra.mxu0 %v399
      %416 = vmatprep.subr.mxu0 0.0
      %417 = vmatpush1.msra.mxu0 %v400
      %418 = vmatprep.subr.mxu0 0.0
      %419 = vmatpush1.msra.mxu0 0.0
      %420 = vmatprep.subr.mxu0 0.0
      %421 = vmatpush1.msra.mxu0 0.0
      %422 = vmatprep.subr.mxu0 0.0
      %423 = vmatpush1.msra.mxu0 0.0
      %424 = vmatprep.subr.mxu0 0.0
      %425 = vmatpush1.msra.mxu0 0.0
      %426 = vmatprep.subr.mxu0 0.0
      %427 = vmatpush1.msra.mxu0 0.0
      %428 = vmatprep.subr.mxu0 0.0
      %429 = vmatpush1.msra.mxu0 0.0
      %430 = vmatprep.subr.mxu0 0.0
      %431 = vmatpush1.msra.mxu0 0.0
      %432 = vmatprep.subr.mxu0 0.0
      %433 = vmatpush1.msra.mxu0 0.0
      %434 = vmatprep.subr.mxu0 0.0
      %435 = vmatpush1.msra.mxu0 0.0
      %436 = vmatprep.subr.mxu0 0.0
      %437 = vmatpush1.msra.mxu0 0.0
      %438 = vmatprep.subr.mxu0 0.0
      %439 = vmatpush1.msra.mxu0 0.0
      %440 = vmatprep.subr.mxu0 0.0
      %441 = vmatpush1.msra.mxu0 0.0
      %442 = vmatprep.subr.mxu0 0.0
      %443 = vmatpush1.msra.mxu0 0.0
      %444 = vmatprep.subr.mxu0 0.0
      %445 = vmatpush1.msra.mxu0 0.0
      %446 = vmatprep.subr.mxu0 0.0
      %447 = vmatpush1.msra.mxu0 0.0
      %448 = vmatprep.subr.mxu0 0.0
      %449 = vmatpush1.msra.mxu0 0.0
      %450 = vmatprep.subr.mxu0 0.0
      %451 = vmatpush1.msra.mxu0 0.0
      %452 = vmatprep.subr.mxu0 0.0
      %453 = vmatpush1.msra.mxu0 0.0
      %454 = vmatprep.subr.mxu0 0.0
      %455 = vmatpush1.msra.mxu0 0.0
      %456 = vmatprep.subr.mxu0 0.0
      %457 = vmatpush1.msra.mxu0 0.0
      %458 = vmatprep.subr.mxu0 0.0
      %459 = vmatpush1.msra.mxu0 0.0
      %460 = vmatprep.subr.mxu0 0.0
      %461 = vmatpush1.msra.mxu0 0.0
      %462 = vmatprep.subr.mxu0 0.0
      %463 = vmatpush1.msra.mxu0 0.0
      %464 = vmatprep.subr.mxu0 0.0
      %465 = vmatpush1.msra.mxu0 0.0
      %466 = vmatprep.subr.mxu0 0.0
      %467 = vmatpush1.msra.mxu0 0.0
      %468 = vmatprep.subr.mxu0 0.0
      %469 = vmatpush1.msra.mxu0 0.0
      %470 = vmatprep.subr.mxu0 0.0
      %471 = vmatpush1.msra.mxu0 0.0
      %472 = vmatprep.subr.mxu0 0.0
      %473 = vmatpush1.msra.mxu0 0.0
      %474 = vmatprep.mubr.f32.mxu0 0.0
      %475 = vmatmul.mubr.f32.gmra.mrb[0].mxu0 %v402
      %v476 = vpop.f32.mrb[0].mxu0
      %v477 = vadd.f32 0.0, %v476
      %v478 = vpop.f32.mrb[0].mxu0
      %479 = vmatprep.mubr.f32.mxu0 0.0
      %480 = vmatmul.mubr.f32.gmra.mrb[0].mxu0 %v405
      %v481 = vpop.f32.mrb[0].mxu0
      %v482 = vadd.f32 0.0, %v481
      %v483 = vpop.f32.mrb[0].mxu0
      %484 = vmatprep.mubr.f32.mxu0 0.0
      %485 = vmatmul.mubr.f32.gmra.mrb[0].mxu0 %v408
      %v486 = vpop.f32.mrb[0].mxu0
      %v487 = vadd.f32 0.0, %v486
      %v488 = vpop.f32.mrb[0].mxu0
      %489 = vdwg.mxu0
      %v490 = vadd.f32 %v375, %v477
      %v491 = vadd.f32 %v380, %v482
      %v492 = vadd.f32 %v385, %v487
      %s493 = scalar_lea.vmem %s1, 96
      %v494 = vld [vmem:[%s493] sm:$0xff]
      %v495 = vld [vmem:[%s493 + $0x8] sm:$0xff]
      %v496 = vld [vmem:[%s493 + $0x10] sm:$0xff]
      %v497 = vld [vmem:[%s493 + $0x18] sm:$0xff]
      %v498 = vld [vmem:[%s183 + $0x6] sm:$0xff]
      %v499 = vld [vmem:[%s183 + $0xe] sm:$0xff]
      %v500 = vld [vmem:[%s183 + $0x16] sm:$0xf]
      %s501 = scalar_lea.vmem %s1, 256
      %v502 = vld [vmem:[%s501] sm:$0xff]
      %v503 = vld [vmem:[%s501 + $0x8] sm:$0xff]
      %v504 = vld [vmem:[%s501 + $0x10] sm:$0xff]
      %v505 = vld [vmem:[%s501 + $0x18] sm:$0xff]
      %v507 = vsel %vm209, %v498, 0
      %v510 = vsel %vm209, %v499, 0
      %v513 = vsel %vm209, %v500, 0
      %515 = vmatprep.subr.mxu0 0.0
      %516 = vmatpush1.msra.mxu0 %v502
      %517 = vmatprep.subr.mxu0 0.0
      %518 = vmatpush1.msra.mxu0 %v503
      %519 = vmatprep.subr.mxu0 0.0
      %520 = vmatpush1.msra.mxu0 %v504
      %521 = vmatprep.subr.mxu0 0.0
      %522 = vmatpush1.msra.mxu0 %v505
      %523 = vmatprep.subr.mxu0 0.0
      %524 = vmatpush1.msra.mxu0 0.0
      %525 = vmatprep.subr.mxu0 0.0
      %526 = vmatpush1.msra.mxu0 0.0
      %527 = vmatprep.subr.mxu0 0.0
      %528 = vmatpush1.msra.mxu0 0.0
      %529 = vmatprep.subr.mxu0 0.0
      %530 = vmatpush1.msra.mxu0 0.0
      %531 = vmatprep.subr.mxu0 0.0
      %532 = vmatpush1.msra.mxu0 0.0
      %533 = vmatprep.subr.mxu0 0.0
      %534 = vmatpush1.msra.mxu0 0.0
      %535 = vmatprep.subr.mxu0 0.0
      %536 = vmatpush1.msra.mxu0 0.0
      %537 = vmatprep.subr.mxu0 0.0
      %538 = vmatpush1.msra.mxu0 0.0
      %539 = vmatprep.subr.mxu0 0.0
      %540 = vmatpush1.msra.mxu0 0.0
      %541 = vmatprep.subr.mxu0 0.0
      %542 = vmatpush1.msra.mxu0 0.0
      %543 = vmatprep.subr.mxu0 0.0
      %544 = vmatpush1.msra.mxu0 0.0
      %545 = vmatprep.subr.mxu0 0.0
      %546 = vmatpush1.msra.mxu0 0.0
      %547 = vmatprep.subr.mxu0 0.0
      %548 = vmatpush1.msra.mxu0 0.0
      %549 = vmatprep.subr.mxu0 0.0
      %550 = vmatpush1.msra.mxu0 0.0
      %551 = vmatprep.subr.mxu0 0.0
      %552 = vmatpush1.msra.mxu0 0.0
      %553 = vmatprep.subr.mxu0 0.0
      %554 = vmatpush1.msra.mxu0 0.0
      %555 = vmatprep.subr.mxu0 0.0
      %556 = vmatpush1.msra.mxu0 0.0
      %557 = vmatprep.subr.mxu0 0.0
      %558 = vmatpush1.msra.mxu0 0.0
      %559 = vmatprep.subr.mxu0 0.0
      %560 = vmatpush1.msra.mxu0 0.0
      %561 = vmatprep.subr.mxu0 0.0
      %562 = vmatpush1.msra.mxu0 0.0
      %563 = vmatprep.subr.mxu0 0.0
      %564 = vmatpush1.msra.mxu0 0.0
      %565 = vmatprep.subr.mxu0 0.0
      %566 = vmatpush1.msra.mxu0 0.0
      %567 = vmatprep.subr.mxu0 0.0
      %568 = vmatpush1.msra.mxu0 0.0
      %569 = vmatprep.subr.mxu0 0.0
      %570 = vmatpush1.msra.mxu0 0.0
      %571 = vmatprep.subr.mxu0 0.0
      %572 = vmatpush1.msra.mxu0 0.0
      %573 = vmatprep.subr.mxu0 0.0
      %574 = vmatpush1.msra.mxu0 0.0
      %575 = vmatprep.subr.mxu0 0.0
      %576 = vmatpush1.msra.mxu0 0.0
      %577 = vmatprep.subr.mxu0 0.0
      %578 = vmatpush1.msra.mxu0 0.0
      %579 = vmatprep.mubr.f32.mxu0 0.0
      %580 = vmatmul.mubr.f32.gmra.mrb[0].mxu0 %v507
      %v581 = vpop.f32.mrb[0].mxu0
      %v582 = vadd.f32 0.0, %v581
      %v583 = vpop.f32.mrb[0].mxu0
      %584 = vmatprep.mubr.f32.mxu0 0.0
      %585 = vmatmul.mubr.f32.gmra.mrb[0].mxu0 %v510
      %v586 = vpop.f32.mrb[0].mxu0
      %v587 = vadd.f32 0.0, %v586
      %v588 = vpop.f32.mrb[0].mxu0
      %589 = vmatprep.mubr.f32.mxu0 0.0
      %590 = vmatmul.mubr.f32.gmra.mrb[0].mxu0 %v513
      %v591 = vpop.f32.mrb[0].mxu0
      %v592 = vadd.f32 0.0, %v591
      %v593 = vpop.f32.mrb[0].mxu0
      %594 = vdwg.mxu0
      %v595 = vadd.f32 %v490, %v582
      %v596 = vadd.f32 %v491, %v587
      %v597 = vadd.f32 %v492, %v592
      %s598 = scalar_lea.vmem %s1, 224
      %v599 = vld [vmem:[%s598] sm:$0xff]
      %v600 = vld [vmem:[%s598 + $0x8] sm:$0xff]
      %v601 = vld [vmem:[%s598 + $0x10] sm:$0xff]
      %v602 = vld [vmem:[%s598 + $0x18] sm:$0xff]
      %603 = vmatprep.subr.mxu0 0.0
      %604 = vmatpush1.msra.mxu0 %v599
      %605 = vmatprep.subr.mxu0 0.0
      %606 = vmatpush1.msra.mxu0 %v600
      %607 = vmatprep.subr.mxu0 0.0
      %608 = vmatpush1.msra.mxu0 %v601
      %609 = vmatprep.subr.mxu0 0.0
      %610 = vmatpush1.msra.mxu0 %v602
      %611 = vmatprep.subr.mxu0 0.0
      %612 = vmatpush1.msra.mxu0 0.0
      %613 = vmatprep.subr.mxu0 0.0
      %614 = vmatpush1.msra.mxu0 0.0
      %615 = vmatprep.subr.mxu0 0.0
      %616 = vmatpush1.msra.mxu0 0.0
      %617 = vmatprep.subr.mxu0 0.0
      %618 = vmatpush1.msra.mxu0 0.0
      %619 = vmatprep.subr.mxu0 0.0
      %620 = vmatpush1.msra.mxu0 0.0
      %621 = vmatprep.subr.mxu0 0.0
      %622 = vmatpush1.msra.mxu0 0.0
      %623 = vmatprep.subr.mxu0 0.0
      %624 = vmatpush1.msra.mxu0 0.0
      %625 = vmatprep.subr.mxu0 0.0
      %626 = vmatpush1.msra.mxu0 0.0
      %627 = vmatprep.subr.mxu0 0.0
      %628 = vmatpush1.msra.mxu0 0.0
      %629 = vmatprep.subr.mxu0 0.0
      %630 = vmatpush1.msra.mxu0 0.0
      %631 = vmatprep.subr.mxu0 0.0
      %632 = vmatpush1.msra.mxu0 0.0
      %633 = vmatprep.subr.mxu0 0.0
      %634 = vmatpush1.msra.mxu0 0.0
      %635 = vmatprep.subr.mxu0 0.0
      %636 = vmatpush1.msra.mxu0 0.0
      %637 = vmatprep.subr.mxu0 0.0
      %638 = vmatpush1.msra.mxu0 0.0
      %639 = vmatprep.subr.mxu0 0.0
      %640 = vmatpush1.msra.mxu0 0.0
      %641 = vmatprep.subr.mxu0 0.0
      %642 = vmatpush1.msra.mxu0 0.0
      %643 = vmatprep.subr.mxu0 0.0
      %644 = vmatpush1.msra.mxu0 0.0
      %645 = vmatprep.subr.mxu0 0.0
      %646 = vmatpush1.msra.mxu0 0.0
      %647 = vmatprep.subr.mxu0 0.0
      %648 = vmatpush1.msra.mxu0 0.0
      %649 = vmatprep.subr.mxu0 0.0
      %650 = vmatpush1.msra.mxu0 0.0
      %651 = vmatprep.subr.mxu0 0.0
      %652 = vmatpush1.msra.mxu0 0.0
      %653 = vmatprep.subr.mxu0 0.0
      %654 = vmatpush1.msra.mxu0 0.0
      %655 = vmatprep.subr.mxu0 0.0
      %656 = vmatpush1.msra.mxu0 0.0
      %657 = vmatprep.subr.mxu0 0.0
      %658 = vmatpush1.msra.mxu0 0.0
      %659 = vmatprep.subr.mxu0 0.0
      %660 = vmatpush1.msra.mxu0 0.0
      %661 = vmatprep.subr.mxu0 0.0
      %662 = vmatpush1.msra.mxu0 0.0
      %663 = vmatprep.subr.mxu0 0.0
      %664 = vmatpush1.msra.mxu0 0.0
      %665 = vmatprep.subr.mxu0 0.0
      %666 = vmatpush1.msra.mxu0 0.0
      %667 = vmatprep.mubr.f32.mxu0 0.0
      %668 = vmatmul.mubr.f32.gmra.mrb[0].mxu0 %v507
      %v669 = vpop.f32.mrb[0].mxu0
      %v670 = vadd.f32 0.0, %v669
      %v671 = vpop.f32.mrb[0].mxu0
      %672 = vmatprep.mubr.f32.mxu0 0.0
      %673 = vmatmul.mubr.f32.gmra.mrb[0].mxu0 %v510
      %v674 = vpop.f32.mrb[0].mxu0
      %v675 = vadd.f32 0.0, %v674
      %v676 = vpop.f32.mrb[0].mxu0
      %677 = vmatprep.mubr.f32.mxu0 0.0
      %678 = vmatmul.mubr.f32.gmra.mrb[0].mxu0 %v513
      %v679 = vpop.f32.mrb[0].mxu0
      %v680 = vadd.f32 0.0, %v679
      %v681 = vpop.f32.mrb[0].mxu0
      %682 = vdwg.mxu0
      %683 = vmatprep.subr.mxu0 0.0
      %684 = vmatpush1.msra.mxu0 %v389
      %685 = vmatprep.subr.mxu0 0.0
      %686 = vmatpush1.msra.mxu0 %v390
      %687 = vmatprep.subr.mxu0 0.0
      %688 = vmatpush1.msra.mxu0 %v391
      %689 = vmatprep.subr.mxu0 0.0
      %690 = vmatpush1.msra.mxu0 %v392
      %691 = vmatprep.subr.mxu0 0.0
      %692 = vmatpush1.msra.mxu0 0.0
      %693 = vmatprep.subr.mxu0 0.0
      %694 = vmatpush1.msra.mxu0 0.0
      %695 = vmatprep.subr.mxu0 0.0
      %696 = vmatpush1.msra.mxu0 0.0
      %697 = vmatprep.subr.mxu0 0.0
      %698 = vmatpush1.msra.mxu0 0.0
      %699 = vmatprep.subr.mxu0 0.0
      %700 = vmatpush1.msra.mxu0 0.0
      %701 = vmatprep.subr.mxu0 0.0
      %702 = vmatpush1.msra.mxu0 0.0
      %703 = vmatprep.subr.mxu0 0.0
      %704 = vmatpush1.msra.mxu0 0.0
      %705 = vmatprep.subr.mxu0 0.0
      %706 = vmatpush1.msra.mxu0 0.0
      %707 = vmatprep.subr.mxu0 0.0
      %708 = vmatpush1.msra.mxu0 0.0
      %709 = vmatprep.subr.mxu0 0.0
      %710 = vmatpush1.msra.mxu0 0.0
      %711 = vmatprep.subr.mxu0 0.0
      %712 = vmatpush1.msra.mxu0 0.0
      %713 = vmatprep.subr.mxu0 0.0
      %714 = vmatpush1.msra.mxu0 0.0
      %715 = vmatprep.subr.mxu0 0.0
      %716 = vmatpush1.msra.mxu0 0.0
      %717 = vmatprep.subr.mxu0 0.0
      %718 = vmatpush1.msra.mxu0 0.0
      %719 = vmatprep.subr.mxu0 0.0
      %720 = vmatpush1.msra.mxu0 0.0
      %721 = vmatprep.subr.mxu0 0.0
      %722 = vmatpush1.msra.mxu0 0.0
      %723 = vmatprep.subr.mxu0 0.0
      %724 = vmatpush1.msra.mxu0 0.0
      %725 = vmatprep.subr.mxu0 0.0
      %726 = vmatpush1.msra.mxu0 0.0
      %727 = vmatprep.subr.mxu0 0.0
      %728 = vmatpush1.msra.mxu0 0.0
      %729 = vmatprep.subr.mxu0 0.0
      %730 = vmatpush1.msra.mxu0 0.0
      %731 = vmatprep.subr.mxu0 0.0
      %732 = vmatpush1.msra.mxu0 0.0
      %733 = vmatprep.subr.mxu0 0.0
      %734 = vmatpush1.msra.mxu0 0.0
      %735 = vmatprep.subr.mxu0 0.0
      %736 = vmatpush1.msra.mxu0 0.0
      %737 = vmatprep.subr.mxu0 0.0
      %738 = vmatpush1.msra.mxu0 0.0
      %739 = vmatprep.subr.mxu0 0.0
      %740 = vmatpush1.msra.mxu0 0.0
      %741 = vmatprep.subr.mxu0 0.0
      %742 = vmatpush1.msra.mxu0 0.0
      %743 = vmatprep.subr.mxu0 0.0
      %744 = vmatpush1.msra.mxu0 0.0
      %745 = vmatprep.subr.mxu0 0.0
      %746 = vmatpush1.msra.mxu0 0.0
      %747 = vmatprep.mubr.f32.mxu0 0.0
      %748 = vmatmul.mubr.f32.gmra.mrb[0].mxu0 %v211
      %v749 = vpop.f32.mrb[0].mxu0
      %v750 = vadd.f32 %v670, %v749
      %v751 = vpop.f32.mrb[0].mxu0
      %752 = vmatprep.mubr.f32.mxu0 0.0
      %753 = vmatmul.mubr.f32.gmra.mrb[0].mxu0 %v214
      %v754 = vpop.f32.mrb[0].mxu0
      %v755 = vadd.f32 %v675, %v754
      %v756 = vpop.f32.mrb[0].mxu0
      %757 = vmatprep.mubr.f32.mxu0 0.0
      %758 = vmatmul.mubr.f32.gmra.mrb[0].mxu0 %v217
      %v759 = vpop.f32.mrb[0].mxu0
      %v760 = vadd.f32 %v680, %v759
      %v761 = vpop.f32.mrb[0].mxu0
      %762 = vdwg.mxu0
      %s763 = scalar_lea.vmem %s1, 160
      %v764 = vld [vmem:[%s763] sm:$0xff]
      %v765 = vld [vmem:[%s763 + $0x8] sm:$0xff]
      %v766 = vld [vmem:[%s763 + $0x10] sm:$0xff]
      %v767 = vld [vmem:[%s763 + $0x18] sm:$0xff]
      %768 = vmatprep.subr.mxu0 0.0
      %769 = vmatpush1.msra.mxu0 %v764
      %770 = vmatprep.subr.mxu0 0.0
      %771 = vmatpush1.msra.mxu0 %v765
      %772 = vmatprep.subr.mxu0 0.0
      %773 = vmatpush1.msra.mxu0 %v766
      %774 = vmatprep.subr.mxu0 0.0
      %775 = vmatpush1.msra.mxu0 %v767
      %776 = vmatprep.subr.mxu0 0.0
      %777 = vmatpush1.msra.mxu0 0.0
      %778 = vmatprep.subr.mxu0 0.0
      %779 = vmatpush1.msra.mxu0 0.0
      %780 = vmatprep.subr.mxu0 0.0
      %781 = vmatpush1.msra.mxu0 0.0
      %782 = vmatprep.subr.mxu0 0.0
      %783 = vmatpush1.msra.mxu0 0.0
      %784 = vmatprep.subr.mxu0 0.0
      %785 = vmatpush1.msra.mxu0 0.0
      %786 = vmatprep.subr.mxu0 0.0
      %787 = vmatpush1.msra.mxu0 0.0
      %788 = vmatprep.subr.mxu0 0.0
      %789 = vmatpush1.msra.mxu0 0.0
      %790 = vmatprep.subr.mxu0 0.0
      %791 = vmatpush1.msra.mxu0 0.0
      %792 = vmatprep.subr.mxu0 0.0
      %793 = vmatpush1.msra.mxu0 0.0
      %794 = vmatprep.subr.mxu0 0.0
      %795 = vmatpush1.msra.mxu0 0.0
      %796 = vmatprep.subr.mxu0 0.0
      %797 = vmatpush1.msra.mxu0 0.0
      %798 = vmatprep.subr.mxu0 0.0
      %799 = vmatpush1.msra.mxu0 0.0
      %800 = vmatprep.subr.mxu0 0.0
      %801 = vmatpush1.msra.mxu0 0.0
      %802 = vmatprep.subr.mxu0 0.0
      %803 = vmatpush1.msra.mxu0 0.0
      %804 = vmatprep.subr.mxu0 0.0
      %805 = vmatpush1.msra.mxu0 0.0
      %806 = vmatprep.subr.mxu0 0.0
      %807 = vmatpush1.msra.mxu0 0.0
      %808 = vmatprep.subr.mxu0 0.0
      %809 = vmatpush1.msra.mxu0 0.0
      %810 = vmatprep.subr.mxu0 0.0
      %811 = vmatpush1.msra.mxu0 0.0
      %812 = vmatprep.subr.mxu0 0.0
      %813 = vmatpush1.msra.mxu0 0.0
      %814 = vmatprep.subr.mxu0 0.0
      %815 = vmatpush1.msra.mxu0 0.0
      %816 = vmatprep.subr.mxu0 0.0
      %817 = vmatpush1.msra.mxu0 0.0
      %818 = vmatprep.subr.mxu0 0.0
      %819 = vmatpush1.msra.mxu0 0.0
      %820 = vmatprep.subr.mxu0 0.0
      %821 = vmatpush1.msra.mxu0 0.0
      %822 = vmatprep.subr.mxu0 0.0
      %823 = vmatpush1.msra.mxu0 0.0
      %824 = vmatprep.subr.mxu0 0.0
      %825 = vmatpush1.msra.mxu0 0.0
      %826 = vmatprep.subr.mxu0 0.0
      %827 = vmatpush1.msra.mxu0 0.0
      %828 = vmatprep.subr.mxu0 0.0
      %829 = vmatpush1.msra.mxu0 0.0
      %830 = vmatprep.subr.mxu0 0.0
      %831 = vmatpush1.msra.mxu0 0.0
      %832 = vmatprep.mubr.f32.mxu0 0.0
      %833 = vmatmul.mubr.f32.gmra.mrb[0].mxu0 %v507
      %v834 = vpop.f32.mrb[0].mxu0
      %v835 = vadd.f32 0.0, %v834
      %v836 = vpop.f32.mrb[0].mxu0
      %837 = vmatprep.mubr.f32.mxu0 0.0
      %838 = vmatmul.mubr.f32.gmra.mrb[0].mxu0 %v510
      %v839 = vpop.f32.mrb[0].mxu0
      %v840 = vadd.f32 0.0, %v839
      %v841 = vpop.f32.mrb[0].mxu0
      %842 = vmatprep.mubr.f32.mxu0 0.0
      %843 = vmatmul.mubr.f32.gmra.mrb[0].mxu0 %v513
      %v844 = vpop.f32.mrb[0].mxu0
      %v845 = vadd.f32 0.0, %v844
      %v846 = vpop.f32.mrb[0].mxu0
      %847 = vdwg.mxu0
      %848 = vmatprep.subr.mxu0 0.0
      %849 = vmatpush1.msra.mxu0 %v494
      %850 = vmatprep.subr.mxu0 0.0
      %851 = vmatpush1.msra.mxu0 %v495
      %852 = vmatprep.subr.mxu0 0.0
      %853 = vmatpush1.msra.mxu0 %v496
      %854 = vmatprep.subr.mxu0 0.0
      %855 = vmatpush1.msra.mxu0 %v497
      %856 = vmatprep.subr.mxu0 0.0
      %857 = vmatpush1.msra.mxu0 0.0
      %858 = vmatprep.subr.mxu0 0.0
      %859 = vmatpush1.msra.mxu0 0.0
      %860 = vmatprep.subr.mxu0 0.0
      %861 = vmatpush1.msra.mxu0 0.0
      %862 = vmatprep.subr.mxu0 0.0
      %863 = vmatpush1.msra.mxu0 0.0
      %864 = vmatprep.subr.mxu0 0.0
      %865 = vmatpush1.msra.mxu0 0.0
      %866 = vmatprep.subr.mxu0 0.0
      %867 = vmatpush1.msra.mxu0 0.0
      %868 = vmatprep.subr.mxu0 0.0
      %869 = vmatpush1.msra.mxu0 0.0
      %870 = vmatprep.subr.mxu0 0.0
      %871 = vmatpush1.msra.mxu0 0.0
      %872 = vmatprep.subr.mxu0 0.0
      %873 = vmatpush1.msra.mxu0 0.0
      %874 = vmatprep.subr.mxu0 0.0
      %875 = vmatpush1.msra.mxu0 0.0
      %876 = vmatprep.subr.mxu0 0.0
      %877 = vmatpush1.msra.mxu0 0.0
      %878 = vmatprep.subr.mxu0 0.0
      %879 = vmatpush1.msra.mxu0 0.0
      %880 = vmatprep.subr.mxu0 0.0
      %881 = vmatpush1.msra.mxu0 0.0
      %882 = vmatprep.subr.mxu0 0.0
      %883 = vmatpush1.msra.mxu0 0.0
      %884 = vmatprep.subr.mxu0 0.0
      %885 = vmatpush1.msra.mxu0 0.0
      %886 = vmatprep.subr.mxu0 0.0
      %887 = vmatpush1.msra.mxu0 0.0
      %888 = vmatprep.subr.mxu0 0.0
      %889 = vmatpush1.msra.mxu0 0.0
      %890 = vmatprep.subr.mxu0 0.0
      %891 = vmatpush1.msra.mxu0 0.0
      %892 = vmatprep.subr.mxu0 0.0
      %893 = vmatpush1.msra.mxu0 0.0
      %894 = vmatprep.subr.mxu0 0.0
      %895 = vmatpush1.msra.mxu0 0.0
      %896 = vmatprep.subr.mxu0 0.0
      %897 = vmatpush1.msra.mxu0 0.0
      %898 = vmatprep.subr.mxu0 0.0
      %899 = vmatpush1.msra.mxu0 0.0
      %900 = vmatprep.subr.mxu0 0.0
      %901 = vmatpush1.msra.mxu0 0.0
      %902 = vmatprep.subr.mxu0 0.0
      %903 = vmatpush1.msra.mxu0 0.0
      %904 = vmatprep.subr.mxu0 0.0
      %905 = vmatpush1.msra.mxu0 0.0
      %906 = vmatprep.subr.mxu0 0.0
      %907 = vmatpush1.msra.mxu0 0.0
      %908 = vmatprep.subr.mxu0 0.0
      %909 = vmatpush1.msra.mxu0 0.0
      %910 = vmatprep.subr.mxu0 0.0
      %911 = vmatpush1.msra.mxu0 0.0
      %912 = vmatprep.mubr.f32.mxu0 0.0
      %913 = vmatmul.mubr.f32.gmra.mrb[0].mxu0 %v402
      %v914 = vpop.f32.mrb[0].mxu0
      %v915 = vadd.f32 %v835, %v914
      %v916 = vpop.f32.mrb[0].mxu0
      %917 = vmatprep.mubr.f32.mxu0 0.0
      %918 = vmatmul.mubr.f32.gmra.mrb[0].mxu0 %v405
      %v919 = vpop.f32.mrb[0].mxu0
      %v920 = vadd.f32 %v840, %v919
      %v921 = vpop.f32.mrb[0].mxu0
      %922 = vmatprep.mubr.f32.mxu0 0.0
      %923 = vmatmul.mubr.f32.gmra.mrb[0].mxu0 %v408
      %v924 = vpop.f32.mrb[0].mxu0
      %v925 = vadd.f32 %v845, %v924
      %v926 = vpop.f32.mrb[0].mxu0
      %927 = vdwg.mxu0
      %s928 = scalar_lea.vmem %s1, 128
      %v929 = vld [vmem:[%s928] sm:$0xff]
      %v930 = vld [vmem:[%s928 + $0x8] sm:$0xff]
      %v931 = vld [vmem:[%s928 + $0x10] sm:$0xff]
      %v932 = vld [vmem:[%s928 + $0x18] sm:$0xff]
      %s933 = scalar_lea.vmem %s183, 32
      %v934 = vld [vmem:[%s933] sm:$0xff]
      %v935 = vld [vmem:[%s933 + $0x8] sm:$0xff]
      %v936 = vld [vmem:[%s933 + $0x10] sm:$0xf]
      %v938 = vsel %vm209, %v934, 0
      %v941 = vsel %vm209, %v935, 0
      %v944 = vsel %vm209, %v936, 0
      %946 = vmatprep.subr.mxu0 0.0
      %947 = vmatpush1.msra.mxu0 %v389
      %948 = vmatprep.subr.mxu0 0.0
      %949 = vmatpush1.msra.mxu0 %v390
      %950 = vmatprep.subr.mxu0 0.0
      %951 = vmatpush1.msra.mxu0 %v391
      %952 = vmatprep.subr.mxu0 0.0
      %953 = vmatpush1.msra.mxu0 %v392
      %954 = vmatprep.subr.mxu0 0.0
      %955 = vmatpush1.msra.mxu0 0.0
      %956 = vmatprep.subr.mxu0 0.0
      %957 = vmatpush1.msra.mxu0 0.0
      %958 = vmatprep.subr.mxu0 0.0
      %959 = vmatpush1.msra.mxu0 0.0
      %960 = vmatprep.subr.mxu0 0.0
      %961 = vmatpush1.msra.mxu0 0.0
      %962 = vmatprep.subr.mxu0 0.0
      %963 = vmatpush1.msra.mxu0 0.0
      %964 = vmatprep.subr.mxu0 0.0
      %965 = vmatpush1.msra.mxu0 0.0
      %966 = vmatprep.subr.mxu0 0.0
      %967 = vmatpush1.msra.mxu0 0.0
      %968 = vmatprep.subr.mxu0 0.0
      %969 = vmatpush1.msra.mxu0 0.0
      %970 = vmatprep.subr.mxu0 0.0
      %971 = vmatpush1.msra.mxu0 0.0
      %972 = vmatprep.subr.mxu0 0.0
      %973 = vmatpush1.msra.mxu0 0.0
      %974 = vmatprep.subr.mxu0 0.0
      %975 = vmatpush1.msra.mxu0 0.0
      %976 = vmatprep.subr.mxu0 0.0
      %977 = vmatpush1.msra.mxu0 0.0
      %978 = vmatprep.subr.mxu0 0.0
      %979 = vmatpush1.msra.mxu0 0.0
      %980 = vmatprep.subr.mxu0 0.0
      %981 = vmatpush1.msra.mxu0 0.0
      %982 = vmatprep.subr.mxu0 0.0
      %983 = vmatpush1.msra.mxu0 0.0
      %984 = vmatprep.subr.mxu0 0.0
      %985 = vmatpush1.msra.mxu0 0.0
      %986 = vmatprep.subr.mxu0 0.0
      %987 = vmatpush1.msra.mxu0 0.0
      %988 = vmatprep.subr.mxu0 0.0
      %989 = vmatpush1.msra.mxu0 0.0
      %990 = vmatprep.subr.mxu0 0.0
      %991 = vmatpush1.msra.mxu0 0.0
      %992 = vmatprep.subr.mxu0 0.0
      %993 = vmatpush1.msra.mxu0 0.0
      %994 = vmatprep.subr.mxu0 0.0
      %995 = vmatpush1.msra.mxu0 0.0
      %996 = vmatprep.subr.mxu0 0.0
      %997 = vmatpush1.msra.mxu0 0.0
      %998 = vmatprep.subr.mxu0 0.0
      %999 = vmatpush1.msra.mxu0 0.0
      %1000 = vmatprep.subr.mxu0 0.0
      %1001 = vmatpush1.msra.mxu0 0.0
      %1002 = vmatprep.subr.mxu0 0.0
      %1003 = vmatpush1.msra.mxu0 0.0
      %1004 = vmatprep.subr.mxu0 0.0
      %1005 = vmatpush1.msra.mxu0 0.0
      %1006 = vmatprep.subr.mxu0 0.0
      %1007 = vmatpush1.msra.mxu0 0.0
      %1008 = vmatprep.subr.mxu0 0.0
      %1009 = vmatpush1.msra.mxu0 0.0
      %1010 = vmatprep.mubr.f32.mxu0 0.0
      %1011 = vmatmul.mubr.f32.gmra.mrb[0].mxu0 %v938
      %v1012 = vpop.f32.mrb[0].mxu0
      %v1013 = vadd.f32 0.0, %v1012
      %v1014 = vpop.f32.mrb[0].mxu0
      %1015 = vmatprep.mubr.f32.mxu0 0.0
      %1016 = vmatmul.mubr.f32.gmra.mrb[0].mxu0 %v941
      %v1017 = vpop.f32.mrb[0].mxu0
      %v1018 = vadd.f32 0.0, %v1017
      %v1019 = vpop.f32.mrb[0].mxu0
      %1020 = vmatprep.mubr.f32.mxu0 0.0
      %1021 = vmatmul.mubr.f32.gmra.mrb[0].mxu0 %v944
      %v1022 = vpop.f32.mrb[0].mxu0
      %v1023 = vadd.f32 0.0, %v1022
      %v1024 = vpop.f32.mrb[0].mxu0
      %1025 = vdwg.mxu0
      %v1026 = vadd.f32 %v595, %v1013
      %v1027 = vadd.f32 %v596, %v1018
      %v1028 = vadd.f32 %v597, %v1023
      %1029 = vmatprep.subr.mxu0 0.0
      %1030 = vmatpush1.msra.mxu0 %v197
      %1031 = vmatprep.subr.mxu0 0.0
      %1032 = vmatpush1.msra.mxu0 %v198
      %1033 = vmatprep.subr.mxu0 0.0
      %1034 = vmatpush1.msra.mxu0 %v199
      %1035 = vmatprep.subr.mxu0 0.0
      %1036 = vmatpush1.msra.mxu0 %v200
      %1037 = vmatprep.subr.mxu0 0.0
      %1038 = vmatpush1.msra.mxu0 0.0
      %1039 = vmatprep.subr.mxu0 0.0
      %1040 = vmatpush1.msra.mxu0 0.0
      %1041 = vmatprep.subr.mxu0 0.0
      %1042 = vmatpush1.msra.mxu0 0.0
      %1043 = vmatprep.subr.mxu0 0.0
      %1044 = vmatpush1.msra.mxu0 0.0
      %1045 = vmatprep.subr.mxu0 0.0
      %1046 = vmatpush1.msra.mxu0 0.0
      %1047 = vmatprep.subr.mxu0 0.0
      %1048 = vmatpush1.msra.mxu0 0.0
      %1049 = vmatprep.subr.mxu0 0.0
      %1050 = vmatpush1.msra.mxu0 0.0
      %1051 = vmatprep.subr.mxu0 0.0
      %1052 = vmatpush1.msra.mxu0 0.0
      %1053 = vmatprep.subr.mxu0 0.0
      %1054 = vmatpush1.msra.mxu0 0.0
      %1055 = vmatprep.subr.mxu0 0.0
      %1056 = vmatpush1.msra.mxu0 0.0
      %1057 = vmatprep.subr.mxu0 0.0
      %1058 = vmatpush1.msra.mxu0 0.0
      %1059 = vmatprep.subr.mxu0 0.0
      %1060 = vmatpush1.msra.mxu0 0.0
      %1061 = vmatprep.subr.mxu0 0.0
      %1062 = vmatpush1.msra.mxu0 0.0
      %1063 = vmatprep.subr.mxu0 0.0
      %1064 = vmatpush1.msra.mxu0 0.0
      %1065 = vmatprep.subr.mxu0 0.0
      %1066 = vmatpush1.msra.mxu0 0.0
      %1067 = vmatprep.subr.mxu0 0.0
      %1068 = vmatpush1.msra.mxu0 0.0
      %1069 = vmatprep.subr.mxu0 0.0
      %1070 = vmatpush1.msra.mxu0 0.0
      %1071 = vmatprep.subr.mxu0 0.0
      %1072 = vmatpush1.msra.mxu0 0.0
      %1073 = vmatprep.subr.mxu0 0.0
      %1074 = vmatpush1.msra.mxu0 0.0
      %1075 = vmatprep.subr.mxu0 0.0
      %1076 = vmatpush1.msra.mxu0 0.0
      %1077 = vmatprep.subr.mxu0 0.0
      %1078 = vmatpush1.msra.mxu0 0.0
      %1079 = vmatprep.subr.mxu0 0.0
      %1080 = vmatpush1.msra.mxu0 0.0
      %1081 = vmatprep.subr.mxu0 0.0
      %1082 = vmatpush1.msra.mxu0 0.0
      %1083 = vmatprep.subr.mxu0 0.0
      %1084 = vmatpush1.msra.mxu0 0.0
      %1085 = vmatprep.subr.mxu0 0.0
      %1086 = vmatpush1.msra.mxu0 0.0
      %1087 = vmatprep.subr.mxu0 0.0
      %1088 = vmatpush1.msra.mxu0 0.0
      %1089 = vmatprep.subr.mxu0 0.0
      %1090 = vmatpush1.msra.mxu0 0.0
      %1091 = vmatprep.subr.mxu0 0.0
      %1092 = vmatpush1.msra.mxu0 0.0
      %1093 = vmatprep.mubr.f32.mxu0 0.0
      %1094 = vmatmul.mubr.f32.gmra.mrb[0].mxu0 %v938
      %v1095 = vpop.f32.mrb[0].mxu0
      %v1096 = vadd.f32 0.0, %v1095
      %v1097 = vpop.f32.mrb[0].mxu0
      %1098 = vmatprep.mubr.f32.mxu0 0.0
      %1099 = vmatmul.mubr.f32.gmra.mrb[0].mxu0 %v941
      %v1100 = vpop.f32.mrb[0].mxu0
      %v1101 = vadd.f32 0.0, %v1100
      %v1102 = vpop.f32.mrb[0].mxu0
      %1103 = vmatprep.mubr.f32.mxu0 0.0
      %1104 = vmatmul.mubr.f32.gmra.mrb[0].mxu0 %v944
      %v1105 = vpop.f32.mrb[0].mxu0
      %v1106 = vadd.f32 0.0, %v1105
      %v1107 = vpop.f32.mrb[0].mxu0
      %1108 = vdwg.mxu0
      %v1109 = vadd.f32 %v750, %v1096
      %v1110 = vadd.f32 %v755, %v1101
      %v1111 = vadd.f32 %v760, %v1106
      %v1112 = vld [vmem:[%s933 + $0x1] sm:$0xff]
      %v1113 = vld [vmem:[%s933 + $0x9] sm:$0xff]
      %v1114 = vld [vmem:[%s933 + $0x11] sm:$0xf]
      %v1116 = vsel %vm209, %v1112, 0
      %v1119 = vsel %vm209, %v1113, 0
      %v1122 = vsel %vm209, %v1114, 0
      %1124 = vmatprep.subr.mxu0 0.0
      %1125 = vmatpush1.msra.mxu0 %v205
      %1126 = vmatprep.subr.mxu0 0.0
      %1127 = vmatpush1.msra.mxu0 %v206
      %1128 = vmatprep.subr.mxu0 0.0
      %1129 = vmatpush1.msra.mxu0 %v207
      %1130 = vmatprep.subr.mxu0 0.0
      %1131 = vmatpush1.msra.mxu0 %v208
      %1132 = vmatprep.subr.mxu0 0.0
      %1133 = vmatpush1.msra.mxu0 0.0
      %1134 = vmatprep.subr.mxu0 0.0
      %1135 = vmatpush1.msra.mxu0 0.0
      %1136 = vmatprep.subr.mxu0 0.0
      %1137 = vmatpush1.msra.mxu0 0.0
      %1138 = vmatprep.subr.mxu0 0.0
      %1139 = vmatpush1.msra.mxu0 0.0
      %1140 = vmatprep.subr.mxu0 0.0
      %1141 = vmatpush1.msra.mxu0 0.0
      %1142 = vmatprep.subr.mxu0 0.0
      %1143 = vmatpush1.msra.mxu0 0.0
      %1144 = vmatprep.subr.mxu0 0.0
      %1145 = vmatpush1.msra.mxu0 0.0
      %1146 = vmatprep.subr.mxu0 0.0
      %1147 = vmatpush1.msra.mxu0 0.0
      %1148 = vmatprep.subr.mxu0 0.0
      %1149 = vmatpush1.msra.mxu0 0.0
      %1150 = vmatprep.subr.mxu0 0.0
      %1151 = vmatpush1.msra.mxu0 0.0
      %1152 = vmatprep.subr.mxu0 0.0
      %1153 = vmatpush1.msra.mxu0 0.0
      %1154 = vmatprep.subr.mxu0 0.0
      %1155 = vmatpush1.msra.mxu0 0.0
      %1156 = vmatprep.subr.mxu0 0.0
      %1157 = vmatpush1.msra.mxu0 0.0
      %1158 = vmatprep.subr.mxu0 0.0
      %1159 = vmatpush1.msra.mxu0 0.0
      %1160 = vmatprep.subr.mxu0 0.0
      %1161 = vmatpush1.msra.mxu0 0.0
      %1162 = vmatprep.subr.mxu0 0.0
      %1163 = vmatpush1.msra.mxu0 0.0
      %1164 = vmatprep.subr.mxu0 0.0
      %1165 = vmatpush1.msra.mxu0 0.0
      %1166 = vmatprep.subr.mxu0 0.0
      %1167 = vmatpush1.msra.mxu0 0.0
      %1168 = vmatprep.subr.mxu0 0.0
      %1169 = vmatpush1.msra.mxu0 0.0
      %1170 = vmatprep.subr.mxu0 0.0
      %1171 = vmatpush1.msra.mxu0 0.0
      %1172 = vmatprep.subr.mxu0 0.0
      %1173 = vmatpush1.msra.mxu0 0.0
      %1174 = vmatprep.subr.mxu0 0.0
      %1175 = vmatpush1.msra.mxu0 0.0
      %1176 = vmatprep.subr.mxu0 0.0
      %1177 = vmatpush1.msra.mxu0 0.0
      %1178 = vmatprep.subr.mxu0 0.0
      %1179 = vmatpush1.msra.mxu0 0.0
      %1180 = vmatprep.subr.mxu0 0.0
      %1181 = vmatpush1.msra.mxu0 0.0
      %1182 = vmatprep.subr.mxu0 0.0
      %1183 = vmatpush1.msra.mxu0 0.0
      %1184 = vmatprep.subr.mxu0 0.0
      %1185 = vmatpush1.msra.mxu0 0.0
      %1186 = vmatprep.subr.mxu0 0.0
      %1187 = vmatpush1.msra.mxu0 0.0
      %1188 = vmatprep.mubr.f32.mxu0 0.0
      %1189 = vmatmul.mubr.f32.gmra.mrb[0].mxu0 %v1116
      %v1190 = vpop.f32.mrb[0].mxu0
      %v1191 = vadd.f32 0.0, %v1190
      %v1192 = vpop.f32.mrb[0].mxu0
      %1193 = vmatprep.mubr.f32.mxu0 0.0
      %1194 = vmatmul.mubr.f32.gmra.mrb[0].mxu0 %v1119
      %v1195 = vpop.f32.mrb[0].mxu0
      %v1196 = vadd.f32 0.0, %v1195
      %v1197 = vpop.f32.mrb[0].mxu0
      %1198 = vmatprep.mubr.f32.mxu0 0.0
      %1199 = vmatmul.mubr.f32.gmra.mrb[0].mxu0 %v1122
      %v1200 = vpop.f32.mrb[0].mxu0
      %v1201 = vadd.f32 0.0, %v1200
      %v1202 = vpop.f32.mrb[0].mxu0
      %1203 = vdwg.mxu0
      %v1204 = vadd.f32 %v1109, %v1191
      %v1205 = vadd.f32 %v1110, %v1196
      %v1206 = vadd.f32 %v1111, %v1201
      %v1207 = vld [vmem:[%s933 + $0x5] sm:$0xff]
      %v1208 = vld [vmem:[%s933 + $0xd] sm:$0xff]
      %v1209 = vld [vmem:[%s933 + $0x15] sm:$0xf]
      %v1211 = vsel %vm209, %v1207, 0
      %v1214 = vsel %vm209, %v1208, 0
      %v1217 = vsel %vm209, %v1209, 0
      %1219 = vmatprep.subr.mxu0 0.0
      %1220 = vmatpush1.msra.mxu0 %v599
      %1221 = vmatprep.subr.mxu0 0.0
      %1222 = vmatpush1.msra.mxu0 %v600
      %1223 = vmatprep.subr.mxu0 0.0
      %1224 = vmatpush1.msra.mxu0 %v601
      %1225 = vmatprep.subr.mxu0 0.0
      %1226 = vmatpush1.msra.mxu0 %v602
      %1227 = vmatprep.subr.mxu0 0.0
      %1228 = vmatpush1.msra.mxu0 0.0
      %1229 = vmatprep.subr.mxu0 0.0
      %1230 = vmatpush1.msra.mxu0 0.0
      %1231 = vmatprep.subr.mxu0 0.0
      %1232 = vmatpush1.msra.mxu0 0.0
      %1233 = vmatprep.subr.mxu0 0.0
      %1234 = vmatpush1.msra.mxu0 0.0
      %1235 = vmatprep.subr.mxu0 0.0
      %1236 = vmatpush1.msra.mxu0 0.0
      %1237 = vmatprep.subr.mxu0 0.0
      %1238 = vmatpush1.msra.mxu0 0.0
      %1239 = vmatprep.subr.mxu0 0.0
      %1240 = vmatpush1.msra.mxu0 0.0
      %1241 = vmatprep.subr.mxu0 0.0
      %1242 = vmatpush1.msra.mxu0 0.0
      %1243 = vmatprep.subr.mxu0 0.0
      %1244 = vmatpush1.msra.mxu0 0.0
      %1245 = vmatprep.subr.mxu0 0.0
      %1246 = vmatpush1.msra.mxu0 0.0
      %1247 = vmatprep.subr.mxu0 0.0
      %1248 = vmatpush1.msra.mxu0 0.0
      %1249 = vmatprep.subr.mxu0 0.0
      %1250 = vmatpush1.msra.mxu0 0.0
      %1251 = vmatprep.subr.mxu0 0.0
      %1252 = vmatpush1.msra.mxu0 0.0
      %1253 = vmatprep.subr.mxu0 0.0
      %1254 = vmatpush1.msra.mxu0 0.0
      %1255 = vmatprep.subr.mxu0 0.0
      %1256 = vmatpush1.msra.mxu0 0.0
      %1257 = vmatprep.subr.mxu0 0.0
      %1258 = vmatpush1.msra.mxu0 0.0
      %1259 = vmatprep.subr.mxu0 0.0
      %1260 = vmatpush1.msra.mxu0 0.0
      %1261 = vmatprep.subr.mxu0 0.0
      %1262 = vmatpush1.msra.mxu0 0.0
      %1263 = vmatprep.subr.mxu0 0.0
      %1264 = vmatpush1.msra.mxu0 0.0
      %1265 = vmatprep.subr.mxu0 0.0
      %1266 = vmatpush1.msra.mxu0 0.0
      %1267 = vmatprep.subr.mxu0 0.0
      %1268 = vmatpush1.msra.mxu0 0.0
      %1269 = vmatprep.subr.mxu0 0.0
      %1270 = vmatpush1.msra.mxu0 0.0
      %1271 = vmatprep.subr.mxu0 0.0
      %1272 = vmatpush1.msra.mxu0 0.0
      %1273 = vmatprep.subr.mxu0 0.0
      %1274 = vmatpush1.msra.mxu0 0.0
      %1275 = vmatprep.subr.mxu0 0.0
      %1276 = vmatpush1.msra.mxu0 0.0
      %1277 = vmatprep.subr.mxu0 0.0
      %1278 = vmatpush1.msra.mxu0 0.0
      %1279 = vmatprep.subr.mxu0 0.0
      %1280 = vmatpush1.msra.mxu0 0.0
      %1281 = vmatprep.subr.mxu0 0.0
      %1282 = vmatpush1.msra.mxu0 0.0
      %1283 = vmatprep.mubr.f32.mxu0 0.0
      %1284 = vmatmul.mubr.f32.gmra.mrb[0].mxu0 %v1211
      %v1285 = vpop.f32.mrb[0].mxu0
      %v1286 = vadd.f32 0.0, %v1285
      %v1287 = vpop.f32.mrb[0].mxu0
      %1288 = vmatprep.mubr.f32.mxu0 0.0
      %1289 = vmatmul.mubr.f32.gmra.mrb[0].mxu0 %v1214
      %v1290 = vpop.f32.mrb[0].mxu0
      %v1291 = vadd.f32 0.0, %v1290
      %v1292 = vpop.f32.mrb[0].mxu0
      %1293 = vmatprep.mubr.f32.mxu0 0.0
      %1294 = vmatmul.mubr.f32.gmra.mrb[0].mxu0 %v1217
      %v1295 = vpop.f32.mrb[0].mxu0
      %v1296 = vadd.f32 0.0, %v1295
      %v1297 = vpop.f32.mrb[0].mxu0
      %1298 = vdwg.mxu0
      %v1299 = vadd.f32 %v1026, %v1286
      %v1300 = vadd.f32 %v1027, %v1291
      %v1301 = vadd.f32 %v1028, %v1296
      %1302 = vmatprep.subr.mxu0 0.0
      %1303 = vmatpush1.msra.mxu0 %v397
      %1304 = vmatprep.subr.mxu0 0.0
      %1305 = vmatpush1.msra.mxu0 %v398
      %1306 = vmatprep.subr.mxu0 0.0
      %1307 = vmatpush1.msra.mxu0 %v399
      %1308 = vmatprep.subr.mxu0 0.0
      %1309 = vmatpush1.msra.mxu0 %v400
      %1310 = vmatprep.subr.mxu0 0.0
      %1311 = vmatpush1.msra.mxu0 0.0
      %1312 = vmatprep.subr.mxu0 0.0
      %1313 = vmatpush1.msra.mxu0 0.0
      %1314 = vmatprep.subr.mxu0 0.0
      %1315 = vmatpush1.msra.mxu0 0.0
      %1316 = vmatprep.subr.mxu0 0.0
      %1317 = vmatpush1.msra.mxu0 0.0
      %1318 = vmatprep.subr.mxu0 0.0
      %1319 = vmatpush1.msra.mxu0 0.0
      %1320 = vmatprep.subr.mxu0 0.0
      %1321 = vmatpush1.msra.mxu0 0.0
      %1322 = vmatprep.subr.mxu0 0.0
      %1323 = vmatpush1.msra.mxu0 0.0
      %1324 = vmatprep.subr.mxu0 0.0
      %1325 = vmatpush1.msra.mxu0 0.0
      %1326 = vmatprep.subr.mxu0 0.0
      %1327 = vmatpush1.msra.mxu0 0.0
      %1328 = vmatprep.subr.mxu0 0.0
      %1329 = vmatpush1.msra.mxu0 0.0
      %1330 = vmatprep.subr.mxu0 0.0
      %1331 = vmatpush1.msra.mxu0 0.0
      %1332 = vmatprep.subr.mxu0 0.0
      %1333 = vmatpush1.msra.mxu0 0.0
      %1334 = vmatprep.subr.mxu0 0.0
      %1335 = vmatpush1.msra.mxu0 0.0
      %1336 = vmatprep.subr.mxu0 0.0
      %1337 = vmatpush1.msra.mxu0 0.0
      %1338 = vmatprep.subr.mxu0 0.0
      %1339 = vmatpush1.msra.mxu0 0.0
      %1340 = vmatprep.subr.mxu0 0.0
      %1341 = vmatpush1.msra.mxu0 0.0
      %1342 = vmatprep.subr.mxu0 0.0
      %1343 = vmatpush1.msra.mxu0 0.0
      %1344 = vmatprep.subr.mxu0 0.0
      %1345 = vmatpush1.msra.mxu0 0.0
      %1346 = vmatprep.subr.mxu0 0.0
      %1347 = vmatpush1.msra.mxu0 0.0
      %1348 = vmatprep.subr.mxu0 0.0
      %1349 = vmatpush1.msra.mxu0 0.0
      %1350 = vmatprep.subr.mxu0 0.0
      %1351 = vmatpush1.msra.mxu0 0.0
      %1352 = vmatprep.subr.mxu0 0.0
      %1353 = vmatpush1.msra.mxu0 0.0
      %1354 = vmatprep.subr.mxu0 0.0
      %1355 = vmatpush1.msra.mxu0 0.0
      %1356 = vmatprep.subr.mxu0 0.0
      %1357 = vmatpush1.msra.mxu0 0.0
      %1358 = vmatprep.subr.mxu0 0.0
      %1359 = vmatpush1.msra.mxu0 0.0
      %1360 = vmatprep.subr.mxu0 0.0
      %1361 = vmatpush1.msra.mxu0 0.0
      %1362 = vmatprep.subr.mxu0 0.0
      %1363 = vmatpush1.msra.mxu0 0.0
      %1364 = vmatprep.subr.mxu0 0.0
      %1365 = vmatpush1.msra.mxu0 0.0
      %1366 = vmatprep.mubr.f32.mxu0 0.0
      %1367 = vmatmul.mubr.f32.gmra.mrb[0].mxu0 %v1211
      %v1368 = vpop.f32.mrb[0].mxu0
      %v1369 = vadd.f32 0.0, %v1368
      %v1370 = vpop.f32.mrb[0].mxu0
      %1371 = vmatprep.mubr.f32.mxu0 0.0
      %1372 = vmatmul.mubr.f32.gmra.mrb[0].mxu0 %v1214
      %v1373 = vpop.f32.mrb[0].mxu0
      %v1374 = vadd.f32 0.0, %v1373
      %v1375 = vpop.f32.mrb[0].mxu0
      %1376 = vmatprep.mubr.f32.mxu0 0.0
      %1377 = vmatmul.mubr.f32.gmra.mrb[0].mxu0 %v1217
      %v1378 = vpop.f32.mrb[0].mxu0
      %v1379 = vadd.f32 0.0, %v1378
      %v1380 = vpop.f32.mrb[0].mxu0
      %1381 = vdwg.mxu0
      %v1382 = vadd.f32 %v1204, %v1369
      %v1383 = vadd.f32 %v1205, %v1374
      %v1384 = vadd.f32 %v1206, %v1379
      %1385 = vmatprep.subr.mxu0 0.0
      %1386 = vmatpush1.msra.mxu0 %v929
      %1387 = vmatprep.subr.mxu0 0.0
      %1388 = vmatpush1.msra.mxu0 %v930
      %1389 = vmatprep.subr.mxu0 0.0
      %1390 = vmatpush1.msra.mxu0 %v931
      %1391 = vmatprep.subr.mxu0 0.0
      %1392 = vmatpush1.msra.mxu0 %v932
      %1393 = vmatprep.subr.mxu0 0.0
      %1394 = vmatpush1.msra.mxu0 0.0
      %1395 = vmatprep.subr.mxu0 0.0
      %1396 = vmatpush1.msra.mxu0 0.0
      %1397 = vmatprep.subr.mxu0 0.0
      %1398 = vmatpush1.msra.mxu0 0.0
      %1399 = vmatprep.subr.mxu0 0.0
      %1400 = vmatpush1.msra.mxu0 0.0
      %1401 = vmatprep.subr.mxu0 0.0
      %1402 = vmatpush1.msra.mxu0 0.0
      %1403 = vmatprep.subr.mxu0 0.0
      %1404 = vmatpush1.msra.mxu0 0.0
      %1405 = vmatprep.subr.mxu0 0.0
      %1406 = vmatpush1.msra.mxu0 0.0
      %1407 = vmatprep.subr.mxu0 0.0
      %1408 = vmatpush1.msra.mxu0 0.0
      %1409 = vmatprep.subr.mxu0 0.0
      %1410 = vmatpush1.msra.mxu0 0.0
      %1411 = vmatprep.subr.mxu0 0.0
      %1412 = vmatpush1.msra.mxu0 0.0
      %1413 = vmatprep.subr.mxu0 0.0
      %1414 = vmatpush1.msra.mxu0 0.0
      %1415 = vmatprep.subr.mxu0 0.0
      %1416 = vmatpush1.msra.mxu0 0.0
      %1417 = vmatprep.subr.mxu0 0.0
      %1418 = vmatpush1.msra.mxu0 0.0
      %1419 = vmatprep.subr.mxu0 0.0
      %1420 = vmatpush1.msra.mxu0 0.0
      %1421 = vmatprep.subr.mxu0 0.0
      %1422 = vmatpush1.msra.mxu0 0.0
      %1423 = vmatprep.subr.mxu0 0.0
      %1424 = vmatpush1.msra.mxu0 0.0
      %1425 = vmatprep.subr.mxu0 0.0
      %1426 = vmatpush1.msra.mxu0 0.0
      %1427 = vmatprep.subr.mxu0 0.0
      %1428 = vmatpush1.msra.mxu0 0.0
      %1429 = vmatprep.subr.mxu0 0.0
      %1430 = vmatpush1.msra.mxu0 0.0
      %1431 = vmatprep.subr.mxu0 0.0
      %1432 = vmatpush1.msra.mxu0 0.0
      %1433 = vmatprep.subr.mxu0 0.0
      %1434 = vmatpush1.msra.mxu0 0.0
      %1435 = vmatprep.subr.mxu0 0.0
      %1436 = vmatpush1.msra.mxu0 0.0
      %1437 = vmatprep.subr.mxu0 0.0
      %1438 = vmatpush1.msra.mxu0 0.0
      %1439 = vmatprep.subr.mxu0 0.0
      %1440 = vmatpush1.msra.mxu0 0.0
      %1441 = vmatprep.subr.mxu0 0.0
      %1442 = vmatpush1.msra.mxu0 0.0
      %1443 = vmatprep.subr.mxu0 0.0
      %1444 = vmatpush1.msra.mxu0 0.0
      %1445 = vmatprep.subr.mxu0 0.0
      %1446 = vmatpush1.msra.mxu0 0.0
      %1447 = vmatprep.subr.mxu0 0.0
      %1448 = vmatpush1.msra.mxu0 0.0
      %1449 = vmatprep.mubr.f32.mxu0 0.0
      %1450 = vmatmul.mubr.f32.gmra.mrb[0].mxu0 %v1211
      %v1451 = vpop.f32.mrb[0].mxu0
      %v1452 = vadd.f32 0.0, %v1451
      %v1453 = vpop.f32.mrb[0].mxu0
      %1454 = vmatprep.mubr.f32.mxu0 0.0
      %1455 = vmatmul.mubr.f32.gmra.mrb[0].mxu0 %v1214
      %v1456 = vpop.f32.mrb[0].mxu0
      %v1457 = vadd.f32 0.0, %v1456
      %v1458 = vpop.f32.mrb[0].mxu0
      %1459 = vmatprep.mubr.f32.mxu0 0.0
      %1460 = vmatmul.mubr.f32.gmra.mrb[0].mxu0 %v1217
      %v1461 = vpop.f32.mrb[0].mxu0
      %v1462 = vadd.f32 0.0, %v1461
      %v1463 = vpop.f32.mrb[0].mxu0
      %1464 = vdwg.mxu0
      %v1465 = vadd.f32 %v915, %v1452
      %v1466 = vadd.f32 %v920, %v1457
      %v1467 = vadd.f32 %v925, %v1462
      %1468 = vmatprep.subr.mxu0 0.0
      %1469 = vmatpush1.msra.mxu0 %v494
      %1470 = vmatprep.subr.mxu0 0.0
      %1471 = vmatpush1.msra.mxu0 %v495
      %1472 = vmatprep.subr.mxu0 0.0
      %1473 = vmatpush1.msra.mxu0 %v496
      %1474 = vmatprep.subr.mxu0 0.0
      %1475 = vmatpush1.msra.mxu0 %v497
      %1476 = vmatprep.subr.mxu0 0.0
      %1477 = vmatpush1.msra.mxu0 0.0
      %1478 = vmatprep.subr.mxu0 0.0
      %1479 = vmatpush1.msra.mxu0 0.0
      %1480 = vmatprep.subr.mxu0 0.0
      %1481 = vmatpush1.msra.mxu0 0.0
      %1482 = vmatprep.subr.mxu0 0.0
      %1483 = vmatpush1.msra.mxu0 0.0
      %1484 = vmatprep.subr.mxu0 0.0
      %1485 = vmatpush1.msra.mxu0 0.0
      %1486 = vmatprep.subr.mxu0 0.0
      %1487 = vmatpush1.msra.mxu0 0.0
      %1488 = vmatprep.subr.mxu0 0.0
      %1489 = vmatpush1.msra.mxu0 0.0
      %1490 = vmatprep.subr.mxu0 0.0
      %1491 = vmatpush1.msra.mxu0 0.0
      %1492 = vmatprep.subr.mxu0 0.0
      %1493 = vmatpush1.msra.mxu0 0.0
      %1494 = vmatprep.subr.mxu0 0.0
      %1495 = vmatpush1.msra.mxu0 0.0
      %1496 = vmatprep.subr.mxu0 0.0
      %1497 = vmatpush1.msra.mxu0 0.0
      %1498 = vmatprep.subr.mxu0 0.0
      %1499 = vmatpush1.msra.mxu0 0.0
      %1500 = vmatprep.subr.mxu0 0.0
      %1501 = vmatpush1.msra.mxu0 0.0
      %1502 = vmatprep.subr.mxu0 0.0
      %1503 = vmatpush1.msra.mxu0 0.0
      %1504 = vmatprep.subr.mxu0 0.0
      %1505 = vmatpush1.msra.mxu0 0.0
      %1506 = vmatprep.subr.mxu0 0.0
      %1507 = vmatpush1.msra.mxu0 0.0
      %1508 = vmatprep.subr.mxu0 0.0
      %1509 = vmatpush1.msra.mxu0 0.0
      %1510 = vmatprep.subr.mxu0 0.0
      %1511 = vmatpush1.msra.mxu0 0.0
      %1512 = vmatprep.subr.mxu0 0.0
      %1513 = vmatpush1.msra.mxu0 0.0
      %1514 = vmatprep.subr.mxu0 0.0
      %1515 = vmatpush1.msra.mxu0 0.0
      %1516 = vmatprep.subr.mxu0 0.0
      %1517 = vmatpush1.msra.mxu0 0.0
      %1518 = vmatprep.subr.mxu0 0.0
      %1519 = vmatpush1.msra.mxu0 0.0
      %1520 = vmatprep.subr.mxu0 0.0
      %1521 = vmatpush1.msra.mxu0 0.0
      %1522 = vmatprep.subr.mxu0 0.0
      %1523 = vmatpush1.msra.mxu0 0.0
      %1524 = vmatprep.subr.mxu0 0.0
      %1525 = vmatpush1.msra.mxu0 0.0
      %1526 = vmatprep.subr.mxu0 0.0
      %1527 = vmatpush1.msra.mxu0 0.0
      %1528 = vmatprep.subr.mxu0 0.0
      %1529 = vmatpush1.msra.mxu0 0.0
      %1530 = vmatprep.subr.mxu0 0.0
      %1531 = vmatpush1.msra.mxu0 0.0
      %1532 = vmatprep.mubr.f32.mxu0 0.0
      %1533 = vmatmul.mubr.f32.gmra.mrb[0].mxu0 %v1211
      %v1534 = vpop.f32.mrb[0].mxu0
      %v1535 = vadd.f32 0.0, %v1534
      %v1536 = vpop.f32.mrb[0].mxu0
      %1537 = vmatprep.mubr.f32.mxu0 0.0
      %1538 = vmatmul.mubr.f32.gmra.mrb[0].mxu0 %v1214
      %v1539 = vpop.f32.mrb[0].mxu0
      %v1540 = vadd.f32 0.0, %v1539
      %v1541 = vpop.f32.mrb[0].mxu0
      %1542 = vmatprep.mubr.f32.mxu0 0.0
      %1543 = vmatmul.mubr.f32.gmra.mrb[0].mxu0 %v1217
      %v1544 = vpop.f32.mrb[0].mxu0
      %v1545 = vadd.f32 0.0, %v1544
      %v1546 = vpop.f32.mrb[0].mxu0
      %1547 = vdwg.mxu0
      %1548 = vmatprep.subr.mxu0 0.0
      %1549 = vmatpush1.msra.mxu0 %v929
      %1550 = vmatprep.subr.mxu0 0.0
      %1551 = vmatpush1.msra.mxu0 %v930
      %1552 = vmatprep.subr.mxu0 0.0
      %1553 = vmatpush1.msra.mxu0 %v931
      %1554 = vmatprep.subr.mxu0 0.0
      %1555 = vmatpush1.msra.mxu0 %v932
      %1556 = vmatprep.subr.mxu0 0.0
      %1557 = vmatpush1.msra.mxu0 0.0
      %1558 = vmatprep.subr.mxu0 0.0
      %1559 = vmatpush1.msra.mxu0 0.0
      %1560 = vmatprep.subr.mxu0 0.0
      %1561 = vmatpush1.msra.mxu0 0.0
      %1562 = vmatprep.subr.mxu0 0.0
      %1563 = vmatpush1.msra.mxu0 0.0
      %1564 = vmatprep.subr.mxu0 0.0
      %1565 = vmatpush1.msra.mxu0 0.0
      %1566 = vmatprep.subr.mxu0 0.0
      %1567 = vmatpush1.msra.mxu0 0.0
      %1568 = vmatprep.subr.mxu0 0.0
      %1569 = vmatpush1.msra.mxu0 0.0
      %1570 = vmatprep.subr.mxu0 0.0
      %1571 = vmatpush1.msra.mxu0 0.0
      %1572 = vmatprep.subr.mxu0 0.0
      %1573 = vmatpush1.msra.mxu0 0.0
      %1574 = vmatprep.subr.mxu0 0.0
      %1575 = vmatpush1.msra.mxu0 0.0
      %1576 = vmatprep.subr.mxu0 0.0
      %1577 = vmatpush1.msra.mxu0 0.0
      %1578 = vmatprep.subr.mxu0 0.0
      %1579 = vmatpush1.msra.mxu0 0.0
      %1580 = vmatprep.subr.mxu0 0.0
      %1581 = vmatpush1.msra.mxu0 0.0
      %1582 = vmatprep.subr.mxu0 0.0
      %1583 = vmatpush1.msra.mxu0 0.0
      %1584 = vmatprep.subr.mxu0 0.0
      %1585 = vmatpush1.msra.mxu0 0.0
      %1586 = vmatprep.subr.mxu0 0.0
      %1587 = vmatpush1.msra.mxu0 0.0
      %1588 = vmatprep.subr.mxu0 0.0
      %1589 = vmatpush1.msra.mxu0 0.0
      %1590 = vmatprep.subr.mxu0 0.0
      %1591 = vmatpush1.msra.mxu0 0.0
      %1592 = vmatprep.subr.mxu0 0.0
      %1593 = vmatpush1.msra.mxu0 0.0
      %1594 = vmatprep.subr.mxu0 0.0
      %1595 = vmatpush1.msra.mxu0 0.0
      %1596 = vmatprep.subr.mxu0 0.0
      %1597 = vmatpush1.msra.mxu0 0.0
      %1598 = vmatprep.subr.mxu0 0.0
      %1599 = vmatpush1.msra.mxu0 0.0
      %1600 = vmatprep.subr.mxu0 0.0
      %1601 = vmatpush1.msra.mxu0 0.0
      %1602 = vmatprep.subr.mxu0 0.0
      %1603 = vmatpush1.msra.mxu0 0.0
      %1604 = vmatprep.subr.mxu0 0.0
      %1605 = vmatpush1.msra.mxu0 0.0
      %1606 = vmatprep.subr.mxu0 0.0
      %1607 = vmatpush1.msra.mxu0 0.0
      %1608 = vmatprep.subr.mxu0 0.0
      %1609 = vmatpush1.msra.mxu0 0.0
      %1610 = vmatprep.subr.mxu0 0.0
      %1611 = vmatpush1.msra.mxu0 0.0
      %1612 = vmatprep.mubr.f32.mxu0 0.0
      %1613 = vmatmul.mubr.f32.gmra.mrb[0].mxu0 %v507
      %v1614 = vpop.f32.mrb[0].mxu0
      %v1615 = vadd.f32 %v1535, %v1614
      %v1616 = vpop.f32.mrb[0].mxu0
      %1617 = vmatprep.mubr.f32.mxu0 0.0
      %1618 = vmatmul.mubr.f32.gmra.mrb[0].mxu0 %v510
      %v1619 = vpop.f32.mrb[0].mxu0
      %v1620 = vadd.f32 %v1540, %v1619
      %v1621 = vpop.f32.mrb[0].mxu0
      %1622 = vmatprep.mubr.f32.mxu0 0.0
      %1623 = vmatmul.mubr.f32.gmra.mrb[0].mxu0 %v513
      %v1624 = vpop.f32.mrb[0].mxu0
      %v1625 = vadd.f32 %v1545, %v1624
      %v1626 = vpop.f32.mrb[0].mxu0
      %1627 = vdwg.mxu0
      %v1628 = vld [vmem:[%s933 + $0x6] sm:$0xff]
      %v1629 = vld [vmem:[%s933 + $0xe] sm:$0xff]
      %v1630 = vld [vmem:[%s933 + $0x16] sm:$0xf]
      %v1632 = vsel %vm209, %v1628, 0
      %v1635 = vsel %vm209, %v1629, 0
      %v1638 = vsel %vm209, %v1630, 0
      %1640 = vmatprep.subr.mxu0 0.0
      %1641 = vmatpush1.msra.mxu0 %v502
      %1642 = vmatprep.subr.mxu0 0.0
      %1643 = vmatpush1.msra.mxu0 %v503
      %1644 = vmatprep.subr.mxu0 0.0
      %1645 = vmatpush1.msra.mxu0 %v504
      %1646 = vmatprep.subr.mxu0 0.0
      %1647 = vmatpush1.msra.mxu0 %v505
      %1648 = vmatprep.subr.mxu0 0.0
      %1649 = vmatpush1.msra.mxu0 0.0
      %1650 = vmatprep.subr.mxu0 0.0
      %1651 = vmatpush1.msra.mxu0 0.0
      %1652 = vmatprep.subr.mxu0 0.0
      %1653 = vmatpush1.msra.mxu0 0.0
      %1654 = vmatprep.subr.mxu0 0.0
      %1655 = vmatpush1.msra.mxu0 0.0
      %1656 = vmatprep.subr.mxu0 0.0
      %1657 = vmatpush1.msra.mxu0 0.0
      %1658 = vmatprep.subr.mxu0 0.0
      %1659 = vmatpush1.msra.mxu0 0.0
      %1660 = vmatprep.subr.mxu0 0.0
      %1661 = vmatpush1.msra.mxu0 0.0
      %1662 = vmatprep.subr.mxu0 0.0
      %1663 = vmatpush1.msra.mxu0 0.0
      %1664 = vmatprep.subr.mxu0 0.0
      %1665 = vmatpush1.msra.mxu0 0.0
      %1666 = vmatprep.subr.mxu0 0.0
      %1667 = vmatpush1.msra.mxu0 0.0
      %1668 = vmatprep.subr.mxu0 0.0
      %1669 = vmatpush1.msra.mxu0 0.0
      %1670 = vmatprep.subr.mxu0 0.0
      %1671 = vmatpush1.msra.mxu0 0.0
      %1672 = vmatprep.subr.mxu0 0.0
      %1673 = vmatpush1.msra.mxu0 0.0
      %1674 = vmatprep.subr.mxu0 0.0
      %1675 = vmatpush1.msra.mxu0 0.0
      %1676 = vmatprep.subr.mxu0 0.0
      %1677 = vmatpush1.msra.mxu0 0.0
      %1678 = vmatprep.subr.mxu0 0.0
      %1679 = vmatpush1.msra.mxu0 0.0
      %1680 = vmatprep.subr.mxu0 0.0
      %1681 = vmatpush1.msra.mxu0 0.0
      %1682 = vmatprep.subr.mxu0 0.0
      %1683 = vmatpush1.msra.mxu0 0.0
      %1684 = vmatprep.subr.mxu0 0.0
      %1685 = vmatpush1.msra.mxu0 0.0
      %1686 = vmatprep.subr.mxu0 0.0
      %1687 = vmatpush1.msra.mxu0 0.0
      %1688 = vmatprep.subr.mxu0 0.0
      %1689 = vmatpush1.msra.mxu0 0.0
      %1690 = vmatprep.subr.mxu0 0.0
      %1691 = vmatpush1.msra.mxu0 0.0
      %1692 = vmatprep.subr.mxu0 0.0
      %1693 = vmatpush1.msra.mxu0 0.0
      %1694 = vmatprep.subr.mxu0 0.0
      %1695 = vmatpush1.msra.mxu0 0.0
      %1696 = vmatprep.subr.mxu0 0.0
      %1697 = vmatpush1.msra.mxu0 0.0
      %1698 = vmatprep.subr.mxu0 0.0
      %1699 = vmatpush1.msra.mxu0 0.0
      %1700 = vmatprep.subr.mxu0 0.0
      %1701 = vmatpush1.msra.mxu0 0.0
      %1702 = vmatprep.subr.mxu0 0.0
      %1703 = vmatpush1.msra.mxu0 0.0
      %1704 = vmatprep.mubr.f32.mxu0 0.0
      %1705 = vmatmul.mubr.f32.gmra.mrb[0].mxu0 %v1632
      %v1706 = vpop.f32.mrb[0].mxu0
      %v1707 = vadd.f32 0.0, %v1706
      %v1708 = vpop.f32.mrb[0].mxu0
      %1709 = vmatprep.mubr.f32.mxu0 0.0
      %1710 = vmatmul.mubr.f32.gmra.mrb[0].mxu0 %v1635
      %v1711 = vpop.f32.mrb[0].mxu0
      %v1712 = vadd.f32 0.0, %v1711
      %v1713 = vpop.f32.mrb[0].mxu0
      %1714 = vmatprep.mubr.f32.mxu0 0.0
      %1715 = vmatmul.mubr.f32.gmra.mrb[0].mxu0 %v1638
      %v1716 = vpop.f32.mrb[0].mxu0
      %v1717 = vadd.f32 0.0, %v1716
      %v1718 = vpop.f32.mrb[0].mxu0
      %1719 = vdwg.mxu0
      %v1720 = vadd.f32 %v1382, %v1707
      %v1721 = vadd.f32 %v1383, %v1712
      %v1722 = vadd.f32 %v1384, %v1717
      %1723 = vmatprep.subr.mxu0 0.0
      %1724 = vmatpush1.msra.mxu0 %v764
      %1725 = vmatprep.subr.mxu0 0.0
      %1726 = vmatpush1.msra.mxu0 %v765
      %1727 = vmatprep.subr.mxu0 0.0
      %1728 = vmatpush1.msra.mxu0 %v766
      %1729 = vmatprep.subr.mxu0 0.0
      %1730 = vmatpush1.msra.mxu0 %v767
      %1731 = vmatprep.subr.mxu0 0.0
      %1732 = vmatpush1.msra.mxu0 0.0
      %1733 = vmatprep.subr.mxu0 0.0
      %1734 = vmatpush1.msra.mxu0 0.0
      %1735 = vmatprep.subr.mxu0 0.0
      %1736 = vmatpush1.msra.mxu0 0.0
      %1737 = vmatprep.subr.mxu0 0.0
      %1738 = vmatpush1.msra.mxu0 0.0
      %1739 = vmatprep.subr.mxu0 0.0
      %1740 = vmatpush1.msra.mxu0 0.0
      %1741 = vmatprep.subr.mxu0 0.0
      %1742 = vmatpush1.msra.mxu0 0.0
      %1743 = vmatprep.subr.mxu0 0.0
      %1744 = vmatpush1.msra.mxu0 0.0
      %1745 = vmatprep.subr.mxu0 0.0
      %1746 = vmatpush1.msra.mxu0 0.0
      %1747 = vmatprep.subr.mxu0 0.0
      %1748 = vmatpush1.msra.mxu0 0.0
      %1749 = vmatprep.subr.mxu0 0.0
      %1750 = vmatpush1.msra.mxu0 0.0
      %1751 = vmatprep.subr.mxu0 0.0
      %1752 = vmatpush1.msra.mxu0 0.0
      %1753 = vmatprep.subr.mxu0 0.0
      %1754 = vmatpush1.msra.mxu0 0.0
      %1755 = vmatprep.subr.mxu0 0.0
      %1756 = vmatpush1.msra.mxu0 0.0
      %1757 = vmatprep.subr.mxu0 0.0
      %1758 = vmatpush1.msra.mxu0 0.0
      %1759 = vmatprep.subr.mxu0 0.0
      %1760 = vmatpush1.msra.mxu0 0.0
      %1761 = vmatprep.subr.mxu0 0.0
      %1762 = vmatpush1.msra.mxu0 0.0
      %1763 = vmatprep.subr.mxu0 0.0
      %1764 = vmatpush1.msra.mxu0 0.0
      %1765 = vmatprep.subr.mxu0 0.0
      %1766 = vmatpush1.msra.mxu0 0.0
      %1767 = vmatprep.subr.mxu0 0.0
      %1768 = vmatpush1.msra.mxu0 0.0
      %1769 = vmatprep.subr.mxu0 0.0
      %1770 = vmatpush1.msra.mxu0 0.0
      %1771 = vmatprep.subr.mxu0 0.0
      %1772 = vmatpush1.msra.mxu0 0.0
      %1773 = vmatprep.subr.mxu0 0.0
      %1774 = vmatpush1.msra.mxu0 0.0
      %1775 = vmatprep.subr.mxu0 0.0
      %1776 = vmatpush1.msra.mxu0 0.0
      %1777 = vmatprep.subr.mxu0 0.0
      %1778 = vmatpush1.msra.mxu0 0.0
      %1779 = vmatprep.subr.mxu0 0.0
      %1780 = vmatpush1.msra.mxu0 0.0
      %1781 = vmatprep.subr.mxu0 0.0
      %1782 = vmatpush1.msra.mxu0 0.0
      %1783 = vmatprep.subr.mxu0 0.0
      %1784 = vmatpush1.msra.mxu0 0.0
      %1785 = vmatprep.subr.mxu0 0.0
      %1786 = vmatpush1.msra.mxu0 0.0
      %1787 = vmatprep.mubr.f32.mxu0 0.0
      %1788 = vmatmul.mubr.f32.gmra.mrb[0].mxu0 %v1632
      %v1789 = vpop.f32.mrb[0].mxu0
      %v1790 = vadd.f32 0.0, %v1789
      %v1791 = vpop.f32.mrb[0].mxu0
      %1792 = vmatprep.mubr.f32.mxu0 0.0
      %1793 = vmatmul.mubr.f32.gmra.mrb[0].mxu0 %v1635
      %v1794 = vpop.f32.mrb[0].mxu0
      %v1795 = vadd.f32 0.0, %v1794
      %v1796 = vpop.f32.mrb[0].mxu0
      %1797 = vmatprep.mubr.f32.mxu0 0.0
      %1798 = vmatmul.mubr.f32.gmra.mrb[0].mxu0 %v1638
      %v1799 = vpop.f32.mrb[0].mxu0
      %v1800 = vadd.f32 0.0, %v1799
      %v1801 = vpop.f32.mrb[0].mxu0
      %1802 = vdwg.mxu0
      %v1803 = vadd.f32 %v1615, %v1790
      %v1804 = vadd.f32 %v1620, %v1795
      %v1805 = vadd.f32 %v1625, %v1800
      %s1806 = scalar_lea.vmem %s183, 64
      %v1807 = vld [vmem:[%s1806] sm:$0xff]
      %v1808 = vld [vmem:[%s1806 + $0x8] sm:$0xff]
      %v1809 = vld [vmem:[%s1806 + $0x10] sm:$0xf]
      %v1811 = vsel %vm209, %v1807, 0
      %v1814 = vsel %vm209, %v1808, 0
      %v1817 = vsel %vm209, %v1809, 0
      %1819 = vmatprep.subr.mxu0 0.0
      %1820 = vmatpush1.msra.mxu0 %v494
      %1821 = vmatprep.subr.mxu0 0.0
      %1822 = vmatpush1.msra.mxu0 %v495
      %1823 = vmatprep.subr.mxu0 0.0
      %1824 = vmatpush1.msra.mxu0 %v496
      %1825 = vmatprep.subr.mxu0 0.0
      %1826 = vmatpush1.msra.mxu0 %v497
      %1827 = vmatprep.subr.mxu0 0.0
      %1828 = vmatpush1.msra.mxu0 0.0
      %1829 = vmatprep.subr.mxu0 0.0
      %1830 = vmatpush1.msra.mxu0 0.0
      %1831 = vmatprep.subr.mxu0 0.0
      %1832 = vmatpush1.msra.mxu0 0.0
      %1833 = vmatprep.subr.mxu0 0.0
      %1834 = vmatpush1.msra.mxu0 0.0
      %1835 = vmatprep.subr.mxu0 0.0
      %1836 = vmatpush1.msra.mxu0 0.0
      %1837 = vmatprep.subr.mxu0 0.0
      %1838 = vmatpush1.msra.mxu0 0.0
      %1839 = vmatprep.subr.mxu0 0.0
      %1840 = vmatpush1.msra.mxu0 0.0
      %1841 = vmatprep.subr.mxu0 0.0
      %1842 = vmatpush1.msra.mxu0 0.0
      %1843 = vmatprep.subr.mxu0 0.0
      %1844 = vmatpush1.msra.mxu0 0.0
      %1845 = vmatprep.subr.mxu0 0.0
      %1846 = vmatpush1.msra.mxu0 0.0
      %1847 = vmatprep.subr.mxu0 0.0
      %1848 = vmatpush1.msra.mxu0 0.0
      %1849 = vmatprep.subr.mxu0 0.0
      %1850 = vmatpush1.msra.mxu0 0.0
      %1851 = vmatprep.subr.mxu0 0.0
      %1852 = vmatpush1.msra.mxu0 0.0
      %1853 = vmatprep.subr.mxu0 0.0
      %1854 = vmatpush1.msra.mxu0 0.0
      %1855 = vmatprep.subr.mxu0 0.0
      %1856 = vmatpush1.msra.mxu0 0.0
      %1857 = vmatprep.subr.mxu0 0.0
      %1858 = vmatpush1.msra.mxu0 0.0
      %1859 = vmatprep.subr.mxu0 0.0
      %1860 = vmatpush1.msra.mxu0 0.0
      %1861 = vmatprep.subr.mxu0 0.0
      %1862 = vmatpush1.msra.mxu0 0.0
      %1863 = vmatprep.subr.mxu0 0.0
      %1864 = vmatpush1.msra.mxu0 0.0
      %1865 = vmatprep.subr.mxu0 0.0
      %1866 = vmatpush1.msra.mxu0 0.0
      %1867 = vmatprep.subr.mxu0 0.0
      %1868 = vmatpush1.msra.mxu0 0.0
      %1869 = vmatprep.subr.mxu0 0.0
      %1870 = vmatpush1.msra.mxu0 0.0
      %1871 = vmatprep.subr.mxu0 0.0
      %1872 = vmatpush1.msra.mxu0 0.0
      %1873 = vmatprep.subr.mxu0 0.0
      %1874 = vmatpush1.msra.mxu0 0.0
      %1875 = vmatprep.subr.mxu0 0.0
      %1876 = vmatpush1.msra.mxu0 0.0
      %1877 = vmatprep.subr.mxu0 0.0
      %1878 = vmatpush1.msra.mxu0 0.0
      %1879 = vmatprep.subr.mxu0 0.0
      %1880 = vmatpush1.msra.mxu0 0.0
      %1881 = vmatprep.subr.mxu0 0.0
      %1882 = vmatpush1.msra.mxu0 0.0
      %1883 = vmatprep.mubr.f32.mxu0 0.0
      %1884 = vmatmul.mubr.f32.gmra.mrb[0].mxu0 %v1811
      %v1885 = vpop.f32.mrb[0].mxu0
      %v1886 = vadd.f32 0.0, %v1885
      %v1887 = vpop.f32.mrb[0].mxu0
      %1888 = vmatprep.mubr.f32.mxu0 0.0
      %1889 = vmatmul.mubr.f32.gmra.mrb[0].mxu0 %v1814
      %v1890 = vpop.f32.mrb[0].mxu0
      %v1891 = vadd.f32 0.0, %v1890
      %v1892 = vpop.f32.mrb[0].mxu0
      %1893 = vmatprep.mubr.f32.mxu0 0.0
      %1894 = vmatmul.mubr.f32.gmra.mrb[0].mxu0 %v1817
      %v1895 = vpop.f32.mrb[0].mxu0
      %v1896 = vadd.f32 0.0, %v1895
      %v1897 = vpop.f32.mrb[0].mxu0
      %1898 = vdwg.mxu0
      %v1899 = vadd.f32 %v1299, %v1886
      %v1900 = vadd.f32 %v1300, %v1891
      %v1901 = vadd.f32 %v1301, %v1896
      %1902 = vmatprep.subr.mxu0 0.0
      %1903 = vmatpush1.msra.mxu0 %v197
      %1904 = vmatprep.subr.mxu0 0.0
      %1905 = vmatpush1.msra.mxu0 %v198
      %1906 = vmatprep.subr.mxu0 0.0
      %1907 = vmatpush1.msra.mxu0 %v199
      %1908 = vmatprep.subr.mxu0 0.0
      %1909 = vmatpush1.msra.mxu0 %v200
      %1910 = vmatprep.subr.mxu0 0.0
      %1911 = vmatpush1.msra.mxu0 0.0
      %1912 = vmatprep.subr.mxu0 0.0
      %1913 = vmatpush1.msra.mxu0 0.0
      %1914 = vmatprep.subr.mxu0 0.0
      %1915 = vmatpush1.msra.mxu0 0.0
      %1916 = vmatprep.subr.mxu0 0.0
      %1917 = vmatpush1.msra.mxu0 0.0
      %1918 = vmatprep.subr.mxu0 0.0
      %1919 = vmatpush1.msra.mxu0 0.0
      %1920 = vmatprep.subr.mxu0 0.0
      %1921 = vmatpush1.msra.mxu0 0.0
      %1922 = vmatprep.subr.mxu0 0.0
      %1923 = vmatpush1.msra.mxu0 0.0
      %1924 = vmatprep.subr.mxu0 0.0
      %1925 = vmatpush1.msra.mxu0 0.0
      %1926 = vmatprep.subr.mxu0 0.0
      %1927 = vmatpush1.msra.mxu0 0.0
      %1928 = vmatprep.subr.mxu0 0.0
      %1929 = vmatpush1.msra.mxu0 0.0
      %1930 = vmatprep.subr.mxu0 0.0
      %1931 = vmatpush1.msra.mxu0 0.0
      %1932 = vmatprep.subr.mxu0 0.0
      %1933 = vmatpush1.msra.mxu0 0.0
      %1934 = vmatprep.subr.mxu0 0.0
      %1935 = vmatpush1.msra.mxu0 0.0
      %1936 = vmatprep.subr.mxu0 0.0
      %1937 = vmatpush1.msra.mxu0 0.0
      %1938 = vmatprep.subr.mxu0 0.0
      %1939 = vmatpush1.msra.mxu0 0.0
      %1940 = vmatprep.subr.mxu0 0.0
      %1941 = vmatpush1.msra.mxu0 0.0
      %1942 = vmatprep.subr.mxu0 0.0
      %1943 = vmatpush1.msra.mxu0 0.0
      %1944 = vmatprep.subr.mxu0 0.0
      %1945 = vmatpush1.msra.mxu0 0.0
      %1946 = vmatprep.subr.mxu0 0.0
      %1947 = vmatpush1.msra.mxu0 0.0
      %1948 = vmatprep.subr.mxu0 0.0
      %1949 = vmatpush1.msra.mxu0 0.0
      %1950 = vmatprep.subr.mxu0 0.0
      %1951 = vmatpush1.msra.mxu0 0.0
      %1952 = vmatprep.subr.mxu0 0.0
      %1953 = vmatpush1.msra.mxu0 0.0
      %1954 = vmatprep.subr.mxu0 0.0
      %1955 = vmatpush1.msra.mxu0 0.0
      %1956 = vmatprep.subr.mxu0 0.0
      %1957 = vmatpush1.msra.mxu0 0.0
      %1958 = vmatprep.subr.mxu0 0.0
      %1959 = vmatpush1.msra.mxu0 0.0
      %1960 = vmatprep.subr.mxu0 0.0
      %1961 = vmatpush1.msra.mxu0 0.0
      %1962 = vmatprep.subr.mxu0 0.0
      %1963 = vmatpush1.msra.mxu0 0.0
      %1964 = vmatprep.subr.mxu0 0.0
      %1965 = vmatpush1.msra.mxu0 0.0
      %1966 = vmatprep.mubr.f32.mxu0 0.0
      %1967 = vmatmul.mubr.f32.gmra.mrb[0].mxu0 %v1811
      %v1968 = vpop.f32.mrb[0].mxu0
      %v1969 = vadd.f32 0.0, %v1968
      %v1970 = vpop.f32.mrb[0].mxu0
      %1971 = vmatprep.mubr.f32.mxu0 0.0
      %1972 = vmatmul.mubr.f32.gmra.mrb[0].mxu0 %v1814
      %v1973 = vpop.f32.mrb[0].mxu0
      %v1974 = vadd.f32 0.0, %v1973
      %v1975 = vpop.f32.mrb[0].mxu0
      %1976 = vmatprep.mubr.f32.mxu0 0.0
      %1977 = vmatmul.mubr.f32.gmra.mrb[0].mxu0 %v1817
      %v1978 = vpop.f32.mrb[0].mxu0
      %v1979 = vadd.f32 0.0, %v1978
      %v1980 = vpop.f32.mrb[0].mxu0
      %1981 = vdwg.mxu0
      %v1982 = vadd.f32 %v1465, %v1969
      %v1983 = vadd.f32 %v1466, %v1974
      %v1984 = vadd.f32 %v1467, %v1979
      %v1985 = vld [vmem:[%s1806 + $0x1] sm:$0xff]
      %v1986 = vld [vmem:[%s1806 + $0x9] sm:$0xff]
      %v1987 = vld [vmem:[%s1806 + $0x11] sm:$0xf]
      %v1989 = vsel %vm209, %v1985, 0
      %v1992 = vsel %vm209, %v1986, 0
      %v1995 = vsel %vm209, %v1987, 0
      %1997 = vmatprep.subr.mxu0 0.0
      %1998 = vmatpush1.msra.mxu0 %v764
      %1999 = vmatprep.subr.mxu0 0.0
      %2000 = vmatpush1.msra.mxu0 %v765
      %2001 = vmatprep.subr.mxu0 0.0
      %2002 = vmatpush1.msra.mxu0 %v766
      %2003 = vmatprep.subr.mxu0 0.0
      %2004 = vmatpush1.msra.mxu0 %v767
      %2005 = vmatprep.subr.mxu0 0.0
      %2006 = vmatpush1.msra.mxu0 0.0
      %2007 = vmatprep.subr.mxu0 0.0
      %2008 = vmatpush1.msra.mxu0 0.0
      %2009 = vmatprep.subr.mxu0 0.0
      %2010 = vmatpush1.msra.mxu0 0.0
      %2011 = vmatprep.subr.mxu0 0.0
      %2012 = vmatpush1.msra.mxu0 0.0
      %2013 = vmatprep.subr.mxu0 0.0
      %2014 = vmatpush1.msra.mxu0 0.0
      %2015 = vmatprep.subr.mxu0 0.0
      %2016 = vmatpush1.msra.mxu0 0.0
      %2017 = vmatprep.subr.mxu0 0.0
      %2018 = vmatpush1.msra.mxu0 0.0
      %2019 = vmatprep.subr.mxu0 0.0
      %2020 = vmatpush1.msra.mxu0 0.0
      %2021 = vmatprep.subr.mxu0 0.0
      %2022 = vmatpush1.msra.mxu0 0.0
      %2023 = vmatprep.subr.mxu0 0.0
      %2024 = vmatpush1.msra.mxu0 0.0
      %2025 = vmatprep.subr.mxu0 0.0
      %2026 = vmatpush1.msra.mxu0 0.0
      %2027 = vmatprep.subr.mxu0 0.0
      %2028 = vmatpush1.msra.mxu0 0.0
      %2029 = vmatprep.subr.mxu0 0.0
      %2030 = vmatpush1.msra.mxu0 0.0
      %2031 = vmatprep.subr.mxu0 0.0
      %2032 = vmatpush1.msra.mxu0 0.0
      %2033 = vmatprep.subr.mxu0 0.0
      %2034 = vmatpush1.msra.mxu0 0.0
      %2035 = vmatprep.subr.mxu0 0.0
      %2036 = vmatpush1.msra.mxu0 0.0
      %2037 = vmatprep.subr.mxu0 0.0
      %2038 = vmatpush1.msra.mxu0 0.0
      %2039 = vmatprep.subr.mxu0 0.0
      %2040 = vmatpush1.msra.mxu0 0.0
      %2041 = vmatprep.subr.mxu0 0.0
      %2042 = vmatpush1.msra.mxu0 0.0
      %2043 = vmatprep.subr.mxu0 0.0
      %2044 = vmatpush1.msra.mxu0 0.0
      %2045 = vmatprep.subr.mxu0 0.0
      %2046 = vmatpush1.msra.mxu0 0.0
      %2047 = vmatprep.subr.mxu0 0.0
      %2048 = vmatpush1.msra.mxu0 0.0
      %2049 = vmatprep.subr.mxu0 0.0
      %2050 = vmatpush1.msra.mxu0 0.0
      %2051 = vmatprep.subr.mxu0 0.0
      %2052 = vmatpush1.msra.mxu0 0.0
      %2053 = vmatprep.subr.mxu0 0.0
      %2054 = vmatpush1.msra.mxu0 0.0
      %2055 = vmatprep.subr.mxu0 0.0
      %2056 = vmatpush1.msra.mxu0 0.0
      %2057 = vmatprep.subr.mxu0 0.0
      %2058 = vmatpush1.msra.mxu0 0.0
      %2059 = vmatprep.subr.mxu0 0.0
      %2060 = vmatpush1.msra.mxu0 0.0
      %2061 = vmatprep.mubr.f32.mxu0 0.0
      %2062 = vmatmul.mubr.f32.gmra.mrb[0].mxu0 %v1989
      %v2063 = vpop.f32.mrb[0].mxu0
      %v2064 = vadd.f32 0.0, %v2063
      %v2065 = vpop.f32.mrb[0].mxu0
      %2066 = vmatprep.mubr.f32.mxu0 0.0
      %2067 = vmatmul.mubr.f32.gmra.mrb[0].mxu0 %v1992
      %v2068 = vpop.f32.mrb[0].mxu0
      %v2069 = vadd.f32 0.0, %v2068
      %v2070 = vpop.f32.mrb[0].mxu0
      %2071 = vmatprep.mubr.f32.mxu0 0.0
      %2072 = vmatmul.mubr.f32.gmra.mrb[0].mxu0 %v1995
      %v2073 = vpop.f32.mrb[0].mxu0
      %v2074 = vadd.f32 0.0, %v2073
      %v2075 = vpop.f32.mrb[0].mxu0
      %2076 = vdwg.mxu0
      %v2077 = vadd.f32 %v1899, %v2064
      %v2078 = vadd.f32 %v1900, %v2069
      %v2079 = vadd.f32 %v1901, %v2074
      %2080 = vmatprep.subr.mxu0 0.0
      %2081 = vmatpush1.msra.mxu0 %v929
      %2082 = vmatprep.subr.mxu0 0.0
      %2083 = vmatpush1.msra.mxu0 %v930
      %2084 = vmatprep.subr.mxu0 0.0
      %2085 = vmatpush1.msra.mxu0 %v931
      %2086 = vmatprep.subr.mxu0 0.0
      %2087 = vmatpush1.msra.mxu0 %v932
      %2088 = vmatprep.subr.mxu0 0.0
      %2089 = vmatpush1.msra.mxu0 0.0
      %2090 = vmatprep.subr.mxu0 0.0
      %2091 = vmatpush1.msra.mxu0 0.0
      %2092 = vmatprep.subr.mxu0 0.0
      %2093 = vmatpush1.msra.mxu0 0.0
      %2094 = vmatprep.subr.mxu0 0.0
      %2095 = vmatpush1.msra.mxu0 0.0
      %2096 = vmatprep.subr.mxu0 0.0
      %2097 = vmatpush1.msra.mxu0 0.0
      %2098 = vmatprep.subr.mxu0 0.0
      %2099 = vmatpush1.msra.mxu0 0.0
      %2100 = vmatprep.subr.mxu0 0.0
      %2101 = vmatpush1.msra.mxu0 0.0
      %2102 = vmatprep.subr.mxu0 0.0
      %2103 = vmatpush1.msra.mxu0 0.0
      %2104 = vmatprep.subr.mxu0 0.0
      %2105 = vmatpush1.msra.mxu0 0.0
      %2106 = vmatprep.subr.mxu0 0.0
      %2107 = vmatpush1.msra.mxu0 0.0
      %2108 = vmatprep.subr.mxu0 0.0
      %2109 = vmatpush1.msra.mxu0 0.0
      %2110 = vmatprep.subr.mxu0 0.0
      %2111 = vmatpush1.msra.mxu0 0.0
      %2112 = vmatprep.subr.mxu0 0.0
      %2113 = vmatpush1.msra.mxu0 0.0
      %2114 = vmatprep.subr.mxu0 0.0
      %2115 = vmatpush1.msra.mxu0 0.0
      %2116 = vmatprep.subr.mxu0 0.0
      %2117 = vmatpush1.msra.mxu0 0.0
      %2118 = vmatprep.subr.mxu0 0.0
      %2119 = vmatpush1.msra.mxu0 0.0
      %2120 = vmatprep.subr.mxu0 0.0
      %2121 = vmatpush1.msra.mxu0 0.0
      %2122 = vmatprep.subr.mxu0 0.0
      %2123 = vmatpush1.msra.mxu0 0.0
      %2124 = vmatprep.subr.mxu0 0.0
      %2125 = vmatpush1.msra.mxu0 0.0
      %2126 = vmatprep.subr.mxu0 0.0
      %2127 = vmatpush1.msra.mxu0 0.0
      %2128 = vmatprep.subr.mxu0 0.0
      %2129 = vmatpush1.msra.mxu0 0.0
      %2130 = vmatprep.subr.mxu0 0.0
      %2131 = vmatpush1.msra.mxu0 0.0
      %2132 = vmatprep.subr.mxu0 0.0
      %2133 = vmatpush1.msra.mxu0 0.0
      %2134 = vmatprep.subr.mxu0 0.0
      %2135 = vmatpush1.msra.mxu0 0.0
      %2136 = vmatprep.subr.mxu0 0.0
      %2137 = vmatpush1.msra.mxu0 0.0
      %2138 = vmatprep.subr.mxu0 0.0
      %2139 = vmatpush1.msra.mxu0 0.0
      %2140 = vmatprep.subr.mxu0 0.0
      %2141 = vmatpush1.msra.mxu0 0.0
      %2142 = vmatprep.subr.mxu0 0.0
      %2143 = vmatpush1.msra.mxu0 0.0
      %2144 = vmatprep.mubr.f32.mxu0 0.0
      %2145 = vmatmul.mubr.f32.gmra.mrb[0].mxu0 %v1989
      %v2146 = vpop.f32.mrb[0].mxu0
      %v2147 = vadd.f32 0.0, %v2146
      %v2148 = vpop.f32.mrb[0].mxu0
      %2149 = vmatprep.mubr.f32.mxu0 0.0
      %2150 = vmatmul.mubr.f32.gmra.mrb[0].mxu0 %v1992
      %v2151 = vpop.f32.mrb[0].mxu0
      %v2152 = vadd.f32 0.0, %v2151
      %v2153 = vpop.f32.mrb[0].mxu0
      %2154 = vmatprep.mubr.f32.mxu0 0.0
      %2155 = vmatmul.mubr.f32.gmra.mrb[0].mxu0 %v1995
      %v2156 = vpop.f32.mrb[0].mxu0
      %v2157 = vadd.f32 0.0, %v2156
      %v2158 = vpop.f32.mrb[0].mxu0
      %2159 = vdwg.mxu0
      %v2160 = vadd.f32 %v1720, %v2147
      %v2161 = vadd.f32 %v1721, %v2152
      %v2162 = vadd.f32 %v1722, %v2157
      %2163 = vmatprep.subr.mxu0 0.0
      %2164 = vmatpush1.msra.mxu0 %v205
      %2165 = vmatprep.subr.mxu0 0.0
      %2166 = vmatpush1.msra.mxu0 %v206
      %2167 = vmatprep.subr.mxu0 0.0
      %2168 = vmatpush1.msra.mxu0 %v207
      %2169 = vmatprep.subr.mxu0 0.0
      %2170 = vmatpush1.msra.mxu0 %v208
      %2171 = vmatprep.subr.mxu0 0.0
      %2172 = vmatpush1.msra.mxu0 0.0
      %2173 = vmatprep.subr.mxu0 0.0
      %2174 = vmatpush1.msra.mxu0 0.0
      %2175 = vmatprep.subr.mxu0 0.0
      %2176 = vmatpush1.msra.mxu0 0.0
      %2177 = vmatprep.subr.mxu0 0.0
      %2178 = vmatpush1.msra.mxu0 0.0
      %2179 = vmatprep.subr.mxu0 0.0
      %2180 = vmatpush1.msra.mxu0 0.0
      %2181 = vmatprep.subr.mxu0 0.0
      %2182 = vmatpush1.msra.mxu0 0.0
      %2183 = vmatprep.subr.mxu0 0.0
      %2184 = vmatpush1.msra.mxu0 0.0
      %2185 = vmatprep.subr.mxu0 0.0
      %2186 = vmatpush1.msra.mxu0 0.0
      %2187 = vmatprep.subr.mxu0 0.0
      %2188 = vmatpush1.msra.mxu0 0.0
      %2189 = vmatprep.subr.mxu0 0.0
      %2190 = vmatpush1.msra.mxu0 0.0
      %2191 = vmatprep.subr.mxu0 0.0
      %2192 = vmatpush1.msra.mxu0 0.0
      %2193 = vmatprep.subr.mxu0 0.0
      %2194 = vmatpush1.msra.mxu0 0.0
      %2195 = vmatprep.subr.mxu0 0.0
      %2196 = vmatpush1.msra.mxu0 0.0
      %2197 = vmatprep.subr.mxu0 0.0
      %2198 = vmatpush1.msra.mxu0 0.0
      %2199 = vmatprep.subr.mxu0 0.0
      %2200 = vmatpush1.msra.mxu0 0.0
      %2201 = vmatprep.subr.mxu0 0.0
      %2202 = vmatpush1.msra.mxu0 0.0
      %2203 = vmatprep.subr.mxu0 0.0
      %2204 = vmatpush1.msra.mxu0 0.0
      %2205 = vmatprep.subr.mxu0 0.0
      %2206 = vmatpush1.msra.mxu0 0.0
      %2207 = vmatprep.subr.mxu0 0.0
      %2208 = vmatpush1.msra.mxu0 0.0
      %2209 = vmatprep.subr.mxu0 0.0
      %2210 = vmatpush1.msra.mxu0 0.0
      %2211 = vmatprep.subr.mxu0 0.0
      %2212 = vmatpush1.msra.mxu0 0.0
      %2213 = vmatprep.subr.mxu0 0.0
      %2214 = vmatpush1.msra.mxu0 0.0
      %2215 = vmatprep.subr.mxu0 0.0
      %2216 = vmatpush1.msra.mxu0 0.0
      %2217 = vmatprep.subr.mxu0 0.0
      %2218 = vmatpush1.msra.mxu0 0.0
      %2219 = vmatprep.subr.mxu0 0.0
      %2220 = vmatpush1.msra.mxu0 0.0
      %2221 = vmatprep.subr.mxu0 0.0
      %2222 = vmatpush1.msra.mxu0 0.0
      %2223 = vmatprep.subr.mxu0 0.0
      %2224 = vmatpush1.msra.mxu0 0.0
      %2225 = vmatprep.subr.mxu0 0.0
      %2226 = vmatpush1.msra.mxu0 0.0
      %2227 = vmatprep.mubr.f32.mxu0 0.0
      %2228 = vmatmul.mubr.f32.gmra.mrb[0].mxu0 %v1989
      %v2229 = vpop.f32.mrb[0].mxu0
      %v2230 = vadd.f32 0.0, %v2229
      %v2231 = vpop.f32.mrb[0].mxu0
      %2232 = vmatprep.mubr.f32.mxu0 0.0
      %2233 = vmatmul.mubr.f32.gmra.mrb[0].mxu0 %v1992
      %v2234 = vpop.f32.mrb[0].mxu0
      %v2235 = vadd.f32 0.0, %v2234
      %v2236 = vpop.f32.mrb[0].mxu0
      %2237 = vmatprep.mubr.f32.mxu0 0.0
      %2238 = vmatmul.mubr.f32.gmra.mrb[0].mxu0 %v1995
      %v2239 = vpop.f32.mrb[0].mxu0
      %v2240 = vadd.f32 0.0, %v2239
      %v2241 = vpop.f32.mrb[0].mxu0
      %2242 = vdwg.mxu0
      %v2243 = vadd.f32 %v1982, %v2230
      %v2244 = vadd.f32 %v1983, %v2235
      %v2245 = vadd.f32 %v1984, %v2240
      %2246 = vmatprep.subr.mxu0 0.0
      %2247 = vmatpush1.msra.mxu0 %v389
      %2248 = vmatprep.subr.mxu0 0.0
      %2249 = vmatpush1.msra.mxu0 %v390
      %2250 = vmatprep.subr.mxu0 0.0
      %2251 = vmatpush1.msra.mxu0 %v391
      %2252 = vmatprep.subr.mxu0 0.0
      %2253 = vmatpush1.msra.mxu0 %v392
      %2254 = vmatprep.subr.mxu0 0.0
      %2255 = vmatpush1.msra.mxu0 0.0
      %2256 = vmatprep.subr.mxu0 0.0
      %2257 = vmatpush1.msra.mxu0 0.0
      %2258 = vmatprep.subr.mxu0 0.0
      %2259 = vmatpush1.msra.mxu0 0.0
      %2260 = vmatprep.subr.mxu0 0.0
      %2261 = vmatpush1.msra.mxu0 0.0
      %2262 = vmatprep.subr.mxu0 0.0
      %2263 = vmatpush1.msra.mxu0 0.0
      %2264 = vmatprep.subr.mxu0 0.0
      %2265 = vmatpush1.msra.mxu0 0.0
      %2266 = vmatprep.subr.mxu0 0.0
      %2267 = vmatpush1.msra.mxu0 0.0
      %2268 = vmatprep.subr.mxu0 0.0
      %2269 = vmatpush1.msra.mxu0 0.0
      %2270 = vmatprep.subr.mxu0 0.0
      %2271 = vmatpush1.msra.mxu0 0.0
      %2272 = vmatprep.subr.mxu0 0.0
      %2273 = vmatpush1.msra.mxu0 0.0
      %2274 = vmatprep.subr.mxu0 0.0
      %2275 = vmatpush1.msra.mxu0 0.0
      %2276 = vmatprep.subr.mxu0 0.0
      %2277 = vmatpush1.msra.mxu0 0.0
      %2278 = vmatprep.subr.mxu0 0.0
      %2279 = vmatpush1.msra.mxu0 0.0
      %2280 = vmatprep.subr.mxu0 0.0
      %2281 = vmatpush1.msra.mxu0 0.0
      %2282 = vmatprep.subr.mxu0 0.0
      %2283 = vmatpush1.msra.mxu0 0.0
      %2284 = vmatprep.subr.mxu0 0.0
      %2285 = vmatpush1.msra.mxu0 0.0
      %2286 = vmatprep.subr.mxu0 0.0
      %2287 = vmatpush1.msra.mxu0 0.0
      %2288 = vmatprep.subr.mxu0 0.0
      %2289 = vmatpush1.msra.mxu0 0.0
      %2290 = vmatprep.subr.mxu0 0.0
      %2291 = vmatpush1.msra.mxu0 0.0
      %2292 = vmatprep.subr.mxu0 0.0
      %2293 = vmatpush1.msra.mxu0 0.0
      %2294 = vmatprep.subr.mxu0 0.0
      %2295 = vmatpush1.msra.mxu0 0.0
      %2296 = vmatprep.subr.mxu0 0.0
      %2297 = vmatpush1.msra.mxu0 0.0
      %2298 = vmatprep.subr.mxu0 0.0
      %2299 = vmatpush1.msra.mxu0 0.0
      %2300 = vmatprep.subr.mxu0 0.0
      %2301 = vmatpush1.msra.mxu0 0.0
      %2302 = vmatprep.subr.mxu0 0.0
      %2303 = vmatpush1.msra.mxu0 0.0
      %2304 = vmatprep.subr.mxu0 0.0
      %2305 = vmatpush1.msra.mxu0 0.0
      %2306 = vmatprep.subr.mxu0 0.0
      %2307 = vmatpush1.msra.mxu0 0.0
      %2308 = vmatprep.subr.mxu0 0.0
      %2309 = vmatpush1.msra.mxu0 0.0
      %2310 = vmatprep.mubr.f32.mxu0 0.0
      %2311 = vmatmul.mubr.f32.gmra.mrb[0].mxu0 %v1989
      %v2312 = vpop.f32.mrb[0].mxu0
      %v2313 = vadd.f32 0.0, %v2312
      %v2314 = vpop.f32.mrb[0].mxu0
      %2315 = vmatprep.mubr.f32.mxu0 0.0
      %2316 = vmatmul.mubr.f32.gmra.mrb[0].mxu0 %v1992
      %v2317 = vpop.f32.mrb[0].mxu0
      %v2318 = vadd.f32 0.0, %v2317
      %v2319 = vpop.f32.mrb[0].mxu0
      %2320 = vmatprep.mubr.f32.mxu0 0.0
      %2321 = vmatmul.mubr.f32.gmra.mrb[0].mxu0 %v1995
      %v2322 = vpop.f32.mrb[0].mxu0
      %v2323 = vadd.f32 0.0, %v2322
      %v2324 = vpop.f32.mrb[0].mxu0
      %2325 = vdwg.mxu0
      %v2326 = vadd.f32 %v1803, %v2313
      %v2327 = vadd.f32 %v1804, %v2318
      %v2328 = vadd.f32 %v1805, %v2323
      %v2329 = vld [vmem:[%s1806 + $0x5] sm:$0xff]
      %v2330 = vld [vmem:[%s1806 + $0xd] sm:$0xff]
      %v2331 = vld [vmem:[%s1806 + $0x15] sm:$0xf]
      %v2333 = vsel %vm209, %v2329, 0
      %v2336 = vsel %vm209, %v2330, 0
      %v2339 = vsel %vm209, %v2331, 0
      %2341 = vmatprep.subr.mxu0 0.0
      %2342 = vmatpush1.msra.mxu0 %v397
      %2343 = vmatprep.subr.mxu0 0.0
      %2344 = vmatpush1.msra.mxu0 %v398
      %2345 = vmatprep.subr.mxu0 0.0
      %2346 = vmatpush1.msra.mxu0 %v399
      %2347 = vmatprep.subr.mxu0 0.0
      %2348 = vmatpush1.msra.mxu0 %v400
      %2349 = vmatprep.subr.mxu0 0.0
      %2350 = vmatpush1.msra.mxu0 0.0
      %2351 = vmatprep.subr.mxu0 0.0
      %2352 = vmatpush1.msra.mxu0 0.0
      %2353 = vmatprep.subr.mxu0 0.0
      %2354 = vmatpush1.msra.mxu0 0.0
      %2355 = vmatprep.subr.mxu0 0.0
      %2356 = vmatpush1.msra.mxu0 0.0
      %2357 = vmatprep.subr.mxu0 0.0
      %2358 = vmatpush1.msra.mxu0 0.0
      %2359 = vmatprep.subr.mxu0 0.0
      %2360 = vmatpush1.msra.mxu0 0.0
      %2361 = vmatprep.subr.mxu0 0.0
      %2362 = vmatpush1.msra.mxu0 0.0
      %2363 = vmatprep.subr.mxu0 0.0
      %2364 = vmatpush1.msra.mxu0 0.0
      %2365 = vmatprep.subr.mxu0 0.0
      %2366 = vmatpush1.msra.mxu0 0.0
      %2367 = vmatprep.subr.mxu0 0.0
      %2368 = vmatpush1.msra.mxu0 0.0
      %2369 = vmatprep.subr.mxu0 0.0
      %2370 = vmatpush1.msra.mxu0 0.0
      %2371 = vmatprep.subr.mxu0 0.0
      %2372 = vmatpush1.msra.mxu0 0.0
      %2373 = vmatprep.subr.mxu0 0.0
      %2374 = vmatpush1.msra.mxu0 0.0
      %2375 = vmatprep.subr.mxu0 0.0
      %2376 = vmatpush1.msra.mxu0 0.0
      %2377 = vmatprep.subr.mxu0 0.0
      %2378 = vmatpush1.msra.mxu0 0.0
      %2379 = vmatprep.subr.mxu0 0.0
      %2380 = vmatpush1.msra.mxu0 0.0
      %2381 = vmatprep.subr.mxu0 0.0
      %2382 = vmatpush1.msra.mxu0 0.0
      %2383 = vmatprep.subr.mxu0 0.0
      %2384 = vmatpush1.msra.mxu0 0.0
      %2385 = vmatprep.subr.mxu0 0.0
      %2386 = vmatpush1.msra.mxu0 0.0
      %2387 = vmatprep.subr.mxu0 0.0
      %2388 = vmatpush1.msra.mxu0 0.0
      %2389 = vmatprep.subr.mxu0 0.0
      %2390 = vmatpush1.msra.mxu0 0.0
      %2391 = vmatprep.subr.mxu0 0.0
      %2392 = vmatpush1.msra.mxu0 0.0
      %2393 = vmatprep.subr.mxu0 0.0
      %2394 = vmatpush1.msra.mxu0 0.0
      %2395 = vmatprep.subr.mxu0 0.0
      %2396 = vmatpush1.msra.mxu0 0.0
      %2397 = vmatprep.subr.mxu0 0.0
      %2398 = vmatpush1.msra.mxu0 0.0
      %2399 = vmatprep.subr.mxu0 0.0
      %2400 = vmatpush1.msra.mxu0 0.0
      %2401 = vmatprep.subr.mxu0 0.0
      %2402 = vmatpush1.msra.mxu0 0.0
      %2403 = vmatprep.subr.mxu0 0.0
      %2404 = vmatpush1.msra.mxu0 0.0
      %2405 = vmatprep.mubr.f32.mxu0 0.0
      %2406 = vmatmul.mubr.f32.gmra.mrb[0].mxu0 %v2333
      %v2407 = vpop.f32.mrb[0].mxu0
      %v2408 = vadd.f32 0.0, %v2407
      %v2409 = vpop.f32.mrb[0].mxu0
      %2410 = vmatprep.mubr.f32.mxu0 0.0
      %2411 = vmatmul.mubr.f32.gmra.mrb[0].mxu0 %v2336
      %v2412 = vpop.f32.mrb[0].mxu0
      %v2413 = vadd.f32 0.0, %v2412
      %v2414 = vpop.f32.mrb[0].mxu0
      %2415 = vmatprep.mubr.f32.mxu0 0.0
      %2416 = vmatmul.mubr.f32.gmra.mrb[0].mxu0 %v2339
      %v2417 = vpop.f32.mrb[0].mxu0
      %v2418 = vadd.f32 0.0, %v2417
      %v2419 = vpop.f32.mrb[0].mxu0
      %2420 = vdwg.mxu0
      %v2421 = vadd.f32 %v2243, %v2408
      %v2422 = vadd.f32 %v2244, %v2413
      %v2423 = vadd.f32 %v2245, %v2418
      %v2424 = vld [vmem:[%s1806 + $0x6] sm:$0xff]
      %v2425 = vld [vmem:[%s1806 + $0xe] sm:$0xff]
      %v2426 = vld [vmem:[%s1806 + $0x16] sm:$0xf]
      %v2428 = vsel %vm209, %v2424, 0
      %v2431 = vsel %vm209, %v2425, 0
      %v2434 = vsel %vm209, %v2426, 0
      %2436 = vmatprep.subr.mxu0 0.0
      %2437 = vmatpush1.msra.mxu0 %v502
      %2438 = vmatprep.subr.mxu0 0.0
      %2439 = vmatpush1.msra.mxu0 %v503
      %2440 = vmatprep.subr.mxu0 0.0
      %2441 = vmatpush1.msra.mxu0 %v504
      %2442 = vmatprep.subr.mxu0 0.0
      %2443 = vmatpush1.msra.mxu0 %v505
      %2444 = vmatprep.subr.mxu0 0.0
      %2445 = vmatpush1.msra.mxu0 0.0
      %2446 = vmatprep.subr.mxu0 0.0
      %2447 = vmatpush1.msra.mxu0 0.0
      %2448 = vmatprep.subr.mxu0 0.0
      %2449 = vmatpush1.msra.mxu0 0.0
      %2450 = vmatprep.subr.mxu0 0.0
      %2451 = vmatpush1.msra.mxu0 0.0
      %2452 = vmatprep.subr.mxu0 0.0
      %2453 = vmatpush1.msra.mxu0 0.0
      %2454 = vmatprep.subr.mxu0 0.0
      %2455 = vmatpush1.msra.mxu0 0.0
      %2456 = vmatprep.subr.mxu0 0.0
      %2457 = vmatpush1.msra.mxu0 0.0
      %2458 = vmatprep.subr.mxu0 0.0
      %2459 = vmatpush1.msra.mxu0 0.0
      %2460 = vmatprep.subr.mxu0 0.0
      %2461 = vmatpush1.msra.mxu0 0.0
      %2462 = vmatprep.subr.mxu0 0.0
      %2463 = vmatpush1.msra.mxu0 0.0
      %2464 = vmatprep.subr.mxu0 0.0
      %2465 = vmatpush1.msra.mxu0 0.0
      %2466 = vmatprep.subr.mxu0 0.0
      %2467 = vmatpush1.msra.mxu0 0.0
      %2468 = vmatprep.subr.mxu0 0.0
      %2469 = vmatpush1.msra.mxu0 0.0
      %2470 = vmatprep.subr.mxu0 0.0
      %2471 = vmatpush1.msra.mxu0 0.0
      %2472 = vmatprep.subr.mxu0 0.0
      %2473 = vmatpush1.msra.mxu0 0.0
      %2474 = vmatprep.subr.mxu0 0.0
      %2475 = vmatpush1.msra.mxu0 0.0
      %2476 = vmatprep.subr.mxu0 0.0
      %2477 = vmatpush1.msra.mxu0 0.0
      %2478 = vmatprep.subr.mxu0 0.0
      %2479 = vmatpush1.msra.mxu0 0.0
      %2480 = vmatprep.subr.mxu0 0.0
      %2481 = vmatpush1.msra.mxu0 0.0
      %2482 = vmatprep.subr.mxu0 0.0
      %2483 = vmatpush1.msra.mxu0 0.0
      %2484 = vmatprep.subr.mxu0 0.0
      %2485 = vmatpush1.msra.mxu0 0.0
      %2486 = vmatprep.subr.mxu0 0.0
      %2487 = vmatpush1.msra.mxu0 0.0
      %2488 = vmatprep.subr.mxu0 0.0
      %2489 = vmatpush1.msra.mxu0 0.0
      %2490 = vmatprep.subr.mxu0 0.0
      %2491 = vmatpush1.msra.mxu0 0.0
      %2492 = vmatprep.subr.mxu0 0.0
      %2493 = vmatpush1.msra.mxu0 0.0
      %2494 = vmatprep.subr.mxu0 0.0
      %2495 = vmatpush1.msra.mxu0 0.0
      %2496 = vmatprep.subr.mxu0 0.0
      %2497 = vmatpush1.msra.mxu0 0.0
      %2498 = vmatprep.subr.mxu0 0.0
      %2499 = vmatpush1.msra.mxu0 0.0
      %2500 = vmatprep.mubr.f32.mxu0 0.0
      %2501 = vmatmul.mubr.f32.gmra.mrb[0].mxu0 %v2428
      %v2502 = vpop.f32.mrb[0].mxu0
      %v2503 = vadd.f32 0.0, %v2502
      %v2504 = vpop.f32.mrb[0].mxu0
      %2505 = vmatprep.mubr.f32.mxu0 0.0
      %2506 = vmatmul.mubr.f32.gmra.mrb[0].mxu0 %v2431
      %v2507 = vpop.f32.mrb[0].mxu0
      %v2508 = vadd.f32 0.0, %v2507
      %v2509 = vpop.f32.mrb[0].mxu0
      %2510 = vmatprep.mubr.f32.mxu0 0.0
      %2511 = vmatmul.mubr.f32.gmra.mrb[0].mxu0 %v2434
      %v2512 = vpop.f32.mrb[0].mxu0
      %v2513 = vadd.f32 0.0, %v2512
      %v2514 = vpop.f32.mrb[0].mxu0
      %2515 = vdwg.mxu0
      %v2516 = vadd.f32 %v2421, %v2503
      %v2517 = vadd.f32 %v2422, %v2508
      %v2518 = vadd.f32 %v2423, %v2513
      %2519 = vmatprep.subr.mxu0 0.0
      %2520 = vmatpush1.msra.mxu0 %v599
      %2521 = vmatprep.subr.mxu0 0.0
      %2522 = vmatpush1.msra.mxu0 %v600
      %2523 = vmatprep.subr.mxu0 0.0
      %2524 = vmatpush1.msra.mxu0 %v601
      %2525 = vmatprep.subr.mxu0 0.0
      %2526 = vmatpush1.msra.mxu0 %v602
      %2527 = vmatprep.subr.mxu0 0.0
      %2528 = vmatpush1.msra.mxu0 0.0
      %2529 = vmatprep.subr.mxu0 0.0
      %2530 = vmatpush1.msra.mxu0 0.0
      %2531 = vmatprep.subr.mxu0 0.0
      %2532 = vmatpush1.msra.mxu0 0.0
      %2533 = vmatprep.subr.mxu0 0.0
      %2534 = vmatpush1.msra.mxu0 0.0
      %2535 = vmatprep.subr.mxu0 0.0
      %2536 = vmatpush1.msra.mxu0 0.0
      %2537 = vmatprep.subr.mxu0 0.0
      %2538 = vmatpush1.msra.mxu0 0.0
      %2539 = vmatprep.subr.mxu0 0.0
      %2540 = vmatpush1.msra.mxu0 0.0
      %2541 = vmatprep.subr.mxu0 0.0
      %2542 = vmatpush1.msra.mxu0 0.0
      %2543 = vmatprep.subr.mxu0 0.0
      %2544 = vmatpush1.msra.mxu0 0.0
      %2545 = vmatprep.subr.mxu0 0.0
      %2546 = vmatpush1.msra.mxu0 0.0
      %2547 = vmatprep.subr.mxu0 0.0
      %2548 = vmatpush1.msra.mxu0 0.0
      %2549 = vmatprep.subr.mxu0 0.0
      %2550 = vmatpush1.msra.mxu0 0.0
      %2551 = vmatprep.subr.mxu0 0.0
      %2552 = vmatpush1.msra.mxu0 0.0
      %2553 = vmatprep.subr.mxu0 0.0
      %2554 = vmatpush1.msra.mxu0 0.0
      %2555 = vmatprep.subr.mxu0 0.0
      %2556 = vmatpush1.msra.mxu0 0.0
      %2557 = vmatprep.subr.mxu0 0.0
      %2558 = vmatpush1.msra.mxu0 0.0
      %2559 = vmatprep.subr.mxu0 0.0
      %2560 = vmatpush1.msra.mxu0 0.0
      %2561 = vmatprep.subr.mxu0 0.0
      %2562 = vmatpush1.msra.mxu0 0.0
      %2563 = vmatprep.subr.mxu0 0.0
      %2564 = vmatpush1.msra.mxu0 0.0
      %2565 = vmatprep.subr.mxu0 0.0
      %2566 = vmatpush1.msra.mxu0 0.0
      %2567 = vmatprep.subr.mxu0 0.0
      %2568 = vmatpush1.msra.mxu0 0.0
      %2569 = vmatprep.subr.mxu0 0.0
      %2570 = vmatpush1.msra.mxu0 0.0
      %2571 = vmatprep.subr.mxu0 0.0
      %2572 = vmatpush1.msra.mxu0 0.0
      %2573 = vmatprep.subr.mxu0 0.0
      %2574 = vmatpush1.msra.mxu0 0.0
      %2575 = vmatprep.subr.mxu0 0.0
      %2576 = vmatpush1.msra.mxu0 0.0
      %2577 = vmatprep.subr.mxu0 0.0
      %2578 = vmatpush1.msra.mxu0 0.0
      %2579 = vmatprep.subr.mxu0 0.0
      %2580 = vmatpush1.msra.mxu0 0.0
      %2581 = vmatprep.subr.mxu0 0.0
      %2582 = vmatpush1.msra.mxu0 0.0
      %2583 = vmatprep.mubr.f32.mxu0 0.0
      %2584 = vmatmul.mubr.f32.gmra.mrb[0].mxu0 %v2428
      %v2585 = vpop.f32.mrb[0].mxu0
      %v2586 = vadd.f32 0.0, %v2585
      %v2587 = vpop.f32.mrb[0].mxu0
      %2588 = vmatprep.mubr.f32.mxu0 0.0
      %2589 = vmatmul.mubr.f32.gmra.mrb[0].mxu0 %v2431
      %v2590 = vpop.f32.mrb[0].mxu0
      %v2591 = vadd.f32 0.0, %v2590
      %v2592 = vpop.f32.mrb[0].mxu0
      %2593 = vmatprep.mubr.f32.mxu0 0.0
      %2594 = vmatmul.mubr.f32.gmra.mrb[0].mxu0 %v2434
      %v2595 = vpop.f32.mrb[0].mxu0
      %v2596 = vadd.f32 0.0, %v2595
      %v2597 = vpop.f32.mrb[0].mxu0
      %2598 = vdwg.mxu0
      %v2599 = vadd.f32 %v2326, %v2586
      %v2600 = vadd.f32 %v2327, %v2591
      %v2601 = vadd.f32 %v2328, %v2596
      %s2602 = scalar_lea.vmem %s183, 96
      %v2603 = vld [vmem:[%s2602] sm:$0xff]
      %v2604 = vld [vmem:[%s2602 + $0x8] sm:$0xff]
      %v2605 = vld [vmem:[%s2602 + $0x10] sm:$0xf]
      %v2607 = vsel %vm209, %v2603, 0
      %v2610 = vsel %vm209, %v2604, 0
      %v2613 = vsel %vm209, %v2605, 0
      %2615 = vmatprep.subr.mxu0 0.0
      %2616 = vmatpush1.msra.mxu0 %v929
      %2617 = vmatprep.subr.mxu0 0.0
      %2618 = vmatpush1.msra.mxu0 %v930
      %2619 = vmatprep.subr.mxu0 0.0
      %2620 = vmatpush1.msra.mxu0 %v931
      %2621 = vmatprep.subr.mxu0 0.0
      %2622 = vmatpush1.msra.mxu0 %v932
      %2623 = vmatprep.subr.mxu0 0.0
      %2624 = vmatpush1.msra.mxu0 0.0
      %2625 = vmatprep.subr.mxu0 0.0
      %2626 = vmatpush1.msra.mxu0 0.0
      %2627 = vmatprep.subr.mxu0 0.0
      %2628 = vmatpush1.msra.mxu0 0.0
      %2629 = vmatprep.subr.mxu0 0.0
      %2630 = vmatpush1.msra.mxu0 0.0
      %2631 = vmatprep.subr.mxu0 0.0
      %2632 = vmatpush1.msra.mxu0 0.0
      %2633 = vmatprep.subr.mxu0 0.0
      %2634 = vmatpush1.msra.mxu0 0.0
      %2635 = vmatprep.subr.mxu0 0.0
      %2636 = vmatpush1.msra.mxu0 0.0
      %2637 = vmatprep.subr.mxu0 0.0
      %2638 = vmatpush1.msra.mxu0 0.0
      %2639 = vmatprep.subr.mxu0 0.0
      %2640 = vmatpush1.msra.mxu0 0.0
      %2641 = vmatprep.subr.mxu0 0.0
      %2642 = vmatpush1.msra.mxu0 0.0
      %2643 = vmatprep.subr.mxu0 0.0
      %2644 = vmatpush1.msra.mxu0 0.0
      %2645 = vmatprep.subr.mxu0 0.0
      %2646 = vmatpush1.msra.mxu0 0.0
      %2647 = vmatprep.subr.mxu0 0.0
      %2648 = vmatpush1.msra.mxu0 0.0
      %2649 = vmatprep.subr.mxu0 0.0
      %2650 = vmatpush1.msra.mxu0 0.0
      %2651 = vmatprep.subr.mxu0 0.0
      %2652 = vmatpush1.msra.mxu0 0.0
      %2653 = vmatprep.subr.mxu0 0.0
      %2654 = vmatpush1.msra.mxu0 0.0
      %2655 = vmatprep.subr.mxu0 0.0
      %2656 = vmatpush1.msra.mxu0 0.0
      %2657 = vmatprep.subr.mxu0 0.0
      %2658 = vmatpush1.msra.mxu0 0.0
      %2659 = vmatprep.subr.mxu0 0.0
      %2660 = vmatpush1.msra.mxu0 0.0
      %2661 = vmatprep.subr.mxu0 0.0
      %2662 = vmatpush1.msra.mxu0 0.0
      %2663 = vmatprep.subr.mxu0 0.0
      %2664 = vmatpush1.msra.mxu0 0.0
      %2665 = vmatprep.subr.mxu0 0.0
      %2666 = vmatpush1.msra.mxu0 0.0
      %2667 = vmatprep.subr.mxu0 0.0
      %2668 = vmatpush1.msra.mxu0 0.0
      %2669 = vmatprep.subr.mxu0 0.0
      %2670 = vmatpush1.msra.mxu0 0.0
      %2671 = vmatprep.subr.mxu0 0.0
      %2672 = vmatpush1.msra.mxu0 0.0
      %2673 = vmatprep.subr.mxu0 0.0
      %2674 = vmatpush1.msra.mxu0 0.0
      %2675 = vmatprep.subr.mxu0 0.0
      %2676 = vmatpush1.msra.mxu0 0.0
      %2677 = vmatprep.subr.mxu0 0.0
      %2678 = vmatpush1.msra.mxu0 0.0
      %2679 = vmatprep.mubr.f32.mxu0 0.0
      %2680 = vmatmul.mubr.f32.gmra.mrb[0].mxu0 %v2607
      %v2681 = vpop.f32.mrb[0].mxu0
      %v2682 = vadd.f32 0.0, %v2681
      %v2683 = vpop.f32.mrb[0].mxu0
      %2684 = vmatprep.mubr.f32.mxu0 0.0
      %2685 = vmatmul.mubr.f32.gmra.mrb[0].mxu0 %v2610
      %v2686 = vpop.f32.mrb[0].mxu0
      %v2687 = vadd.f32 0.0, %v2686
      %v2688 = vpop.f32.mrb[0].mxu0
      %2689 = vmatprep.mubr.f32.mxu0 0.0
      %2690 = vmatmul.mubr.f32.gmra.mrb[0].mxu0 %v2613
      %v2691 = vpop.f32.mrb[0].mxu0
      %v2692 = vadd.f32 0.0, %v2691
      %v2693 = vpop.f32.mrb[0].mxu0
      %2694 = vdwg.mxu0
      %v2695 = vadd.f32 %v2077, %v2682
      %v2696 = vadd.f32 %v2078, %v2687
      %v2697 = vadd.f32 %v2079, %v2692
      %2698 = vmatprep.subr.mxu0 0.0
      %2699 = vmatpush1.msra.mxu0 %v494
      %2700 = vmatprep.subr.mxu0 0.0
      %2701 = vmatpush1.msra.mxu0 %v495
      %2702 = vmatprep.subr.mxu0 0.0
      %2703 = vmatpush1.msra.mxu0 %v496
      %2704 = vmatprep.subr.mxu0 0.0
      %2705 = vmatpush1.msra.mxu0 %v497
      %2706 = vmatprep.subr.mxu0 0.0
      %2707 = vmatpush1.msra.mxu0 0.0
      %2708 = vmatprep.subr.mxu0 0.0
      %2709 = vmatpush1.msra.mxu0 0.0
      %2710 = vmatprep.subr.mxu0 0.0
      %2711 = vmatpush1.msra.mxu0 0.0
      %2712 = vmatprep.subr.mxu0 0.0
      %2713 = vmatpush1.msra.mxu0 0.0
      %2714 = vmatprep.subr.mxu0 0.0
      %2715 = vmatpush1.msra.mxu0 0.0
      %2716 = vmatprep.subr.mxu0 0.0
      %2717 = vmatpush1.msra.mxu0 0.0
      %2718 = vmatprep.subr.mxu0 0.0
      %2719 = vmatpush1.msra.mxu0 0.0
      %2720 = vmatprep.subr.mxu0 0.0
      %2721 = vmatpush1.msra.mxu0 0.0
      %2722 = vmatprep.subr.mxu0 0.0
      %2723 = vmatpush1.msra.mxu0 0.0
      %2724 = vmatprep.subr.mxu0 0.0
      %2725 = vmatpush1.msra.mxu0 0.0
      %2726 = vmatprep.subr.mxu0 0.0
      %2727 = vmatpush1.msra.mxu0 0.0
      %2728 = vmatprep.subr.mxu0 0.0
      %2729 = vmatpush1.msra.mxu0 0.0
      %2730 = vmatprep.subr.mxu0 0.0
      %2731 = vmatpush1.msra.mxu0 0.0
      %2732 = vmatprep.subr.mxu0 0.0
      %2733 = vmatpush1.msra.mxu0 0.0
      %2734 = vmatprep.subr.mxu0 0.0
      %2735 = vmatpush1.msra.mxu0 0.0
      %2736 = vmatprep.subr.mxu0 0.0
      %2737 = vmatpush1.msra.mxu0 0.0
      %2738 = vmatprep.subr.mxu0 0.0
      %2739 = vmatpush1.msra.mxu0 0.0
      %2740 = vmatprep.subr.mxu0 0.0
      %2741 = vmatpush1.msra.mxu0 0.0
      %2742 = vmatprep.subr.mxu0 0.0
      %2743 = vmatpush1.msra.mxu0 0.0
      %2744 = vmatprep.subr.mxu0 0.0
      %2745 = vmatpush1.msra.mxu0 0.0
      %2746 = vmatprep.subr.mxu0 0.0
      %2747 = vmatpush1.msra.mxu0 0.0
      %2748 = vmatprep.subr.mxu0 0.0
      %2749 = vmatpush1.msra.mxu0 0.0
      %2750 = vmatprep.subr.mxu0 0.0
      %2751 = vmatpush1.msra.mxu0 0.0
      %2752 = vmatprep.subr.mxu0 0.0
      %2753 = vmatpush1.msra.mxu0 0.0
      %2754 = vmatprep.subr.mxu0 0.0
      %2755 = vmatpush1.msra.mxu0 0.0
      %2756 = vmatprep.subr.mxu0 0.0
      %2757 = vmatpush1.msra.mxu0 0.0
      %2758 = vmatprep.subr.mxu0 0.0
      %2759 = vmatpush1.msra.mxu0 0.0
      %2760 = vmatprep.subr.mxu0 0.0
      %2761 = vmatpush1.msra.mxu0 0.0
      %2762 = vmatprep.mubr.f32.mxu0 0.0
      %2763 = vmatmul.mubr.f32.gmra.mrb[0].mxu0 %v2607
      %v2764 = vpop.f32.mrb[0].mxu0
      %v2765 = vadd.f32 0.0, %v2764
      %v2766 = vpop.f32.mrb[0].mxu0
      %2767 = vmatprep.mubr.f32.mxu0 0.0
      %2768 = vmatmul.mubr.f32.gmra.mrb[0].mxu0 %v2610
      %v2769 = vpop.f32.mrb[0].mxu0
      %v2770 = vadd.f32 0.0, %v2769
      %v2771 = vpop.f32.mrb[0].mxu0
      %2772 = vmatprep.mubr.f32.mxu0 0.0
      %2773 = vmatmul.mubr.f32.gmra.mrb[0].mxu0 %v2613
      %v2774 = vpop.f32.mrb[0].mxu0
      %v2775 = vadd.f32 0.0, %v2774
      %v2776 = vpop.f32.mrb[0].mxu0
      %2777 = vdwg.mxu0
      %v2778 = vadd.f32 %v2160, %v2765
      %v2779 = vadd.f32 %v2161, %v2770
      %v2780 = vadd.f32 %v2162, %v2775
      %2781 = vmatprep.subr.mxu0 0.0
      %2782 = vmatpush1.msra.mxu0 %v389
      %2783 = vmatprep.subr.mxu0 0.0
      %2784 = vmatpush1.msra.mxu0 %v390
      %2785 = vmatprep.subr.mxu0 0.0
      %2786 = vmatpush1.msra.mxu0 %v391
      %2787 = vmatprep.subr.mxu0 0.0
      %2788 = vmatpush1.msra.mxu0 %v392
      %2789 = vmatprep.subr.mxu0 0.0
      %2790 = vmatpush1.msra.mxu0 0.0
      %2791 = vmatprep.subr.mxu0 0.0
      %2792 = vmatpush1.msra.mxu0 0.0
      %2793 = vmatprep.subr.mxu0 0.0
      %2794 = vmatpush1.msra.mxu0 0.0
      %2795 = vmatprep.subr.mxu0 0.0
      %2796 = vmatpush1.msra.mxu0 0.0
      %2797 = vmatprep.subr.mxu0 0.0
      %2798 = vmatpush1.msra.mxu0 0.0
      %2799 = vmatprep.subr.mxu0 0.0
      %2800 = vmatpush1.msra.mxu0 0.0
      %2801 = vmatprep.subr.mxu0 0.0
      %2802 = vmatpush1.msra.mxu0 0.0
      %2803 = vmatprep.subr.mxu0 0.0
      %2804 = vmatpush1.msra.mxu0 0.0
      %2805 = vmatprep.subr.mxu0 0.0
      %2806 = vmatpush1.msra.mxu0 0.0
      %2807 = vmatprep.subr.mxu0 0.0
      %2808 = vmatpush1.msra.mxu0 0.0
      %2809 = vmatprep.subr.mxu0 0.0
      %2810 = vmatpush1.msra.mxu0 0.0
      %2811 = vmatprep.subr.mxu0 0.0
      %2812 = vmatpush1.msra.mxu0 0.0
      %2813 = vmatprep.subr.mxu0 0.0
      %2814 = vmatpush1.msra.mxu0 0.0
      %2815 = vmatprep.subr.mxu0 0.0
      %2816 = vmatpush1.msra.mxu0 0.0
      %2817 = vmatprep.subr.mxu0 0.0
      %2818 = vmatpush1.msra.mxu0 0.0
      %2819 = vmatprep.subr.mxu0 0.0
      %2820 = vmatpush1.msra.mxu0 0.0
      %2821 = vmatprep.subr.mxu0 0.0
      %2822 = vmatpush1.msra.mxu0 0.0
      %2823 = vmatprep.subr.mxu0 0.0
      %2824 = vmatpush1.msra.mxu0 0.0
      %2825 = vmatprep.subr.mxu0 0.0
      %2826 = vmatpush1.msra.mxu0 0.0
      %2827 = vmatprep.subr.mxu0 0.0
      %2828 = vmatpush1.msra.mxu0 0.0
      %2829 = vmatprep.subr.mxu0 0.0
      %2830 = vmatpush1.msra.mxu0 0.0
      %2831 = vmatprep.subr.mxu0 0.0
      %2832 = vmatpush1.msra.mxu0 0.0
      %2833 = vmatprep.subr.mxu0 0.0
      %2834 = vmatpush1.msra.mxu0 0.0
      %2835 = vmatprep.subr.mxu0 0.0
      %2836 = vmatpush1.msra.mxu0 0.0
      %2837 = vmatprep.subr.mxu0 0.0
      %2838 = vmatpush1.msra.mxu0 0.0
      %2839 = vmatprep.subr.mxu0 0.0
      %2840 = vmatpush1.msra.mxu0 0.0
      %2841 = vmatprep.subr.mxu0 0.0
      %2842 = vmatpush1.msra.mxu0 0.0
      %2843 = vmatprep.subr.mxu0 0.0
      %2844 = vmatpush1.msra.mxu0 0.0
      %2845 = vmatprep.mubr.f32.mxu0 0.0
      %2846 = vmatmul.mubr.f32.gmra.mrb[0].mxu0 %v2607
      %v2847 = vpop.f32.mrb[0].mxu0
      %v2848 = vadd.f32 0.0, %v2847
      %v2849 = vpop.f32.mrb[0].mxu0
      %2850 = vmatprep.mubr.f32.mxu0 0.0
      %2851 = vmatmul.mubr.f32.gmra.mrb[0].mxu0 %v2610
      %v2852 = vpop.f32.mrb[0].mxu0
      %v2853 = vadd.f32 0.0, %v2852
      %v2854 = vpop.f32.mrb[0].mxu0
      %2855 = vmatprep.mubr.f32.mxu0 0.0
      %2856 = vmatmul.mubr.f32.gmra.mrb[0].mxu0 %v2613
      %v2857 = vpop.f32.mrb[0].mxu0
      %v2858 = vadd.f32 0.0, %v2857
      %v2859 = vpop.f32.mrb[0].mxu0
      %2860 = vdwg.mxu0
      %v2861 = vadd.f32 %v2516, %v2848
      %v2862 = vadd.f32 %v2517, %v2853
      %v2863 = vadd.f32 %v2518, %v2858
      %2864 = vmatprep.subr.mxu0 0.0
      %2865 = vmatpush1.msra.mxu0 %v197
      %2866 = vmatprep.subr.mxu0 0.0
      %2867 = vmatpush1.msra.mxu0 %v198
      %2868 = vmatprep.subr.mxu0 0.0
      %2869 = vmatpush1.msra.mxu0 %v199
      %2870 = vmatprep.subr.mxu0 0.0
      %2871 = vmatpush1.msra.mxu0 %v200
      %2872 = vmatprep.subr.mxu0 0.0
      %2873 = vmatpush1.msra.mxu0 0.0
      %2874 = vmatprep.subr.mxu0 0.0
      %2875 = vmatpush1.msra.mxu0 0.0
      %2876 = vmatprep.subr.mxu0 0.0
      %2877 = vmatpush1.msra.mxu0 0.0
      %2878 = vmatprep.subr.mxu0 0.0
      %2879 = vmatpush1.msra.mxu0 0.0
      %2880 = vmatprep.subr.mxu0 0.0
      %2881 = vmatpush1.msra.mxu0 0.0
      %2882 = vmatprep.subr.mxu0 0.0
      %2883 = vmatpush1.msra.mxu0 0.0
      %2884 = vmatprep.subr.mxu0 0.0
      %2885 = vmatpush1.msra.mxu0 0.0
      %2886 = vmatprep.subr.mxu0 0.0
      %2887 = vmatpush1.msra.mxu0 0.0
      %2888 = vmatprep.subr.mxu0 0.0
      %2889 = vmatpush1.msra.mxu0 0.0
      %2890 = vmatprep.subr.mxu0 0.0
      %2891 = vmatpush1.msra.mxu0 0.0
      %2892 = vmatprep.subr.mxu0 0.0
      %2893 = vmatpush1.msra.mxu0 0.0
      %2894 = vmatprep.subr.mxu0 0.0
      %2895 = vmatpush1.msra.mxu0 0.0
      %2896 = vmatprep.subr.mxu0 0.0
      %2897 = vmatpush1.msra.mxu0 0.0
      %2898 = vmatprep.subr.mxu0 0.0
      %2899 = vmatpush1.msra.mxu0 0.0
      %2900 = vmatprep.subr.mxu0 0.0
      %2901 = vmatpush1.msra.mxu0 0.0
      %2902 = vmatprep.subr.mxu0 0.0
      %2903 = vmatpush1.msra.mxu0 0.0
      %2904 = vmatprep.subr.mxu0 0.0
      %2905 = vmatpush1.msra.mxu0 0.0
      %2906 = vmatprep.subr.mxu0 0.0
      %2907 = vmatpush1.msra.mxu0 0.0
      %2908 = vmatprep.subr.mxu0 0.0
      %2909 = vmatpush1.msra.mxu0 0.0
      %2910 = vmatprep.subr.mxu0 0.0
      %2911 = vmatpush1.msra.mxu0 0.0
      %2912 = vmatprep.subr.mxu0 0.0
      %2913 = vmatpush1.msra.mxu0 0.0
      %2914 = vmatprep.subr.mxu0 0.0
      %2915 = vmatpush1.msra.mxu0 0.0
      %2916 = vmatprep.subr.mxu0 0.0
      %2917 = vmatpush1.msra.mxu0 0.0
      %2918 = vmatprep.subr.mxu0 0.0
      %2919 = vmatpush1.msra.mxu0 0.0
      %2920 = vmatprep.subr.mxu0 0.0
      %2921 = vmatpush1.msra.mxu0 0.0
      %2922 = vmatprep.subr.mxu0 0.0
      %2923 = vmatpush1.msra.mxu0 0.0
      %2924 = vmatprep.subr.mxu0 0.0
      %2925 = vmatpush1.msra.mxu0 0.0
      %2926 = vmatprep.subr.mxu0 0.0
      %2927 = vmatpush1.msra.mxu0 0.0
      %2928 = vmatprep.mubr.f32.mxu0 0.0
      %2929 = vmatmul.mubr.f32.gmra.mrb[0].mxu0 %v2607
      %v2930 = vpop.f32.mrb[0].mxu0
      %v2931 = vadd.f32 0.0, %v2930
      %v2932 = vpop.f32.mrb[0].mxu0
      %2933 = vmatprep.mubr.f32.mxu0 0.0
      %2934 = vmatmul.mubr.f32.gmra.mrb[0].mxu0 %v2610
      %v2935 = vpop.f32.mrb[0].mxu0
      %v2936 = vadd.f32 0.0, %v2935
      %v2937 = vpop.f32.mrb[0].mxu0
      %2938 = vmatprep.mubr.f32.mxu0 0.0
      %2939 = vmatmul.mubr.f32.gmra.mrb[0].mxu0 %v2613
      %v2940 = vpop.f32.mrb[0].mxu0
      %v2941 = vadd.f32 0.0, %v2940
      %v2942 = vpop.f32.mrb[0].mxu0
      %2943 = vdwg.mxu0
      %v2944 = vadd.f32 %v2599, %v2931
      %v2945 = vadd.f32 %v2600, %v2936
      %v2946 = vadd.f32 %v2601, %v2941
      %v2947 = vld [vmem:[%s2602 + $0x1] sm:$0xff]
      %v2948 = vld [vmem:[%s2602 + $0x9] sm:$0xff]
      %v2949 = vld [vmem:[%s2602 + $0x11] sm:$0xf]
      %v2951 = vsel %vm209, %v2947, 0
      %v2954 = vsel %vm209, %v2948, 0
      %v2957 = vsel %vm209, %v2949, 0
      %2959 = vmatprep.subr.mxu0 0.0
      %2960 = vmatpush1.msra.mxu0 %v764
      %2961 = vmatprep.subr.mxu0 0.0
      %2962 = vmatpush1.msra.mxu0 %v765
      %2963 = vmatprep.subr.mxu0 0.0
      %2964 = vmatpush1.msra.mxu0 %v766
      %2965 = vmatprep.subr.mxu0 0.0
      %2966 = vmatpush1.msra.mxu0 %v767
      %2967 = vmatprep.subr.mxu0 0.0
      %2968 = vmatpush1.msra.mxu0 0.0
      %2969 = vmatprep.subr.mxu0 0.0
      %2970 = vmatpush1.msra.mxu0 0.0
      %2971 = vmatprep.subr.mxu0 0.0
      %2972 = vmatpush1.msra.mxu0 0.0
      %2973 = vmatprep.subr.mxu0 0.0
      %2974 = vmatpush1.msra.mxu0 0.0
      %2975 = vmatprep.subr.mxu0 0.0
      %2976 = vmatpush1.msra.mxu0 0.0
      %2977 = vmatprep.subr.mxu0 0.0
      %2978 = vmatpush1.msra.mxu0 0.0
      %2979 = vmatprep.subr.mxu0 0.0
      %2980 = vmatpush1.msra.mxu0 0.0
      %2981 = vmatprep.subr.mxu0 0.0
      %2982 = vmatpush1.msra.mxu0 0.0
      %2983 = vmatprep.subr.mxu0 0.0
      %2984 = vmatpush1.msra.mxu0 0.0
      %2985 = vmatprep.subr.mxu0 0.0
      %2986 = vmatpush1.msra.mxu0 0.0
      %2987 = vmatprep.subr.mxu0 0.0
      %2988 = vmatpush1.msra.mxu0 0.0
      %2989 = vmatprep.subr.mxu0 0.0
      %2990 = vmatpush1.msra.mxu0 0.0
      %2991 = vmatprep.subr.mxu0 0.0
      %2992 = vmatpush1.msra.mxu0 0.0
      %2993 = vmatprep.subr.mxu0 0.0
      %2994 = vmatpush1.msra.mxu0 0.0
      %2995 = vmatprep.subr.mxu0 0.0
      %2996 = vmatpush1.msra.mxu0 0.0
      %2997 = vmatprep.subr.mxu0 0.0
      %2998 = vmatpush1.msra.mxu0 0.0
      %2999 = vmatprep.subr.mxu0 0.0
      %3000 = vmatpush1.msra.mxu0 0.0
      %3001 = vmatprep.subr.mxu0 0.0
      %3002 = vmatpush1.msra.mxu0 0.0
      %3003 = vmatprep.subr.mxu0 0.0
      %3004 = vmatpush1.msra.mxu0 0.0
      %3005 = vmatprep.subr.mxu0 0.0
      %3006 = vmatpush1.msra.mxu0 0.0
      %3007 = vmatprep.subr.mxu0 0.0
      %3008 = vmatpush1.msra.mxu0 0.0
      %3009 = vmatprep.subr.mxu0 0.0
      %3010 = vmatpush1.msra.mxu0 0.0
      %3011 = vmatprep.subr.mxu0 0.0
      %3012 = vmatpush1.msra.mxu0 0.0
      %3013 = vmatprep.subr.mxu0 0.0
      %3014 = vmatpush1.msra.mxu0 0.0
      %3015 = vmatprep.subr.mxu0 0.0
      %3016 = vmatpush1.msra.mxu0 0.0
      %3017 = vmatprep.subr.mxu0 0.0
      %3018 = vmatpush1.msra.mxu0 0.0
      %3019 = vmatprep.subr.mxu0 0.0
      %3020 = vmatpush1.msra.mxu0 0.0
      %3021 = vmatprep.subr.mxu0 0.0
      %3022 = vmatpush1.msra.mxu0 0.0
      %3023 = vmatprep.mubr.f32.mxu0 0.0
      %3024 = vmatmul.mubr.f32.gmra.mrb[0].mxu0 %v2951
      %v3025 = vpop.f32.mrb[0].mxu0
      %v3026 = vadd.f32 0.0, %v3025
      %v3027 = vpop.f32.mrb[0].mxu0
      %3028 = vmatprep.mubr.f32.mxu0 0.0
      %3029 = vmatmul.mubr.f32.gmra.mrb[0].mxu0 %v2954
      %v3030 = vpop.f32.mrb[0].mxu0
      %v3031 = vadd.f32 0.0, %v3030
      %v3032 = vpop.f32.mrb[0].mxu0
      %3033 = vmatprep.mubr.f32.mxu0 0.0
      %3034 = vmatmul.mubr.f32.gmra.mrb[0].mxu0 %v2957
      %v3035 = vpop.f32.mrb[0].mxu0
      %v3036 = vadd.f32 0.0, %v3035
      %v3037 = vpop.f32.mrb[0].mxu0
      %3038 = vdwg.mxu0
      %v3039 = vadd.f32 %v2778, %v3026
      %v3040 = vadd.f32 %v2779, %v3031
      %v3041 = vadd.f32 %v2780, %v3036
      %3042 = vmatprep.subr.mxu0 0.0
      %3043 = vmatpush1.msra.mxu0 %v205
      %3044 = vmatprep.subr.mxu0 0.0
      %3045 = vmatpush1.msra.mxu0 %v206
      %3046 = vmatprep.subr.mxu0 0.0
      %3047 = vmatpush1.msra.mxu0 %v207
      %3048 = vmatprep.subr.mxu0 0.0
      %3049 = vmatpush1.msra.mxu0 %v208
      %3050 = vmatprep.subr.mxu0 0.0
      %3051 = vmatpush1.msra.mxu0 0.0
      %3052 = vmatprep.subr.mxu0 0.0
      %3053 = vmatpush1.msra.mxu0 0.0
      %3054 = vmatprep.subr.mxu0 0.0
      %3055 = vmatpush1.msra.mxu0 0.0
      %3056 = vmatprep.subr.mxu0 0.0
      %3057 = vmatpush1.msra.mxu0 0.0
      %3058 = vmatprep.subr.mxu0 0.0
      %3059 = vmatpush1.msra.mxu0 0.0
      %3060 = vmatprep.subr.mxu0 0.0
      %3061 = vmatpush1.msra.mxu0 0.0
      %3062 = vmatprep.subr.mxu0 0.0
      %3063 = vmatpush1.msra.mxu0 0.0
      %3064 = vmatprep.subr.mxu0 0.0
      %3065 = vmatpush1.msra.mxu0 0.0
      %3066 = vmatprep.subr.mxu0 0.0
      %3067 = vmatpush1.msra.mxu0 0.0
      %3068 = vmatprep.subr.mxu0 0.0
      %3069 = vmatpush1.msra.mxu0 0.0
      %3070 = vmatprep.subr.mxu0 0.0
      %3071 = vmatpush1.msra.mxu0 0.0
      %3072 = vmatprep.subr.mxu0 0.0
      %3073 = vmatpush1.msra.mxu0 0.0
      %3074 = vmatprep.subr.mxu0 0.0
      %3075 = vmatpush1.msra.mxu0 0.0
      %3076 = vmatprep.subr.mxu0 0.0
      %3077 = vmatpush1.msra.mxu0 0.0
      %3078 = vmatprep.subr.mxu0 0.0
      %3079 = vmatpush1.msra.mxu0 0.0
      %3080 = vmatprep.subr.mxu0 0.0
      %3081 = vmatpush1.msra.mxu0 0.0
      %3082 = vmatprep.subr.mxu0 0.0
      %3083 = vmatpush1.msra.mxu0 0.0
      %3084 = vmatprep.subr.mxu0 0.0
      %3085 = vmatpush1.msra.mxu0 0.0
      %3086 = vmatprep.subr.mxu0 0.0
      %3087 = vmatpush1.msra.mxu0 0.0
      %3088 = vmatprep.subr.mxu0 0.0
      %3089 = vmatpush1.msra.mxu0 0.0
      %3090 = vmatprep.subr.mxu0 0.0
      %3091 = vmatpush1.msra.mxu0 0.0
      %3092 = vmatprep.subr.mxu0 0.0
      %3093 = vmatpush1.msra.mxu0 0.0
      %3094 = vmatprep.subr.mxu0 0.0
      %3095 = vmatpush1.msra.mxu0 0.0
      %3096 = vmatprep.subr.mxu0 0.0
      %3097 = vmatpush1.msra.mxu0 0.0
      %3098 = vmatprep.subr.mxu0 0.0
      %3099 = vmatpush1.msra.mxu0 0.0
      %3100 = vmatprep.subr.mxu0 0.0
      %3101 = vmatpush1.msra.mxu0 0.0
      %3102 = vmatprep.subr.mxu0 0.0
      %3103 = vmatpush1.msra.mxu0 0.0
      %3104 = vmatprep.subr.mxu0 0.0
      %3105 = vmatpush1.msra.mxu0 0.0
      %3106 = vmatprep.mubr.f32.mxu0 0.0
      %3107 = vmatmul.mubr.f32.gmra.mrb[0].mxu0 %v2951
      %v3108 = vpop.f32.mrb[0].mxu0
      %v3109 = vadd.f32 0.0, %v3108
      %v3110 = vpop.f32.mrb[0].mxu0
      %3111 = vmatprep.mubr.f32.mxu0 0.0
      %3112 = vmatmul.mubr.f32.gmra.mrb[0].mxu0 %v2954
      %v3113 = vpop.f32.mrb[0].mxu0
      %v3114 = vadd.f32 0.0, %v3113
      %v3115 = vpop.f32.mrb[0].mxu0
      %3116 = vmatprep.mubr.f32.mxu0 0.0
      %3117 = vmatmul.mubr.f32.gmra.mrb[0].mxu0 %v2957
      %v3118 = vpop.f32.mrb[0].mxu0
      %v3119 = vadd.f32 0.0, %v3118
      %v3120 = vpop.f32.mrb[0].mxu0
      %3121 = vdwg.mxu0
      %v3122 = vadd.f32 %v2944, %v3109
      %v3123 = vadd.f32 %v2945, %v3114
      %v3124 = vadd.f32 %v2946, %v3119
      %v3125 = vld [vmem:[%s2602 + $0x5] sm:$0xff]
      %v3126 = vld [vmem:[%s2602 + $0xd] sm:$0xff]
      %v3127 = vld [vmem:[%s2602 + $0x15] sm:$0xf]
      %v3129 = vsel %vm209, %v3125, 0
      %v3132 = vsel %vm209, %v3126, 0
      %v3135 = vsel %vm209, %v3127, 0
      %3137 = vmatprep.subr.mxu0 0.0
      %3138 = vmatpush1.msra.mxu0 %v599
      %3139 = vmatprep.subr.mxu0 0.0
      %3140 = vmatpush1.msra.mxu0 %v600
      %3141 = vmatprep.subr.mxu0 0.0
      %3142 = vmatpush1.msra.mxu0 %v601
      %3143 = vmatprep.subr.mxu0 0.0
      %3144 = vmatpush1.msra.mxu0 %v602
      %3145 = vmatprep.subr.mxu0 0.0
      %3146 = vmatpush1.msra.mxu0 0.0
      %3147 = vmatprep.subr.mxu0 0.0
      %3148 = vmatpush1.msra.mxu0 0.0
      %3149 = vmatprep.subr.mxu0 0.0
      %3150 = vmatpush1.msra.mxu0 0.0
      %3151 = vmatprep.subr.mxu0 0.0
      %3152 = vmatpush1.msra.mxu0 0.0
      %3153 = vmatprep.subr.mxu0 0.0
      %3154 = vmatpush1.msra.mxu0 0.0
      %3155 = vmatprep.subr.mxu0 0.0
      %3156 = vmatpush1.msra.mxu0 0.0
      %3157 = vmatprep.subr.mxu0 0.0
      %3158 = vmatpush1.msra.mxu0 0.0
      %3159 = vmatprep.subr.mxu0 0.0
      %3160 = vmatpush1.msra.mxu0 0.0
      %3161 = vmatprep.subr.mxu0 0.0
      %3162 = vmatpush1.msra.mxu0 0.0
      %3163 = vmatprep.subr.mxu0 0.0
      %3164 = vmatpush1.msra.mxu0 0.0
      %3165 = vmatprep.subr.mxu0 0.0
      %3166 = vmatpush1.msra.mxu0 0.0
      %3167 = vmatprep.subr.mxu0 0.0
      %3168 = vmatpush1.msra.mxu0 0.0
      %3169 = vmatprep.subr.mxu0 0.0
      %3170 = vmatpush1.msra.mxu0 0.0
      %3171 = vmatprep.subr.mxu0 0.0
      %3172 = vmatpush1.msra.mxu0 0.0
      %3173 = vmatprep.subr.mxu0 0.0
      %3174 = vmatpush1.msra.mxu0 0.0
      %3175 = vmatprep.subr.mxu0 0.0
      %3176 = vmatpush1.msra.mxu0 0.0
      %3177 = vmatprep.subr.mxu0 0.0
      %3178 = vmatpush1.msra.mxu0 0.0
      %3179 = vmatprep.subr.mxu0 0.0
      %3180 = vmatpush1.msra.mxu0 0.0
      %3181 = vmatprep.subr.mxu0 0.0
      %3182 = vmatpush1.msra.mxu0 0.0
      %3183 = vmatprep.subr.mxu0 0.0
      %3184 = vmatpush1.msra.mxu0 0.0
      %3185 = vmatprep.subr.mxu0 0.0
      %3186 = vmatpush1.msra.mxu0 0.0
      %3187 = vmatprep.subr.mxu0 0.0
      %3188 = vmatpush1.msra.mxu0 0.0
      %3189 = vmatprep.subr.mxu0 0.0
      %3190 = vmatpush1.msra.mxu0 0.0
      %3191 = vmatprep.subr.mxu0 0.0
      %3192 = vmatpush1.msra.mxu0 0.0
      %3193 = vmatprep.subr.mxu0 0.0
      %3194 = vmatpush1.msra.mxu0 0.0
      %3195 = vmatprep.subr.mxu0 0.0
      %3196 = vmatpush1.msra.mxu0 0.0
      %3197 = vmatprep.subr.mxu0 0.0
      %3198 = vmatpush1.msra.mxu0 0.0
      %3199 = vmatprep.subr.mxu0 0.0
      %3200 = vmatpush1.msra.mxu0 0.0
      %3201 = vmatprep.mubr.f32.mxu0 0.0
      %3202 = vmatmul.mubr.f32.gmra.mrb[0].mxu0 %v3129
      %v3203 = vpop.f32.mrb[0].mxu0
      %v3204 = vadd.f32 0.0, %v3203
      %v3205 = vpop.f32.mrb[0].mxu0
      %3206 = vmatprep.mubr.f32.mxu0 0.0
      %3207 = vmatmul.mubr.f32.gmra.mrb[0].mxu0 %v3132
      %v3208 = vpop.f32.mrb[0].mxu0
      %v3209 = vadd.f32 0.0, %v3208
      %v3210 = vpop.f32.mrb[0].mxu0
      %3211 = vmatprep.mubr.f32.mxu0 0.0
      %3212 = vmatmul.mubr.f32.gmra.mrb[0].mxu0 %v3135
      %v3213 = vpop.f32.mrb[0].mxu0
      %v3214 = vadd.f32 0.0, %v3213
      %v3215 = vpop.f32.mrb[0].mxu0
      %3216 = vdwg.mxu0
      %v3217 = vadd.f32 %v2861, %v3204
      %v3218 = vadd.f32 %v2862, %v3209
      %v3219 = vadd.f32 %v2863, %v3214
      %3220 = vmatprep.subr.mxu0 0.0
      %3221 = vmatpush1.msra.mxu0 %v397
      %3222 = vmatprep.subr.mxu0 0.0
      %3223 = vmatpush1.msra.mxu0 %v398
      %3224 = vmatprep.subr.mxu0 0.0
      %3225 = vmatpush1.msra.mxu0 %v399
      %3226 = vmatprep.subr.mxu0 0.0
      %3227 = vmatpush1.msra.mxu0 %v400
      %3228 = vmatprep.subr.mxu0 0.0
      %3229 = vmatpush1.msra.mxu0 0.0
      %3230 = vmatprep.subr.mxu0 0.0
      %3231 = vmatpush1.msra.mxu0 0.0
      %3232 = vmatprep.subr.mxu0 0.0
      %3233 = vmatpush1.msra.mxu0 0.0
      %3234 = vmatprep.subr.mxu0 0.0
      %3235 = vmatpush1.msra.mxu0 0.0
      %3236 = vmatprep.subr.mxu0 0.0
      %3237 = vmatpush1.msra.mxu0 0.0
      %3238 = vmatprep.subr.mxu0 0.0
      %3239 = vmatpush1.msra.mxu0 0.0
      %3240 = vmatprep.subr.mxu0 0.0
      %3241 = vmatpush1.msra.mxu0 0.0
      %3242 = vmatprep.subr.mxu0 0.0
      %3243 = vmatpush1.msra.mxu0 0.0
      %3244 = vmatprep.subr.mxu0 0.0
      %3245 = vmatpush1.msra.mxu0 0.0
      %3246 = vmatprep.subr.mxu0 0.0
      %3247 = vmatpush1.msra.mxu0 0.0
      %3248 = vmatprep.subr.mxu0 0.0
      %3249 = vmatpush1.msra.mxu0 0.0
      %3250 = vmatprep.subr.mxu0 0.0
      %3251 = vmatpush1.msra.mxu0 0.0
      %3252 = vmatprep.subr.mxu0 0.0
      %3253 = vmatpush1.msra.mxu0 0.0
      %3254 = vmatprep.subr.mxu0 0.0
      %3255 = vmatpush1.msra.mxu0 0.0
      %3256 = vmatprep.subr.mxu0 0.0
      %3257 = vmatpush1.msra.mxu0 0.0
      %3258 = vmatprep.subr.mxu0 0.0
      %3259 = vmatpush1.msra.mxu0 0.0
      %3260 = vmatprep.subr.mxu0 0.0
      %3261 = vmatpush1.msra.mxu0 0.0
      %3262 = vmatprep.subr.mxu0 0.0
      %3263 = vmatpush1.msra.mxu0 0.0
      %3264 = vmatprep.subr.mxu0 0.0
      %3265 = vmatpush1.msra.mxu0 0.0
      %3266 = vmatprep.subr.mxu0 0.0
      %3267 = vmatpush1.msra.mxu0 0.0
      %3268 = vmatprep.subr.mxu0 0.0
      %3269 = vmatpush1.msra.mxu0 0.0
      %3270 = vmatprep.subr.mxu0 0.0
      %3271 = vmatpush1.msra.mxu0 0.0
      %3272 = vmatprep.subr.mxu0 0.0
      %3273 = vmatpush1.msra.mxu0 0.0
      %3274 = vmatprep.subr.mxu0 0.0
      %3275 = vmatpush1.msra.mxu0 0.0
      %3276 = vmatprep.subr.mxu0 0.0
      %3277 = vmatpush1.msra.mxu0 0.0
      %3278 = vmatprep.subr.mxu0 0.0
      %3279 = vmatpush1.msra.mxu0 0.0
      %3280 = vmatprep.subr.mxu0 0.0
      %3281 = vmatpush1.msra.mxu0 0.0
      %3282 = vmatprep.subr.mxu0 0.0
      %3283 = vmatpush1.msra.mxu0 0.0
      %3284 = vmatprep.mubr.f32.mxu0 0.0
      %3285 = vmatmul.mubr.f32.gmra.mrb[0].mxu0 %v3129
      %v3286 = vpop.f32.mrb[0].mxu0
      %v3287 = vadd.f32 0.0, %v3286
      %v3288 = vpop.f32.mrb[0].mxu0
      %3289 = vmatprep.mubr.f32.mxu0 0.0
      %3290 = vmatmul.mubr.f32.gmra.mrb[0].mxu0 %v3132
      %v3291 = vpop.f32.mrb[0].mxu0
      %v3292 = vadd.f32 0.0, %v3291
      %v3293 = vpop.f32.mrb[0].mxu0
      %3294 = vmatprep.mubr.f32.mxu0 0.0
      %3295 = vmatmul.mubr.f32.gmra.mrb[0].mxu0 %v3135
      %v3296 = vpop.f32.mrb[0].mxu0
      %v3297 = vadd.f32 0.0, %v3296
      %v3298 = vpop.f32.mrb[0].mxu0
      %3299 = vdwg.mxu0
      %v3300 = vadd.f32 %v3122, %v3287
      %v3301 = vadd.f32 %v3123, %v3292
      %v3302 = vadd.f32 %v3124, %v3297
      %v3303 = vld [vmem:[%s2602 + $0x6] sm:$0xff]
      %v3304 = vld [vmem:[%s2602 + $0xe] sm:$0xff]
      %v3305 = vld [vmem:[%s2602 + $0x16] sm:$0xf]
      %v3307 = vsel %vm209, %v3303, 0
      %v3310 = vsel %vm209, %v3304, 0
      %v3313 = vsel %vm209, %v3305, 0
      %3315 = vmatprep.subr.mxu0 0.0
      %3316 = vmatpush1.msra.mxu0 %v502
      %3317 = vmatprep.subr.mxu0 0.0
      %3318 = vmatpush1.msra.mxu0 %v503
      %3319 = vmatprep.subr.mxu0 0.0
      %3320 = vmatpush1.msra.mxu0 %v504
      %3321 = vmatprep.subr.mxu0 0.0
      %3322 = vmatpush1.msra.mxu0 %v505
      %3323 = vmatprep.subr.mxu0 0.0
      %3324 = vmatpush1.msra.mxu0 0.0
      %3325 = vmatprep.subr.mxu0 0.0
      %3326 = vmatpush1.msra.mxu0 0.0
      %3327 = vmatprep.subr.mxu0 0.0
      %3328 = vmatpush1.msra.mxu0 0.0
      %3329 = vmatprep.subr.mxu0 0.0
      %3330 = vmatpush1.msra.mxu0 0.0
      %3331 = vmatprep.subr.mxu0 0.0
      %3332 = vmatpush1.msra.mxu0 0.0
      %3333 = vmatprep.subr.mxu0 0.0
      %3334 = vmatpush1.msra.mxu0 0.0
      %3335 = vmatprep.subr.mxu0 0.0
      %3336 = vmatpush1.msra.mxu0 0.0
      %3337 = vmatprep.subr.mxu0 0.0
      %3338 = vmatpush1.msra.mxu0 0.0
      %3339 = vmatprep.subr.mxu0 0.0
      %3340 = vmatpush1.msra.mxu0 0.0
      %3341 = vmatprep.subr.mxu0 0.0
      %3342 = vmatpush1.msra.mxu0 0.0
      %3343 = vmatprep.subr.mxu0 0.0
      %3344 = vmatpush1.msra.mxu0 0.0
      %3345 = vmatprep.subr.mxu0 0.0
      %3346 = vmatpush1.msra.mxu0 0.0
      %3347 = vmatprep.subr.mxu0 0.0
      %3348 = vmatpush1.msra.mxu0 0.0
      %3349 = vmatprep.subr.mxu0 0.0
      %3350 = vmatpush1.msra.mxu0 0.0
      %3351 = vmatprep.subr.mxu0 0.0
      %3352 = vmatpush1.msra.mxu0 0.0
      %3353 = vmatprep.subr.mxu0 0.0
      %3354 = vmatpush1.msra.mxu0 0.0
      %3355 = vmatprep.subr.mxu0 0.0
      %3356 = vmatpush1.msra.mxu0 0.0
      %3357 = vmatprep.subr.mxu0 0.0
      %3358 = vmatpush1.msra.mxu0 0.0
      %3359 = vmatprep.subr.mxu0 0.0
      %3360 = vmatpush1.msra.mxu0 0.0
      %3361 = vmatprep.subr.mxu0 0.0
      %3362 = vmatpush1.msra.mxu0 0.0
      %3363 = vmatprep.subr.mxu0 0.0
      %3364 = vmatpush1.msra.mxu0 0.0
      %3365 = vmatprep.subr.mxu0 0.0
      %3366 = vmatpush1.msra.mxu0 0.0
      %3367 = vmatprep.subr.mxu0 0.0
      %3368 = vmatpush1.msra.mxu0 0.0
      %3369 = vmatprep.subr.mxu0 0.0
      %3370 = vmatpush1.msra.mxu0 0.0
      %3371 = vmatprep.subr.mxu0 0.0
      %3372 = vmatpush1.msra.mxu0 0.0
      %3373 = vmatprep.subr.mxu0 0.0
      %3374 = vmatpush1.msra.mxu0 0.0
      %3375 = vmatprep.subr.mxu0 0.0
      %3376 = vmatpush1.msra.mxu0 0.0
      %3377 = vmatprep.subr.mxu0 0.0
      %3378 = vmatpush1.msra.mxu0 0.0
      %3379 = vmatprep.mubr.f32.mxu0 0.0
      %3380 = vmatmul.mubr.f32.gmra.mrb[0].mxu0 %v3307
      %v3381 = vpop.f32.mrb[0].mxu0
      %v3382 = vadd.f32 0.0, %v3381
      %v3383 = vpop.f32.mrb[0].mxu0
      %3384 = vmatprep.mubr.f32.mxu0 0.0
      %3385 = vmatmul.mubr.f32.gmra.mrb[0].mxu0 %v3310
      %v3386 = vpop.f32.mrb[0].mxu0
      %v3387 = vadd.f32 0.0, %v3386
      %v3388 = vpop.f32.mrb[0].mxu0
      %3389 = vmatprep.mubr.f32.mxu0 0.0
      %3390 = vmatmul.mubr.f32.gmra.mrb[0].mxu0 %v3313
      %v3391 = vpop.f32.mrb[0].mxu0
      %v3392 = vadd.f32 0.0, %v3391
      %v3393 = vpop.f32.mrb[0].mxu0
      %3394 = vdwg.mxu0
      %v3395 = vadd.f32 %v3300, %v3382
      %v3396 = vadd.f32 %v3301, %v3387
      %v3397 = vadd.f32 %v3302, %v3392
      %v3398 = vmax.f32 %v2695, %v3039
      %v3399 = vmax.f32 %v2696, %v3040
      %v3400 = vmax.f32 %v2697, %v3041
      %v3401 = vmax.f32 %v3217, %v3395
      %v3402 = vmax.f32 %v3218, %v3396
      %v3403 = vmax.f32 %v3219, %v3397
      %v3404 = vmax.f32 %v3398, %v3401
      %v3405 = vmax.f32 %v3399, %v3402
      %v3406 = vmax.f32 %v3400, %v3403
      %v3407 = vld [vmem:[%s2] sm:$0x1]
      %v3409 = vlaneseq
      %v3410 = vshrl.u32 %v3409, 7
      %v3411 = vsub.s32 0, %v3410
      %v3412 = vrot.slane %v3407, %v3411
      %v3414 = vadd.f32 %v3404, %v3412
      %v3415 = vadd.f32 %v3405, %v3412
      %v3416 = vadd.f32 %v3406, %v3412
      %v3417 = vmax.f32 %v3414, 0.0
      %v3418 = vmax.f32 %v3415, 0.0
      %v3419 = vmax.f32 %v3416, 0.0
      %vm3420 = vcmask 523264
      %3421 = vst.msk [vmem:[%s192] sm:$0xff] %vm3420, %v3417
      %3422 = vst.msk [vmem:[%s192 + $0x8] sm:$0xff] %vm3420, %v3418
      %vm3423 = vcmask 519168
      %3424 = vst.msk [vmem:[%s192 + $0x10] sm:$0xf] %vm3423, %v3419
      %s3425 = smul.u32 3, %s19
      %p3426 = scmp.lt.s32.totalorder %s18, 1
      %s3427 = scalar_select %p3426, %s18, 1
      %p3428 = scmp.lt.s32.totalorder %s3425, 2
      %s3429 = scalar_select %p3428, %s3425, 2
      %s3430 = smul.addr %s3427, 3
      %s3431 = sadd.s32 %s3429, %s3430
      %s3432 = smul.addr %s3431, 8
      %s3433 = scalar_lea.vmem %s3, %s3432
      // Predicated region
      $region33: #{chord_detector_forward.5} parent=31 // pred_check
        %p3434 = pneg %p114
      $region34: #{chord_detector_forward.5} parent=31 // pred_check_branch
        %3436 = sbr.rel (%p3434) target = $region36
      $region35: #{chord_detector_forward.5} parent=31 // pred_region
        %s3437 = smul.u32 3, %s19
      $region36: #{chord_detector_forward.5} parent=31 // pred_fallthru
        _
    $region32: #{chord_detector_forward.5} parent=5 // pred_fallthru
      _
    %p3438 = scmp.le.s32.totalorder 2, %s9
    // Predicated region
    $region37: #{chord_detector_forward.5} parent=5 // pred_check
      %p3439 = pneg %p3438
    $region38: #{chord_detector_forward.5} parent=5 // pred_check_branch
      %3441 = sbr.rel (%p3439) target = $region40
    $region39: #{chord_detector_forward.5} parent=5 // pred_region
      %s3442 = ssub.s32 %s9, 2
      // Predicated region
      $region41: #{chord_detector_forward.5} parent=39 // pred_check
        %p3443 = pneg %p120
      $region42: #{chord_detector_forward.5} parent=39 // pred_check_branch
        %3445 = sbr.rel (%p3443) target = $region44
      $region43: #{chord_detector_forward.5} parent=39 // pred_region
        %s3446 = smul.u32 3, %s21
        %p3447 = scmp.lt.s32.totalorder %s20, 1
        %s3448 = scalar_select %p3447, %s20, 1
        %p3449 = scmp.lt.s32.totalorder %s3446, 2
        %s3450 = scalar_select %p3449, %s3446, 2
        %s3451 = smul.addr %s3448, 3
        %s3452 = sadd.s32 %s3450, %s3451
        %s3453 = smul.addr %s3452, 8
        %s3454 = scalar_lea.vmem %s3, %s3453
      $region44: #{chord_detector_forward.5} parent=39 // pred_fallthru
        _
    $region40: #{chord_detector_forward.5} parent=5 // pred_fallthru
      _
  $region6: #{chord_detector_forward.5} parent=0 // loop_footer
    %s13 = sadd.s32 1, %s9
  $region7: #{chord_detector_forward.5} parent=0 // loop_footer_branch
    %8 = sbr.rel target = $region3
  $region8: #{chord_detector_forward.5} parent=0 // loop_exit
    _

</llo_original>
